<compile_context>
chip_gen: v7x
topology: tpu7x:2x2x1
jax: 0.10.0
libtpu: 0.0.40
codegen_flags: <defaults>
</compile_context>

<pallas_src>
import jax
import jax.numpy as jnp
from jax.experimental import pallas as pl
from jax.experimental.pallas import tpu as pltpu

L = 64                         # num_subcarriers (PyTorch module default)
CH = (1, 16, 32, 64, 64, 64)   # channel progression conv1..conv5
LOUT = L                       # fc output features
LOUT_PAD = 128                 # lane-dense output width (sliced back to LOUT)
TB = 64                        # batch tile per grid step (sweep 32..128, %8 == 0)


# ----------------------------- kernel ------------------------------------- #
def _shift_pm1(h):
    """h[l-1], h[l+1] along the leading (position) axis, zero-padded.

    Position is the leading (major) dim, so one position == TB rows (TB%8==0):
    these are vreg-aligned row copies, no lane shuffles.
    """
    zero = jnp.zeros_like(h[:1])
    hm1 = jnp.concatenate([zero, h[:-1]], axis=0)   # h[l-1]
    hp1 = jnp.concatenate([h[1:], zero], axis=0)    # h[l+1]
    return hm1, hp1


def _conv_relu(h, w_ref, b_ref):
    """Conv1d(k=3, pad=1) + ReLU via three per-tap MXU matmuls.

    h: (L, TB, Cin) f32.  w_ref: (3, Cin, Cout) bf16.  b_ref: (1, Cout) f32.
    y[l] = h[l-1] @ W0 + h[l] @ W1 + h[l+1] @ W2 + b   (f32 accumulation)
    """
    l, tb, cin = h.shape
    hb = h.astype(jnp.bfloat16)
    hm1, hp1 = _shift_pm1(hb)
    y = (jnp.dot(hm1.reshape(l * tb, cin), w_ref[0],
                 preferred_element_type=jnp.float32)
         + jnp.dot(hb.reshape(l * tb, cin), w_ref[1],
                   preferred_element_type=jnp.float32)
         + jnp.dot(hp1.reshape(l * tb, cin), w_ref[2],
                   preferred_element_type=jnp.float32))
    y = y.reshape(l, tb, -1) + b_ref[...]
    return jnp.maximum(y, 0.0)                       # (L, TB, Cout)


def fused_kernel(x_ref,
                 w1_ref, b1_ref, w2_ref, b2_ref, w3_ref, b3_ref,
                 w4_ref, b4_ref, w5_ref, b5_ref,
                 wfc_ref, bfc_ref,
                 out_ref):
    x = x_ref[...]                                   # (L, TB, 1) f32
    # conv1 (Cin == 1): VPU broadcast-multiply, kept f32 (cheap; v5e has no bf16 VPU)
    xm1, xp1 = _shift_pm1(x)
    w1 = w1_ref[...]                                 # (3, 1, 16) f32
    h = xm1 * w1[0] + x * w1[1] + xp1 * w1[2] + b1_ref[...]
    h = jnp.maximum(h, 0.0)                          # (L, TB, 16)
    h = _conv_relu(h, w2_ref, b2_ref)                # (L, TB, 32)
    h = _conv_relu(h, w3_ref, b3_ref)                # (L, TB, 64)
    h = _conv_relu(h, w4_ref, b4_ref)                # (L, TB, 64)
    h = _conv_relu(h, w5_ref, b5_ref)                # (L, TB, 64)

    # Fused FC: out[b, o] = sum_{l, c} h[l, b, c] * wfc[l, c, o].
    # Reduction over l stays inside the MXU via a small f32 accumulator -- no
    # (L, TB, Lout) intermediate, no VPU tree-sum.
    hb = h.astype(jnp.bfloat16)
    wfc = wfc_ref[...]                               # (L, C, Lout) bf16, VMEM-resident
    tb = h.shape[1]
    acc = jnp.zeros((tb, LOUT), jnp.float32)
    for l in range(L):                               # static unroll: 64 MXU matmuls
        acc = acc + jnp.dot(hb[l], wfc[l], preferred_element_type=jnp.float32)
    out = acc + bfc_ref[...]                         # (TB, LOUT) f32
    pad = jnp.zeros((tb, LOUT_PAD - LOUT), jnp.float32)
    out_ref[...] = jnp.concatenate([out, pad], axis=-1).astype(out_ref.dtype)


# ----------------------------- wrapper ------------------------------------ #
def _const_spec(shape):
    nd = len(shape)
    return pl.BlockSpec(shape, lambda i, _nd=nd: (0,) * _nd)


def cnn_channel_estimator(x, params, tb=TB):
    """x: (B, L) float32; params: dict of torch-layout f32 weights."""
    B = x.shape[0]
    assert x.shape[1] == L
    # Shrink the batch tile for tiny batches (stay a multiple of 8).
    tb = max(8, min(tb, ((B + 7) // 8) * 8))
    tb = (tb // 8) * 8

    # --- glue: repack params into kernel-friendly layouts (plain JAX) ---
    w1 = jnp.transpose(params["conv1_w"], (2, 1, 0)).astype(jnp.float32)   # (3,1,16)
    b1 = params["conv1_b"].reshape(1, -1).astype(jnp.float32)
    conv_args = [w1, b1]
    for i in range(2, 6):
        w = params[f"conv{i}_w"]                                           # (Co,Ci,3)
        conv_args.append(jnp.transpose(w, (2, 1, 0)).astype(jnp.bfloat16))  # (3,Ci,Co)
        conv_args.append(params[f"conv{i}_b"].reshape(1, -1).astype(jnp.float32))
    # FC weight: torch flatten index is c*L + l; reorder to (l, c, o), bf16.
    fc_w = params["fc_w"]                                                  # (Lout, C*L)
    wfc = jnp.transpose(fc_w.reshape(LOUT, CH[5], L), (2, 1, 0)).astype(jnp.bfloat16)
    bfc = params["fc_b"].reshape(1, LOUT).astype(jnp.float32)

    # --- pad batch to a multiple of tb, lay out as (L, Bp, 1): TB on sublanes ---
    Bp = pl.cdiv(B, tb) * tb
    xp = jnp.pad(x.astype(jnp.float32), ((0, Bp - B), (0, 0)))
    xt = jnp.transpose(xp, (1, 0)).reshape(L, Bp, 1)

    in_specs = [pl.BlockSpec((L, tb, 1), lambda i: (0, i, 0))]
    for a in conv_args + [wfc, bfc]:
        in_specs.append(_const_spec(a.shape))

    out = pl.pallas_call(
        fused_kernel,
        out_shape=jax.ShapeDtypeStruct((Bp, LOUT_PAD), jnp.float32),
        grid=(Bp // tb,),
        in_specs=in_specs,
        out_specs=pl.BlockSpec((tb, LOUT_PAD), lambda i: (i, 0)),
        compiler_params=pltpu.CompilerParams(
            dimension_semantics=("parallel",),
            vmem_limit_bytes=48 * 1024 * 1024),
    )(xt, *conv_args, wfc, bfc)
    return out[:B, :LOUT]


# --------------------- deterministic parameter init ----------------------- #
def init_params(key):
    params = {}
    keys = jax.random.split(key, 12)
    ki = 0
    for i in range(1, 6):
        cin, cout = CH[i - 1], CH[i]
        bound = 1.0 / float(jnp.sqrt(cin * 3.0))
        params[f"conv{i}_w"] = jax.random.uniform(
            keys[ki], (cout, cin, 3), jnp.float32, -bound, bound); ki += 1
        params[f"conv{i}_b"] = jax.random.uniform(
            keys[ki], (cout,), jnp.float32, -bound, bound); ki += 1
    bound = 1.0 / float(jnp.sqrt(float(L * CH[5])))
    params["fc_w"] = jax.random.uniform(
        keys[ki], (LOUT, L * CH[5]), jnp.float32, -bound, bound); ki += 1
    params["fc_b"] = jax.random.uniform(
        keys[ki], (LOUT,), jnp.float32, -bound, bound)
    return params


# ------------------------- pure-JAX reference ------------------------------ #
def reference_forward(x, params):
    hp = jax.lax.Precision.HIGHEST
    h = x[:, None, :]                                      # (B, 1, L)  NCW
    for i in range(1, 6):
        w = params[f"conv{i}_w"]
        b = params[f"conv{i}_b"]
        h = jax.lax.conv_general_dilated(
            h, w, window_strides=(1,), padding=((1, 1),),
            dimension_numbers=("NCH", "OIH", "NCH"), precision=hp)
        h = jax.nn.relu(h + b[None, :, None])
    flat = h.reshape(h.shape[0], -1)                       # torch .view(B, -1)
    return jnp.dot(flat, params["fc_w"].T, precision=hp) + params["fc_b"]


if __name__ == "__main__":
    key = jax.random.PRNGKey(0)
    pkey, xkey = jax.random.split(key)
    params = init_params(pkey)

    # Small-shape smoke test (B=2) plus a larger batch that exercises the default
    # tile, the multi-step "parallel" grid, and the batch-tail padding/slicing path.
    for B in (2, 200):
        x = jax.random.normal(jax.random.fold_in(xkey, B), (B, L), jnp.float32)
        out = jax.block_until_ready(cnn_channel_estimator(x, params))
        ref = reference_forward(x, params)
        assert out.shape == (B, L), out.shape
        max_err = float(jnp.max(jnp.abs(out - ref)))
        assert jnp.allclose(out, ref, rtol=2e-3, atol=2e-3), f"B={B} max err {max_err}"
    print("KERNEL_OK")
</pallas_src>

<mosaic_0001>
module attributes {stable_mosaic.version = 11 : i64} {
  func.func @fused_kernel(%arg0: i32, %arg1: memref<64x8x1xf32, #tpu.memory_space<vmem>>, %arg2: memref<3x1x16xf32, #tpu.memory_space<vmem>>, %arg3: memref<1x16xf32, #tpu.memory_space<vmem>>, %arg4: memref<3x16x32xbf16, #tpu.memory_space<vmem>>, %arg5: memref<1x32xf32, #tpu.memory_space<vmem>>, %arg6: memref<3x32x64xbf16, #tpu.memory_space<vmem>>, %arg7: memref<1x64xf32, #tpu.memory_space<vmem>>, %arg8: memref<3x64x64xbf16, #tpu.memory_space<vmem>>, %arg9: memref<1x64xf32, #tpu.memory_space<vmem>>, %arg10: memref<3x64x64xbf16, #tpu.memory_space<vmem>>, %arg11: memref<1x64xf32, #tpu.memory_space<vmem>>, %arg12: memref<64x64x64xbf16, #tpu.memory_space<vmem>>, %arg13: memref<1x64xf32, #tpu.memory_space<vmem>>, %arg14: memref<8x128xf32, #tpu.memory_space<vmem>>) attributes {dimension_semantics = [#tpu.dimension_semantics<parallel>], iteration_bounds = array<i64: 1>, scalar_prefetch = 0 : i64, scratch_operands = 0 : i64, tpu.core_type = #tpu.core_type<tc>, window_params = [{transform_indices = @transform_0, window_bounds = array<i64: 64, 8, 1>}, {pipeline_mode = #tpu.pipeline_mode<synchronous>, transform_indices = @transform_1, window_bounds = array<i64: 3, 1, 16>}, {pipeline_mode = #tpu.pipeline_mode<synchronous>, transform_indices = @transform_2, window_bounds = array<i64: 1, 16>}, {pipeline_mode = #tpu.pipeline_mode<synchronous>, transform_indices = @transform_3, window_bounds = array<i64: 3, 16, 32>}, {pipeline_mode = #tpu.pipeline_mode<synchronous>, transform_indices = @transform_4, window_bounds = array<i64: 1, 32>}, {pipeline_mode = #tpu.pipeline_mode<synchronous>, transform_indices = @transform_5, window_bounds = array<i64: 3, 32, 64>}, {pipeline_mode = #tpu.pipeline_mode<synchronous>, transform_indices = @transform_6, window_bounds = array<i64: 1, 64>}, {pipeline_mode = #tpu.pipeline_mode<synchronous>, transform_indices = @transform_7, window_bounds = array<i64: 3, 64, 64>}, {pipeline_mode = #tpu.pipeline_mode<synchronous>, transform_indices = @transform_8, window_bounds = array<i64: 1, 64>}, {pipeline_mode = #tpu.pipeline_mode<synchronous>, transform_indices = @transform_9, window_bounds = array<i64: 3, 64, 64>}, {pipeline_mode = #tpu.pipeline_mode<synchronous>, transform_indices = @transform_10, window_bounds = array<i64: 1, 64>}, {pipeline_mode = #tpu.pipeline_mode<synchronous>, transform_indices = @transform_11, window_bounds = array<i64: 64, 64, 64>}, {pipeline_mode = #tpu.pipeline_mode<synchronous>, transform_indices = @transform_12, window_bounds = array<i64: 1, 64>}, {transform_indices = @transform_13, window_bounds = array<i64: 8, 128>}]} {
    %c0 = arith.constant 0 : index
    %c0_0 = arith.constant 0 : index
    %c0_1 = arith.constant 0 : index
    %0 = vector.load %arg1[%c0, %c0_0, %c0_1] : memref<64x8x1xf32, #tpu.memory_space<vmem>>, vector<64x8x1xf32>
    %cst = arith.constant 0.000000e+00 : f32
    %1 = vector.broadcast %cst : f32 to vector<1x8x1xf32>
    %2 = vector.extract_strided_slice %0 {offsets = [0, 0, 0], sizes = [63, 8, 1], strides = [1, 1, 1]} : vector<64x8x1xf32> to vector<63x8x1xf32>
    %3 = tpu.concatenate %1, %2 in 0 : vector<1x8x1xf32>, vector<63x8x1xf32> -> vector<64x8x1xf32>
    %4 = vector.extract_strided_slice %0 {offsets = [1, 0, 0], sizes = [63, 8, 1], strides = [1, 1, 1]} : vector<64x8x1xf32> to vector<63x8x1xf32>
    %5 = tpu.concatenate %4, %1 in 0 : vector<63x8x1xf32>, vector<1x8x1xf32> -> vector<64x8x1xf32>
    %c0_2 = arith.constant 0 : index
    %c0_3 = arith.constant 0 : index
    %c0_4 = arith.constant 0 : index
    %6 = vector.load %arg2[%c0_2, %c0_3, %c0_4] : memref<3x1x16xf32, #tpu.memory_space<vmem>>, vector<3x1x16xf32>
    %7 = vector.extract_strided_slice %6 {offsets = [0, 0, 0], sizes = [1, 1, 16], strides = [1, 1, 1]} : vector<3x1x16xf32> to vector<1x1x16xf32>
    %8 = vector.shape_cast %7 : vector<1x1x16xf32> to vector<1x16xf32>
    %9 = vector.shape_cast %8 : vector<1x16xf32> to vector<1x1x16xf32>
    %10 = vector.broadcast %3 : vector<64x8x1xf32> to vector<64x8x16xf32>
    %11 = vector.broadcast %9 : vector<1x1x16xf32> to vector<64x8x16xf32>
    %12 = arith.mulf %10, %11 : vector<64x8x16xf32>
    %13 = vector.extract_strided_slice %6 {offsets = [1, 0, 0], sizes = [1, 1, 16], strides = [1, 1, 1]} : vector<3x1x16xf32> to vector<1x1x16xf32>
    %14 = vector.shape_cast %13 : vector<1x1x16xf32> to vector<1x16xf32>
    %15 = vector.shape_cast %14 : vector<1x16xf32> to vector<1x1x16xf32>
    %16 = vector.broadcast %0 : vector<64x8x1xf32> to vector<64x8x16xf32>
    %17 = vector.broadcast %15 : vector<1x1x16xf32> to vector<64x8x16xf32>
    %18 = arith.mulf %16, %17 : vector<64x8x16xf32>
    %19 = arith.addf %12, %18 : vector<64x8x16xf32>
    %20 = vector.extract_strided_slice %6 {offsets = [2, 0, 0], sizes = [1, 1, 16], strides = [1, 1, 1]} : vector<3x1x16xf32> to vector<1x1x16xf32>
    %21 = vector.shape_cast %20 : vector<1x1x16xf32> to vector<1x16xf32>
    %22 = vector.shape_cast %21 : vector<1x16xf32> to vector<1x1x16xf32>
    %23 = vector.broadcast %5 : vector<64x8x1xf32> to vector<64x8x16xf32>
    %24 = vector.broadcast %22 : vector<1x1x16xf32> to vector<64x8x16xf32>
    %25 = arith.mulf %23, %24 : vector<64x8x16xf32>
    %26 = arith.addf %19, %25 : vector<64x8x16xf32>
    %c0_5 = arith.constant 0 : index
    %c0_6 = arith.constant 0 : index
    %27 = vector.load %arg3[%c0_5, %c0_6] : memref<1x16xf32, #tpu.memory_space<vmem>>, vector<1x16xf32>
    %28 = vector.shape_cast %27 : vector<1x16xf32> to vector<1x1x16xf32>
    %29 = vector.broadcast %28 : vector<1x1x16xf32> to vector<64x8x16xf32>
    %30 = arith.addf %26, %29 : vector<64x8x16xf32>
    %cst_7 = arith.constant 0.000000e+00 : f32
    %31 = vector.broadcast %cst_7 : f32 to vector<64x8x16xf32>
    %32 = arith.maximumf %30, %31 : vector<64x8x16xf32>
    %33 = arith.truncf %32 : vector<64x8x16xf32> to vector<64x8x16xbf16>
    %cst_8 = arith.constant 0.000000e+00 : bf16
    %34 = vector.broadcast %cst_8 : bf16 to vector<1x8x16xbf16>
    %35 = vector.extract_strided_slice %33 {offsets = [0, 0, 0], sizes = [63, 8, 16], strides = [1, 1, 1]} : vector<64x8x16xbf16> to vector<63x8x16xbf16>
    %36 = tpu.concatenate %34, %35 in 0 : vector<1x8x16xbf16>, vector<63x8x16xbf16> -> vector<64x8x16xbf16>
    %37 = vector.extract_strided_slice %33 {offsets = [1, 0, 0], sizes = [63, 8, 16], strides = [1, 1, 1]} : vector<64x8x16xbf16> to vector<63x8x16xbf16>
    %38 = tpu.concatenate %37, %34 in 0 : vector<63x8x16xbf16>, vector<1x8x16xbf16> -> vector<64x8x16xbf16>
    %39 = vector.shape_cast %36 : vector<64x8x16xbf16> to vector<512x16xbf16>
    %c0_9 = arith.constant 0 : index
    %c0_10 = arith.constant 0 : index
    %c0_11 = arith.constant 0 : index
    %40 = vector.load %arg4[%c0_9, %c0_10, %c0_11] : memref<3x16x32xbf16, #tpu.memory_space<vmem>>, vector<1x16x32xbf16>
    %41 = vector.shape_cast %40 : vector<1x16x32xbf16> to vector<16x32xbf16>
    %cst_12 = arith.constant dense<0.000000e+00> : vector<512x32xf32>
    %42 = tpu.matmul %39, %41, %cst_12 {dimension_numbers = #tpu.dot_dimension_numbers<[1], [0], [0], [1], [0, 0, 1, 1], [], []>} : vector<512x16xbf16>, vector<16x32xbf16>, vector<512x32xf32> -> vector<512x32xf32>
    %43 = vector.shape_cast %33 : vector<64x8x16xbf16> to vector<512x16xbf16>
    %c1 = arith.constant 1 : index
    %c0_13 = arith.constant 0 : index
    %c0_14 = arith.constant 0 : index
    %44 = vector.load %arg4[%c1, %c0_13, %c0_14] : memref<3x16x32xbf16, #tpu.memory_space<vmem>>, vector<1x16x32xbf16>
    %45 = vector.shape_cast %44 : vector<1x16x32xbf16> to vector<16x32xbf16>
    %cst_15 = arith.constant dense<0.000000e+00> : vector<512x32xf32>
    %46 = tpu.matmul %43, %45, %cst_15 {dimension_numbers = #tpu.dot_dimension_numbers<[1], [0], [0], [1], [0, 0, 1, 1], [], []>} : vector<512x16xbf16>, vector<16x32xbf16>, vector<512x32xf32> -> vector<512x32xf32>
    %47 = arith.addf %42, %46 : vector<512x32xf32>
    %48 = vector.shape_cast %38 : vector<64x8x16xbf16> to vector<512x16xbf16>
    %c2 = arith.constant 2 : index
    %c0_16 = arith.constant 0 : index
    %c0_17 = arith.constant 0 : index
    %49 = vector.load %arg4[%c2, %c0_16, %c0_17] : memref<3x16x32xbf16, #tpu.memory_space<vmem>>, vector<1x16x32xbf16>
    %50 = vector.shape_cast %49 : vector<1x16x32xbf16> to vector<16x32xbf16>
    %cst_18 = arith.constant dense<0.000000e+00> : vector<512x32xf32>
    %51 = tpu.matmul %48, %50, %cst_18 {dimension_numbers = #tpu.dot_dimension_numbers<[1], [0], [0], [1], [0, 0, 1, 1], [], []>} : vector<512x16xbf16>, vector<16x32xbf16>, vector<512x32xf32> -> vector<512x32xf32>
    %52 = arith.addf %47, %51 : vector<512x32xf32>
    %53 = vector.shape_cast %52 : vector<512x32xf32> to vector<64x8x32xf32>
    %c0_19 = arith.constant 0 : index
    %c0_20 = arith.constant 0 : index
    %54 = vector.load %arg5[%c0_19, %c0_20] : memref<1x32xf32, #tpu.memory_space<vmem>>, vector<1x32xf32>
    %55 = vector.shape_cast %54 : vector<1x32xf32> to vector<1x1x32xf32>
    %56 = vector.broadcast %55 : vector<1x1x32xf32> to vector<64x8x32xf32>
    %57 = arith.addf %53, %56 : vector<64x8x32xf32>
    %cst_21 = arith.constant 0.000000e+00 : f32
    %58 = vector.broadcast %cst_21 : f32 to vector<64x8x32xf32>
    %59 = arith.maximumf %57, %58 : vector<64x8x32xf32>
    %60 = arith.truncf %59 : vector<64x8x32xf32> to vector<64x8x32xbf16>
    %cst_22 = arith.constant 0.000000e+00 : bf16
    %61 = vector.broadcast %cst_22 : bf16 to vector<1x8x32xbf16>
    %62 = vector.extract_strided_slice %60 {offsets = [0, 0, 0], sizes = [63, 8, 32], strides = [1, 1, 1]} : vector<64x8x32xbf16> to vector<63x8x32xbf16>
    %63 = tpu.concatenate %61, %62 in 0 : vector<1x8x32xbf16>, vector<63x8x32xbf16> -> vector<64x8x32xbf16>
    %64 = vector.extract_strided_slice %60 {offsets = [1, 0, 0], sizes = [63, 8, 32], strides = [1, 1, 1]} : vector<64x8x32xbf16> to vector<63x8x32xbf16>
    %65 = tpu.concatenate %64, %61 in 0 : vector<63x8x32xbf16>, vector<1x8x32xbf16> -> vector<64x8x32xbf16>
    %66 = vector.shape_cast %63 : vector<64x8x32xbf16> to vector<512x32xbf16>
    %c0_23 = arith.constant 0 : index
    %c0_24 = arith.constant 0 : index
    %c0_25 = arith.constant 0 : index
    %67 = vector.load %arg6[%c0_23, %c0_24, %c0_25] : memref<3x32x64xbf16, #tpu.memory_space<vmem>>, vector<1x32x64xbf16>
    %68 = vector.shape_cast %67 : vector<1x32x64xbf16> to vector<32x64xbf16>
    %cst_26 = arith.constant dense<0.000000e+00> : vector<512x64xf32>
    %69 = tpu.matmul %66, %68, %cst_26 {dimension_numbers = #tpu.dot_dimension_numbers<[1], [0], [0], [1], [0, 0, 1, 1], [], []>} : vector<512x32xbf16>, vector<32x64xbf16>, vector<512x64xf32> -> vector<512x64xf32>
    %70 = vector.shape_cast %60 : vector<64x8x32xbf16> to vector<512x32xbf16>
    %c1_27 = arith.constant 1 : index
    %c0_28 = arith.constant 0 : index
    %c0_29 = arith.constant 0 : index
    %71 = vector.load %arg6[%c1_27, %c0_28, %c0_29] : memref<3x32x64xbf16, #tpu.memory_space<vmem>>, vector<1x32x64xbf16>
    %72 = vector.shape_cast %71 : vector<1x32x64xbf16> to vector<32x64xbf16>
    %cst_30 = arith.constant dense<0.000000e+00> : vector<512x64xf32>
    %73 = tpu.matmul %70, %72, %cst_30 {dimension_numbers = #tpu.dot_dimension_numbers<[1], [0], [0], [1], [0, 0, 1, 1], [], []>} : vector<512x32xbf16>, vector<32x64xbf16>, vector<512x64xf32> -> vector<512x64xf32>
    %74 = arith.addf %69, %73 : vector<512x64xf32>
    %75 = vector.shape_cast %65 : vector<64x8x32xbf16> to vector<512x32xbf16>
    %c2_31 = arith.constant 2 : index
    %c0_32 = arith.constant 0 : index
    %c0_33 = arith.constant 0 : index
    %76 = vector.load %arg6[%c2_31, %c0_32, %c0_33] : memref<3x32x64xbf16, #tpu.memory_space<vmem>>, vector<1x32x64xbf16>
    %77 = vector.shape_cast %76 : vector<1x32x64xbf16> to vector<32x64xbf16>
    %cst_34 = arith.constant dense<0.000000e+00> : vector<512x64xf32>
    %78 = tpu.matmul %75, %77, %cst_34 {dimension_numbers = #tpu.dot_dimension_numbers<[1], [0], [0], [1], [0, 0, 1, 1], [], []>} : vector<512x32xbf16>, vector<32x64xbf16>, vector<512x64xf32> -> vector<512x64xf32>
    %79 = arith.addf %74, %78 : vector<512x64xf32>
    %80 = vector.shape_cast %79 : vector<512x64xf32> to vector<64x8x64xf32>
    %c0_35 = arith.constant 0 : index
    %c0_36 = arith.constant 0 : index
    %81 = vector.load %arg7[%c0_35, %c0_36] : memref<1x64xf32, #tpu.memory_space<vmem>>, vector<1x64xf32>
    %82 = vector.shape_cast %81 : vector<1x64xf32> to vector<1x1x64xf32>
    %83 = vector.broadcast %82 : vector<1x1x64xf32> to vector<64x8x64xf32>
    %84 = arith.addf %80, %83 : vector<64x8x64xf32>
    %cst_37 = arith.constant 0.000000e+00 : f32
    %85 = vector.broadcast %cst_37 : f32 to vector<64x8x64xf32>
    %86 = arith.maximumf %84, %85 : vector<64x8x64xf32>
    %87 = arith.truncf %86 : vector<64x8x64xf32> to vector<64x8x64xbf16>
    %cst_38 = arith.constant 0.000000e+00 : bf16
    %88 = vector.broadcast %cst_38 : bf16 to vector<1x8x64xbf16>
    %89 = vector.extract_strided_slice %87 {offsets = [0, 0, 0], sizes = [63, 8, 64], strides = [1, 1, 1]} : vector<64x8x64xbf16> to vector<63x8x64xbf16>
    %90 = tpu.concatenate %88, %89 in 0 : vector<1x8x64xbf16>, vector<63x8x64xbf16> -> vector<64x8x64xbf16>
    %91 = vector.extract_strided_slice %87 {offsets = [1, 0, 0], sizes = [63, 8, 64], strides = [1, 1, 1]} : vector<64x8x64xbf16> to vector<63x8x64xbf16>
    %92 = tpu.concatenate %91, %88 in 0 : vector<63x8x64xbf16>, vector<1x8x64xbf16> -> vector<64x8x64xbf16>
    %93 = vector.shape_cast %90 : vector<64x8x64xbf16> to vector<512x64xbf16>
    %c0_39 = arith.constant 0 : index
    %c0_40 = arith.constant 0 : index
    %c0_41 = arith.constant 0 : index
    %94 = vector.load %arg8[%c0_39, %c0_40, %c0_41] : memref<3x64x64xbf16, #tpu.memory_space<vmem>>, vector<1x64x64xbf16>
    %95 = vector.shape_cast %94 : vector<1x64x64xbf16> to vector<64x64xbf16>
    %cst_42 = arith.constant dense<0.000000e+00> : vector<512x64xf32>
    %96 = tpu.matmul %93, %95, %cst_42 {dimension_numbers = #tpu.dot_dimension_numbers<[1], [0], [0], [1], [0, 0, 1, 1], [], []>} : vector<512x64xbf16>, vector<64x64xbf16>, vector<512x64xf32> -> vector<512x64xf32>
    %97 = vector.shape_cast %87 : vector<64x8x64xbf16> to vector<512x64xbf16>
    %c1_43 = arith.constant 1 : index
    %c0_44 = arith.constant 0 : index
    %c0_45 = arith.constant 0 : index
    %98 = vector.load %arg8[%c1_43, %c0_44, %c0_45] : memref<3x64x64xbf16, #tpu.memory_space<vmem>>, vector<1x64x64xbf16>
    %99 = vector.shape_cast %98 : vector<1x64x64xbf16> to vector<64x64xbf16>
    %cst_46 = arith.constant dense<0.000000e+00> : vector<512x64xf32>
    %100 = tpu.matmul %97, %99, %cst_46 {dimension_numbers = #tpu.dot_dimension_numbers<[1], [0], [0], [1], [0, 0, 1, 1], [], []>} : vector<512x64xbf16>, vector<64x64xbf16>, vector<512x64xf32> -> vector<512x64xf32>
    %101 = arith.addf %96, %100 : vector<512x64xf32>
    %102 = vector.shape_cast %92 : vector<64x8x64xbf16> to vector<512x64xbf16>
    %c2_47 = arith.constant 2 : index
    %c0_48 = arith.constant 0 : index
    %c0_49 = arith.constant 0 : index
    %103 = vector.load %arg8[%c2_47, %c0_48, %c0_49] : memref<3x64x64xbf16, #tpu.memory_space<vmem>>, vector<1x64x64xbf16>
    %104 = vector.shape_cast %103 : vector<1x64x64xbf16> to vector<64x64xbf16>
    %cst_50 = arith.constant dense<0.000000e+00> : vector<512x64xf32>
    %105 = tpu.matmul %102, %104, %cst_50 {dimension_numbers = #tpu.dot_dimension_numbers<[1], [0], [0], [1], [0, 0, 1, 1], [], []>} : vector<512x64xbf16>, vector<64x64xbf16>, vector<512x64xf32> -> vector<512x64xf32>
    %106 = arith.addf %101, %105 : vector<512x64xf32>
    %107 = vector.shape_cast %106 : vector<512x64xf32> to vector<64x8x64xf32>
    %c0_51 = arith.constant 0 : index
    %c0_52 = arith.constant 0 : index
    %108 = vector.load %arg9[%c0_51, %c0_52] : memref<1x64xf32, #tpu.memory_space<vmem>>, vector<1x64xf32>
    %109 = vector.shape_cast %108 : vector<1x64xf32> to vector<1x1x64xf32>
    %110 = vector.broadcast %109 : vector<1x1x64xf32> to vector<64x8x64xf32>
    %111 = arith.addf %107, %110 : vector<64x8x64xf32>
    %cst_53 = arith.constant 0.000000e+00 : f32
    %112 = vector.broadcast %cst_53 : f32 to vector<64x8x64xf32>
    %113 = arith.maximumf %111, %112 : vector<64x8x64xf32>
    %114 = arith.truncf %113 : vector<64x8x64xf32> to vector<64x8x64xbf16>
    %cst_54 = arith.constant 0.000000e+00 : bf16
    %115 = vector.broadcast %cst_54 : bf16 to vector<1x8x64xbf16>
    %116 = vector.extract_strided_slice %114 {offsets = [0, 0, 0], sizes = [63, 8, 64], strides = [1, 1, 1]} : vector<64x8x64xbf16> to vector<63x8x64xbf16>
    %117 = tpu.concatenate %115, %116 in 0 : vector<1x8x64xbf16>, vector<63x8x64xbf16> -> vector<64x8x64xbf16>
    %118 = vector.extract_strided_slice %114 {offsets = [1, 0, 0], sizes = [63, 8, 64], strides = [1, 1, 1]} : vector<64x8x64xbf16> to vector<63x8x64xbf16>
    %119 = tpu.concatenate %118, %115 in 0 : vector<63x8x64xbf16>, vector<1x8x64xbf16> -> vector<64x8x64xbf16>
    %120 = vector.shape_cast %117 : vector<64x8x64xbf16> to vector<512x64xbf16>
    %c0_55 = arith.constant 0 : index
    %c0_56 = arith.constant 0 : index
    %c0_57 = arith.constant 0 : index
    %121 = vector.load %arg10[%c0_55, %c0_56, %c0_57] : memref<3x64x64xbf16, #tpu.memory_space<vmem>>, vector<1x64x64xbf16>
    %122 = vector.shape_cast %121 : vector<1x64x64xbf16> to vector<64x64xbf16>
    %cst_58 = arith.constant dense<0.000000e+00> : vector<512x64xf32>
    %123 = tpu.matmul %120, %122, %cst_58 {dimension_numbers = #tpu.dot_dimension_numbers<[1], [0], [0], [1], [0, 0, 1, 1], [], []>} : vector<512x64xbf16>, vector<64x64xbf16>, vector<512x64xf32> -> vector<512x64xf32>
    %124 = vector.shape_cast %114 : vector<64x8x64xbf16> to vector<512x64xbf16>
    %c1_59 = arith.constant 1 : index
    %c0_60 = arith.constant 0 : index
    %c0_61 = arith.constant 0 : index
    %125 = vector.load %arg10[%c1_59, %c0_60, %c0_61] : memref<3x64x64xbf16, #tpu.memory_space<vmem>>, vector<1x64x64xbf16>
    %126 = vector.shape_cast %125 : vector<1x64x64xbf16> to vector<64x64xbf16>
    %cst_62 = arith.constant dense<0.000000e+00> : vector<512x64xf32>
    %127 = tpu.matmul %124, %126, %cst_62 {dimension_numbers = #tpu.dot_dimension_numbers<[1], [0], [0], [1], [0, 0, 1, 1], [], []>} : vector<512x64xbf16>, vector<64x64xbf16>, vector<512x64xf32> -> vector<512x64xf32>
    %128 = arith.addf %123, %127 : vector<512x64xf32>
    %129 = vector.shape_cast %119 : vector<64x8x64xbf16> to vector<512x64xbf16>
    %c2_63 = arith.constant 2 : index
    %c0_64 = arith.constant 0 : index
    %c0_65 = arith.constant 0 : index
    %130 = vector.load %arg10[%c2_63, %c0_64, %c0_65] : memref<3x64x64xbf16, #tpu.memory_space<vmem>>, vector<1x64x64xbf16>
    %131 = vector.shape_cast %130 : vector<1x64x64xbf16> to vector<64x64xbf16>
    %cst_66 = arith.constant dense<0.000000e+00> : vector<512x64xf32>
    %132 = tpu.matmul %129, %131, %cst_66 {dimension_numbers = #tpu.dot_dimension_numbers<[1], [0], [0], [1], [0, 0, 1, 1], [], []>} : vector<512x64xbf16>, vector<64x64xbf16>, vector<512x64xf32> -> vector<512x64xf32>
    %133 = arith.addf %128, %132 : vector<512x64xf32>
    %134 = vector.shape_cast %133 : vector<512x64xf32> to vector<64x8x64xf32>
    %c0_67 = arith.constant 0 : index
    %c0_68 = arith.constant 0 : index
    %135 = vector.load %arg11[%c0_67, %c0_68] : memref<1x64xf32, #tpu.memory_space<vmem>>, vector<1x64xf32>
    %136 = vector.shape_cast %135 : vector<1x64xf32> to vector<1x1x64xf32>
    %137 = vector.broadcast %136 : vector<1x1x64xf32> to vector<64x8x64xf32>
    %138 = arith.addf %134, %137 : vector<64x8x64xf32>
    %cst_69 = arith.constant 0.000000e+00 : f32
    %139 = vector.broadcast %cst_69 : f32 to vector<64x8x64xf32>
    %140 = arith.maximumf %138, %139 : vector<64x8x64xf32>
    %141 = arith.truncf %140 : vector<64x8x64xf32> to vector<64x8x64xbf16>
    %c0_70 = arith.constant 0 : index
    %c0_71 = arith.constant 0 : index
    %c0_72 = arith.constant 0 : index
    %142 = vector.load %arg12[%c0_70, %c0_71, %c0_72] : memref<64x64x64xbf16, #tpu.memory_space<vmem>>, vector<64x64x64xbf16>
    %cst_73 = arith.constant 0.000000e+00 : f32
    %143 = vector.broadcast %cst_73 : f32 to vector<8x64xf32>
    %144 = vector.extract_strided_slice %141 {offsets = [0, 0, 0], sizes = [1, 8, 64], strides = [1, 1, 1]} : vector<64x8x64xbf16> to vector<1x8x64xbf16>
    %145 = vector.shape_cast %144 : vector<1x8x64xbf16> to vector<8x64xbf16>
    %146 = vector.extract_strided_slice %142 {offsets = [0, 0, 0], sizes = [1, 64, 64], strides = [1, 1, 1]} : vector<64x64x64xbf16> to vector<1x64x64xbf16>
    %147 = vector.shape_cast %146 : vector<1x64x64xbf16> to vector<64x64xbf16>
    %cst_74 = arith.constant dense<0.000000e+00> : vector<8x64xf32>
    %148 = tpu.matmul %145, %147, %cst_74 {dimension_numbers = #tpu.dot_dimension_numbers<[1], [0], [0], [1], [0, 0, 1, 1], [], []>} : vector<8x64xbf16>, vector<64x64xbf16>, vector<8x64xf32> -> vector<8x64xf32>
    %149 = arith.addf %143, %148 : vector<8x64xf32>
    %150 = vector.extract_strided_slice %141 {offsets = [1, 0, 0], sizes = [1, 8, 64], strides = [1, 1, 1]} : vector<64x8x64xbf16> to vector<1x8x64xbf16>
    %151 = vector.shape_cast %150 : vector<1x8x64xbf16> to vector<8x64xbf16>
    %152 = vector.extract_strided_slice %142 {offsets = [1, 0, 0], sizes = [1, 64, 64], strides = [1, 1, 1]} : vector<64x64x64xbf16> to vector<1x64x64xbf16>
    %153 = vector.shape_cast %152 : vector<1x64x64xbf16> to vector<64x64xbf16>
    %cst_75 = arith.constant dense<0.000000e+00> : vector<8x64xf32>
    %154 = tpu.matmul %151, %153, %cst_75 {dimension_numbers = #tpu.dot_dimension_numbers<[1], [0], [0], [1], [0, 0, 1, 1], [], []>} : vector<8x64xbf16>, vector<64x64xbf16>, vector<8x64xf32> -> vector<8x64xf32>
    %155 = arith.addf %149, %154 : vector<8x64xf32>
    %156 = vector.extract_strided_slice %141 {offsets = [2, 0, 0], sizes = [1, 8, 64], strides = [1, 1, 1]} : vector<64x8x64xbf16> to vector<1x8x64xbf16>
    %157 = vector.shape_cast %156 : vector<1x8x64xbf16> to vector<8x64xbf16>
    %158 = vector.extract_strided_slice %142 {offsets = [2, 0, 0], sizes = [1, 64, 64], strides = [1, 1, 1]} : vector<64x64x64xbf16> to vector<1x64x64xbf16>
    %159 = vector.shape_cast %158 : vector<1x64x64xbf16> to vector<64x64xbf16>
    %cst_76 = arith.constant dense<0.000000e+00> : vector<8x64xf32>
    %160 = tpu.matmul %157, %159, %cst_76 {dimension_numbers = #tpu.dot_dimension_numbers<[1], [0], [0], [1], [0, 0, 1, 1], [], []>} : vector<8x64xbf16>, vector<64x64xbf16>, vector<8x64xf32> -> vector<8x64xf32>
    %161 = arith.addf %155, %160 : vector<8x64xf32>
    %162 = vector.extract_strided_slice %141 {offsets = [3, 0, 0], sizes = [1, 8, 64], strides = [1, 1, 1]} : vector<64x8x64xbf16> to vector<1x8x64xbf16>
    %163 = vector.shape_cast %162 : vector<1x8x64xbf16> to vector<8x64xbf16>
    %164 = vector.extract_strided_slice %142 {offsets = [3, 0, 0], sizes = [1, 64, 64], strides = [1, 1, 1]} : vector<64x64x64xbf16> to vector<1x64x64xbf16>
    %165 = vector.shape_cast %164 : vector<1x64x64xbf16> to vector<64x64xbf16>
    %cst_77 = arith.constant dense<0.000000e+00> : vector<8x64xf32>
    %166 = tpu.matmul %163, %165, %cst_77 {dimension_numbers = #tpu.dot_dimension_numbers<[1], [0], [0], [1], [0, 0, 1, 1], [], []>} : vector<8x64xbf16>, vector<64x64xbf16>, vector<8x64xf32> -> vector<8x64xf32>
    %167 = arith.addf %161, %166 : vector<8x64xf32>
    %168 = vector.extract_strided_slice %141 {offsets = [4, 0, 0], sizes = [1, 8, 64], strides = [1, 1, 1]} : vector<64x8x64xbf16> to vector<1x8x64xbf16>
    %169 = vector.shape_cast %168 : vector<1x8x64xbf16> to vector<8x64xbf16>
    %170 = vector.extract_strided_slice %142 {offsets = [4, 0, 0], sizes = [1, 64, 64], strides = [1, 1, 1]} : vector<64x64x64xbf16> to vector<1x64x64xbf16>
    %171 = vector.shape_cast %170 : vector<1x64x64xbf16> to vector<64x64xbf16>
    %cst_78 = arith.constant dense<0.000000e+00> : vector<8x64xf32>
    %172 = tpu.matmul %169, %171, %cst_78 {dimension_numbers = #tpu.dot_dimension_numbers<[1], [0], [0], [1], [0, 0, 1, 1], [], []>} : vector<8x64xbf16>, vector<64x64xbf16>, vector<8x64xf32> -> vector<8x64xf32>
    %173 = arith.addf %167, %172 : vector<8x64xf32>
    %174 = vector.extract_strided_slice %141 {offsets = [5, 0, 0], sizes = [1, 8, 64], strides = [1, 1, 1]} : vector<64x8x64xbf16> to vector<1x8x64xbf16>
    %175 = vector.shape_cast %174 : vector<1x8x64xbf16> to vector<8x64xbf16>
    %176 = vector.extract_strided_slice %142 {offsets = [5, 0, 0], sizes = [1, 64, 64], strides = [1, 1, 1]} : vector<64x64x64xbf16> to vector<1x64x64xbf16>
    %177 = vector.shape_cast %176 : vector<1x64x64xbf16> to vector<64x64xbf16>
    %cst_79 = arith.constant dense<0.000000e+00> : vector<8x64xf32>
    %178 = tpu.matmul %175, %177, %cst_79 {dimension_numbers = #tpu.dot_dimension_numbers<[1], [0], [0], [1], [0, 0, 1, 1], [], []>} : vector<8x64xbf16>, vector<64x64xbf16>, vector<8x64xf32> -> vector<8x64xf32>
    %179 = arith.addf %173, %178 : vector<8x64xf32>
    %180 = vector.extract_strided_slice %141 {offsets = [6, 0, 0], sizes = [1, 8, 64], strides = [1, 1, 1]} : vector<64x8x64xbf16> to vector<1x8x64xbf16>
    %181 = vector.shape_cast %180 : vector<1x8x64xbf16> to vector<8x64xbf16>
    %182 = vector.extract_strided_slice %142 {offsets = [6, 0, 0], sizes = [1, 64, 64], strides = [1, 1, 1]} : vector<64x64x64xbf16> to vector<1x64x64xbf16>
    %183 = vector.shape_cast %182 : vector<1x64x64xbf16> to vector<64x64xbf16>
    %cst_80 = arith.constant dense<0.000000e+00> : vector<8x64xf32>
    %184 = tpu.matmul %181, %183, %cst_80 {dimension_numbers = #tpu.dot_dimension_numbers<[1], [0], [0], [1], [0, 0, 1, 1], [], []>} : vector<8x64xbf16>, vector<64x64xbf16>, vector<8x64xf32> -> vector<8x64xf32>
    %185 = arith.addf %179, %184 : vector<8x64xf32>
    %186 = vector.extract_strided_slice %141 {offsets = [7, 0, 0], sizes = [1, 8, 64], strides = [1, 1, 1]} : vector<64x8x64xbf16> to vector<1x8x64xbf16>
    %187 = vector.shape_cast %186 : vector<1x8x64xbf16> to vector<8x64xbf16>
    %188 = vector.extract_strided_slice %142 {offsets = [7, 0, 0], sizes = [1, 64, 64], strides = [1, 1, 1]} : vector<64x64x64xbf16> to vector<1x64x64xbf16>
    %189 = vector.shape_cast %188 : vector<1x64x64xbf16> to vector<64x64xbf16>
    %cst_81 = arith.constant dense<0.000000e+00> : vector<8x64xf32>
    %190 = tpu.matmul %187, %189, %cst_81 {dimension_numbers = #tpu.dot_dimension_numbers<[1], [0], [0], [1], [0, 0, 1, 1], [], []>} : vector<8x64xbf16>, vector<64x64xbf16>, vector<8x64xf32> -> vector<8x64xf32>
    %191 = arith.addf %185, %190 : vector<8x64xf32>
    %192 = vector.extract_strided_slice %141 {offsets = [8, 0, 0], sizes = [1, 8, 64], strides = [1, 1, 1]} : vector<64x8x64xbf16> to vector<1x8x64xbf16>
    %193 = vector.shape_cast %192 : vector<1x8x64xbf16> to vector<8x64xbf16>
    %194 = vector.extract_strided_slice %142 {offsets = [8, 0, 0], sizes = [1, 64, 64], strides = [1, 1, 1]} : vector<64x64x64xbf16> to vector<1x64x64xbf16>
    %195 = vector.shape_cast %194 : vector<1x64x64xbf16> to vector<64x64xbf16>
    %cst_82 = arith.constant dense<0.000000e+00> : vector<8x64xf32>
    %196 = tpu.matmul %193, %195, %cst_82 {dimension_numbers = #tpu.dot_dimension_numbers<[1], [0], [0], [1], [0, 0, 1, 1], [], []>} : vector<8x64xbf16>, vector<64x64xbf16>, vector<8x64xf32> -> vector<8x64xf32>
    %197 = arith.addf %191, %196 : vector<8x64xf32>
    %198 = vector.extract_strided_slice %141 {offsets = [9, 0, 0], sizes = [1, 8, 64], strides = [1, 1, 1]} : vector<64x8x64xbf16> to vector<1x8x64xbf16>
    %199 = vector.shape_cast %198 : vector<1x8x64xbf16> to vector<8x64xbf16>
    %200 = vector.extract_strided_slice %142 {offsets = [9, 0, 0], sizes = [1, 64, 64], strides = [1, 1, 1]} : vector<64x64x64xbf16> to vector<1x64x64xbf16>
    %201 = vector.shape_cast %200 : vector<1x64x64xbf16> to vector<64x64xbf16>
    %cst_83 = arith.constant dense<0.000000e+00> : vector<8x64xf32>
    %202 = tpu.matmul %199, %201, %cst_83 {dimension_numbers = #tpu.dot_dimension_numbers<[1], [0], [0], [1], [0, 0, 1, 1], [], []>} : vector<8x64xbf16>, vector<64x64xbf16>, vector<8x64xf32> -> vector<8x64xf32>
    %203 = arith.addf %197, %202 : vector<8x64xf32>
    %204 = vector.extract_strided_slice %141 {offsets = [10, 0, 0], sizes = [1, 8, 64], strides = [1, 1, 1]} : vector<64x8x64xbf16> to vector<1x8x64xbf16>
    %205 = vector.shape_cast %204 : vector<1x8x64xbf16> to vector<8x64xbf16>
    %206 = vector.extract_strided_slice %142 {offsets = [10, 0, 0], sizes = [1, 64, 64], strides = [1, 1, 1]} : vector<64x64x64xbf16> to vector<1x64x64xbf16>
    %207 = vector.shape_cast %206 : vector<1x64x64xbf16> to vector<64x64xbf16>
    %cst_84 = arith.constant dense<0.000000e+00> : vector<8x64xf32>
    %208 = tpu.matmul %205, %207, %cst_84 {dimension_numbers = #tpu.dot_dimension_numbers<[1], [0], [0], [1], [0, 0, 1, 1], [], []>} : vector<8x64xbf16>, vector<64x64xbf16>, vector<8x64xf32> -> vector<8x64xf32>
    %209 = arith.addf %203, %208 : vector<8x64xf32>
    %210 = vector.extract_strided_slice %141 {offsets = [11, 0, 0], sizes = [1, 8, 64], strides = [1, 1, 1]} : vector<64x8x64xbf16> to vector<1x8x64xbf16>
    %211 = vector.shape_cast %210 : vector<1x8x64xbf16> to vector<8x64xbf16>
    %212 = vector.extract_strided_slice %142 {offsets = [11, 0, 0], sizes = [1, 64, 64], strides = [1, 1, 1]} : vector<64x64x64xbf16> to vector<1x64x64xbf16>
    %213 = vector.shape_cast %212 : vector<1x64x64xbf16> to vector<64x64xbf16>
    %cst_85 = arith.constant dense<0.000000e+00> : vector<8x64xf32>
    %214 = tpu.matmul %211, %213, %cst_85 {dimension_numbers = #tpu.dot_dimension_numbers<[1], [0], [0], [1], [0, 0, 1, 1], [], []>} : vector<8x64xbf16>, vector<64x64xbf16>, vector<8x64xf32> -> vector<8x64xf32>
    %215 = arith.addf %209, %214 : vector<8x64xf32>
    %216 = vector.extract_strided_slice %141 {offsets = [12, 0, 0], sizes = [1, 8, 64], strides = [1, 1, 1]} : vector<64x8x64xbf16> to vector<1x8x64xbf16>
    %217 = vector.shape_cast %216 : vector<1x8x64xbf16> to vector<8x64xbf16>
    %218 = vector.extract_strided_slice %142 {offsets = [12, 0, 0], sizes = [1, 64, 64], strides = [1, 1, 1]} : vector<64x64x64xbf16> to vector<1x64x64xbf16>
    %219 = vector.shape_cast %218 : vector<1x64x64xbf16> to vector<64x64xbf16>
    %cst_86 = arith.constant dense<0.000000e+00> : vector<8x64xf32>
    %220 = tpu.matmul %217, %219, %cst_86 {dimension_numbers = #tpu.dot_dimension_numbers<[1], [0], [0], [1], [0, 0, 1, 1], [], []>} : vector<8x64xbf16>, vector<64x64xbf16>, vector<8x64xf32> -> vector<8x64xf32>
    %221 = arith.addf %215, %220 : vector<8x64xf32>
    %222 = vector.extract_strided_slice %141 {offsets = [13, 0, 0], sizes = [1, 8, 64], strides = [1, 1, 1]} : vector<64x8x64xbf16> to vector<1x8x64xbf16>
    %223 = vector.shape_cast %222 : vector<1x8x64xbf16> to vector<8x64xbf16>
    %224 = vector.extract_strided_slice %142 {offsets = [13, 0, 0], sizes = [1, 64, 64], strides = [1, 1, 1]} : vector<64x64x64xbf16> to vector<1x64x64xbf16>
    %225 = vector.shape_cast %224 : vector<1x64x64xbf16> to vector<64x64xbf16>
    %cst_87 = arith.constant dense<0.000000e+00> : vector<8x64xf32>
    %226 = tpu.matmul %223, %225, %cst_87 {dimension_numbers = #tpu.dot_dimension_numbers<[1], [0], [0], [1], [0, 0, 1, 1], [], []>} : vector<8x64xbf16>, vector<64x64xbf16>, vector<8x64xf32> -> vector<8x64xf32>
    %227 = arith.addf %221, %226 : vector<8x64xf32>
    %228 = vector.extract_strided_slice %141 {offsets = [14, 0, 0], sizes = [1, 8, 64], strides = [1, 1, 1]} : vector<64x8x64xbf16> to vector<1x8x64xbf16>
    %229 = vector.shape_cast %228 : vector<1x8x64xbf16> to vector<8x64xbf16>
    %230 = vector.extract_strided_slice %142 {offsets = [14, 0, 0], sizes = [1, 64, 64], strides = [1, 1, 1]} : vector<64x64x64xbf16> to vector<1x64x64xbf16>
    %231 = vector.shape_cast %230 : vector<1x64x64xbf16> to vector<64x64xbf16>
    %cst_88 = arith.constant dense<0.000000e+00> : vector<8x64xf32>
    %232 = tpu.matmul %229, %231, %cst_88 {dimension_numbers = #tpu.dot_dimension_numbers<[1], [0], [0], [1], [0, 0, 1, 1], [], []>} : vector<8x64xbf16>, vector<64x64xbf16>, vector<8x64xf32> -> vector<8x64xf32>
    %233 = arith.addf %227, %232 : vector<8x64xf32>
    %234 = vector.extract_strided_slice %141 {offsets = [15, 0, 0], sizes = [1, 8, 64], strides = [1, 1, 1]} : vector<64x8x64xbf16> to vector<1x8x64xbf16>
    %235 = vector.shape_cast %234 : vector<1x8x64xbf16> to vector<8x64xbf16>
    %236 = vector.extract_strided_slice %142 {offsets = [15, 0, 0], sizes = [1, 64, 64], strides = [1, 1, 1]} : vector<64x64x64xbf16> to vector<1x64x64xbf16>
    %237 = vector.shape_cast %236 : vector<1x64x64xbf16> to vector<64x64xbf16>
    %cst_89 = arith.constant dense<0.000000e+00> : vector<8x64xf32>
    %238 = tpu.matmul %235, %237, %cst_89 {dimension_numbers = #tpu.dot_dimension_numbers<[1], [0], [0], [1], [0, 0, 1, 1], [], []>} : vector<8x64xbf16>, vector<64x64xbf16>, vector<8x64xf32> -> vector<8x64xf32>
    %239 = arith.addf %233, %238 : vector<8x64xf32>
    %240 = vector.extract_strided_slice %141 {offsets = [16, 0, 0], sizes = [1, 8, 64], strides = [1, 1, 1]} : vector<64x8x64xbf16> to vector<1x8x64xbf16>
    %241 = vector.shape_cast %240 : vector<1x8x64xbf16> to vector<8x64xbf16>
    %242 = vector.extract_strided_slice %142 {offsets = [16, 0, 0], sizes = [1, 64, 64], strides = [1, 1, 1]} : vector<64x64x64xbf16> to vector<1x64x64xbf16>
    %243 = vector.shape_cast %242 : vector<1x64x64xbf16> to vector<64x64xbf16>
    %cst_90 = arith.constant dense<0.000000e+00> : vector<8x64xf32>
    %244 = tpu.matmul %241, %243, %cst_90 {dimension_numbers = #tpu.dot_dimension_numbers<[1], [0], [0], [1], [0, 0, 1, 1], [], []>} : vector<8x64xbf16>, vector<64x64xbf16>, vector<8x64xf32> -> vector<8x64xf32>
    %245 = arith.addf %239, %244 : vector<8x64xf32>
    %246 = vector.extract_strided_slice %141 {offsets = [17, 0, 0], sizes = [1, 8, 64], strides = [1, 1, 1]} : vector<64x8x64xbf16> to vector<1x8x64xbf16>
    %247 = vector.shape_cast %246 : vector<1x8x64xbf16> to vector<8x64xbf16>
    %248 = vector.extract_strided_slice %142 {offsets = [17, 0, 0], sizes = [1, 64, 64], strides = [1, 1, 1]} : vector<64x64x64xbf16> to vector<1x64x64xbf16>
    %249 = vector.shape_cast %248 : vector<1x64x64xbf16> to vector<64x64xbf16>
    %cst_91 = arith.constant dense<0.000000e+00> : vector<8x64xf32>
    %250 = tpu.matmul %247, %249, %cst_91 {dimension_numbers = #tpu.dot_dimension_numbers<[1], [0], [0], [1], [0, 0, 1, 1], [], []>} : vector<8x64xbf16>, vector<64x64xbf16>, vector<8x64xf32> -> vector<8x64xf32>
    %251 = arith.addf %245, %250 : vector<8x64xf32>
    %252 = vector.extract_strided_slice %141 {offsets = [18, 0, 0], sizes = [1, 8, 64], strides = [1, 1, 1]} : vector<64x8x64xbf16> to vector<1x8x64xbf16>
    %253 = vector.shape_cast %252 : vector<1x8x64xbf16> to vector<8x64xbf16>
    %254 = vector.extract_strided_slice %142 {offsets = [18, 0, 0], sizes = [1, 64, 64], strides = [1, 1, 1]} : vector<64x64x64xbf16> to vector<1x64x64xbf16>
    %255 = vector.shape_cast %254 : vector<1x64x64xbf16> to vector<64x64xbf16>
    %cst_92 = arith.constant dense<0.000000e+00> : vector<8x64xf32>
    %256 = tpu.matmul %253, %255, %cst_92 {dimension_numbers = #tpu.dot_dimension_numbers<[1], [0], [0], [1], [0, 0, 1, 1], [], []>} : vector<8x64xbf16>, vector<64x64xbf16>, vector<8x64xf32> -> vector<8x64xf32>
    %257 = arith.addf %251, %256 : vector<8x64xf32>
    %258 = vector.extract_strided_slice %141 {offsets = [19, 0, 0], sizes = [1, 8, 64], strides = [1, 1, 1]} : vector<64x8x64xbf16> to vector<1x8x64xbf16>
    %259 = vector.shape_cast %258 : vector<1x8x64xbf16> to vector<8x64xbf16>
    %260 = vector.extract_strided_slice %142 {offsets = [19, 0, 0], sizes = [1, 64, 64], strides = [1, 1, 1]} : vector<64x64x64xbf16> to vector<1x64x64xbf16>
    %261 = vector.shape_cast %260 : vector<1x64x64xbf16> to vector<64x64xbf16>
    %cst_93 = arith.constant dense<0.000000e+00> : vector<8x64xf32>
    %262 = tpu.matmul %259, %261, %cst_93 {dimension_numbers = #tpu.dot_dimension_numbers<[1], [0], [0], [1], [0, 0, 1, 1], [], []>} : vector<8x64xbf16>, vector<64x64xbf16>, vector<8x64xf32> -> vector<8x64xf32>
    %263 = arith.addf %257, %262 : vector<8x64xf32>
    %264 = vector.extract_strided_slice %141 {offsets = [20, 0, 0], sizes = [1, 8, 64], strides = [1, 1, 1]} : vector<64x8x64xbf16> to vector<1x8x64xbf16>
    %265 = vector.shape_cast %264 : vector<1x8x64xbf16> to vector<8x64xbf16>
    %266 = vector.extract_strided_slice %142 {offsets = [20, 0, 0], sizes = [1, 64, 64], strides = [1, 1, 1]} : vector<64x64x64xbf16> to vector<1x64x64xbf16>
    %267 = vector.shape_cast %266 : vector<1x64x64xbf16> to vector<64x64xbf16>
    %cst_94 = arith.constant dense<0.000000e+00> : vector<8x64xf32>
    %268 = tpu.matmul %265, %267, %cst_94 {dimension_numbers = #tpu.dot_dimension_numbers<[1], [0], [0], [1], [0, 0, 1, 1], [], []>} : vector<8x64xbf16>, vector<64x64xbf16>, vector<8x64xf32> -> vector<8x64xf32>
    %269 = arith.addf %263, %268 : vector<8x64xf32>
    %270 = vector.extract_strided_slice %141 {offsets = [21, 0, 0], sizes = [1, 8, 64], strides = [1, 1, 1]} : vector<64x8x64xbf16> to vector<1x8x64xbf16>
    %271 = vector.shape_cast %270 : vector<1x8x64xbf16> to vector<8x64xbf16>
    %272 = vector.extract_strided_slice %142 {offsets = [21, 0, 0], sizes = [1, 64, 64], strides = [1, 1, 1]} : vector<64x64x64xbf16> to vector<1x64x64xbf16>
    %273 = vector.shape_cast %272 : vector<1x64x64xbf16> to vector<64x64xbf16>
    %cst_95 = arith.constant dense<0.000000e+00> : vector<8x64xf32>
    %274 = tpu.matmul %271, %273, %cst_95 {dimension_numbers = #tpu.dot_dimension_numbers<[1], [0], [0], [1], [0, 0, 1, 1], [], []>} : vector<8x64xbf16>, vector<64x64xbf16>, vector<8x64xf32> -> vector<8x64xf32>
    %275 = arith.addf %269, %274 : vector<8x64xf32>
    %276 = vector.extract_strided_slice %141 {offsets = [22, 0, 0], sizes = [1, 8, 64], strides = [1, 1, 1]} : vector<64x8x64xbf16> to vector<1x8x64xbf16>
    %277 = vector.shape_cast %276 : vector<1x8x64xbf16> to vector<8x64xbf16>
    %278 = vector.extract_strided_slice %142 {offsets = [22, 0, 0], sizes = [1, 64, 64], strides = [1, 1, 1]} : vector<64x64x64xbf16> to vector<1x64x64xbf16>
    %279 = vector.shape_cast %278 : vector<1x64x64xbf16> to vector<64x64xbf16>
    %cst_96 = arith.constant dense<0.000000e+00> : vector<8x64xf32>
    %280 = tpu.matmul %277, %279, %cst_96 {dimension_numbers = #tpu.dot_dimension_numbers<[1], [0], [0], [1], [0, 0, 1, 1], [], []>} : vector<8x64xbf16>, vector<64x64xbf16>, vector<8x64xf32> -> vector<8x64xf32>
    %281 = arith.addf %275, %280 : vector<8x64xf32>
    %282 = vector.extract_strided_slice %141 {offsets = [23, 0, 0], sizes = [1, 8, 64], strides = [1, 1, 1]} : vector<64x8x64xbf16> to vector<1x8x64xbf16>
    %283 = vector.shape_cast %282 : vector<1x8x64xbf16> to vector<8x64xbf16>
    %284 = vector.extract_strided_slice %142 {offsets = [23, 0, 0], sizes = [1, 64, 64], strides = [1, 1, 1]} : vector<64x64x64xbf16> to vector<1x64x64xbf16>
    %285 = vector.shape_cast %284 : vector<1x64x64xbf16> to vector<64x64xbf16>
    %cst_97 = arith.constant dense<0.000000e+00> : vector<8x64xf32>
    %286 = tpu.matmul %283, %285, %cst_97 {dimension_numbers = #tpu.dot_dimension_numbers<[1], [0], [0], [1], [0, 0, 1, 1], [], []>} : vector<8x64xbf16>, vector<64x64xbf16>, vector<8x64xf32> -> vector<8x64xf32>
    %287 = arith.addf %281, %286 : vector<8x64xf32>
    %288 = vector.extract_strided_slice %141 {offsets = [24, 0, 0], sizes = [1, 8, 64], strides = [1, 1, 1]} : vector<64x8x64xbf16> to vector<1x8x64xbf16>
    %289 = vector.shape_cast %288 : vector<1x8x64xbf16> to vector<8x64xbf16>
    %290 = vector.extract_strided_slice %142 {offsets = [24, 0, 0], sizes = [1, 64, 64], strides = [1, 1, 1]} : vector<64x64x64xbf16> to vector<1x64x64xbf16>
    %291 = vector.shape_cast %290 : vector<1x64x64xbf16> to vector<64x64xbf16>
    %cst_98 = arith.constant dense<0.000000e+00> : vector<8x64xf32>
    %292 = tpu.matmul %289, %291, %cst_98 {dimension_numbers = #tpu.dot_dimension_numbers<[1], [0], [0], [1], [0, 0, 1, 1], [], []>} : vector<8x64xbf16>, vector<64x64xbf16>, vector<8x64xf32> -> vector<8x64xf32>
    %293 = arith.addf %287, %292 : vector<8x64xf32>
    %294 = vector.extract_strided_slice %141 {offsets = [25, 0, 0], sizes = [1, 8, 64], strides = [1, 1, 1]} : vector<64x8x64xbf16> to vector<1x8x64xbf16>
    %295 = vector.shape_cast %294 : vector<1x8x64xbf16> to vector<8x64xbf16>
    %296 = vector.extract_strided_slice %142 {offsets = [25, 0, 0], sizes = [1, 64, 64], strides = [1, 1, 1]} : vector<64x64x64xbf16> to vector<1x64x64xbf16>
    %297 = vector.shape_cast %296 : vector<1x64x64xbf16> to vector<64x64xbf16>
    %cst_99 = arith.constant dense<0.000000e+00> : vector<8x64xf32>
    %298 = tpu.matmul %295, %297, %cst_99 {dimension_numbers = #tpu.dot_dimension_numbers<[1], [0], [0], [1], [0, 0, 1, 1], [], []>} : vector<8x64xbf16>, vector<64x64xbf16>, vector<8x64xf32> -> vector<8x64xf32>
    %299 = arith.addf %293, %298 : vector<8x64xf32>
    %300 = vector.extract_strided_slice %141 {offsets = [26, 0, 0], sizes = [1, 8, 64], strides = [1, 1, 1]} : vector<64x8x64xbf16> to vector<1x8x64xbf16>
    %301 = vector.shape_cast %300 : vector<1x8x64xbf16> to vector<8x64xbf16>
    %302 = vector.extract_strided_slice %142 {offsets = [26, 0, 0], sizes = [1, 64, 64], strides = [1, 1, 1]} : vector<64x64x64xbf16> to vector<1x64x64xbf16>
    %303 = vector.shape_cast %302 : vector<1x64x64xbf16> to vector<64x64xbf16>
    %cst_100 = arith.constant dense<0.000000e+00> : vector<8x64xf32>
    %304 = tpu.matmul %301, %303, %cst_100 {dimension_numbers = #tpu.dot_dimension_numbers<[1], [0], [0], [1], [0, 0, 1, 1], [], []>} : vector<8x64xbf16>, vector<64x64xbf16>, vector<8x64xf32> -> vector<8x64xf32>
    %305 = arith.addf %299, %304 : vector<8x64xf32>
    %306 = vector.extract_strided_slice %141 {offsets = [27, 0, 0], sizes = [1, 8, 64], strides = [1, 1, 1]} : vector<64x8x64xbf16> to vector<1x8x64xbf16>
    %307 = vector.shape_cast %306 : vector<1x8x64xbf16> to vector<8x64xbf16>
    %308 = vector.extract_strided_slice %142 {offsets = [27, 0, 0], sizes = [1, 64, 64], strides = [1, 1, 1]} : vector<64x64x64xbf16> to vector<1x64x64xbf16>
    %309 = vector.shape_cast %308 : vector<1x64x64xbf16> to vector<64x64xbf16>
    %cst_101 = arith.constant dense<0.000000e+00> : vector<8x64xf32>
    %310 = tpu.matmul %307, %309, %cst_101 {dimension_numbers = #tpu.dot_dimension_numbers<[1], [0], [0], [1], [0, 0, 1, 1], [], []>} : vector<8x64xbf16>, vector<64x64xbf16>, vector<8x64xf32> -> vector<8x64xf32>
    %311 = arith.addf %305, %310 : vector<8x64xf32>
    %312 = vector.extract_strided_slice %141 {offsets = [28, 0, 0], sizes = [1, 8, 64], strides = [1, 1, 1]} : vector<64x8x64xbf16> to vector<1x8x64xbf16>
    %313 = vector.shape_cast %312 : vector<1x8x64xbf16> to vector<8x64xbf16>
    %314 = vector.extract_strided_slice %142 {offsets = [28, 0, 0], sizes = [1, 64, 64], strides = [1, 1, 1]} : vector<64x64x64xbf16> to vector<1x64x64xbf16>
    %315 = vector.shape_cast %314 : vector<1x64x64xbf16> to vector<64x64xbf16>
    %cst_102 = arith.constant dense<0.000000e+00> : vector<8x64xf32>
    %316 = tpu.matmul %313, %315, %cst_102 {dimension_numbers = #tpu.dot_dimension_numbers<[1], [0], [0], [1], [0, 0, 1, 1], [], []>} : vector<8x64xbf16>, vector<64x64xbf16>, vector<8x64xf32> -> vector<8x64xf32>
    %317 = arith.addf %311, %316 : vector<8x64xf32>
    %318 = vector.extract_strided_slice %141 {offsets = [29, 0, 0], sizes = [1, 8, 64], strides = [1, 1, 1]} : vector<64x8x64xbf16> to vector<1x8x64xbf16>
    %319 = vector.shape_cast %318 : vector<1x8x64xbf16> to vector<8x64xbf16>
    %320 = vector.extract_strided_slice %142 {offsets = [29, 0, 0], sizes = [1, 64, 64], strides = [1, 1, 1]} : vector<64x64x64xbf16> to vector<1x64x64xbf16>
    %321 = vector.shape_cast %320 : vector<1x64x64xbf16> to vector<64x64xbf16>
    %cst_103 = arith.constant dense<0.000000e+00> : vector<8x64xf32>
    %322 = tpu.matmul %319, %321, %cst_103 {dimension_numbers = #tpu.dot_dimension_numbers<[1], [0], [0], [1], [0, 0, 1, 1], [], []>} : vector<8x64xbf16>, vector<64x64xbf16>, vector<8x64xf32> -> vector<8x64xf32>
    %323 = arith.addf %317, %322 : vector<8x64xf32>
    %324 = vector.extract_strided_slice %141 {offsets = [30, 0, 0], sizes = [1, 8, 64], strides = [1, 1, 1]} : vector<64x8x64xbf16> to vector<1x8x64xbf16>
    %325 = vector.shape_cast %324 : vector<1x8x64xbf16> to vector<8x64xbf16>
    %326 = vector.extract_strided_slice %142 {offsets = [30, 0, 0], sizes = [1, 64, 64], strides = [1, 1, 1]} : vector<64x64x64xbf16> to vector<1x64x64xbf16>
    %327 = vector.shape_cast %326 : vector<1x64x64xbf16> to vector<64x64xbf16>
    %cst_104 = arith.constant dense<0.000000e+00> : vector<8x64xf32>
    %328 = tpu.matmul %325, %327, %cst_104 {dimension_numbers = #tpu.dot_dimension_numbers<[1], [0], [0], [1], [0, 0, 1, 1], [], []>} : vector<8x64xbf16>, vector<64x64xbf16>, vector<8x64xf32> -> vector<8x64xf32>
    %329 = arith.addf %323, %328 : vector<8x64xf32>
    %330 = vector.extract_strided_slice %141 {offsets = [31, 0, 0], sizes = [1, 8, 64], strides = [1, 1, 1]} : vector<64x8x64xbf16> to vector<1x8x64xbf16>
    %331 = vector.shape_cast %330 : vector<1x8x64xbf16> to vector<8x64xbf16>
    %332 = vector.extract_strided_slice %142 {offsets = [31, 0, 0], sizes = [1, 64, 64], strides = [1, 1, 1]} : vector<64x64x64xbf16> to vector<1x64x64xbf16>
    %333 = vector.shape_cast %332 : vector<1x64x64xbf16> to vector<64x64xbf16>
    %cst_105 = arith.constant dense<0.000000e+00> : vector<8x64xf32>
    %334 = tpu.matmul %331, %333, %cst_105 {dimension_numbers = #tpu.dot_dimension_numbers<[1], [0], [0], [1], [0, 0, 1, 1], [], []>} : vector<8x64xbf16>, vector<64x64xbf16>, vector<8x64xf32> -> vector<8x64xf32>
    %335 = arith.addf %329, %334 : vector<8x64xf32>
    %336 = vector.extract_strided_slice %141 {offsets = [32, 0, 0], sizes = [1, 8, 64], strides = [1, 1, 1]} : vector<64x8x64xbf16> to vector<1x8x64xbf16>
    %337 = vector.shape_cast %336 : vector<1x8x64xbf16> to vector<8x64xbf16>
    %338 = vector.extract_strided_slice %142 {offsets = [32, 0, 0], sizes = [1, 64, 64], strides = [1, 1, 1]} : vector<64x64x64xbf16> to vector<1x64x64xbf16>
    %339 = vector.shape_cast %338 : vector<1x64x64xbf16> to vector<64x64xbf16>
    %cst_106 = arith.constant dense<0.000000e+00> : vector<8x64xf32>
    %340 = tpu.matmul %337, %339, %cst_106 {dimension_numbers = #tpu.dot_dimension_numbers<[1], [0], [0], [1], [0, 0, 1, 1], [], []>} : vector<8x64xbf16>, vector<64x64xbf16>, vector<8x64xf32> -> vector<8x64xf32>
    %341 = arith.addf %335, %340 : vector<8x64xf32>
    %342 = vector.extract_strided_slice %141 {offsets = [33, 0, 0], sizes = [1, 8, 64], strides = [1, 1, 1]} : vector<64x8x64xbf16> to vector<1x8x64xbf16>
    %343 = vector.shape_cast %342 : vector<1x8x64xbf16> to vector<8x64xbf16>
    %344 = vector.extract_strided_slice %142 {offsets = [33, 0, 0], sizes = [1, 64, 64], strides = [1, 1, 1]} : vector<64x64x64xbf16> to vector<1x64x64xbf16>
    %345 = vector.shape_cast %344 : vector<1x64x64xbf16> to vector<64x64xbf16>
    %cst_107 = arith.constant dense<0.000000e+00> : vector<8x64xf32>
    %346 = tpu.matmul %343, %345, %cst_107 {dimension_numbers = #tpu.dot_dimension_numbers<[1], [0], [0], [1], [0, 0, 1, 1], [], []>} : vector<8x64xbf16>, vector<64x64xbf16>, vector<8x64xf32> -> vector<8x64xf32>
    %347 = arith.addf %341, %346 : vector<8x64xf32>
    %348 = vector.extract_strided_slice %141 {offsets = [34, 0, 0], sizes = [1, 8, 64], strides = [1, 1, 1]} : vector<64x8x64xbf16> to vector<1x8x64xbf16>
    %349 = vector.shape_cast %348 : vector<1x8x64xbf16> to vector<8x64xbf16>
    %350 = vector.extract_strided_slice %142 {offsets = [34, 0, 0], sizes = [1, 64, 64], strides = [1, 1, 1]} : vector<64x64x64xbf16> to vector<1x64x64xbf16>
    %351 = vector.shape_cast %350 : vector<1x64x64xbf16> to vector<64x64xbf16>
    %cst_108 = arith.constant dense<0.000000e+00> : vector<8x64xf32>
    %352 = tpu.matmul %349, %351, %cst_108 {dimension_numbers = #tpu.dot_dimension_numbers<[1], [0], [0], [1], [0, 0, 1, 1], [], []>} : vector<8x64xbf16>, vector<64x64xbf16>, vector<8x64xf32> -> vector<8x64xf32>
    %353 = arith.addf %347, %352 : vector<8x64xf32>
    %354 = vector.extract_strided_slice %141 {offsets = [35, 0, 0], sizes = [1, 8, 64], strides = [1, 1, 1]} : vector<64x8x64xbf16> to vector<1x8x64xbf16>
    %355 = vector.shape_cast %354 : vector<1x8x64xbf16> to vector<8x64xbf16>
    %356 = vector.extract_strided_slice %142 {offsets = [35, 0, 0], sizes = [1, 64, 64], strides = [1, 1, 1]} : vector<64x64x64xbf16> to vector<1x64x64xbf16>
    %357 = vector.shape_cast %356 : vector<1x64x64xbf16> to vector<64x64xbf16>
    %cst_109 = arith.constant dense<0.000000e+00> : vector<8x64xf32>
    %358 = tpu.matmul %355, %357, %cst_109 {dimension_numbers = #tpu.dot_dimension_numbers<[1], [0], [0], [1], [0, 0, 1, 1], [], []>} : vector<8x64xbf16>, vector<64x64xbf16>, vector<8x64xf32> -> vector<8x64xf32>
    %359 = arith.addf %353, %358 : vector<8x64xf32>
    %360 = vector.extract_strided_slice %141 {offsets = [36, 0, 0], sizes = [1, 8, 64], strides = [1, 1, 1]} : vector<64x8x64xbf16> to vector<1x8x64xbf16>
    %361 = vector.shape_cast %360 : vector<1x8x64xbf16> to vector<8x64xbf16>
    %362 = vector.extract_strided_slice %142 {offsets = [36, 0, 0], sizes = [1, 64, 64], strides = [1, 1, 1]} : vector<64x64x64xbf16> to vector<1x64x64xbf16>
    %363 = vector.shape_cast %362 : vector<1x64x64xbf16> to vector<64x64xbf16>
    %cst_110 = arith.constant dense<0.000000e+00> : vector<8x64xf32>
    %364 = tpu.matmul %361, %363, %cst_110 {dimension_numbers = #tpu.dot_dimension_numbers<[1], [0], [0], [1], [0, 0, 1, 1], [], []>} : vector<8x64xbf16>, vector<64x64xbf16>, vector<8x64xf32> -> vector<8x64xf32>
    %365 = arith.addf %359, %364 : vector<8x64xf32>
    %366 = vector.extract_strided_slice %141 {offsets = [37, 0, 0], sizes = [1, 8, 64], strides = [1, 1, 1]} : vector<64x8x64xbf16> to vector<1x8x64xbf16>
    %367 = vector.shape_cast %366 : vector<1x8x64xbf16> to vector<8x64xbf16>
    %368 = vector.extract_strided_slice %142 {offsets = [37, 0, 0], sizes = [1, 64, 64], strides = [1, 1, 1]} : vector<64x64x64xbf16> to vector<1x64x64xbf16>
    %369 = vector.shape_cast %368 : vector<1x64x64xbf16> to vector<64x64xbf16>
    %cst_111 = arith.constant dense<0.000000e+00> : vector<8x64xf32>
    %370 = tpu.matmul %367, %369, %cst_111 {dimension_numbers = #tpu.dot_dimension_numbers<[1], [0], [0], [1], [0, 0, 1, 1], [], []>} : vector<8x64xbf16>, vector<64x64xbf16>, vector<8x64xf32> -> vector<8x64xf32>
    %371 = arith.addf %365, %370 : vector<8x64xf32>
    %372 = vector.extract_strided_slice %141 {offsets = [38, 0, 0], sizes = [1, 8, 64], strides = [1, 1, 1]} : vector<64x8x64xbf16> to vector<1x8x64xbf16>
    %373 = vector.shape_cast %372 : vector<1x8x64xbf16> to vector<8x64xbf16>
    %374 = vector.extract_strided_slice %142 {offsets = [38, 0, 0], sizes = [1, 64, 64], strides = [1, 1, 1]} : vector<64x64x64xbf16> to vector<1x64x64xbf16>
    %375 = vector.shape_cast %374 : vector<1x64x64xbf16> to vector<64x64xbf16>
    %cst_112 = arith.constant dense<0.000000e+00> : vector<8x64xf32>
    %376 = tpu.matmul %373, %375, %cst_112 {dimension_numbers = #tpu.dot_dimension_numbers<[1], [0], [0], [1], [0, 0, 1, 1], [], []>} : vector<8x64xbf16>, vector<64x64xbf16>, vector<8x64xf32> -> vector<8x64xf32>
    %377 = arith.addf %371, %376 : vector<8x64xf32>
    %378 = vector.extract_strided_slice %141 {offsets = [39, 0, 0], sizes = [1, 8, 64], strides = [1, 1, 1]} : vector<64x8x64xbf16> to vector<1x8x64xbf16>
    %379 = vector.shape_cast %378 : vector<1x8x64xbf16> to vector<8x64xbf16>
    %380 = vector.extract_strided_slice %142 {offsets = [39, 0, 0], sizes = [1, 64, 64], strides = [1, 1, 1]} : vector<64x64x64xbf16> to vector<1x64x64xbf16>
    %381 = vector.shape_cast %380 : vector<1x64x64xbf16> to vector<64x64xbf16>
    %cst_113 = arith.constant dense<0.000000e+00> : vector<8x64xf32>
    %382 = tpu.matmul %379, %381, %cst_113 {dimension_numbers = #tpu.dot_dimension_numbers<[1], [0], [0], [1], [0, 0, 1, 1], [], []>} : vector<8x64xbf16>, vector<64x64xbf16>, vector<8x64xf32> -> vector<8x64xf32>
    %383 = arith.addf %377, %382 : vector<8x64xf32>
    %384 = vector.extract_strided_slice %141 {offsets = [40, 0, 0], sizes = [1, 8, 64], strides = [1, 1, 1]} : vector<64x8x64xbf16> to vector<1x8x64xbf16>
    %385 = vector.shape_cast %384 : vector<1x8x64xbf16> to vector<8x64xbf16>
    %386 = vector.extract_strided_slice %142 {offsets = [40, 0, 0], sizes = [1, 64, 64], strides = [1, 1, 1]} : vector<64x64x64xbf16> to vector<1x64x64xbf16>
    %387 = vector.shape_cast %386 : vector<1x64x64xbf16> to vector<64x64xbf16>
    %cst_114 = arith.constant dense<0.000000e+00> : vector<8x64xf32>
    %388 = tpu.matmul %385, %387, %cst_114 {dimension_numbers = #tpu.dot_dimension_numbers<[1], [0], [0], [1], [0, 0, 1, 1], [], []>} : vector<8x64xbf16>, vector<64x64xbf16>, vector<8x64xf32> -> vector<8x64xf32>
    %389 = arith.addf %383, %388 : vector<8x64xf32>
    %390 = vector.extract_strided_slice %141 {offsets = [41, 0, 0], sizes = [1, 8, 64], strides = [1, 1, 1]} : vector<64x8x64xbf16> to vector<1x8x64xbf16>
    %391 = vector.shape_cast %390 : vector<1x8x64xbf16> to vector<8x64xbf16>
    %392 = vector.extract_strided_slice %142 {offsets = [41, 0, 0], sizes = [1, 64, 64], strides = [1, 1, 1]} : vector<64x64x64xbf16> to vector<1x64x64xbf16>
    %393 = vector.shape_cast %392 : vector<1x64x64xbf16> to vector<64x64xbf16>
    %cst_115 = arith.constant dense<0.000000e+00> : vector<8x64xf32>
    %394 = tpu.matmul %391, %393, %cst_115 {dimension_numbers = #tpu.dot_dimension_numbers<[1], [0], [0], [1], [0, 0, 1, 1], [], []>} : vector<8x64xbf16>, vector<64x64xbf16>, vector<8x64xf32> -> vector<8x64xf32>
    %395 = arith.addf %389, %394 : vector<8x64xf32>
    %396 = vector.extract_strided_slice %141 {offsets = [42, 0, 0], sizes = [1, 8, 64], strides = [1, 1, 1]} : vector<64x8x64xbf16> to vector<1x8x64xbf16>
    %397 = vector.shape_cast %396 : vector<1x8x64xbf16> to vector<8x64xbf16>
    %398 = vector.extract_strided_slice %142 {offsets = [42, 0, 0], sizes = [1, 64, 64], strides = [1, 1, 1]} : vector<64x64x64xbf16> to vector<1x64x64xbf16>
    %399 = vector.shape_cast %398 : vector<1x64x64xbf16> to vector<64x64xbf16>
    %cst_116 = arith.constant dense<0.000000e+00> : vector<8x64xf32>
    %400 = tpu.matmul %397, %399, %cst_116 {dimension_numbers = #tpu.dot_dimension_numbers<[1], [0], [0], [1], [0, 0, 1, 1], [], []>} : vector<8x64xbf16>, vector<64x64xbf16>, vector<8x64xf32> -> vector<8x64xf32>
    %401 = arith.addf %395, %400 : vector<8x64xf32>
    %402 = vector.extract_strided_slice %141 {offsets = [43, 0, 0], sizes = [1, 8, 64], strides = [1, 1, 1]} : vector<64x8x64xbf16> to vector<1x8x64xbf16>
    %403 = vector.shape_cast %402 : vector<1x8x64xbf16> to vector<8x64xbf16>
    %404 = vector.extract_strided_slice %142 {offsets = [43, 0, 0], sizes = [1, 64, 64], strides = [1, 1, 1]} : vector<64x64x64xbf16> to vector<1x64x64xbf16>
    %405 = vector.shape_cast %404 : vector<1x64x64xbf16> to vector<64x64xbf16>
    %cst_117 = arith.constant dense<0.000000e+00> : vector<8x64xf32>
    %406 = tpu.matmul %403, %405, %cst_117 {dimension_numbers = #tpu.dot_dimension_numbers<[1], [0], [0], [1], [0, 0, 1, 1], [], []>} : vector<8x64xbf16>, vector<64x64xbf16>, vector<8x64xf32> -> vector<8x64xf32>
    %407 = arith.addf %401, %406 : vector<8x64xf32>
    %408 = vector.extract_strided_slice %141 {offsets = [44, 0, 0], sizes = [1, 8, 64], strides = [1, 1, 1]} : vector<64x8x64xbf16> to vector<1x8x64xbf16>
    %409 = vector.shape_cast %408 : vector<1x8x64xbf16> to vector<8x64xbf16>
    %410 = vector.extract_strided_slice %142 {offsets = [44, 0, 0], sizes = [1, 64, 64], strides = [1, 1, 1]} : vector<64x64x64xbf16> to vector<1x64x64xbf16>
    %411 = vector.shape_cast %410 : vector<1x64x64xbf16> to vector<64x64xbf16>
    %cst_118 = arith.constant dense<0.000000e+00> : vector<8x64xf32>
    %412 = tpu.matmul %409, %411, %cst_118 {dimension_numbers = #tpu.dot_dimension_numbers<[1], [0], [0], [1], [0, 0, 1, 1], [], []>} : vector<8x64xbf16>, vector<64x64xbf16>, vector<8x64xf32> -> vector<8x64xf32>
    %413 = arith.addf %407, %412 : vector<8x64xf32>
    %414 = vector.extract_strided_slice %141 {offsets = [45, 0, 0], sizes = [1, 8, 64], strides = [1, 1, 1]} : vector<64x8x64xbf16> to vector<1x8x64xbf16>
    %415 = vector.shape_cast %414 : vector<1x8x64xbf16> to vector<8x64xbf16>
    %416 = vector.extract_strided_slice %142 {offsets = [45, 0, 0], sizes = [1, 64, 64], strides = [1, 1, 1]} : vector<64x64x64xbf16> to vector<1x64x64xbf16>
    %417 = vector.shape_cast %416 : vector<1x64x64xbf16> to vector<64x64xbf16>
    %cst_119 = arith.constant dense<0.000000e+00> : vector<8x64xf32>
    %418 = tpu.matmul %415, %417, %cst_119 {dimension_numbers = #tpu.dot_dimension_numbers<[1], [0], [0], [1], [0, 0, 1, 1], [], []>} : vector<8x64xbf16>, vector<64x64xbf16>, vector<8x64xf32> -> vector<8x64xf32>
    %419 = arith.addf %413, %418 : vector<8x64xf32>
    %420 = vector.extract_strided_slice %141 {offsets = [46, 0, 0], sizes = [1, 8, 64], strides = [1, 1, 1]} : vector<64x8x64xbf16> to vector<1x8x64xbf16>
    %421 = vector.shape_cast %420 : vector<1x8x64xbf16> to vector<8x64xbf16>
    %422 = vector.extract_strided_slice %142 {offsets = [46, 0, 0], sizes = [1, 64, 64], strides = [1, 1, 1]} : vector<64x64x64xbf16> to vector<1x64x64xbf16>
    %423 = vector.shape_cast %422 : vector<1x64x64xbf16> to vector<64x64xbf16>
    %cst_120 = arith.constant dense<0.000000e+00> : vector<8x64xf32>
    %424 = tpu.matmul %421, %423, %cst_120 {dimension_numbers = #tpu.dot_dimension_numbers<[1], [0], [0], [1], [0, 0, 1, 1], [], []>} : vector<8x64xbf16>, vector<64x64xbf16>, vector<8x64xf32> -> vector<8x64xf32>
    %425 = arith.addf %419, %424 : vector<8x64xf32>
    %426 = vector.extract_strided_slice %141 {offsets = [47, 0, 0], sizes = [1, 8, 64], strides = [1, 1, 1]} : vector<64x8x64xbf16> to vector<1x8x64xbf16>
    %427 = vector.shape_cast %426 : vector<1x8x64xbf16> to vector<8x64xbf16>
    %428 = vector.extract_strided_slice %142 {offsets = [47, 0, 0], sizes = [1, 64, 64], strides = [1, 1, 1]} : vector<64x64x64xbf16> to vector<1x64x64xbf16>
    %429 = vector.shape_cast %428 : vector<1x64x64xbf16> to vector<64x64xbf16>
    %cst_121 = arith.constant dense<0.000000e+00> : vector<8x64xf32>
    %430 = tpu.matmul %427, %429, %cst_121 {dimension_numbers = #tpu.dot_dimension_numbers<[1], [0], [0], [1], [0, 0, 1, 1], [], []>} : vector<8x64xbf16>, vector<64x64xbf16>, vector<8x64xf32> -> vector<8x64xf32>
    %431 = arith.addf %425, %430 : vector<8x64xf32>
    %432 = vector.extract_strided_slice %141 {offsets = [48, 0, 0], sizes = [1, 8, 64], strides = [1, 1, 1]} : vector<64x8x64xbf16> to vector<1x8x64xbf16>
    %433 = vector.shape_cast %432 : vector<1x8x64xbf16> to vector<8x64xbf16>
    %434 = vector.extract_strided_slice %142 {offsets = [48, 0, 0], sizes = [1, 64, 64], strides = [1, 1, 1]} : vector<64x64x64xbf16> to vector<1x64x64xbf16>
    %435 = vector.shape_cast %434 : vector<1x64x64xbf16> to vector<64x64xbf16>
    %cst_122 = arith.constant dense<0.000000e+00> : vector<8x64xf32>
    %436 = tpu.matmul %433, %435, %cst_122 {dimension_numbers = #tpu.dot_dimension_numbers<[1], [0], [0], [1], [0, 0, 1, 1], [], []>} : vector<8x64xbf16>, vector<64x64xbf16>, vector<8x64xf32> -> vector<8x64xf32>
    %437 = arith.addf %431, %436 : vector<8x64xf32>
    %438 = vector.extract_strided_slice %141 {offsets = [49, 0, 0], sizes = [1, 8, 64], strides = [1, 1, 1]} : vector<64x8x64xbf16> to vector<1x8x64xbf16>
    %439 = vector.shape_cast %438 : vector<1x8x64xbf16> to vector<8x64xbf16>
    %440 = vector.extract_strided_slice %142 {offsets = [49, 0, 0], sizes = [1, 64, 64], strides = [1, 1, 1]} : vector<64x64x64xbf16> to vector<1x64x64xbf16>
    %441 = vector.shape_cast %440 : vector<1x64x64xbf16> to vector<64x64xbf16>
    %cst_123 = arith.constant dense<0.000000e+00> : vector<8x64xf32>
    %442 = tpu.matmul %439, %441, %cst_123 {dimension_numbers = #tpu.dot_dimension_numbers<[1], [0], [0], [1], [0, 0, 1, 1], [], []>} : vector<8x64xbf16>, vector<64x64xbf16>, vector<8x64xf32> -> vector<8x64xf32>
    %443 = arith.addf %437, %442 : vector<8x64xf32>
    %444 = vector.extract_strided_slice %141 {offsets = [50, 0, 0], sizes = [1, 8, 64], strides = [1, 1, 1]} : vector<64x8x64xbf16> to vector<1x8x64xbf16>
    %445 = vector.shape_cast %444 : vector<1x8x64xbf16> to vector<8x64xbf16>
    %446 = vector.extract_strided_slice %142 {offsets = [50, 0, 0], sizes = [1, 64, 64], strides = [1, 1, 1]} : vector<64x64x64xbf16> to vector<1x64x64xbf16>
    %447 = vector.shape_cast %446 : vector<1x64x64xbf16> to vector<64x64xbf16>
    %cst_124 = arith.constant dense<0.000000e+00> : vector<8x64xf32>
    %448 = tpu.matmul %445, %447, %cst_124 {dimension_numbers = #tpu.dot_dimension_numbers<[1], [0], [0], [1], [0, 0, 1, 1], [], []>} : vector<8x64xbf16>, vector<64x64xbf16>, vector<8x64xf32> -> vector<8x64xf32>
    %449 = arith.addf %443, %448 : vector<8x64xf32>
    %450 = vector.extract_strided_slice %141 {offsets = [51, 0, 0], sizes = [1, 8, 64], strides = [1, 1, 1]} : vector<64x8x64xbf16> to vector<1x8x64xbf16>
    %451 = vector.shape_cast %450 : vector<1x8x64xbf16> to vector<8x64xbf16>
    %452 = vector.extract_strided_slice %142 {offsets = [51, 0, 0], sizes = [1, 64, 64], strides = [1, 1, 1]} : vector<64x64x64xbf16> to vector<1x64x64xbf16>
    %453 = vector.shape_cast %452 : vector<1x64x64xbf16> to vector<64x64xbf16>
    %cst_125 = arith.constant dense<0.000000e+00> : vector<8x64xf32>
    %454 = tpu.matmul %451, %453, %cst_125 {dimension_numbers = #tpu.dot_dimension_numbers<[1], [0], [0], [1], [0, 0, 1, 1], [], []>} : vector<8x64xbf16>, vector<64x64xbf16>, vector<8x64xf32> -> vector<8x64xf32>
    %455 = arith.addf %449, %454 : vector<8x64xf32>
    %456 = vector.extract_strided_slice %141 {offsets = [52, 0, 0], sizes = [1, 8, 64], strides = [1, 1, 1]} : vector<64x8x64xbf16> to vector<1x8x64xbf16>
    %457 = vector.shape_cast %456 : vector<1x8x64xbf16> to vector<8x64xbf16>
    %458 = vector.extract_strided_slice %142 {offsets = [52, 0, 0], sizes = [1, 64, 64], strides = [1, 1, 1]} : vector<64x64x64xbf16> to vector<1x64x64xbf16>
    %459 = vector.shape_cast %458 : vector<1x64x64xbf16> to vector<64x64xbf16>
    %cst_126 = arith.constant dense<0.000000e+00> : vector<8x64xf32>
    %460 = tpu.matmul %457, %459, %cst_126 {dimension_numbers = #tpu.dot_dimension_numbers<[1], [0], [0], [1], [0, 0, 1, 1], [], []>} : vector<8x64xbf16>, vector<64x64xbf16>, vector<8x64xf32> -> vector<8x64xf32>
    %461 = arith.addf %455, %460 : vector<8x64xf32>
    %462 = vector.extract_strided_slice %141 {offsets = [53, 0, 0], sizes = [1, 8, 64], strides = [1, 1, 1]} : vector<64x8x64xbf16> to vector<1x8x64xbf16>
    %463 = vector.shape_cast %462 : vector<1x8x64xbf16> to vector<8x64xbf16>
    %464 = vector.extract_strided_slice %142 {offsets = [53, 0, 0], sizes = [1, 64, 64], strides = [1, 1, 1]} : vector<64x64x64xbf16> to vector<1x64x64xbf16>
    %465 = vector.shape_cast %464 : vector<1x64x64xbf16> to vector<64x64xbf16>
    %cst_127 = arith.constant dense<0.000000e+00> : vector<8x64xf32>
    %466 = tpu.matmul %463, %465, %cst_127 {dimension_numbers = #tpu.dot_dimension_numbers<[1], [0], [0], [1], [0, 0, 1, 1], [], []>} : vector<8x64xbf16>, vector<64x64xbf16>, vector<8x64xf32> -> vector<8x64xf32>
    %467 = arith.addf %461, %466 : vector<8x64xf32>
    %468 = vector.extract_strided_slice %141 {offsets = [54, 0, 0], sizes = [1, 8, 64], strides = [1, 1, 1]} : vector<64x8x64xbf16> to vector<1x8x64xbf16>
    %469 = vector.shape_cast %468 : vector<1x8x64xbf16> to vector<8x64xbf16>
    %470 = vector.extract_strided_slice %142 {offsets = [54, 0, 0], sizes = [1, 64, 64], strides = [1, 1, 1]} : vector<64x64x64xbf16> to vector<1x64x64xbf16>
    %471 = vector.shape_cast %470 : vector<1x64x64xbf16> to vector<64x64xbf16>
    %cst_128 = arith.constant dense<0.000000e+00> : vector<8x64xf32>
    %472 = tpu.matmul %469, %471, %cst_128 {dimension_numbers = #tpu.dot_dimension_numbers<[1], [0], [0], [1], [0, 0, 1, 1], [], []>} : vector<8x64xbf16>, vector<64x64xbf16>, vector<8x64xf32> -> vector<8x64xf32>
    %473 = arith.addf %467, %472 : vector<8x64xf32>
    %474 = vector.extract_strided_slice %141 {offsets = [55, 0, 0], sizes = [1, 8, 64], strides = [1, 1, 1]} : vector<64x8x64xbf16> to vector<1x8x64xbf16>
    %475 = vector.shape_cast %474 : vector<1x8x64xbf16> to vector<8x64xbf16>
    %476 = vector.extract_strided_slice %142 {offsets = [55, 0, 0], sizes = [1, 64, 64], strides = [1, 1, 1]} : vector<64x64x64xbf16> to vector<1x64x64xbf16>
    %477 = vector.shape_cast %476 : vector<1x64x64xbf16> to vector<64x64xbf16>
    %cst_129 = arith.constant dense<0.000000e+00> : vector<8x64xf32>
    %478 = tpu.matmul %475, %477, %cst_129 {dimension_numbers = #tpu.dot_dimension_numbers<[1], [0], [0], [1], [0, 0, 1, 1], [], []>} : vector<8x64xbf16>, vector<64x64xbf16>, vector<8x64xf32> -> vector<8x64xf32>
    %479 = arith.addf %473, %478 : vector<8x64xf32>
    %480 = vector.extract_strided_slice %141 {offsets = [56, 0, 0], sizes = [1, 8, 64], strides = [1, 1, 1]} : vector<64x8x64xbf16> to vector<1x8x64xbf16>
    %481 = vector.shape_cast %480 : vector<1x8x64xbf16> to vector<8x64xbf16>
    %482 = vector.extract_strided_slice %142 {offsets = [56, 0, 0], sizes = [1, 64, 64], strides = [1, 1, 1]} : vector<64x64x64xbf16> to vector<1x64x64xbf16>
    %483 = vector.shape_cast %482 : vector<1x64x64xbf16> to vector<64x64xbf16>
    %cst_130 = arith.constant dense<0.000000e+00> : vector<8x64xf32>
    %484 = tpu.matmul %481, %483, %cst_130 {dimension_numbers = #tpu.dot_dimension_numbers<[1], [0], [0], [1], [0, 0, 1, 1], [], []>} : vector<8x64xbf16>, vector<64x64xbf16>, vector<8x64xf32> -> vector<8x64xf32>
    %485 = arith.addf %479, %484 : vector<8x64xf32>
    %486 = vector.extract_strided_slice %141 {offsets = [57, 0, 0], sizes = [1, 8, 64], strides = [1, 1, 1]} : vector<64x8x64xbf16> to vector<1x8x64xbf16>
    %487 = vector.shape_cast %486 : vector<1x8x64xbf16> to vector<8x64xbf16>
    %488 = vector.extract_strided_slice %142 {offsets = [57, 0, 0], sizes = [1, 64, 64], strides = [1, 1, 1]} : vector<64x64x64xbf16> to vector<1x64x64xbf16>
    %489 = vector.shape_cast %488 : vector<1x64x64xbf16> to vector<64x64xbf16>
    %cst_131 = arith.constant dense<0.000000e+00> : vector<8x64xf32>
    %490 = tpu.matmul %487, %489, %cst_131 {dimension_numbers = #tpu.dot_dimension_numbers<[1], [0], [0], [1], [0, 0, 1, 1], [], []>} : vector<8x64xbf16>, vector<64x64xbf16>, vector<8x64xf32> -> vector<8x64xf32>
    %491 = arith.addf %485, %490 : vector<8x64xf32>
    %492 = vector.extract_strided_slice %141 {offsets = [58, 0, 0], sizes = [1, 8, 64], strides = [1, 1, 1]} : vector<64x8x64xbf16> to vector<1x8x64xbf16>
    %493 = vector.shape_cast %492 : vector<1x8x64xbf16> to vector<8x64xbf16>
    %494 = vector.extract_strided_slice %142 {offsets = [58, 0, 0], sizes = [1, 64, 64], strides = [1, 1, 1]} : vector<64x64x64xbf16> to vector<1x64x64xbf16>
    %495 = vector.shape_cast %494 : vector<1x64x64xbf16> to vector<64x64xbf16>
    %cst_132 = arith.constant dense<0.000000e+00> : vector<8x64xf32>
    %496 = tpu.matmul %493, %495, %cst_132 {dimension_numbers = #tpu.dot_dimension_numbers<[1], [0], [0], [1], [0, 0, 1, 1], [], []>} : vector<8x64xbf16>, vector<64x64xbf16>, vector<8x64xf32> -> vector<8x64xf32>
    %497 = arith.addf %491, %496 : vector<8x64xf32>
    %498 = vector.extract_strided_slice %141 {offsets = [59, 0, 0], sizes = [1, 8, 64], strides = [1, 1, 1]} : vector<64x8x64xbf16> to vector<1x8x64xbf16>
    %499 = vector.shape_cast %498 : vector<1x8x64xbf16> to vector<8x64xbf16>
    %500 = vector.extract_strided_slice %142 {offsets = [59, 0, 0], sizes = [1, 64, 64], strides = [1, 1, 1]} : vector<64x64x64xbf16> to vector<1x64x64xbf16>
    %501 = vector.shape_cast %500 : vector<1x64x64xbf16> to vector<64x64xbf16>
    %cst_133 = arith.constant dense<0.000000e+00> : vector<8x64xf32>
    %502 = tpu.matmul %499, %501, %cst_133 {dimension_numbers = #tpu.dot_dimension_numbers<[1], [0], [0], [1], [0, 0, 1, 1], [], []>} : vector<8x64xbf16>, vector<64x64xbf16>, vector<8x64xf32> -> vector<8x64xf32>
    %503 = arith.addf %497, %502 : vector<8x64xf32>
    %504 = vector.extract_strided_slice %141 {offsets = [60, 0, 0], sizes = [1, 8, 64], strides = [1, 1, 1]} : vector<64x8x64xbf16> to vector<1x8x64xbf16>
    %505 = vector.shape_cast %504 : vector<1x8x64xbf16> to vector<8x64xbf16>
    %506 = vector.extract_strided_slice %142 {offsets = [60, 0, 0], sizes = [1, 64, 64], strides = [1, 1, 1]} : vector<64x64x64xbf16> to vector<1x64x64xbf16>
    %507 = vector.shape_cast %506 : vector<1x64x64xbf16> to vector<64x64xbf16>
    %cst_134 = arith.constant dense<0.000000e+00> : vector<8x64xf32>
    %508 = tpu.matmul %505, %507, %cst_134 {dimension_numbers = #tpu.dot_dimension_numbers<[1], [0], [0], [1], [0, 0, 1, 1], [], []>} : vector<8x64xbf16>, vector<64x64xbf16>, vector<8x64xf32> -> vector<8x64xf32>
    %509 = arith.addf %503, %508 : vector<8x64xf32>
    %510 = vector.extract_strided_slice %141 {offsets = [61, 0, 0], sizes = [1, 8, 64], strides = [1, 1, 1]} : vector<64x8x64xbf16> to vector<1x8x64xbf16>
    %511 = vector.shape_cast %510 : vector<1x8x64xbf16> to vector<8x64xbf16>
    %512 = vector.extract_strided_slice %142 {offsets = [61, 0, 0], sizes = [1, 64, 64], strides = [1, 1, 1]} : vector<64x64x64xbf16> to vector<1x64x64xbf16>
    %513 = vector.shape_cast %512 : vector<1x64x64xbf16> to vector<64x64xbf16>
    %cst_135 = arith.constant dense<0.000000e+00> : vector<8x64xf32>
    %514 = tpu.matmul %511, %513, %cst_135 {dimension_numbers = #tpu.dot_dimension_numbers<[1], [0], [0], [1], [0, 0, 1, 1], [], []>} : vector<8x64xbf16>, vector<64x64xbf16>, vector<8x64xf32> -> vector<8x64xf32>
    %515 = arith.addf %509, %514 : vector<8x64xf32>
    %516 = vector.extract_strided_slice %141 {offsets = [62, 0, 0], sizes = [1, 8, 64], strides = [1, 1, 1]} : vector<64x8x64xbf16> to vector<1x8x64xbf16>
    %517 = vector.shape_cast %516 : vector<1x8x64xbf16> to vector<8x64xbf16>
    %518 = vector.extract_strided_slice %142 {offsets = [62, 0, 0], sizes = [1, 64, 64], strides = [1, 1, 1]} : vector<64x64x64xbf16> to vector<1x64x64xbf16>
    %519 = vector.shape_cast %518 : vector<1x64x64xbf16> to vector<64x64xbf16>
    %cst_136 = arith.constant dense<0.000000e+00> : vector<8x64xf32>
    %520 = tpu.matmul %517, %519, %cst_136 {dimension_numbers = #tpu.dot_dimension_numbers<[1], [0], [0], [1], [0, 0, 1, 1], [], []>} : vector<8x64xbf16>, vector<64x64xbf16>, vector<8x64xf32> -> vector<8x64xf32>
    %521 = arith.addf %515, %520 : vector<8x64xf32>
    %522 = vector.extract_strided_slice %141 {offsets = [63, 0, 0], sizes = [1, 8, 64], strides = [1, 1, 1]} : vector<64x8x64xbf16> to vector<1x8x64xbf16>
    %523 = vector.shape_cast %522 : vector<1x8x64xbf16> to vector<8x64xbf16>
    %524 = vector.extract_strided_slice %142 {offsets = [63, 0, 0], sizes = [1, 64, 64], strides = [1, 1, 1]} : vector<64x64x64xbf16> to vector<1x64x64xbf16>
    %525 = vector.shape_cast %524 : vector<1x64x64xbf16> to vector<64x64xbf16>
    %cst_137 = arith.constant dense<0.000000e+00> : vector<8x64xf32>
    %526 = tpu.matmul %523, %525, %cst_137 {dimension_numbers = #tpu.dot_dimension_numbers<[1], [0], [0], [1], [0, 0, 1, 1], [], []>} : vector<8x64xbf16>, vector<64x64xbf16>, vector<8x64xf32> -> vector<8x64xf32>
    %527 = arith.addf %521, %526 : vector<8x64xf32>
    %c0_138 = arith.constant 0 : index
    %c0_139 = arith.constant 0 : index
    %528 = vector.load %arg13[%c0_138, %c0_139] : memref<1x64xf32, #tpu.memory_space<vmem>>, vector<1x64xf32>
    %529 = vector.broadcast %528 : vector<1x64xf32> to vector<8x64xf32>
    %530 = arith.addf %527, %529 : vector<8x64xf32>
    %cst_140 = arith.constant 0.000000e+00 : f32
    %531 = vector.broadcast %cst_140 : f32 to vector<8x64xf32>
    %532 = tpu.concatenate %530, %531 in 1 : vector<8x64xf32>, vector<8x64xf32> -> vector<8x128xf32>
    %c0_141 = arith.constant 0 : index
    %c0_142 = arith.constant 0 : index
    %533 = vector.load %arg14[%c0_141, %c0_142] : memref<8x128xf32, #tpu.memory_space<vmem>>, vector<8x128xf32>
    tpu.vector_store %arg14[%c0_141, %c0_142], %532 {strides = array<i32>} : memref<8x128xf32, #tpu.memory_space<vmem>>, vector<8x128xf32>,
    return
  }
  func.func @transform_0(%arg0: i32) -> (i32, i32, i32) {
    %c0_i32 = arith.constant 0 : i32
    %c0_i32_0 = arith.constant 0 : i32
    %c0_i32_1 = arith.constant 0 : i32
    return %c0_i32, %arg0, %c0_i32_0 : i32, i32, i32
  }
  func.func @transform_1(%arg0: i32) -> (i32, i32, i32) {
    %c0_i32 = arith.constant 0 : i32
    %c0_i32_0 = arith.constant 0 : i32
    %c0_i32_1 = arith.constant 0 : i32
    %c0_i32_2 = arith.constant 0 : i32
    return %c0_i32, %c0_i32_0, %c0_i32_1 : i32, i32, i32
  }
  func.func @transform_2(%arg0: i32) -> (i32, i32) {
    %c0_i32 = arith.constant 0 : i32
    %c0_i32_0 = arith.constant 0 : i32
    %c0_i32_1 = arith.constant 0 : i32
    return %c0_i32, %c0_i32_0 : i32, i32
  }
  func.func @transform_3(%arg0: i32) -> (i32, i32, i32) {
    %c0_i32 = arith.constant 0 : i32
    %c0_i32_0 = arith.constant 0 : i32
    %c0_i32_1 = arith.constant 0 : i32
    %c0_i32_2 = arith.constant 0 : i32
    return %c0_i32, %c0_i32_0, %c0_i32_1 : i32, i32, i32
  }
  func.func @transform_4(%arg0: i32) -> (i32, i32) {
    %c0_i32 = arith.constant 0 : i32
    %c0_i32_0 = arith.constant 0 : i32
    %c0_i32_1 = arith.constant 0 : i32
    return %c0_i32, %c0_i32_0 : i32, i32
  }
  func.func @transform_5(%arg0: i32) -> (i32, i32, i32) {
    %c0_i32 = arith.constant 0 : i32
    %c0_i32_0 = arith.constant 0 : i32
    %c0_i32_1 = arith.constant 0 : i32
    %c0_i32_2 = arith.constant 0 : i32
    return %c0_i32, %c0_i32_0, %c0_i32_1 : i32, i32, i32
  }
  func.func @transform_6(%arg0: i32) -> (i32, i32) {
    %c0_i32 = arith.constant 0 : i32
    %c0_i32_0 = arith.constant 0 : i32
    %c0_i32_1 = arith.constant 0 : i32
    return %c0_i32, %c0_i32_0 : i32, i32
  }
  func.func @transform_7(%arg0: i32) -> (i32, i32, i32) {
    %c0_i32 = arith.constant 0 : i32
    %c0_i32_0 = arith.constant 0 : i32
    %c0_i32_1 = arith.constant 0 : i32
    %c0_i32_2 = arith.constant 0 : i32
    return %c0_i32, %c0_i32_0, %c0_i32_1 : i32, i32, i32
  }
  func.func @transform_8(%arg0: i32) -> (i32, i32) {
    %c0_i32 = arith.constant 0 : i32
    %c0_i32_0 = arith.constant 0 : i32
    %c0_i32_1 = arith.constant 0 : i32
    return %c0_i32, %c0_i32_0 : i32, i32
  }
  func.func @transform_9(%arg0: i32) -> (i32, i32, i32) {
    %c0_i32 = arith.constant 0 : i32
    %c0_i32_0 = arith.constant 0 : i32
    %c0_i32_1 = arith.constant 0 : i32
    %c0_i32_2 = arith.constant 0 : i32
    return %c0_i32, %c0_i32_0, %c0_i32_1 : i32, i32, i32
  }
  func.func @transform_10(%arg0: i32) -> (i32, i32) {
    %c0_i32 = arith.constant 0 : i32
    %c0_i32_0 = arith.constant 0 : i32
    %c0_i32_1 = arith.constant 0 : i32
    return %c0_i32, %c0_i32_0 : i32, i32
  }
  func.func @transform_11(%arg0: i32) -> (i32, i32, i32) {
    %c0_i32 = arith.constant 0 : i32
    %c0_i32_0 = arith.constant 0 : i32
    %c0_i32_1 = arith.constant 0 : i32
    %c0_i32_2 = arith.constant 0 : i32
    return %c0_i32, %c0_i32_0, %c0_i32_1 : i32, i32, i32
  }
  func.func @transform_12(%arg0: i32) -> (i32, i32) {
    %c0_i32 = arith.constant 0 : i32
    %c0_i32_0 = arith.constant 0 : i32
    %c0_i32_1 = arith.constant 0 : i32
    return %c0_i32, %c0_i32_0 : i32, i32
  }
  func.func @transform_13(%arg0: i32) -> (i32, i32) {
    %c0_i32 = arith.constant 0 : i32
    %c0_i32_0 = arith.constant 0 : i32
    return %arg0, %c0_i32 : i32, i32
  }
}

</mosaic_0001>

<llo_original>
// kernel: tpu_custom_call.1
$region0: #{tpu_custom_call.1}
  #allocation0 [shape = 'u32[]', space=smem, size = 0x4, offset = 0x4, fixed_abs, tag = 'smem constant byte address 0x4 - core index']
  #allocation1 [shape = 'u32[144,128]{1,0:T(1,128)}', space=vmem, size = 0x12000, scoped, tag = 'internal scratch']
  %s0 = inlined_call_operand.vmem [shape: f32[64,8,1], index: 0, kind: input, shape index: {}]
  %s1 = inlined_call_operand.vmem [shape: f32[3,1,16], index: 1, kind: input, shape index: {}]
  %s2 = inlined_call_operand.vmem [shape: f32[1,16], index: 2, kind: input, shape index: {}]
  %s3 = inlined_call_operand.vmem [shape: bf16[3,16,32], index: 3, kind: input, shape index: {}]
  %s4 = inlined_call_operand.vmem [shape: f32[1,32], index: 4, kind: input, shape index: {}]
  %s5 = inlined_call_operand.vmem [shape: bf16[3,32,64], index: 5, kind: input, shape index: {}]
  %s6 = inlined_call_operand.vmem [shape: f32[1,64], index: 6, kind: input, shape index: {}]
  %s7 = inlined_call_operand.vmem [shape: bf16[3,64,64], index: 7, kind: input, shape index: {}]
  %s8 = inlined_call_operand.vmem [shape: f32[1,64], index: 8, kind: input, shape index: {}]
  %s9 = inlined_call_operand.vmem [shape: bf16[3,64,64], index: 9, kind: input, shape index: {}]
  %s10 = inlined_call_operand.vmem [shape: f32[1,64], index: 10, kind: input, shape index: {}]
  %s11 = inlined_call_operand.hbm [shape: bf16[64,64,64], index: 11, kind: input, shape index: {}]
  %s12 = inlined_call_operand.vmem [shape: f32[1,64], index: 12, kind: input, shape index: {}]
  %s13 = inlined_call_operand.hbm [shape: f32[8,128], index: 13, kind: output, shape index: {}]
  %s14 = sld [smem:[#allocation0]]
  $region66: #{tpu_custom_call.1} parent=0
    _
  %s16 = ssub.s32 1, %s14
  %s17 = scalar_select 0, %s16, %s14
  $region1: #{tpu_custom_call.1} parent=0
    #allocation2 [shape = 'u8[1048576]{0}', space=vmem, size = 0x100000, scoped, tag = 'input window, operand 11, single buffered']
    #allocation3 [shape = 's32[1]{0}', space=sflag, size = 0x4, scoped, tag = 'scoped memory for tpu_custom_call.1']
    #allocation4 [shape = 's32[1]{0}', space=sflag, size = 0x4, scoped, tag = 'scoped memory for tpu_custom_call.1']
    #allocation5 [shape = 'u8[4096]{0}', space=vmem, size = 0x1000, scoped, tag = 'output window, operand 0, single buffered']
    %18 = vsyncpa [#allocation3], 0
    %19 = vsyncpa [#allocation4], 0
    // Predicated region
    $region2: #{tpu_custom_call.1} parent=1 // pred_check
      _
    $region3: #{tpu_custom_call.1} parent=1 // pred_check_branch
      %21 = sbr.rel (0) target = $region5
    $region4: #{tpu_custom_call.1} parent=1 // pred_region
      _
    $region5: #{tpu_custom_call.1} parent=1 // pred_fallthru
      _
    // Predicated region
    $region6: #{tpu_custom_call.1} parent=1 // pred_check
      _
    $region7: #{tpu_custom_call.1} parent=1 // pred_check_branch
      %23 = sbr.rel (0) target = $region9
    $region8: #{tpu_custom_call.1} parent=1 // pred_region
      _
    $region9: #{tpu_custom_call.1} parent=1 // pred_fallthru
      _
    // Predicated region
    $region10: #{tpu_custom_call.1} parent=1 // pred_check
      _
    $region11: #{tpu_custom_call.1} parent=1 // pred_check_branch
      %25 = sbr.rel (0) target = $region13
    $region12: #{tpu_custom_call.1} parent=1 // pred_region
      _
    $region13: #{tpu_custom_call.1} parent=1 // pred_fallthru
      _
    // Predicated region
    $region14: #{tpu_custom_call.1} parent=1 // pred_check
      _
    $region15: #{tpu_custom_call.1} parent=1 // pred_check_branch
      %27 = sbr.rel (0) target = $region17
    $region16: #{tpu_custom_call.1} parent=1 // pred_region
      _
    $region17: #{tpu_custom_call.1} parent=1 // pred_fallthru
      _
    // Predicated region
    $region18: #{tpu_custom_call.1} parent=1 // pred_check
      _
    $region19: #{tpu_custom_call.1} parent=1 // pred_check_branch
      %29 = sbr.rel (0) target = $region21
    $region20: #{tpu_custom_call.1} parent=1 // pred_region
      _
    $region21: #{tpu_custom_call.1} parent=1 // pred_fallthru
      _
    // Predicated region
    $region22: #{tpu_custom_call.1} parent=1 // pred_check
      _
    $region23: #{tpu_custom_call.1} parent=1 // pred_check_branch
      %31 = sbr.rel (0) target = $region25
    $region24: #{tpu_custom_call.1} parent=1 // pred_region
      _
    $region25: #{tpu_custom_call.1} parent=1 // pred_fallthru
      _
    // Predicated region
    $region26: #{tpu_custom_call.1} parent=1 // pred_check
      _
    $region27: #{tpu_custom_call.1} parent=1 // pred_check_branch
      %33 = sbr.rel (0) target = $region29
    $region28: #{tpu_custom_call.1} parent=1 // pred_region
      _
    $region29: #{tpu_custom_call.1} parent=1 // pred_fallthru
      _
    // Predicated region
    $region30: #{tpu_custom_call.1} parent=1 // pred_check
      _
    $region31: #{tpu_custom_call.1} parent=1 // pred_check_branch
      %35 = sbr.rel (0) target = $region33
    $region32: #{tpu_custom_call.1} parent=1 // pred_region
      _
    $region33: #{tpu_custom_call.1} parent=1 // pred_fallthru
      _
    // Predicated region
    $region34: #{tpu_custom_call.1} parent=1 // pred_check
      _
    $region35: #{tpu_custom_call.1} parent=1 // pred_check_branch
      %37 = sbr.rel (0) target = $region37
    $region36: #{tpu_custom_call.1} parent=1 // pred_region
      _
    $region37: #{tpu_custom_call.1} parent=1 // pred_fallthru
      _
    // Predicated region
    $region38: #{tpu_custom_call.1} parent=1 // pred_check
      _
    $region39: #{tpu_custom_call.1} parent=1 // pred_check_branch
      %39 = sbr.rel (0) target = $region41
    $region40: #{tpu_custom_call.1} parent=1 // pred_region
      _
    $region41: #{tpu_custom_call.1} parent=1 // pred_fallthru
      _
    // Predicated region
    $region42: #{tpu_custom_call.1} parent=1 // pred_check
      _
    $region43: #{tpu_custom_call.1} parent=1 // pred_check_branch
      %41 = sbr.rel (0) target = $region45
    $region44: #{tpu_custom_call.1} parent=1 // pred_region
      _
    $region45: #{tpu_custom_call.1} parent=1 // pred_fallthru
      _
    // Predicated region
    $region46: #{tpu_custom_call.1} parent=1 // pred_check
      _
    $region47: #{tpu_custom_call.1} parent=1 // pred_check_branch
      %43 = sbr.rel (0) target = $region49
    $region48: #{tpu_custom_call.1} parent=1 // pred_region
      %s45 = ssub.s32 32768, 32768
      %46 = vsyncadd [#allocation3], %s45
      %s47 = sshll.u32 [#allocation2], 4
      %s48 = int_to_ptr.vmem [resolvable:$true] %s47
      %53 = dma.hbm_to_vmem [thread:$0]  %s11, 32768, %s48, [#allocation3], 64, 64, 4
    $region49: #{tpu_custom_call.1} parent=1 // pred_fallthru
      _
    // Predicated region
    $region50: #{tpu_custom_call.1} parent=1 // pred_check
      _
    $region51: #{tpu_custom_call.1} parent=1 // pred_check_branch
      %55 = sbr.rel (0) target = $region53
    $region52: #{tpu_custom_call.1} parent=1 // pred_region
      _
    $region53: #{tpu_custom_call.1} parent=1 // pred_fallthru
      _
    // Predicated region
    $region54: #{tpu_custom_call.1} parent=1 // pred_check
      _
    $region55: #{tpu_custom_call.1} parent=1 // pred_check_branch
      %57 = sbr.rel (0) target = $region57
    $region56: #{tpu_custom_call.1} parent=1 // pred_region
      %58 = dma.done [#allocation3], 32768
    $region57: #{tpu_custom_call.1} parent=1 // pred_fallthru
      _
    %v60 = vld [vmem:[%s0] sm:$0xff]
    %v61 = vld [vmem:[%s0 + $0x8] sm:$0xff]
    %v62 = vld [vmem:[%s0 + $0x10] sm:$0xff]
    %v63 = vld [vmem:[%s0 + $0x18] sm:$0xff]
    %v64 = vld [vmem:[%s0 + $0x20] sm:$0xff]
    %v65 = vld [vmem:[%s0 + $0x28] sm:$0xff]
    %v66 = vld [vmem:[%s0 + $0x30] sm:$0xff]
    %v67 = vld [vmem:[%s0 + $0x38] sm:$0xff]
    %v68 = vld [vmem:[%s0 + $0x40] sm:$0xff]
    %v69 = vld [vmem:[%s0 + $0x48] sm:$0xff]
    %v70 = vld [vmem:[%s0 + $0x50] sm:$0xff]
    %v71 = vld [vmem:[%s0 + $0x58] sm:$0xff]
    %v72 = vld [vmem:[%s0 + $0x60] sm:$0xff]
    %v73 = vld [vmem:[%s0 + $0x68] sm:$0xff]
    %v74 = vld [vmem:[%s0 + $0x70] sm:$0xff]
    %v75 = vld [vmem:[%s0 + $0x78] sm:$0xff]
    %v76 = vld [vmem:[%s0 + $0x80] sm:$0xff]
    %v77 = vld [vmem:[%s0 + $0x88] sm:$0xff]
    %v78 = vld [vmem:[%s0 + $0x90] sm:$0xff]
    %v79 = vld [vmem:[%s0 + $0x98] sm:$0xff]
    %v80 = vld [vmem:[%s0 + $0xa0] sm:$0xff]
    %v81 = vld [vmem:[%s0 + $0xa8] sm:$0xff]
    %v82 = vld [vmem:[%s0 + $0xb0] sm:$0xff]
    %v83 = vld [vmem:[%s0 + $0xb8] sm:$0xff]
    %v84 = vld [vmem:[%s0 + $0xc0] sm:$0xff]
    %v85 = vld [vmem:[%s0 + $0xc8] sm:$0xff]
    %v86 = vld [vmem:[%s0 + $0xd0] sm:$0xff]
    %v87 = vld [vmem:[%s0 + $0xd8] sm:$0xff]
    %v88 = vld [vmem:[%s0 + $0xe0] sm:$0xff]
    %v89 = vld [vmem:[%s0 + $0xe8] sm:$0xff]
    %v90 = vld [vmem:[%s0 + $0xf0] sm:$0xff]
    %v91 = vld [vmem:[%s0 + $0xf8] sm:$0xff]
    %v92 = vld [vmem:[%s0 + $0x100] sm:$0xff]
    %v93 = vld [vmem:[%s0 + $0x108] sm:$0xff]
    %v94 = vld [vmem:[%s0 + $0x110] sm:$0xff]
    %v95 = vld [vmem:[%s0 + $0x118] sm:$0xff]
    %v96 = vld [vmem:[%s0 + $0x120] sm:$0xff]
    %v97 = vld [vmem:[%s0 + $0x128] sm:$0xff]
    %v98 = vld [vmem:[%s0 + $0x130] sm:$0xff]
    %v99 = vld [vmem:[%s0 + $0x138] sm:$0xff]
    %v100 = vld [vmem:[%s0 + $0x140] sm:$0xff]
    %v101 = vld [vmem:[%s0 + $0x148] sm:$0xff]
    %v102 = vld [vmem:[%s0 + $0x150] sm:$0xff]
    %v103 = vld [vmem:[%s0 + $0x158] sm:$0xff]
    %v104 = vld [vmem:[%s0 + $0x160] sm:$0xff]
    %v105 = vld [vmem:[%s0 + $0x168] sm:$0xff]
    %v106 = vld [vmem:[%s0 + $0x170] sm:$0xff]
    %v107 = vld [vmem:[%s0 + $0x178] sm:$0xff]
    %v108 = vld [vmem:[%s0 + $0x180] sm:$0xff]
    %v109 = vld [vmem:[%s0 + $0x188] sm:$0xff]
    %v110 = vld [vmem:[%s0 + $0x190] sm:$0xff]
    %v111 = vld [vmem:[%s0 + $0x198] sm:$0xff]
    %v112 = vld [vmem:[%s0 + $0x1a0] sm:$0xff]
    %v113 = vld [vmem:[%s0 + $0x1a8] sm:$0xff]
    %v114 = vld [vmem:[%s0 + $0x1b0] sm:$0xff]
    %v115 = vld [vmem:[%s0 + $0x1b8] sm:$0xff]
    %v116 = vld [vmem:[%s0 + $0x1c0] sm:$0xff]
    %v117 = vld [vmem:[%s0 + $0x1c8] sm:$0xff]
    %v118 = vld [vmem:[%s0 + $0x1d0] sm:$0xff]
    %v119 = vld [vmem:[%s0 + $0x1d8] sm:$0xff]
    %v120 = vld [vmem:[%s0 + $0x1e0] sm:$0xff]
    %v121 = vld [vmem:[%s0 + $0x1e8] sm:$0xff]
    %v122 = vld [vmem:[%s0 + $0x1f0] sm:$0xff]
    %v123 = vld [vmem:[%s0 + $0x1f8] sm:$0xff]
    %v124 = vld [vmem:[%s1] sm:$0x1]
    %v125 = vld [vmem:[%s1 + $0x1] sm:$0x1]
    %v126 = vld [vmem:[%s1 + $0x2] sm:$0x1]
    %128 = vset.pattern.permute.xlu0 0
    %129 = vperm.xlu0 %128, 0.0
    %v130 = vpop.permute.xlu0 %129
    %133 = vset.pattern.permute.xlu0 0
    %134 = vperm.xlu0 %133, %v60
    %v135 = vpop.permute.xlu0 %134
    %138 = vset.pattern.permute.xlu0 0
    %139 = vperm.xlu0 %138, %v61
    %v140 = vpop.permute.xlu0 %139
    %143 = vset.pattern.permute.xlu0 0
    %144 = vperm.xlu0 %143, %v62
    %v145 = vpop.permute.xlu0 %144
    %148 = vset.pattern.permute.xlu0 0
    %149 = vperm.xlu0 %148, %v63
    %v150 = vpop.permute.xlu0 %149
    %153 = vset.pattern.permute.xlu0 0
    %154 = vperm.xlu0 %153, %v64
    %v155 = vpop.permute.xlu0 %154
    %158 = vset.pattern.permute.xlu0 0
    %159 = vperm.xlu0 %158, %v65
    %v160 = vpop.permute.xlu0 %159
    %163 = vset.pattern.permute.xlu0 0
    %164 = vperm.xlu0 %163, %v66
    %v165 = vpop.permute.xlu0 %164
    %168 = vset.pattern.permute.xlu0 0
    %169 = vperm.xlu0 %168, %v67
    %v170 = vpop.permute.xlu0 %169
    %173 = vset.pattern.permute.xlu0 0
    %174 = vperm.xlu0 %173, %v68
    %v175 = vpop.permute.xlu0 %174
    %178 = vset.pattern.permute.xlu0 0
    %179 = vperm.xlu0 %178, %v69
    %v180 = vpop.permute.xlu0 %179
    %183 = vset.pattern.permute.xlu0 0
    %184 = vperm.xlu0 %183, %v70
    %v185 = vpop.permute.xlu0 %184
    %188 = vset.pattern.permute.xlu0 0
    %189 = vperm.xlu0 %188, %v71
    %v190 = vpop.permute.xlu0 %189
    %193 = vset.pattern.permute.xlu0 0
    %194 = vperm.xlu0 %193, %v72
    %v195 = vpop.permute.xlu0 %194
    %198 = vset.pattern.permute.xlu0 0
    %199 = vperm.xlu0 %198, %v73
    %v200 = vpop.permute.xlu0 %199
    %203 = vset.pattern.permute.xlu0 0
    %204 = vperm.xlu0 %203, %v74
    %v205 = vpop.permute.xlu0 %204
    %208 = vset.pattern.permute.xlu0 0
    %209 = vperm.xlu0 %208, %v75
    %v210 = vpop.permute.xlu0 %209
    %213 = vset.pattern.permute.xlu0 0
    %214 = vperm.xlu0 %213, %v76
    %v215 = vpop.permute.xlu0 %214
    %218 = vset.pattern.permute.xlu0 0
    %219 = vperm.xlu0 %218, %v77
    %v220 = vpop.permute.xlu0 %219
    %223 = vset.pattern.permute.xlu0 0
    %224 = vperm.xlu0 %223, %v78
    %v225 = vpop.permute.xlu0 %224
    %228 = vset.pattern.permute.xlu0 0
    %229 = vperm.xlu0 %228, %v79
    %v230 = vpop.permute.xlu0 %229
    %233 = vset.pattern.permute.xlu0 0
    %234 = vperm.xlu0 %233, %v80
    %v235 = vpop.permute.xlu0 %234
    %238 = vset.pattern.permute.xlu0 0
    %239 = vperm.xlu0 %238, %v81
    %v240 = vpop.permute.xlu0 %239
    %243 = vset.pattern.permute.xlu0 0
    %244 = vperm.xlu0 %243, %v82
    %v245 = vpop.permute.xlu0 %244
    %248 = vset.pattern.permute.xlu0 0
    %249 = vperm.xlu0 %248, %v83
    %v250 = vpop.permute.xlu0 %249
    %253 = vset.pattern.permute.xlu0 0
    %254 = vperm.xlu0 %253, %v84
    %v255 = vpop.permute.xlu0 %254
    %258 = vset.pattern.permute.xlu0 0
    %259 = vperm.xlu0 %258, %v85
    %v260 = vpop.permute.xlu0 %259
    %263 = vset.pattern.permute.xlu0 0
    %264 = vperm.xlu0 %263, %v86
    %v265 = vpop.permute.xlu0 %264
    %268 = vset.pattern.permute.xlu0 0
    %269 = vperm.xlu0 %268, %v87
    %v270 = vpop.permute.xlu0 %269
    %273 = vset.pattern.permute.xlu0 0
    %274 = vperm.xlu0 %273, %v88
    %v275 = vpop.permute.xlu0 %274
    %278 = vset.pattern.permute.xlu0 0
    %279 = vperm.xlu0 %278, %v89
    %v280 = vpop.permute.xlu0 %279
    %283 = vset.pattern.permute.xlu0 0
    %284 = vperm.xlu0 %283, %v90
    %v285 = vpop.permute.xlu0 %284
    %288 = vset.pattern.permute.xlu0 0
    %289 = vperm.xlu0 %288, %v91
    %v290 = vpop.permute.xlu0 %289
    %293 = vset.pattern.permute.xlu0 0
    %294 = vperm.xlu0 %293, %v92
    %v295 = vpop.permute.xlu0 %294
    %298 = vset.pattern.permute.xlu0 0
    %299 = vperm.xlu0 %298, %v93
    %v300 = vpop.permute.xlu0 %299
    %303 = vset.pattern.permute.xlu0 0
    %304 = vperm.xlu0 %303, %v94
    %v305 = vpop.permute.xlu0 %304
    %308 = vset.pattern.permute.xlu0 0
    %309 = vperm.xlu0 %308, %v95
    %v310 = vpop.permute.xlu0 %309
    %313 = vset.pattern.permute.xlu0 0
    %314 = vperm.xlu0 %313, %v96
    %v315 = vpop.permute.xlu0 %314
    %318 = vset.pattern.permute.xlu0 0
    %319 = vperm.xlu0 %318, %v97
    %v320 = vpop.permute.xlu0 %319
    %323 = vset.pattern.permute.xlu0 0
    %324 = vperm.xlu0 %323, %v98
    %v325 = vpop.permute.xlu0 %324
    %328 = vset.pattern.permute.xlu0 0
    %329 = vperm.xlu0 %328, %v99
    %v330 = vpop.permute.xlu0 %329
    %333 = vset.pattern.permute.xlu0 0
    %334 = vperm.xlu0 %333, %v100
    %v335 = vpop.permute.xlu0 %334
    %338 = vset.pattern.permute.xlu0 0
    %339 = vperm.xlu0 %338, %v101
    %v340 = vpop.permute.xlu0 %339
    %343 = vset.pattern.permute.xlu0 0
    %344 = vperm.xlu0 %343, %v102
    %v345 = vpop.permute.xlu0 %344
    %348 = vset.pattern.permute.xlu0 0
    %349 = vperm.xlu0 %348, %v103
    %v350 = vpop.permute.xlu0 %349
    %353 = vset.pattern.permute.xlu0 0
    %354 = vperm.xlu0 %353, %v104
    %v355 = vpop.permute.xlu0 %354
    %358 = vset.pattern.permute.xlu0 0
    %359 = vperm.xlu0 %358, %v105
    %v360 = vpop.permute.xlu0 %359
    %363 = vset.pattern.permute.xlu0 0
    %364 = vperm.xlu0 %363, %v106
    %v365 = vpop.permute.xlu0 %364
    %368 = vset.pattern.permute.xlu0 0
    %369 = vperm.xlu0 %368, %v107
    %v370 = vpop.permute.xlu0 %369
    %373 = vset.pattern.permute.xlu0 0
    %374 = vperm.xlu0 %373, %v108
    %v375 = vpop.permute.xlu0 %374
    %378 = vset.pattern.permute.xlu0 0
    %379 = vperm.xlu0 %378, %v109
    %v380 = vpop.permute.xlu0 %379
    %383 = vset.pattern.permute.xlu0 0
    %384 = vperm.xlu0 %383, %v110
    %v385 = vpop.permute.xlu0 %384
    %388 = vset.pattern.permute.xlu0 0
    %389 = vperm.xlu0 %388, %v111
    %v390 = vpop.permute.xlu0 %389
    %393 = vset.pattern.permute.xlu0 0
    %394 = vperm.xlu0 %393, %v112
    %v395 = vpop.permute.xlu0 %394
    %398 = vset.pattern.permute.xlu0 0
    %399 = vperm.xlu0 %398, %v113
    %v400 = vpop.permute.xlu0 %399
    %403 = vset.pattern.permute.xlu0 0
    %404 = vperm.xlu0 %403, %v114
    %v405 = vpop.permute.xlu0 %404
    %408 = vset.pattern.permute.xlu0 0
    %409 = vperm.xlu0 %408, %v115
    %v410 = vpop.permute.xlu0 %409
    %413 = vset.pattern.permute.xlu0 0
    %414 = vperm.xlu0 %413, %v116
    %v415 = vpop.permute.xlu0 %414
    %418 = vset.pattern.permute.xlu0 0
    %419 = vperm.xlu0 %418, %v117
    %v420 = vpop.permute.xlu0 %419
    %423 = vset.pattern.permute.xlu0 0
    %424 = vperm.xlu0 %423, %v118
    %v425 = vpop.permute.xlu0 %424
    %428 = vset.pattern.permute.xlu0 0
    %429 = vperm.xlu0 %428, %v119
    %v430 = vpop.permute.xlu0 %429
    %433 = vset.pattern.permute.xlu0 0
    %434 = vperm.xlu0 %433, %v120
    %v435 = vpop.permute.xlu0 %434
    %438 = vset.pattern.permute.xlu0 0
    %439 = vperm.xlu0 %438, %v121
    %v440 = vpop.permute.xlu0 %439
    %443 = vset.pattern.permute.xlu0 0
    %444 = vperm.xlu0 %443, %v122
    %v445 = vpop.permute.xlu0 %444
    %v448 = vlaneseq
    %v449 = vshrl.u32 %v448, 7
    %v450 = vsub.s32 0, %v449
    %v451 = vrot.slane %v124, %v450
    %v453 = vmul.f32 %v130, %v451
    %v454 = vmul.f32 %v135, %v451
    %v455 = vmul.f32 %v140, %v451
    %v456 = vmul.f32 %v145, %v451
    %v457 = vmul.f32 %v150, %v451
    %v458 = vmul.f32 %v155, %v451
    %v459 = vmul.f32 %v160, %v451
    %v460 = vmul.f32 %v165, %v451
    %v461 = vmul.f32 %v170, %v451
    %v462 = vmul.f32 %v175, %v451
    %v463 = vmul.f32 %v180, %v451
    %v464 = vmul.f32 %v185, %v451
    %v465 = vmul.f32 %v190, %v451
    %v466 = vmul.f32 %v195, %v451
    %v467 = vmul.f32 %v200, %v451
    %v468 = vmul.f32 %v205, %v451
    %v469 = vmul.f32 %v210, %v451
    %v470 = vmul.f32 %v215, %v451
    %v471 = vmul.f32 %v220, %v451
    %v472 = vmul.f32 %v225, %v451
    %v473 = vmul.f32 %v230, %v451
    %v474 = vmul.f32 %v235, %v451
    %v475 = vmul.f32 %v240, %v451
    %v476 = vmul.f32 %v245, %v451
    %v477 = vmul.f32 %v250, %v451
    %v478 = vmul.f32 %v255, %v451
    %v479 = vmul.f32 %v260, %v451
    %v480 = vmul.f32 %v265, %v451
    %v481 = vmul.f32 %v270, %v451
    %v482 = vmul.f32 %v275, %v451
    %v483 = vmul.f32 %v280, %v451
    %v484 = vmul.f32 %v285, %v451
    %v485 = vmul.f32 %v290, %v451
    %v486 = vmul.f32 %v295, %v451
    %v487 = vmul.f32 %v300, %v451
    %v488 = vmul.f32 %v305, %v451
    %v489 = vmul.f32 %v310, %v451
    %v490 = vmul.f32 %v315, %v451
    %v491 = vmul.f32 %v320, %v451
    %v492 = vmul.f32 %v325, %v451
    %v493 = vmul.f32 %v330, %v451
    %v494 = vmul.f32 %v335, %v451
    %v495 = vmul.f32 %v340, %v451
    %v496 = vmul.f32 %v345, %v451
    %v497 = vmul.f32 %v350, %v451
    %v498 = vmul.f32 %v355, %v451
    %v499 = vmul.f32 %v360, %v451
    %v500 = vmul.f32 %v365, %v451
    %v501 = vmul.f32 %v370, %v451
    %v502 = vmul.f32 %v375, %v451
    %v503 = vmul.f32 %v380, %v451
    %v504 = vmul.f32 %v385, %v451
    %v505 = vmul.f32 %v390, %v451
    %v506 = vmul.f32 %v395, %v451
    %v507 = vmul.f32 %v400, %v451
    %v508 = vmul.f32 %v405, %v451
    %v509 = vmul.f32 %v410, %v451
    %v510 = vmul.f32 %v415, %v451
    %v511 = vmul.f32 %v420, %v451
    %v512 = vmul.f32 %v425, %v451
    %v513 = vmul.f32 %v430, %v451
    %v514 = vmul.f32 %v435, %v451
    %v515 = vmul.f32 %v440, %v451
    %v516 = vmul.f32 %v445, %v451
    %518 = vset.pattern.permute.xlu0 0
    %519 = vperm.xlu0 %518, %v123
    %v520 = vpop.permute.xlu0 %519
    %v523 = vlaneseq
    %v524 = vshrl.u32 %v523, 7
    %v525 = vsub.s32 0, %v524
    %v526 = vrot.slane %v125, %v525
    %v528 = vmul.f32 %v135, %v526
    %v529 = vmul.f32 %v140, %v526
    %v530 = vmul.f32 %v145, %v526
    %v531 = vmul.f32 %v150, %v526
    %v532 = vmul.f32 %v155, %v526
    %v533 = vmul.f32 %v160, %v526
    %v534 = vmul.f32 %v165, %v526
    %v535 = vmul.f32 %v170, %v526
    %v536 = vmul.f32 %v175, %v526
    %v537 = vmul.f32 %v180, %v526
    %v538 = vmul.f32 %v185, %v526
    %v539 = vmul.f32 %v190, %v526
    %v540 = vmul.f32 %v195, %v526
    %v541 = vmul.f32 %v200, %v526
    %v542 = vmul.f32 %v205, %v526
    %v543 = vmul.f32 %v210, %v526
    %v544 = vmul.f32 %v215, %v526
    %v545 = vmul.f32 %v220, %v526
    %v546 = vmul.f32 %v225, %v526
    %v547 = vmul.f32 %v230, %v526
    %v548 = vmul.f32 %v235, %v526
    %v549 = vmul.f32 %v240, %v526
    %v550 = vmul.f32 %v245, %v526
    %v551 = vmul.f32 %v250, %v526
    %v552 = vmul.f32 %v255, %v526
    %v553 = vmul.f32 %v260, %v526
    %v554 = vmul.f32 %v265, %v526
    %v555 = vmul.f32 %v270, %v526
    %v556 = vmul.f32 %v275, %v526
    %v557 = vmul.f32 %v280, %v526
    %v558 = vmul.f32 %v285, %v526
    %v559 = vmul.f32 %v290, %v526
    %v560 = vmul.f32 %v295, %v526
    %v561 = vmul.f32 %v300, %v526
    %v562 = vmul.f32 %v305, %v526
    %v563 = vmul.f32 %v310, %v526
    %v564 = vmul.f32 %v315, %v526
    %v565 = vmul.f32 %v320, %v526
    %v566 = vmul.f32 %v325, %v526
    %v567 = vmul.f32 %v330, %v526
    %v568 = vmul.f32 %v335, %v526
    %v569 = vmul.f32 %v340, %v526
    %v570 = vmul.f32 %v345, %v526
    %v571 = vmul.f32 %v350, %v526
    %v572 = vmul.f32 %v355, %v526
    %v573 = vmul.f32 %v360, %v526
    %v574 = vmul.f32 %v365, %v526
    %v575 = vmul.f32 %v370, %v526
    %v576 = vmul.f32 %v375, %v526
    %v577 = vmul.f32 %v380, %v526
    %v578 = vmul.f32 %v385, %v526
    %v579 = vmul.f32 %v390, %v526
    %v580 = vmul.f32 %v395, %v526
    %v581 = vmul.f32 %v400, %v526
    %v582 = vmul.f32 %v405, %v526
    %v583 = vmul.f32 %v410, %v526
    %v584 = vmul.f32 %v415, %v526
    %v585 = vmul.f32 %v420, %v526
    %v586 = vmul.f32 %v425, %v526
    %v587 = vmul.f32 %v430, %v526
    %v588 = vmul.f32 %v435, %v526
    %v589 = vmul.f32 %v440, %v526
    %v590 = vmul.f32 %v445, %v526
    %v591 = vmul.f32 %v520, %v526
    %v592 = vadd.f32 %v453, %v528
    %v593 = vadd.f32 %v454, %v529
    %v594 = vadd.f32 %v455, %v530
    %v595 = vadd.f32 %v456, %v531
    %v596 = vadd.f32 %v457, %v532
    %v597 = vadd.f32 %v458, %v533
    %v598 = vadd.f32 %v459, %v534
    %v599 = vadd.f32 %v460, %v535
    %v600 = vadd.f32 %v461, %v536
    %v601 = vadd.f32 %v462, %v537
    %v602 = vadd.f32 %v463, %v538
    %v603 = vadd.f32 %v464, %v539
    %v604 = vadd.f32 %v465, %v540
    %v605 = vadd.f32 %v466, %v541
    %v606 = vadd.f32 %v467, %v542
    %v607 = vadd.f32 %v468, %v543
    %v608 = vadd.f32 %v469, %v544
    %v609 = vadd.f32 %v470, %v545
    %v610 = vadd.f32 %v471, %v546
    %v611 = vadd.f32 %v472, %v547
    %v612 = vadd.f32 %v473, %v548
    %v613 = vadd.f32 %v474, %v549
    %v614 = vadd.f32 %v475, %v550
    %v615 = vadd.f32 %v476, %v551
    %v616 = vadd.f32 %v477, %v552
    %v617 = vadd.f32 %v478, %v553
    %v618 = vadd.f32 %v479, %v554
    %v619 = vadd.f32 %v480, %v555
    %v620 = vadd.f32 %v481, %v556
    %v621 = vadd.f32 %v482, %v557
    %v622 = vadd.f32 %v483, %v558
    %v623 = vadd.f32 %v484, %v559
    %v624 = vadd.f32 %v485, %v560
    %v625 = vadd.f32 %v486, %v561
    %v626 = vadd.f32 %v487, %v562
    %v627 = vadd.f32 %v488, %v563
    %v628 = vadd.f32 %v489, %v564
    %v629 = vadd.f32 %v490, %v565
    %v630 = vadd.f32 %v491, %v566
    %v631 = vadd.f32 %v492, %v567
    %v632 = vadd.f32 %v493, %v568
    %v633 = vadd.f32 %v494, %v569
    %v634 = vadd.f32 %v495, %v570
    %v635 = vadd.f32 %v496, %v571
    %v636 = vadd.f32 %v497, %v572
    %v637 = vadd.f32 %v498, %v573
    %v638 = vadd.f32 %v499, %v574
    %v639 = vadd.f32 %v500, %v575
    %v640 = vadd.f32 %v501, %v576
    %v641 = vadd.f32 %v502, %v577
    %v642 = vadd.f32 %v503, %v578
    %v643 = vadd.f32 %v504, %v579
    %v644 = vadd.f32 %v505, %v580
    %v645 = vadd.f32 %v506, %v581
    %v646 = vadd.f32 %v507, %v582
    %v647 = vadd.f32 %v508, %v583
    %v648 = vadd.f32 %v509, %v584
    %v649 = vadd.f32 %v510, %v585
    %v650 = vadd.f32 %v511, %v586
    %v651 = vadd.f32 %v512, %v587
    %v652 = vadd.f32 %v513, %v588
    %v653 = vadd.f32 %v514, %v589
    %v654 = vadd.f32 %v515, %v590
    %v655 = vadd.f32 %v516, %v591
    %v657 = vlaneseq
    %v658 = vshrl.u32 %v657, 7
    %v659 = vsub.s32 0, %v658
    %v660 = vrot.slane %v126, %v659
    %v662 = vmul.f32 %v140, %v660
    %v663 = vmul.f32 %v145, %v660
    %v664 = vmul.f32 %v150, %v660
    %v665 = vmul.f32 %v155, %v660
    %v666 = vmul.f32 %v160, %v660
    %v667 = vmul.f32 %v165, %v660
    %v668 = vmul.f32 %v170, %v660
    %v669 = vmul.f32 %v175, %v660
    %v670 = vmul.f32 %v180, %v660
    %v671 = vmul.f32 %v185, %v660
    %v672 = vmul.f32 %v190, %v660
    %v673 = vmul.f32 %v195, %v660
    %v674 = vmul.f32 %v200, %v660
    %v675 = vmul.f32 %v205, %v660
    %v676 = vmul.f32 %v210, %v660
    %v677 = vmul.f32 %v215, %v660
    %v678 = vmul.f32 %v220, %v660
    %v679 = vmul.f32 %v225, %v660
    %v680 = vmul.f32 %v230, %v660
    %v681 = vmul.f32 %v235, %v660
    %v682 = vmul.f32 %v240, %v660
    %v683 = vmul.f32 %v245, %v660
    %v684 = vmul.f32 %v250, %v660
    %v685 = vmul.f32 %v255, %v660
    %v686 = vmul.f32 %v260, %v660
    %v687 = vmul.f32 %v265, %v660
    %v688 = vmul.f32 %v270, %v660
    %v689 = vmul.f32 %v275, %v660
    %v690 = vmul.f32 %v280, %v660
    %v691 = vmul.f32 %v285, %v660
    %v692 = vmul.f32 %v290, %v660
    %v693 = vmul.f32 %v295, %v660
    %v694 = vmul.f32 %v300, %v660
    %v695 = vmul.f32 %v305, %v660
    %v696 = vmul.f32 %v310, %v660
    %v697 = vmul.f32 %v315, %v660
    %v698 = vmul.f32 %v320, %v660
    %v699 = vmul.f32 %v325, %v660
    %v700 = vmul.f32 %v330, %v660
    %v701 = vmul.f32 %v335, %v660
    %v702 = vmul.f32 %v340, %v660
    %v703 = vmul.f32 %v345, %v660
    %v704 = vmul.f32 %v350, %v660
    %v705 = vmul.f32 %v355, %v660
    %v706 = vmul.f32 %v360, %v660
    %v707 = vmul.f32 %v365, %v660
    %v708 = vmul.f32 %v370, %v660
    %v709 = vmul.f32 %v375, %v660
    %v710 = vmul.f32 %v380, %v660
    %v711 = vmul.f32 %v385, %v660
    %v712 = vmul.f32 %v390, %v660
    %v713 = vmul.f32 %v395, %v660
    %v714 = vmul.f32 %v400, %v660
    %v715 = vmul.f32 %v405, %v660
    %v716 = vmul.f32 %v410, %v660
    %v717 = vmul.f32 %v415, %v660
    %v718 = vmul.f32 %v420, %v660
    %v719 = vmul.f32 %v425, %v660
    %v720 = vmul.f32 %v430, %v660
    %v721 = vmul.f32 %v435, %v660
    %v722 = vmul.f32 %v440, %v660
    %v723 = vmul.f32 %v445, %v660
    %v724 = vmul.f32 %v520, %v660
    %v725 = vmul.f32 %v130, %v660
    %v726 = vadd.f32 %v592, %v662
    %v727 = vadd.f32 %v593, %v663
    %v728 = vadd.f32 %v594, %v664
    %v729 = vadd.f32 %v595, %v665
    %v730 = vadd.f32 %v596, %v666
    %v731 = vadd.f32 %v597, %v667
    %v732 = vadd.f32 %v598, %v668
    %v733 = vadd.f32 %v599, %v669
    %v734 = vadd.f32 %v600, %v670
    %v735 = vadd.f32 %v601, %v671
    %v736 = vadd.f32 %v602, %v672
    %v737 = vadd.f32 %v603, %v673
    %v738 = vadd.f32 %v604, %v674
    %v739 = vadd.f32 %v605, %v675
    %v740 = vadd.f32 %v606, %v676
    %v741 = vadd.f32 %v607, %v677
    %v742 = vadd.f32 %v608, %v678
    %v743 = vadd.f32 %v609, %v679
    %v744 = vadd.f32 %v610, %v680
    %v745 = vadd.f32 %v611, %v681
    %v746 = vadd.f32 %v612, %v682
    %v747 = vadd.f32 %v613, %v683
    %v748 = vadd.f32 %v614, %v684
    %v749 = vadd.f32 %v615, %v685
    %v750 = vadd.f32 %v616, %v686
    %v751 = vadd.f32 %v617, %v687
    %v752 = vadd.f32 %v618, %v688
    %v753 = vadd.f32 %v619, %v689
    %v754 = vadd.f32 %v620, %v690
    %v755 = vadd.f32 %v621, %v691
    %v756 = vadd.f32 %v622, %v692
    %v757 = vadd.f32 %v623, %v693
    %v758 = vadd.f32 %v624, %v694
    %v759 = vadd.f32 %v625, %v695
    %v760 = vadd.f32 %v626, %v696
    %v761 = vadd.f32 %v627, %v697
    %v762 = vadd.f32 %v628, %v698
    %v763 = vadd.f32 %v629, %v699
    %v764 = vadd.f32 %v630, %v700
    %v765 = vadd.f32 %v631, %v701
    %v766 = vadd.f32 %v632, %v702
    %v767 = vadd.f32 %v633, %v703
    %v768 = vadd.f32 %v634, %v704
    %v769 = vadd.f32 %v635, %v705
    %v770 = vadd.f32 %v636, %v706
    %v771 = vadd.f32 %v637, %v707
    %v772 = vadd.f32 %v638, %v708
    %v773 = vadd.f32 %v639, %v709
    %v774 = vadd.f32 %v640, %v710
    %v775 = vadd.f32 %v641, %v711
    %v776 = vadd.f32 %v642, %v712
    %v777 = vadd.f32 %v643, %v713
    %v778 = vadd.f32 %v644, %v714
    %v779 = vadd.f32 %v645, %v715
    %v780 = vadd.f32 %v646, %v716
    %v781 = vadd.f32 %v647, %v717
    %v782 = vadd.f32 %v648, %v718
    %v783 = vadd.f32 %v649, %v719
    %v784 = vadd.f32 %v650, %v720
    %v785 = vadd.f32 %v651, %v721
    %v786 = vadd.f32 %v652, %v722
    %v787 = vadd.f32 %v653, %v723
    %v788 = vadd.f32 %v654, %v724
    %v789 = vadd.f32 %v655, %v725
    %v790 = vld [vmem:[%s2] sm:$0x1]
    %v792 = vlaneseq
    %v793 = vshrl.u32 %v792, 7
    %v794 = vsub.s32 0, %v793
    %v795 = vrot.slane %v790, %v794
    %v797 = vadd.f32 %v726, %v795
    %v798 = vadd.f32 %v727, %v795
    %v799 = vadd.f32 %v728, %v795
    %v800 = vadd.f32 %v729, %v795
    %v801 = vadd.f32 %v730, %v795
    %v802 = vadd.f32 %v731, %v795
    %v803 = vadd.f32 %v732, %v795
    %v804 = vadd.f32 %v733, %v795
    %v805 = vadd.f32 %v734, %v795
    %v806 = vadd.f32 %v735, %v795
    %v807 = vadd.f32 %v736, %v795
    %v808 = vadd.f32 %v737, %v795
    %v809 = vadd.f32 %v738, %v795
    %v810 = vadd.f32 %v739, %v795
    %v811 = vadd.f32 %v740, %v795
    %v812 = vadd.f32 %v741, %v795
    %v813 = vadd.f32 %v742, %v795
    %v814 = vadd.f32 %v743, %v795
    %v815 = vadd.f32 %v744, %v795
    %v816 = vadd.f32 %v745, %v795
    %v817 = vadd.f32 %v746, %v795
    %v818 = vadd.f32 %v747, %v795
    %v819 = vadd.f32 %v748, %v795
    %v820 = vadd.f32 %v749, %v795
    %v821 = vadd.f32 %v750, %v795
    %v822 = vadd.f32 %v751, %v795
    %v823 = vadd.f32 %v752, %v795
    %v824 = vadd.f32 %v753, %v795
    %v825 = vadd.f32 %v754, %v795
    %v826 = vadd.f32 %v755, %v795
    %v827 = vadd.f32 %v756, %v795
    %v828 = vadd.f32 %v757, %v795
    %v829 = vadd.f32 %v758, %v795
    %v830 = vadd.f32 %v759, %v795
    %v831 = vadd.f32 %v760, %v795
    %v832 = vadd.f32 %v761, %v795
    %v833 = vadd.f32 %v762, %v795
    %v834 = vadd.f32 %v763, %v795
    %v835 = vadd.f32 %v764, %v795
    %v836 = vadd.f32 %v765, %v795
    %v837 = vadd.f32 %v766, %v795
    %v838 = vadd.f32 %v767, %v795
    %v839 = vadd.f32 %v768, %v795
    %v840 = vadd.f32 %v769, %v795
    %v841 = vadd.f32 %v770, %v795
    %v842 = vadd.f32 %v771, %v795
    %v843 = vadd.f32 %v772, %v795
    %v844 = vadd.f32 %v773, %v795
    %v845 = vadd.f32 %v774, %v795
    %v846 = vadd.f32 %v775, %v795
    %v847 = vadd.f32 %v776, %v795
    %v848 = vadd.f32 %v777, %v795
    %v849 = vadd.f32 %v778, %v795
    %v850 = vadd.f32 %v779, %v795
    %v851 = vadd.f32 %v780, %v795
    %v852 = vadd.f32 %v781, %v795
    %v853 = vadd.f32 %v782, %v795
    %v854 = vadd.f32 %v783, %v795
    %v855 = vadd.f32 %v784, %v795
    %v856 = vadd.f32 %v785, %v795
    %v857 = vadd.f32 %v786, %v795
    %v858 = vadd.f32 %v787, %v795
    %v859 = vadd.f32 %v788, %v795
    %v860 = vadd.f32 %v789, %v795
    %v861 = vmax.f32 %v797, 0.0
    %v862 = vmax.f32 %v798, 0.0
    %v863 = vmax.f32 %v799, 0.0
    %v864 = vmax.f32 %v800, 0.0
    %v865 = vmax.f32 %v801, 0.0
    %v866 = vmax.f32 %v802, 0.0
    %v867 = vmax.f32 %v803, 0.0
    %v868 = vmax.f32 %v804, 0.0
    %v869 = vmax.f32 %v805, 0.0
    %v870 = vmax.f32 %v806, 0.0
    %v871 = vmax.f32 %v807, 0.0
    %v872 = vmax.f32 %v808, 0.0
    %v873 = vmax.f32 %v809, 0.0
    %v874 = vmax.f32 %v810, 0.0
    %v875 = vmax.f32 %v811, 0.0
    %v876 = vmax.f32 %v812, 0.0
    %v877 = vmax.f32 %v813, 0.0
    %v878 = vmax.f32 %v814, 0.0
    %v879 = vmax.f32 %v815, 0.0
    %v880 = vmax.f32 %v816, 0.0
    %v881 = vmax.f32 %v817, 0.0
    %v882 = vmax.f32 %v818, 0.0
    %v883 = vmax.f32 %v819, 0.0
    %v884 = vmax.f32 %v820, 0.0
    %v885 = vmax.f32 %v821, 0.0
    %v886 = vmax.f32 %v822, 0.0
    %v887 = vmax.f32 %v823, 0.0
    %v888 = vmax.f32 %v824, 0.0
    %v889 = vmax.f32 %v825, 0.0
    %v890 = vmax.f32 %v826, 0.0
    %v891 = vmax.f32 %v827, 0.0
    %v892 = vmax.f32 %v828, 0.0
    %v893 = vmax.f32 %v829, 0.0
    %v894 = vmax.f32 %v830, 0.0
    %v895 = vmax.f32 %v831, 0.0
    %v896 = vmax.f32 %v832, 0.0
    %v897 = vmax.f32 %v833, 0.0
    %v898 = vmax.f32 %v834, 0.0
    %v899 = vmax.f32 %v835, 0.0
    %v900 = vmax.f32 %v836, 0.0
    %v901 = vmax.f32 %v837, 0.0
    %v902 = vmax.f32 %v838, 0.0
    %v903 = vmax.f32 %v839, 0.0
    %v904 = vmax.f32 %v840, 0.0
    %v905 = vmax.f32 %v841, 0.0
    %v906 = vmax.f32 %v842, 0.0
    %v907 = vmax.f32 %v843, 0.0
    %v908 = vmax.f32 %v844, 0.0
    %v909 = vmax.f32 %v845, 0.0
    %v910 = vmax.f32 %v846, 0.0
    %v911 = vmax.f32 %v847, 0.0
    %v912 = vmax.f32 %v848, 0.0
    %v913 = vmax.f32 %v849, 0.0
    %v914 = vmax.f32 %v850, 0.0
    %v915 = vmax.f32 %v851, 0.0
    %v916 = vmax.f32 %v852, 0.0
    %v917 = vmax.f32 %v853, 0.0
    %v918 = vmax.f32 %v854, 0.0
    %v919 = vmax.f32 %v855, 0.0
    %v920 = vmax.f32 %v856, 0.0
    %v921 = vmax.f32 %v857, 0.0
    %v922 = vmax.f32 %v858, 0.0
    %v923 = vmax.f32 %v859, 0.0
    %v924 = vmax.f32 %v860, 0.0
    %v925 = vpack.c.bf16 %v861, %v861
    %v926 = vpack.c.bf16 %v862, %v862
    %v927 = vpack.c.bf16 %v863, %v863
    %v928 = vpack.c.bf16 %v864, %v864
    %v929 = vpack.c.bf16 %v865, %v865
    %v930 = vpack.c.bf16 %v866, %v866
    %v931 = vpack.c.bf16 %v867, %v867
    %v932 = vpack.c.bf16 %v868, %v868
    %v933 = vpack.c.bf16 %v869, %v869
    %v934 = vpack.c.bf16 %v870, %v870
    %v935 = vpack.c.bf16 %v871, %v871
    %v936 = vpack.c.bf16 %v872, %v872
    %v937 = vpack.c.bf16 %v873, %v873
    %v938 = vpack.c.bf16 %v874, %v874
    %v939 = vpack.c.bf16 %v875, %v875
    %v940 = vpack.c.bf16 %v876, %v876
    %v941 = vpack.c.bf16 %v877, %v877
    %v942 = vpack.c.bf16 %v878, %v878
    %v943 = vpack.c.bf16 %v879, %v879
    %v944 = vpack.c.bf16 %v880, %v880
    %v945 = vpack.c.bf16 %v881, %v881
    %v946 = vpack.c.bf16 %v882, %v882
    %v947 = vpack.c.bf16 %v883, %v883
    %v948 = vpack.c.bf16 %v884, %v884
    %v949 = vpack.c.bf16 %v885, %v885
    %v950 = vpack.c.bf16 %v886, %v886
    %v951 = vpack.c.bf16 %v887, %v887
    %v952 = vpack.c.bf16 %v888, %v888
    %v953 = vpack.c.bf16 %v889, %v889
    %v954 = vpack.c.bf16 %v890, %v890
    %v955 = vpack.c.bf16 %v891, %v891
    %v956 = vpack.c.bf16 %v892, %v892
    %v957 = vpack.c.bf16 %v893, %v893
    %v958 = vpack.c.bf16 %v894, %v894
    %v959 = vpack.c.bf16 %v895, %v895
    %v960 = vpack.c.bf16 %v896, %v896
    %v961 = vpack.c.bf16 %v897, %v897
    %v962 = vpack.c.bf16 %v898, %v898
    %v963 = vpack.c.bf16 %v899, %v899
    %v964 = vpack.c.bf16 %v900, %v900
    %v965 = vpack.c.bf16 %v901, %v901
    %v966 = vpack.c.bf16 %v902, %v902
    %v967 = vpack.c.bf16 %v903, %v903
    %v968 = vpack.c.bf16 %v904, %v904
    %v969 = vpack.c.bf16 %v905, %v905
    %v970 = vpack.c.bf16 %v906, %v906
    %v971 = vpack.c.bf16 %v907, %v907
    %v972 = vpack.c.bf16 %v908, %v908
    %v973 = vpack.c.bf16 %v909, %v909
    %v974 = vpack.c.bf16 %v910, %v910
    %v975 = vpack.c.bf16 %v911, %v911
    %v976 = vpack.c.bf16 %v912, %v912
    %v977 = vpack.c.bf16 %v913, %v913
    %v978 = vpack.c.bf16 %v914, %v914
    %v979 = vpack.c.bf16 %v915, %v915
    %v980 = vpack.c.bf16 %v916, %v916
    %v981 = vpack.c.bf16 %v917, %v917
    %v982 = vpack.c.bf16 %v918, %v918
    %v983 = vpack.c.bf16 %v919, %v919
    %v984 = vpack.c.bf16 %v920, %v920
    %v985 = vpack.c.bf16 %v921, %v921
    %v986 = vpack.c.bf16 %v922, %v922
    %v987 = vpack.c.bf16 %v923, %v923
    %v988 = vpack.c.bf16 %v924, %v924
    %v989 = vld [vmem:[%s3] sm:$0xf]
    %v990 = vld [vmem:[%s3 + $0x4] sm:$0xf]
    %s991 = scalar_lea.vmem %s3, 8
    %v992 = vld [vmem:[%s991] sm:$0xf]
    %v993 = vld [vmem:[%s991 + $0x4] sm:$0xf]
    %v1058 = vunpack.c.l.b16 %v925
    %v1059 = vunpack.c.l.b16 %v926
    %v1060 = vunpack.c.l.b16 %v927
    %v1061 = vunpack.c.l.b16 %v928
    %v1062 = vunpack.c.l.b16 %v929
    %v1063 = vunpack.c.l.b16 %v930
    %v1064 = vunpack.c.l.b16 %v931
    %v1065 = vunpack.c.l.b16 %v932
    %v1066 = vunpack.c.l.b16 %v933
    %v1067 = vunpack.c.l.b16 %v934
    %v1068 = vunpack.c.l.b16 %v935
    %v1069 = vunpack.c.l.b16 %v936
    %v1070 = vunpack.c.l.b16 %v937
    %v1071 = vunpack.c.l.b16 %v938
    %v1072 = vunpack.c.l.b16 %v939
    %v1073 = vunpack.c.l.b16 %v940
    %v1074 = vunpack.c.l.b16 %v941
    %v1075 = vunpack.c.l.b16 %v942
    %v1076 = vunpack.c.l.b16 %v943
    %v1077 = vunpack.c.l.b16 %v944
    %v1078 = vunpack.c.l.b16 %v945
    %v1079 = vunpack.c.l.b16 %v946
    %v1080 = vunpack.c.l.b16 %v947
    %v1081 = vunpack.c.l.b16 %v948
    %v1082 = vunpack.c.l.b16 %v949
    %v1083 = vunpack.c.l.b16 %v950
    %v1084 = vunpack.c.l.b16 %v951
    %v1085 = vunpack.c.l.b16 %v952
    %v1086 = vunpack.c.l.b16 %v953
    %v1087 = vunpack.c.l.b16 %v954
    %v1088 = vunpack.c.l.b16 %v955
    %v1089 = vunpack.c.l.b16 %v956
    %v1090 = vunpack.c.l.b16 %v957
    %v1091 = vunpack.c.l.b16 %v958
    %v1092 = vunpack.c.l.b16 %v959
    %v1093 = vunpack.c.l.b16 %v960
    %v1094 = vunpack.c.l.b16 %v961
    %v1095 = vunpack.c.l.b16 %v962
    %v1096 = vunpack.c.l.b16 %v963
    %v1097 = vunpack.c.l.b16 %v964
    %v1098 = vunpack.c.l.b16 %v965
    %v1099 = vunpack.c.l.b16 %v966
    %v1100 = vunpack.c.l.b16 %v967
    %v1101 = vunpack.c.l.b16 %v968
    %v1102 = vunpack.c.l.b16 %v969
    %v1103 = vunpack.c.l.b16 %v970
    %v1104 = vunpack.c.l.b16 %v971
    %v1105 = vunpack.c.l.b16 %v972
    %v1106 = vunpack.c.l.b16 %v973
    %v1107 = vunpack.c.l.b16 %v974
    %v1108 = vunpack.c.l.b16 %v975
    %v1109 = vunpack.c.l.b16 %v976
    %v1110 = vunpack.c.l.b16 %v977
    %v1111 = vunpack.c.l.b16 %v978
    %v1112 = vunpack.c.l.b16 %v979
    %v1113 = vunpack.c.l.b16 %v980
    %v1114 = vunpack.c.l.b16 %v981
    %v1115 = vunpack.c.l.b16 %v982
    %v1116 = vunpack.c.l.b16 %v983
    %v1117 = vunpack.c.l.b16 %v984
    %v1118 = vunpack.c.l.b16 %v985
    %v1119 = vunpack.c.l.b16 %v986
    %v1120 = vunpack.c.l.b16 %v987
    %v1121 = vunpack.c.l.b16 %v988
    %v1122 = vpack.c.b16 %v1059, %v1058
    %v1123 = vpack.c.b16 %v1061, %v1060
    %v1124 = vpack.c.b16 %v1063, %v1062
    %v1125 = vpack.c.b16 %v1065, %v1064
    %v1126 = vpack.c.b16 %v1067, %v1066
    %v1127 = vpack.c.b16 %v1069, %v1068
    %v1128 = vpack.c.b16 %v1071, %v1070
    %v1129 = vpack.c.b16 %v1073, %v1072
    %v1130 = vpack.c.b16 %v1075, %v1074
    %v1131 = vpack.c.b16 %v1077, %v1076
    %v1132 = vpack.c.b16 %v1079, %v1078
    %v1133 = vpack.c.b16 %v1081, %v1080
    %v1134 = vpack.c.b16 %v1083, %v1082
    %v1135 = vpack.c.b16 %v1085, %v1084
    %v1136 = vpack.c.b16 %v1087, %v1086
    %v1137 = vpack.c.b16 %v1089, %v1088
    %v1138 = vpack.c.b16 %v1091, %v1090
    %v1139 = vpack.c.b16 %v1093, %v1092
    %v1140 = vpack.c.b16 %v1095, %v1094
    %v1141 = vpack.c.b16 %v1097, %v1096
    %v1142 = vpack.c.b16 %v1099, %v1098
    %v1143 = vpack.c.b16 %v1101, %v1100
    %v1144 = vpack.c.b16 %v1103, %v1102
    %v1145 = vpack.c.b16 %v1105, %v1104
    %v1146 = vpack.c.b16 %v1107, %v1106
    %v1147 = vpack.c.b16 %v1109, %v1108
    %v1148 = vpack.c.b16 %v1111, %v1110
    %v1149 = vpack.c.b16 %v1113, %v1112
    %v1150 = vpack.c.b16 %v1115, %v1114
    %v1151 = vpack.c.b16 %v1117, %v1116
    %v1152 = vpack.c.b16 %v1119, %v1118
    %v1153 = vpack.c.b16 %v1121, %v1120
    %v1156 = vunpack.c.l.b16 %v992
    %v1157 = vunpack.c.l.b16 %v993
    %v1158 = vpack.c.b16 %v1157, %v1156
    %vm1160 = vcmask 130048
    %v1162 = vsel %vm1160, %v1122, 0
    %v1165 = vsel %vm1160, %v1123, 0
    %v1168 = vsel %vm1160, %v1124, 0
    %v1171 = vsel %vm1160, %v1125, 0
    %v1174 = vsel %vm1160, %v1126, 0
    %v1177 = vsel %vm1160, %v1127, 0
    %v1180 = vsel %vm1160, %v1128, 0
    %v1183 = vsel %vm1160, %v1129, 0
    %v1186 = vsel %vm1160, %v1130, 0
    %v1189 = vsel %vm1160, %v1131, 0
    %v1192 = vsel %vm1160, %v1132, 0
    %v1195 = vsel %vm1160, %v1133, 0
    %v1198 = vsel %vm1160, %v1134, 0
    %v1201 = vsel %vm1160, %v1135, 0
    %v1204 = vsel %vm1160, %v1136, 0
    %v1207 = vsel %vm1160, %v1137, 0
    %v1210 = vsel %vm1160, %v1138, 0
    %v1213 = vsel %vm1160, %v1139, 0
    %v1216 = vsel %vm1160, %v1140, 0
    %v1219 = vsel %vm1160, %v1141, 0
    %v1222 = vsel %vm1160, %v1142, 0
    %v1225 = vsel %vm1160, %v1143, 0
    %v1228 = vsel %vm1160, %v1144, 0
    %v1231 = vsel %vm1160, %v1145, 0
    %v1234 = vsel %vm1160, %v1146, 0
    %v1237 = vsel %vm1160, %v1147, 0
    %v1240 = vsel %vm1160, %v1148, 0
    %v1243 = vsel %vm1160, %v1149, 0
    %v1246 = vsel %vm1160, %v1150, 0
    %v1249 = vsel %vm1160, %v1151, 0
    %v1252 = vsel %vm1160, %v1152, 0
    %v1255 = vsel %vm1160, %v1153, 0
    %1257 = vmatprep.subr.bf16.mxu0 0
    %1258 = vmatpush1.bf16.msra.mxu0 %v1158
    %1259 = vmatprep.subr.bf16.mxu0 0
    %1260 = vmatpush1.bf16.msra.mxu0 0
    %1261 = vmatprep.subr.bf16.mxu0 0
    %1262 = vmatpush1.bf16.msra.mxu0 0
    %1263 = vmatprep.subr.bf16.mxu0 0
    %1264 = vmatpush1.bf16.msra.mxu0 0
    %1265 = vmatprep.subr.bf16.mxu0 0
    %1266 = vmatpush1.bf16.msra.mxu0 0
    %1267 = vmatprep.subr.bf16.mxu0 0
    %1268 = vmatpush1.bf16.msra.mxu0 0
    %1269 = vmatprep.subr.bf16.mxu0 0
    %1270 = vmatpush1.bf16.msra.mxu0 0
    %1271 = vmatprep.subr.bf16.mxu0 0
    %1272 = vmatpush1.bf16.msra.mxu0 0
    %1273 = vmatprep.subr.bf16.mxu0 0
    %1274 = vmatpush1.bf16.msra.mxu0 0
    %1275 = vmatprep.subr.bf16.mxu0 0
    %1276 = vmatpush1.bf16.msra.mxu0 0
    %1277 = vmatprep.subr.bf16.mxu0 0
    %1278 = vmatpush1.bf16.msra.mxu0 0
    %1279 = vmatprep.subr.bf16.mxu0 0
    %1280 = vmatpush1.bf16.msra.mxu0 0
    %1281 = vmatprep.subr.bf16.mxu0 0
    %1282 = vmatpush1.bf16.msra.mxu0 0
    %1283 = vmatprep.subr.bf16.mxu0 0
    %1284 = vmatpush1.bf16.msra.mxu0 0
    %1285 = vmatprep.subr.bf16.mxu0 0
    %1286 = vmatpush1.bf16.msra.mxu0 0
    %1287 = vmatprep.subr.bf16.mxu0 0
    %1288 = vmatpush1.bf16.msra.mxu0 0
    %1289 = vmatprep.mubr.bf16.mxu0 0
    %1290 = vmatmul.mubr.bf16.gmra.mrb[0].mxu0 %v1162
    %v1291 = vpop.f32.mrb[0].mxu0
    %v1292 = vadd.f32 0.0, %v1291
    %v1293 = vpop.f32.mrb[0].mxu0
    %v1294 = vpop.f32.mrb[0].mxu0
    %v1295 = vadd.f32 0.0, %v1294
    %v1296 = vpop.f32.mrb[0].mxu0
    %1297 = vmatprep.mubr.bf16.mxu0 0
    %1298 = vmatmul.mubr.bf16.gmra.mrb[0].mxu0 %v1165
    %v1299 = vpop.f32.mrb[0].mxu0
    %v1300 = vadd.f32 0.0, %v1299
    %v1301 = vpop.f32.mrb[0].mxu0
    %v1302 = vpop.f32.mrb[0].mxu0
    %v1303 = vadd.f32 0.0, %v1302
    %v1304 = vpop.f32.mrb[0].mxu0
    %1305 = vmatprep.mubr.bf16.mxu0 0
    %1306 = vmatmul.mubr.bf16.gmra.mrb[0].mxu0 %v1168
    %v1307 = vpop.f32.mrb[0].mxu0
    %v1308 = vadd.f32 0.0, %v1307
    %v1309 = vpop.f32.mrb[0].mxu0
    %v1310 = vpop.f32.mrb[0].mxu0
    %v1311 = vadd.f32 0.0, %v1310
    %v1312 = vpop.f32.mrb[0].mxu0
    %1313 = vmatprep.mubr.bf16.mxu0 0
    %1314 = vmatmul.mubr.bf16.gmra.mrb[0].mxu0 %v1171
    %v1315 = vpop.f32.mrb[0].mxu0
    %v1316 = vadd.f32 0.0, %v1315
    %v1317 = vpop.f32.mrb[0].mxu0
    %v1318 = vpop.f32.mrb[0].mxu0
    %v1319 = vadd.f32 0.0, %v1318
    %v1320 = vpop.f32.mrb[0].mxu0
    %1321 = vmatprep.mubr.bf16.mxu0 0
    %1322 = vmatmul.mubr.bf16.gmra.mrb[0].mxu0 %v1174
    %v1323 = vpop.f32.mrb[0].mxu0
    %v1324 = vadd.f32 0.0, %v1323
    %v1325 = vpop.f32.mrb[0].mxu0
    %v1326 = vpop.f32.mrb[0].mxu0
    %v1327 = vadd.f32 0.0, %v1326
    %v1328 = vpop.f32.mrb[0].mxu0
    %1329 = vmatprep.mubr.bf16.mxu0 0
    %1330 = vmatmul.mubr.bf16.gmra.mrb[0].mxu0 %v1177
    %v1331 = vpop.f32.mrb[0].mxu0
    %v1332 = vadd.f32 0.0, %v1331
    %v1333 = vpop.f32.mrb[0].mxu0
    %v1334 = vpop.f32.mrb[0].mxu0
    %v1335 = vadd.f32 0.0, %v1334
    %v1336 = vpop.f32.mrb[0].mxu0
    %1337 = vmatprep.mubr.bf16.mxu0 0
    %1338 = vmatmul.mubr.bf16.gmra.mrb[0].mxu0 %v1180
    %v1339 = vpop.f32.mrb[0].mxu0
    %v1340 = vadd.f32 0.0, %v1339
    %v1341 = vpop.f32.mrb[0].mxu0
    %v1342 = vpop.f32.mrb[0].mxu0
    %v1343 = vadd.f32 0.0, %v1342
    %v1344 = vpop.f32.mrb[0].mxu0
    %1345 = vmatprep.mubr.bf16.mxu0 0
    %1346 = vmatmul.mubr.bf16.gmra.mrb[0].mxu0 %v1183
    %v1347 = vpop.f32.mrb[0].mxu0
    %v1348 = vadd.f32 0.0, %v1347
    %v1349 = vpop.f32.mrb[0].mxu0
    %v1350 = vpop.f32.mrb[0].mxu0
    %v1351 = vadd.f32 0.0, %v1350
    %v1352 = vpop.f32.mrb[0].mxu0
    %1353 = vmatprep.mubr.bf16.mxu0 0
    %1354 = vmatmul.mubr.bf16.gmra.mrb[0].mxu0 %v1186
    %v1355 = vpop.f32.mrb[0].mxu0
    %v1356 = vadd.f32 0.0, %v1355
    %v1357 = vpop.f32.mrb[0].mxu0
    %v1358 = vpop.f32.mrb[0].mxu0
    %v1359 = vadd.f32 0.0, %v1358
    %v1360 = vpop.f32.mrb[0].mxu0
    %1361 = vmatprep.mubr.bf16.mxu0 0
    %1362 = vmatmul.mubr.bf16.gmra.mrb[0].mxu0 %v1189
    %v1363 = vpop.f32.mrb[0].mxu0
    %v1364 = vadd.f32 0.0, %v1363
    %v1365 = vpop.f32.mrb[0].mxu0
    %v1366 = vpop.f32.mrb[0].mxu0
    %v1367 = vadd.f32 0.0, %v1366
    %v1368 = vpop.f32.mrb[0].mxu0
    %1369 = vmatprep.mubr.bf16.mxu0 0
    %1370 = vmatmul.mubr.bf16.gmra.mrb[0].mxu0 %v1192
    %v1371 = vpop.f32.mrb[0].mxu0
    %v1372 = vadd.f32 0.0, %v1371
    %v1373 = vpop.f32.mrb[0].mxu0
    %v1374 = vpop.f32.mrb[0].mxu0
    %v1375 = vadd.f32 0.0, %v1374
    %v1376 = vpop.f32.mrb[0].mxu0
    %1377 = vmatprep.mubr.bf16.mxu0 0
    %1378 = vmatmul.mubr.bf16.gmra.mrb[0].mxu0 %v1195
    %v1379 = vpop.f32.mrb[0].mxu0
    %v1380 = vadd.f32 0.0, %v1379
    %v1381 = vpop.f32.mrb[0].mxu0
    %v1382 = vpop.f32.mrb[0].mxu0
    %v1383 = vadd.f32 0.0, %v1382
    %v1384 = vpop.f32.mrb[0].mxu0
    %1385 = vmatprep.mubr.bf16.mxu0 0
    %1386 = vmatmul.mubr.bf16.gmra.mrb[0].mxu0 %v1198
    %v1387 = vpop.f32.mrb[0].mxu0
    %v1388 = vadd.f32 0.0, %v1387
    %v1389 = vpop.f32.mrb[0].mxu0
    %v1390 = vpop.f32.mrb[0].mxu0
    %v1391 = vadd.f32 0.0, %v1390
    %v1392 = vpop.f32.mrb[0].mxu0
    %1393 = vmatprep.mubr.bf16.mxu0 0
    %1394 = vmatmul.mubr.bf16.gmra.mrb[0].mxu0 %v1201
    %v1395 = vpop.f32.mrb[0].mxu0
    %v1396 = vadd.f32 0.0, %v1395
    %v1397 = vpop.f32.mrb[0].mxu0
    %v1398 = vpop.f32.mrb[0].mxu0
    %v1399 = vadd.f32 0.0, %v1398
    %v1400 = vpop.f32.mrb[0].mxu0
    %1401 = vmatprep.mubr.bf16.mxu0 0
    %1402 = vmatmul.mubr.bf16.gmra.mrb[0].mxu0 %v1204
    %v1403 = vpop.f32.mrb[0].mxu0
    %v1404 = vadd.f32 0.0, %v1403
    %v1405 = vpop.f32.mrb[0].mxu0
    %v1406 = vpop.f32.mrb[0].mxu0
    %v1407 = vadd.f32 0.0, %v1406
    %v1408 = vpop.f32.mrb[0].mxu0
    %1409 = vmatprep.mubr.bf16.mxu0 0
    %1410 = vmatmul.mubr.bf16.gmra.mrb[0].mxu0 %v1207
    %v1411 = vpop.f32.mrb[0].mxu0
    %v1412 = vadd.f32 0.0, %v1411
    %v1413 = vpop.f32.mrb[0].mxu0
    %v1414 = vpop.f32.mrb[0].mxu0
    %v1415 = vadd.f32 0.0, %v1414
    %v1416 = vpop.f32.mrb[0].mxu0
    %1417 = vmatprep.mubr.bf16.mxu0 0
    %1418 = vmatmul.mubr.bf16.gmra.mrb[0].mxu0 %v1210
    %v1419 = vpop.f32.mrb[0].mxu0
    %v1420 = vadd.f32 0.0, %v1419
    %v1421 = vpop.f32.mrb[0].mxu0
    %v1422 = vpop.f32.mrb[0].mxu0
    %v1423 = vadd.f32 0.0, %v1422
    %v1424 = vpop.f32.mrb[0].mxu0
    %1425 = vmatprep.mubr.bf16.mxu0 0
    %1426 = vmatmul.mubr.bf16.gmra.mrb[0].mxu0 %v1213
    %v1427 = vpop.f32.mrb[0].mxu0
    %v1428 = vadd.f32 0.0, %v1427
    %v1429 = vpop.f32.mrb[0].mxu0
    %v1430 = vpop.f32.mrb[0].mxu0
    %v1431 = vadd.f32 0.0, %v1430
    %v1432 = vpop.f32.mrb[0].mxu0
    %1433 = vmatprep.mubr.bf16.mxu0 0
    %1434 = vmatmul.mubr.bf16.gmra.mrb[0].mxu0 %v1216
    %v1435 = vpop.f32.mrb[0].mxu0
    %v1436 = vadd.f32 0.0, %v1435
    %v1437 = vpop.f32.mrb[0].mxu0
    %v1438 = vpop.f32.mrb[0].mxu0
    %v1439 = vadd.f32 0.0, %v1438
    %v1440 = vpop.f32.mrb[0].mxu0
    %1441 = vmatprep.mubr.bf16.mxu0 0
    %1442 = vmatmul.mubr.bf16.gmra.mrb[0].mxu0 %v1219
    %v1443 = vpop.f32.mrb[0].mxu0
    %v1444 = vadd.f32 0.0, %v1443
    %v1445 = vpop.f32.mrb[0].mxu0
    %v1446 = vpop.f32.mrb[0].mxu0
    %v1447 = vadd.f32 0.0, %v1446
    %v1448 = vpop.f32.mrb[0].mxu0
    %1449 = vmatprep.mubr.bf16.mxu0 0
    %1450 = vmatmul.mubr.bf16.gmra.mrb[0].mxu0 %v1222
    %v1451 = vpop.f32.mrb[0].mxu0
    %v1452 = vadd.f32 0.0, %v1451
    %v1453 = vpop.f32.mrb[0].mxu0
    %v1454 = vpop.f32.mrb[0].mxu0
    %v1455 = vadd.f32 0.0, %v1454
    %v1456 = vpop.f32.mrb[0].mxu0
    %1457 = vmatprep.mubr.bf16.mxu0 0
    %1458 = vmatmul.mubr.bf16.gmra.mrb[0].mxu0 %v1225
    %v1459 = vpop.f32.mrb[0].mxu0
    %v1460 = vadd.f32 0.0, %v1459
    %v1461 = vpop.f32.mrb[0].mxu0
    %v1462 = vpop.f32.mrb[0].mxu0
    %v1463 = vadd.f32 0.0, %v1462
    %v1464 = vpop.f32.mrb[0].mxu0
    %1465 = vmatprep.mubr.bf16.mxu0 0
    %1466 = vmatmul.mubr.bf16.gmra.mrb[0].mxu0 %v1228
    %v1467 = vpop.f32.mrb[0].mxu0
    %v1468 = vadd.f32 0.0, %v1467
    %v1469 = vpop.f32.mrb[0].mxu0
    %v1470 = vpop.f32.mrb[0].mxu0
    %v1471 = vadd.f32 0.0, %v1470
    %v1472 = vpop.f32.mrb[0].mxu0
    %1473 = vmatprep.mubr.bf16.mxu0 0
    %1474 = vmatmul.mubr.bf16.gmra.mrb[0].mxu0 %v1231
    %v1475 = vpop.f32.mrb[0].mxu0
    %v1476 = vadd.f32 0.0, %v1475
    %v1477 = vpop.f32.mrb[0].mxu0
    %v1478 = vpop.f32.mrb[0].mxu0
    %v1479 = vadd.f32 0.0, %v1478
    %v1480 = vpop.f32.mrb[0].mxu0
    %1481 = vmatprep.mubr.bf16.mxu0 0
    %1482 = vmatmul.mubr.bf16.gmra.mrb[0].mxu0 %v1234
    %v1483 = vpop.f32.mrb[0].mxu0
    %v1484 = vadd.f32 0.0, %v1483
    %v1485 = vpop.f32.mrb[0].mxu0
    %v1486 = vpop.f32.mrb[0].mxu0
    %v1487 = vadd.f32 0.0, %v1486
    %v1488 = vpop.f32.mrb[0].mxu0
    %1489 = vmatprep.mubr.bf16.mxu0 0
    %1490 = vmatmul.mubr.bf16.gmra.mrb[0].mxu0 %v1237
    %v1491 = vpop.f32.mrb[0].mxu0
    %v1492 = vadd.f32 0.0, %v1491
    %v1493 = vpop.f32.mrb[0].mxu0
    %v1494 = vpop.f32.mrb[0].mxu0
    %v1495 = vadd.f32 0.0, %v1494
    %v1496 = vpop.f32.mrb[0].mxu0
    %1497 = vmatprep.mubr.bf16.mxu0 0
    %1498 = vmatmul.mubr.bf16.gmra.mrb[0].mxu0 %v1240
    %v1499 = vpop.f32.mrb[0].mxu0
    %v1500 = vadd.f32 0.0, %v1499
    %v1501 = vpop.f32.mrb[0].mxu0
    %v1502 = vpop.f32.mrb[0].mxu0
    %v1503 = vadd.f32 0.0, %v1502
    %v1504 = vpop.f32.mrb[0].mxu0
    %1505 = vmatprep.mubr.bf16.mxu0 0
    %1506 = vmatmul.mubr.bf16.gmra.mrb[0].mxu0 %v1243
    %v1507 = vpop.f32.mrb[0].mxu0
    %v1508 = vadd.f32 0.0, %v1507
    %v1509 = vpop.f32.mrb[0].mxu0
    %v1510 = vpop.f32.mrb[0].mxu0
    %v1511 = vadd.f32 0.0, %v1510
    %v1512 = vpop.f32.mrb[0].mxu0
    %1513 = vmatprep.mubr.bf16.mxu0 0
    %1514 = vmatmul.mubr.bf16.gmra.mrb[0].mxu0 %v1246
    %v1515 = vpop.f32.mrb[0].mxu0
    %v1516 = vadd.f32 0.0, %v1515
    %v1517 = vpop.f32.mrb[0].mxu0
    %v1518 = vpop.f32.mrb[0].mxu0
    %v1519 = vadd.f32 0.0, %v1518
    %v1520 = vpop.f32.mrb[0].mxu0
    %1521 = vmatprep.mubr.bf16.mxu0 0
    %1522 = vmatmul.mubr.bf16.gmra.mrb[0].mxu0 %v1249
    %v1523 = vpop.f32.mrb[0].mxu0
    %v1524 = vadd.f32 0.0, %v1523
    %v1525 = vpop.f32.mrb[0].mxu0
    %v1526 = vpop.f32.mrb[0].mxu0
    %v1527 = vadd.f32 0.0, %v1526
    %v1528 = vpop.f32.mrb[0].mxu0
    %1529 = vmatprep.mubr.bf16.mxu0 0
    %1530 = vmatmul.mubr.bf16.gmra.mrb[0].mxu0 %v1252
    %v1531 = vpop.f32.mrb[0].mxu0
    %v1532 = vadd.f32 0.0, %v1531
    %v1533 = vpop.f32.mrb[0].mxu0
    %v1534 = vpop.f32.mrb[0].mxu0
    %v1535 = vadd.f32 0.0, %v1534
    %v1536 = vpop.f32.mrb[0].mxu0
    %1537 = vmatprep.mubr.bf16.mxu0 0
    %1538 = vmatmul.mubr.bf16.gmra.mrb[0].mxu0 %v1255
    %v1539 = vpop.f32.mrb[0].mxu0
    %v1540 = vadd.f32 0.0, %v1539
    %v1541 = vpop.f32.mrb[0].mxu0
    %v1542 = vpop.f32.mrb[0].mxu0
    %v1543 = vadd.f32 0.0, %v1542
    %v1544 = vpop.f32.mrb[0].mxu0
    %1545 = vdwg.mxu0
    %v1547 = vunpack.c.l.b16 0
    %v1548 = vpack.c.b16 %v1058, %v1547
    %v1549 = vpack.c.b16 %v1060, %v1059
    %v1550 = vpack.c.b16 %v1062, %v1061
    %v1551 = vpack.c.b16 %v1064, %v1063
    %v1552 = vpack.c.b16 %v1066, %v1065
    %v1553 = vpack.c.b16 %v1068, %v1067
    %v1554 = vpack.c.b16 %v1070, %v1069
    %v1555 = vpack.c.b16 %v1072, %v1071
    %v1556 = vpack.c.b16 %v1074, %v1073
    %v1557 = vpack.c.b16 %v1076, %v1075
    %v1558 = vpack.c.b16 %v1078, %v1077
    %v1559 = vpack.c.b16 %v1080, %v1079
    %v1560 = vpack.c.b16 %v1082, %v1081
    %v1561 = vpack.c.b16 %v1084, %v1083
    %v1562 = vpack.c.b16 %v1086, %v1085
    %v1563 = vpack.c.b16 %v1088, %v1087
    %v1564 = vpack.c.b16 %v1090, %v1089
    %v1565 = vpack.c.b16 %v1092, %v1091
    %v1566 = vpack.c.b16 %v1094, %v1093
    %v1567 = vpack.c.b16 %v1096, %v1095
    %v1568 = vpack.c.b16 %v1098, %v1097
    %v1569 = vpack.c.b16 %v1100, %v1099
    %v1570 = vpack.c.b16 %v1102, %v1101
    %v1571 = vpack.c.b16 %v1104, %v1103
    %v1572 = vpack.c.b16 %v1106, %v1105
    %v1573 = vpack.c.b16 %v1108, %v1107
    %v1574 = vpack.c.b16 %v1110, %v1109
    %v1575 = vpack.c.b16 %v1112, %v1111
    %v1576 = vpack.c.b16 %v1114, %v1113
    %v1577 = vpack.c.b16 %v1116, %v1115
    %v1578 = vpack.c.b16 %v1118, %v1117
    %v1579 = vpack.c.b16 %v1120, %v1119
    %v1582 = vunpack.c.l.b16 %v989
    %v1583 = vunpack.c.l.b16 %v990
    %v1584 = vpack.c.b16 %v1583, %v1582
    %v1587 = vsel %vm1160, %v1548, 0
    %v1590 = vsel %vm1160, %v1549, 0
    %v1593 = vsel %vm1160, %v1550, 0
    %v1596 = vsel %vm1160, %v1551, 0
    %v1599 = vsel %vm1160, %v1552, 0
    %v1602 = vsel %vm1160, %v1553, 0
    %v1605 = vsel %vm1160, %v1554, 0
    %v1608 = vsel %vm1160, %v1555, 0
    %v1611 = vsel %vm1160, %v1556, 0
    %v1614 = vsel %vm1160, %v1557, 0
    %v1617 = vsel %vm1160, %v1558, 0
    %v1620 = vsel %vm1160, %v1559, 0
    %v1623 = vsel %vm1160, %v1560, 0
    %v1626 = vsel %vm1160, %v1561, 0
    %v1629 = vsel %vm1160, %v1562, 0
    %v1632 = vsel %vm1160, %v1563, 0
    %v1635 = vsel %vm1160, %v1564, 0
    %v1638 = vsel %vm1160, %v1565, 0
    %v1641 = vsel %vm1160, %v1566, 0
    %v1644 = vsel %vm1160, %v1567, 0
    %v1647 = vsel %vm1160, %v1568, 0
    %v1650 = vsel %vm1160, %v1569, 0
    %v1653 = vsel %vm1160, %v1570, 0
    %v1656 = vsel %vm1160, %v1571, 0
    %v1659 = vsel %vm1160, %v1572, 0
    %v1662 = vsel %vm1160, %v1573, 0
    %v1665 = vsel %vm1160, %v1574, 0
    %v1668 = vsel %vm1160, %v1575, 0
    %v1671 = vsel %vm1160, %v1576, 0
    %v1674 = vsel %vm1160, %v1577, 0
    %v1677 = vsel %vm1160, %v1578, 0
    %v1680 = vsel %vm1160, %v1579, 0
    %1682 = vmatprep.subr.bf16.mxu0 0
    %1683 = vmatpush1.bf16.msra.mxu0 %v1584
    %1684 = vmatprep.subr.bf16.mxu0 0
    %1685 = vmatpush1.bf16.msra.mxu0 0
    %1686 = vmatprep.subr.bf16.mxu0 0
    %1687 = vmatpush1.bf16.msra.mxu0 0
    %1688 = vmatprep.subr.bf16.mxu0 0
    %1689 = vmatpush1.bf16.msra.mxu0 0
    %1690 = vmatprep.subr.bf16.mxu0 0
    %1691 = vmatpush1.bf16.msra.mxu0 0
    %1692 = vmatprep.subr.bf16.mxu0 0
    %1693 = vmatpush1.bf16.msra.mxu0 0
    %1694 = vmatprep.subr.bf16.mxu0 0
    %1695 = vmatpush1.bf16.msra.mxu0 0
    %1696 = vmatprep.subr.bf16.mxu0 0
    %1697 = vmatpush1.bf16.msra.mxu0 0
    %1698 = vmatprep.subr.bf16.mxu0 0
    %1699 = vmatpush1.bf16.msra.mxu0 0
    %1700 = vmatprep.subr.bf16.mxu0 0
    %1701 = vmatpush1.bf16.msra.mxu0 0
    %1702 = vmatprep.subr.bf16.mxu0 0
    %1703 = vmatpush1.bf16.msra.mxu0 0
    %1704 = vmatprep.subr.bf16.mxu0 0
    %1705 = vmatpush1.bf16.msra.mxu0 0
    %1706 = vmatprep.subr.bf16.mxu0 0
    %1707 = vmatpush1.bf16.msra.mxu0 0
    %1708 = vmatprep.subr.bf16.mxu0 0
    %1709 = vmatpush1.bf16.msra.mxu0 0
    %1710 = vmatprep.subr.bf16.mxu0 0
    %1711 = vmatpush1.bf16.msra.mxu0 0
    %1712 = vmatprep.subr.bf16.mxu0 0
    %1713 = vmatpush1.bf16.msra.mxu0 0
    %1714 = vmatprep.mubr.bf16.mxu0 0
    %1715 = vmatmul.mubr.bf16.gmra.mrb[0].mxu0 %v1587
    %v1716 = vpop.f32.mrb[0].mxu0
    %v1717 = vadd.f32 %v1292, %v1716
    %v1718 = vpop.f32.mrb[0].mxu0
    %v1719 = vpop.f32.mrb[0].mxu0
    %v1720 = vadd.f32 %v1295, %v1719
    %v1721 = vpop.f32.mrb[0].mxu0
    %1722 = vmatprep.mubr.bf16.mxu0 0
    %1723 = vmatmul.mubr.bf16.gmra.mrb[0].mxu0 %v1590
    %v1724 = vpop.f32.mrb[0].mxu0
    %v1725 = vadd.f32 %v1300, %v1724
    %v1726 = vpop.f32.mrb[0].mxu0
    %v1727 = vpop.f32.mrb[0].mxu0
    %v1728 = vadd.f32 %v1303, %v1727
    %v1729 = vpop.f32.mrb[0].mxu0
    %1730 = vmatprep.mubr.bf16.mxu0 0
    %1731 = vmatmul.mubr.bf16.gmra.mrb[0].mxu0 %v1593
    %v1732 = vpop.f32.mrb[0].mxu0
    %v1733 = vadd.f32 %v1308, %v1732
    %v1734 = vpop.f32.mrb[0].mxu0
    %v1735 = vpop.f32.mrb[0].mxu0
    %v1736 = vadd.f32 %v1311, %v1735
    %v1737 = vpop.f32.mrb[0].mxu0
    %1738 = vmatprep.mubr.bf16.mxu0 0
    %1739 = vmatmul.mubr.bf16.gmra.mrb[0].mxu0 %v1596
    %v1740 = vpop.f32.mrb[0].mxu0
    %v1741 = vadd.f32 %v1316, %v1740
    %v1742 = vpop.f32.mrb[0].mxu0
    %v1743 = vpop.f32.mrb[0].mxu0
    %v1744 = vadd.f32 %v1319, %v1743
    %v1745 = vpop.f32.mrb[0].mxu0
    %1746 = vmatprep.mubr.bf16.mxu0 0
    %1747 = vmatmul.mubr.bf16.gmra.mrb[0].mxu0 %v1599
    %v1748 = vpop.f32.mrb[0].mxu0
    %v1749 = vadd.f32 %v1324, %v1748
    %v1750 = vpop.f32.mrb[0].mxu0
    %v1751 = vpop.f32.mrb[0].mxu0
    %v1752 = vadd.f32 %v1327, %v1751
    %v1753 = vpop.f32.mrb[0].mxu0
    %1754 = vmatprep.mubr.bf16.mxu0 0
    %1755 = vmatmul.mubr.bf16.gmra.mrb[0].mxu0 %v1602
    %v1756 = vpop.f32.mrb[0].mxu0
    %v1757 = vadd.f32 %v1332, %v1756
    %v1758 = vpop.f32.mrb[0].mxu0
    %v1759 = vpop.f32.mrb[0].mxu0
    %v1760 = vadd.f32 %v1335, %v1759
    %v1761 = vpop.f32.mrb[0].mxu0
    %1762 = vmatprep.mubr.bf16.mxu0 0
    %1763 = vmatmul.mubr.bf16.gmra.mrb[0].mxu0 %v1605
    %v1764 = vpop.f32.mrb[0].mxu0
    %v1765 = vadd.f32 %v1340, %v1764
    %v1766 = vpop.f32.mrb[0].mxu0
    %v1767 = vpop.f32.mrb[0].mxu0
    %v1768 = vadd.f32 %v1343, %v1767
    %v1769 = vpop.f32.mrb[0].mxu0
    %1770 = vmatprep.mubr.bf16.mxu0 0
    %1771 = vmatmul.mubr.bf16.gmra.mrb[0].mxu0 %v1608
    %v1772 = vpop.f32.mrb[0].mxu0
    %v1773 = vadd.f32 %v1348, %v1772
    %v1774 = vpop.f32.mrb[0].mxu0
    %v1775 = vpop.f32.mrb[0].mxu0
    %v1776 = vadd.f32 %v1351, %v1775
    %v1777 = vpop.f32.mrb[0].mxu0
    %1778 = vmatprep.mubr.bf16.mxu0 0
    %1779 = vmatmul.mubr.bf16.gmra.mrb[0].mxu0 %v1611
    %v1780 = vpop.f32.mrb[0].mxu0
    %v1781 = vadd.f32 %v1356, %v1780
    %v1782 = vpop.f32.mrb[0].mxu0
    %v1783 = vpop.f32.mrb[0].mxu0
    %v1784 = vadd.f32 %v1359, %v1783
    %v1785 = vpop.f32.mrb[0].mxu0
    %1786 = vmatprep.mubr.bf16.mxu0 0
    %1787 = vmatmul.mubr.bf16.gmra.mrb[0].mxu0 %v1614
    %v1788 = vpop.f32.mrb[0].mxu0
    %v1789 = vadd.f32 %v1364, %v1788
    %v1790 = vpop.f32.mrb[0].mxu0
    %v1791 = vpop.f32.mrb[0].mxu0
    %v1792 = vadd.f32 %v1367, %v1791
    %v1793 = vpop.f32.mrb[0].mxu0
    %1794 = vmatprep.mubr.bf16.mxu0 0
    %1795 = vmatmul.mubr.bf16.gmra.mrb[0].mxu0 %v1617
    %v1796 = vpop.f32.mrb[0].mxu0
    %v1797 = vadd.f32 %v1372, %v1796
    %v1798 = vpop.f32.mrb[0].mxu0
    %v1799 = vpop.f32.mrb[0].mxu0
    %v1800 = vadd.f32 %v1375, %v1799
    %v1801 = vpop.f32.mrb[0].mxu0
    %1802 = vmatprep.mubr.bf16.mxu0 0
    %1803 = vmatmul.mubr.bf16.gmra.mrb[0].mxu0 %v1620
    %v1804 = vpop.f32.mrb[0].mxu0
    %v1805 = vadd.f32 %v1380, %v1804
    %v1806 = vpop.f32.mrb[0].mxu0
    %v1807 = vpop.f32.mrb[0].mxu0
    %v1808 = vadd.f32 %v1383, %v1807
    %v1809 = vpop.f32.mrb[0].mxu0
    %1810 = vmatprep.mubr.bf16.mxu0 0
    %1811 = vmatmul.mubr.bf16.gmra.mrb[0].mxu0 %v1623
    %v1812 = vpop.f32.mrb[0].mxu0
    %v1813 = vadd.f32 %v1388, %v1812
    %v1814 = vpop.f32.mrb[0].mxu0
    %v1815 = vpop.f32.mrb[0].mxu0
    %v1816 = vadd.f32 %v1391, %v1815
    %v1817 = vpop.f32.mrb[0].mxu0
    %1818 = vmatprep.mubr.bf16.mxu0 0
    %1819 = vmatmul.mubr.bf16.gmra.mrb[0].mxu0 %v1626
    %v1820 = vpop.f32.mrb[0].mxu0
    %v1821 = vadd.f32 %v1396, %v1820
    %v1822 = vpop.f32.mrb[0].mxu0
    %v1823 = vpop.f32.mrb[0].mxu0
    %v1824 = vadd.f32 %v1399, %v1823
    %v1825 = vpop.f32.mrb[0].mxu0
    %1826 = vmatprep.mubr.bf16.mxu0 0
    %1827 = vmatmul.mubr.bf16.gmra.mrb[0].mxu0 %v1629
    %v1828 = vpop.f32.mrb[0].mxu0
    %v1829 = vadd.f32 %v1404, %v1828
    %v1830 = vpop.f32.mrb[0].mxu0
    %v1831 = vpop.f32.mrb[0].mxu0
    %v1832 = vadd.f32 %v1407, %v1831
    %v1833 = vpop.f32.mrb[0].mxu0
    %1834 = vmatprep.mubr.bf16.mxu0 0
    %1835 = vmatmul.mubr.bf16.gmra.mrb[0].mxu0 %v1632
    %v1836 = vpop.f32.mrb[0].mxu0
    %v1837 = vadd.f32 %v1412, %v1836
    %v1838 = vpop.f32.mrb[0].mxu0
    %v1839 = vpop.f32.mrb[0].mxu0
    %v1840 = vadd.f32 %v1415, %v1839
    %v1841 = vpop.f32.mrb[0].mxu0
    %1842 = vmatprep.mubr.bf16.mxu0 0
    %1843 = vmatmul.mubr.bf16.gmra.mrb[0].mxu0 %v1635
    %v1844 = vpop.f32.mrb[0].mxu0
    %v1845 = vadd.f32 %v1420, %v1844
    %v1846 = vpop.f32.mrb[0].mxu0
    %v1847 = vpop.f32.mrb[0].mxu0
    %v1848 = vadd.f32 %v1423, %v1847
    %v1849 = vpop.f32.mrb[0].mxu0
    %1850 = vmatprep.mubr.bf16.mxu0 0
    %1851 = vmatmul.mubr.bf16.gmra.mrb[0].mxu0 %v1638
    %v1852 = vpop.f32.mrb[0].mxu0
    %v1853 = vadd.f32 %v1428, %v1852
    %v1854 = vpop.f32.mrb[0].mxu0
    %v1855 = vpop.f32.mrb[0].mxu0
    %v1856 = vadd.f32 %v1431, %v1855
    %v1857 = vpop.f32.mrb[0].mxu0
    %1858 = vmatprep.mubr.bf16.mxu0 0
    %1859 = vmatmul.mubr.bf16.gmra.mrb[0].mxu0 %v1641
    %v1860 = vpop.f32.mrb[0].mxu0
    %v1861 = vadd.f32 %v1436, %v1860
    %v1862 = vpop.f32.mrb[0].mxu0
    %v1863 = vpop.f32.mrb[0].mxu0
    %v1864 = vadd.f32 %v1439, %v1863
    %v1865 = vpop.f32.mrb[0].mxu0
    %1866 = vmatprep.mubr.bf16.mxu0 0
    %1867 = vmatmul.mubr.bf16.gmra.mrb[0].mxu0 %v1644
    %v1868 = vpop.f32.mrb[0].mxu0
    %v1869 = vadd.f32 %v1444, %v1868
    %v1870 = vpop.f32.mrb[0].mxu0
    %v1871 = vpop.f32.mrb[0].mxu0
    %v1872 = vadd.f32 %v1447, %v1871
    %v1873 = vpop.f32.mrb[0].mxu0
    %1874 = vmatprep.mubr.bf16.mxu0 0
    %1875 = vmatmul.mubr.bf16.gmra.mrb[0].mxu0 %v1647
    %v1876 = vpop.f32.mrb[0].mxu0
    %v1877 = vadd.f32 %v1452, %v1876
    %v1878 = vpop.f32.mrb[0].mxu0
    %v1879 = vpop.f32.mrb[0].mxu0
    %v1880 = vadd.f32 %v1455, %v1879
    %v1881 = vpop.f32.mrb[0].mxu0
    %1882 = vmatprep.mubr.bf16.mxu0 0
    %1883 = vmatmul.mubr.bf16.gmra.mrb[0].mxu0 %v1650
    %v1884 = vpop.f32.mrb[0].mxu0
    %v1885 = vadd.f32 %v1460, %v1884
    %v1886 = vpop.f32.mrb[0].mxu0
    %v1887 = vpop.f32.mrb[0].mxu0
    %v1888 = vadd.f32 %v1463, %v1887
    %v1889 = vpop.f32.mrb[0].mxu0
    %1890 = vmatprep.mubr.bf16.mxu0 0
    %1891 = vmatmul.mubr.bf16.gmra.mrb[0].mxu0 %v1653
    %v1892 = vpop.f32.mrb[0].mxu0
    %v1893 = vadd.f32 %v1468, %v1892
    %v1894 = vpop.f32.mrb[0].mxu0
    %v1895 = vpop.f32.mrb[0].mxu0
    %v1896 = vadd.f32 %v1471, %v1895
    %v1897 = vpop.f32.mrb[0].mxu0
    %1898 = vmatprep.mubr.bf16.mxu0 0
    %1899 = vmatmul.mubr.bf16.gmra.mrb[0].mxu0 %v1656
    %v1900 = vpop.f32.mrb[0].mxu0
    %v1901 = vadd.f32 %v1476, %v1900
    %v1902 = vpop.f32.mrb[0].mxu0
    %v1903 = vpop.f32.mrb[0].mxu0
    %v1904 = vadd.f32 %v1479, %v1903
    %v1905 = vpop.f32.mrb[0].mxu0
    %1906 = vmatprep.mubr.bf16.mxu0 0
    %1907 = vmatmul.mubr.bf16.gmra.mrb[0].mxu0 %v1659
    %v1908 = vpop.f32.mrb[0].mxu0
    %v1909 = vadd.f32 %v1484, %v1908
    %v1910 = vpop.f32.mrb[0].mxu0
    %v1911 = vpop.f32.mrb[0].mxu0
    %v1912 = vadd.f32 %v1487, %v1911
    %v1913 = vpop.f32.mrb[0].mxu0
    %1914 = vmatprep.mubr.bf16.mxu0 0
    %1915 = vmatmul.mubr.bf16.gmra.mrb[0].mxu0 %v1662
    %v1916 = vpop.f32.mrb[0].mxu0
    %v1917 = vadd.f32 %v1492, %v1916
    %v1918 = vpop.f32.mrb[0].mxu0
    %v1919 = vpop.f32.mrb[0].mxu0
    %v1920 = vadd.f32 %v1495, %v1919
    %v1921 = vpop.f32.mrb[0].mxu0
    %1922 = vmatprep.mubr.bf16.mxu0 0
    %1923 = vmatmul.mubr.bf16.gmra.mrb[0].mxu0 %v1665
    %v1924 = vpop.f32.mrb[0].mxu0
    %v1925 = vadd.f32 %v1500, %v1924
    %v1926 = vpop.f32.mrb[0].mxu0
    %v1927 = vpop.f32.mrb[0].mxu0
    %v1928 = vadd.f32 %v1503, %v1927
    %v1929 = vpop.f32.mrb[0].mxu0
    %1930 = vmatprep.mubr.bf16.mxu0 0
    %1931 = vmatmul.mubr.bf16.gmra.mrb[0].mxu0 %v1668
    %v1932 = vpop.f32.mrb[0].mxu0
    %v1933 = vadd.f32 %v1508, %v1932
    %v1934 = vpop.f32.mrb[0].mxu0
    %v1935 = vpop.f32.mrb[0].mxu0
    %v1936 = vadd.f32 %v1511, %v1935
    %v1937 = vpop.f32.mrb[0].mxu0
    %1938 = vmatprep.mubr.bf16.mxu0 0
    %1939 = vmatmul.mubr.bf16.gmra.mrb[0].mxu0 %v1671
    %v1940 = vpop.f32.mrb[0].mxu0
    %v1941 = vadd.f32 %v1516, %v1940
    %v1942 = vpop.f32.mrb[0].mxu0
    %v1943 = vpop.f32.mrb[0].mxu0
    %v1944 = vadd.f32 %v1519, %v1943
    %v1945 = vpop.f32.mrb[0].mxu0
    %1946 = vmatprep.mubr.bf16.mxu0 0
    %1947 = vmatmul.mubr.bf16.gmra.mrb[0].mxu0 %v1674
    %v1948 = vpop.f32.mrb[0].mxu0
    %v1949 = vadd.f32 %v1524, %v1948
    %v1950 = vpop.f32.mrb[0].mxu0
    %v1951 = vpop.f32.mrb[0].mxu0
    %v1952 = vadd.f32 %v1527, %v1951
    %v1953 = vpop.f32.mrb[0].mxu0
    %1954 = vmatprep.mubr.bf16.mxu0 0
    %1955 = vmatmul.mubr.bf16.gmra.mrb[0].mxu0 %v1677
    %v1956 = vpop.f32.mrb[0].mxu0
    %v1957 = vadd.f32 %v1532, %v1956
    %v1958 = vpop.f32.mrb[0].mxu0
    %v1959 = vpop.f32.mrb[0].mxu0
    %v1960 = vadd.f32 %v1535, %v1959
    %v1961 = vpop.f32.mrb[0].mxu0
    %1962 = vmatprep.mubr.bf16.mxu0 0
    %1963 = vmatmul.mubr.bf16.gmra.mrb[0].mxu0 %v1680
    %v1964 = vpop.f32.mrb[0].mxu0
    %v1965 = vadd.f32 %v1540, %v1964
    %v1966 = vpop.f32.mrb[0].mxu0
    %v1967 = vpop.f32.mrb[0].mxu0
    %v1968 = vadd.f32 %v1543, %v1967
    %v1969 = vpop.f32.mrb[0].mxu0
    %1970 = vdwg.mxu0
    %s1971 = scalar_lea.vmem %s3, 16
    %v1972 = vld [vmem:[%s1971] sm:$0xf]
    %v1973 = vld [vmem:[%s1971 + $0x4] sm:$0xf]
    %v1974 = vpack.c.b16 %v1547, %v1121
    %v1977 = vunpack.c.l.b16 %v1972
    %v1978 = vunpack.c.l.b16 %v1973
    %v1979 = vpack.c.b16 %v1978, %v1977
    %v1982 = vsel %vm1160, %v1974, 0
    %1984 = vmatprep.subr.bf16.mxu0 0
    %1985 = vmatpush1.bf16.msra.mxu0 %v1979
    %1986 = vmatprep.subr.bf16.mxu0 0
    %1987 = vmatpush1.bf16.msra.mxu0 0
    %1988 = vmatprep.subr.bf16.mxu0 0
    %1989 = vmatpush1.bf16.msra.mxu0 0
    %1990 = vmatprep.subr.bf16.mxu0 0
    %1991 = vmatpush1.bf16.msra.mxu0 0
    %1992 = vmatprep.subr.bf16.mxu0 0
    %1993 = vmatpush1.bf16.msra.mxu0 0
    %1994 = vmatprep.subr.bf16.mxu0 0
    %1995 = vmatpush1.bf16.msra.mxu0 0
    %1996 = vmatprep.subr.bf16.mxu0 0
    %1997 = vmatpush1.bf16.msra.mxu0 0
    %1998 = vmatprep.subr.bf16.mxu0 0
    %1999 = vmatpush1.bf16.msra.mxu0 0
    %2000 = vmatprep.subr.bf16.mxu0 0
    %2001 = vmatpush1.bf16.msra.mxu0 0
    %2002 = vmatprep.subr.bf16.mxu0 0
    %2003 = vmatpush1.bf16.msra.mxu0 0
    %2004 = vmatprep.subr.bf16.mxu0 0
    %2005 = vmatpush1.bf16.msra.mxu0 0
    %2006 = vmatprep.subr.bf16.mxu0 0
    %2007 = vmatpush1.bf16.msra.mxu0 0
    %2008 = vmatprep.subr.bf16.mxu0 0
    %2009 = vmatpush1.bf16.msra.mxu0 0
    %2010 = vmatprep.subr.bf16.mxu0 0
    %2011 = vmatpush1.bf16.msra.mxu0 0
    %2012 = vmatprep.subr.bf16.mxu0 0
    %2013 = vmatpush1.bf16.msra.mxu0 0
    %2014 = vmatprep.subr.bf16.mxu0 0
    %2015 = vmatpush1.bf16.msra.mxu0 0
    %2016 = vmatprep.mubr.bf16.mxu0 0
    %2017 = vmatmul.mubr.bf16.gmra.mrb[0].mxu0 %v1590
    %v2018 = vpop.f32.mrb[0].mxu0
    %v2019 = vadd.f32 0.0, %v2018
    %v2020 = vpop.f32.mrb[0].mxu0
    %v2021 = vpop.f32.mrb[0].mxu0
    %v2022 = vadd.f32 0.0, %v2021
    %v2023 = vpop.f32.mrb[0].mxu0
    %2024 = vmatprep.mubr.bf16.mxu0 0
    %2025 = vmatmul.mubr.bf16.gmra.mrb[0].mxu0 %v1593
    %v2026 = vpop.f32.mrb[0].mxu0
    %v2027 = vadd.f32 0.0, %v2026
    %v2028 = vpop.f32.mrb[0].mxu0
    %v2029 = vpop.f32.mrb[0].mxu0
    %v2030 = vadd.f32 0.0, %v2029
    %v2031 = vpop.f32.mrb[0].mxu0
    %2032 = vmatprep.mubr.bf16.mxu0 0
    %2033 = vmatmul.mubr.bf16.gmra.mrb[0].mxu0 %v1596
    %v2034 = vpop.f32.mrb[0].mxu0
    %v2035 = vadd.f32 0.0, %v2034
    %v2036 = vpop.f32.mrb[0].mxu0
    %v2037 = vpop.f32.mrb[0].mxu0
    %v2038 = vadd.f32 0.0, %v2037
    %v2039 = vpop.f32.mrb[0].mxu0
    %2040 = vmatprep.mubr.bf16.mxu0 0
    %2041 = vmatmul.mubr.bf16.gmra.mrb[0].mxu0 %v1599
    %v2042 = vpop.f32.mrb[0].mxu0
    %v2043 = vadd.f32 0.0, %v2042
    %v2044 = vpop.f32.mrb[0].mxu0
    %v2045 = vpop.f32.mrb[0].mxu0
    %v2046 = vadd.f32 0.0, %v2045
    %v2047 = vpop.f32.mrb[0].mxu0
    %2048 = vmatprep.mubr.bf16.mxu0 0
    %2049 = vmatmul.mubr.bf16.gmra.mrb[0].mxu0 %v1602
    %v2050 = vpop.f32.mrb[0].mxu0
    %v2051 = vadd.f32 0.0, %v2050
    %v2052 = vpop.f32.mrb[0].mxu0
    %v2053 = vpop.f32.mrb[0].mxu0
    %v2054 = vadd.f32 0.0, %v2053
    %v2055 = vpop.f32.mrb[0].mxu0
    %2056 = vmatprep.mubr.bf16.mxu0 0
    %2057 = vmatmul.mubr.bf16.gmra.mrb[0].mxu0 %v1605
    %v2058 = vpop.f32.mrb[0].mxu0
    %v2059 = vadd.f32 0.0, %v2058
    %v2060 = vpop.f32.mrb[0].mxu0
    %v2061 = vpop.f32.mrb[0].mxu0
    %v2062 = vadd.f32 0.0, %v2061
    %v2063 = vpop.f32.mrb[0].mxu0
    %2064 = vmatprep.mubr.bf16.mxu0 0
    %2065 = vmatmul.mubr.bf16.gmra.mrb[0].mxu0 %v1608
    %v2066 = vpop.f32.mrb[0].mxu0
    %v2067 = vadd.f32 0.0, %v2066
    %v2068 = vpop.f32.mrb[0].mxu0
    %v2069 = vpop.f32.mrb[0].mxu0
    %v2070 = vadd.f32 0.0, %v2069
    %v2071 = vpop.f32.mrb[0].mxu0
    %2072 = vmatprep.mubr.bf16.mxu0 0
    %2073 = vmatmul.mubr.bf16.gmra.mrb[0].mxu0 %v1611
    %v2074 = vpop.f32.mrb[0].mxu0
    %v2075 = vadd.f32 0.0, %v2074
    %v2076 = vpop.f32.mrb[0].mxu0
    %v2077 = vpop.f32.mrb[0].mxu0
    %v2078 = vadd.f32 0.0, %v2077
    %v2079 = vpop.f32.mrb[0].mxu0
    %2080 = vmatprep.mubr.bf16.mxu0 0
    %2081 = vmatmul.mubr.bf16.gmra.mrb[0].mxu0 %v1614
    %v2082 = vpop.f32.mrb[0].mxu0
    %v2083 = vadd.f32 0.0, %v2082
    %v2084 = vpop.f32.mrb[0].mxu0
    %v2085 = vpop.f32.mrb[0].mxu0
    %v2086 = vadd.f32 0.0, %v2085
    %v2087 = vpop.f32.mrb[0].mxu0
    %2088 = vmatprep.mubr.bf16.mxu0 0
    %2089 = vmatmul.mubr.bf16.gmra.mrb[0].mxu0 %v1617
    %v2090 = vpop.f32.mrb[0].mxu0
    %v2091 = vadd.f32 0.0, %v2090
    %v2092 = vpop.f32.mrb[0].mxu0
    %v2093 = vpop.f32.mrb[0].mxu0
    %v2094 = vadd.f32 0.0, %v2093
    %v2095 = vpop.f32.mrb[0].mxu0
    %2096 = vmatprep.mubr.bf16.mxu0 0
    %2097 = vmatmul.mubr.bf16.gmra.mrb[0].mxu0 %v1620
    %v2098 = vpop.f32.mrb[0].mxu0
    %v2099 = vadd.f32 0.0, %v2098
    %v2100 = vpop.f32.mrb[0].mxu0
    %v2101 = vpop.f32.mrb[0].mxu0
    %v2102 = vadd.f32 0.0, %v2101
    %v2103 = vpop.f32.mrb[0].mxu0
    %2104 = vmatprep.mubr.bf16.mxu0 0
    %2105 = vmatmul.mubr.bf16.gmra.mrb[0].mxu0 %v1623
    %v2106 = vpop.f32.mrb[0].mxu0
    %v2107 = vadd.f32 0.0, %v2106
    %v2108 = vpop.f32.mrb[0].mxu0
    %v2109 = vpop.f32.mrb[0].mxu0
    %v2110 = vadd.f32 0.0, %v2109
    %v2111 = vpop.f32.mrb[0].mxu0
    %2112 = vmatprep.mubr.bf16.mxu0 0
    %2113 = vmatmul.mubr.bf16.gmra.mrb[0].mxu0 %v1626
    %v2114 = vpop.f32.mrb[0].mxu0
    %v2115 = vadd.f32 0.0, %v2114
    %v2116 = vpop.f32.mrb[0].mxu0
    %v2117 = vpop.f32.mrb[0].mxu0
    %v2118 = vadd.f32 0.0, %v2117
    %v2119 = vpop.f32.mrb[0].mxu0
    %2120 = vmatprep.mubr.bf16.mxu0 0
    %2121 = vmatmul.mubr.bf16.gmra.mrb[0].mxu0 %v1629
    %v2122 = vpop.f32.mrb[0].mxu0
    %v2123 = vadd.f32 0.0, %v2122
    %v2124 = vpop.f32.mrb[0].mxu0
    %v2125 = vpop.f32.mrb[0].mxu0
    %v2126 = vadd.f32 0.0, %v2125
    %v2127 = vpop.f32.mrb[0].mxu0
    %2128 = vmatprep.mubr.bf16.mxu0 0
    %2129 = vmatmul.mubr.bf16.gmra.mrb[0].mxu0 %v1632
    %v2130 = vpop.f32.mrb[0].mxu0
    %v2131 = vadd.f32 0.0, %v2130
    %v2132 = vpop.f32.mrb[0].mxu0
    %v2133 = vpop.f32.mrb[0].mxu0
    %v2134 = vadd.f32 0.0, %v2133
    %v2135 = vpop.f32.mrb[0].mxu0
    %2136 = vmatprep.mubr.bf16.mxu0 0
    %2137 = vmatmul.mubr.bf16.gmra.mrb[0].mxu0 %v1635
    %v2138 = vpop.f32.mrb[0].mxu0
    %v2139 = vadd.f32 0.0, %v2138
    %v2140 = vpop.f32.mrb[0].mxu0
    %v2141 = vpop.f32.mrb[0].mxu0
    %v2142 = vadd.f32 0.0, %v2141
    %v2143 = vpop.f32.mrb[0].mxu0
    %2144 = vmatprep.mubr.bf16.mxu0 0
    %2145 = vmatmul.mubr.bf16.gmra.mrb[0].mxu0 %v1638
    %v2146 = vpop.f32.mrb[0].mxu0
    %v2147 = vadd.f32 0.0, %v2146
    %v2148 = vpop.f32.mrb[0].mxu0
    %v2149 = vpop.f32.mrb[0].mxu0
    %v2150 = vadd.f32 0.0, %v2149
    %v2151 = vpop.f32.mrb[0].mxu0
    %2152 = vmatprep.mubr.bf16.mxu0 0
    %2153 = vmatmul.mubr.bf16.gmra.mrb[0].mxu0 %v1641
    %v2154 = vpop.f32.mrb[0].mxu0
    %v2155 = vadd.f32 0.0, %v2154
    %v2156 = vpop.f32.mrb[0].mxu0
    %v2157 = vpop.f32.mrb[0].mxu0
    %v2158 = vadd.f32 0.0, %v2157
    %v2159 = vpop.f32.mrb[0].mxu0
    %2160 = vmatprep.mubr.bf16.mxu0 0
    %2161 = vmatmul.mubr.bf16.gmra.mrb[0].mxu0 %v1644
    %v2162 = vpop.f32.mrb[0].mxu0
    %v2163 = vadd.f32 0.0, %v2162
    %v2164 = vpop.f32.mrb[0].mxu0
    %v2165 = vpop.f32.mrb[0].mxu0
    %v2166 = vadd.f32 0.0, %v2165
    %v2167 = vpop.f32.mrb[0].mxu0
    %2168 = vmatprep.mubr.bf16.mxu0 0
    %2169 = vmatmul.mubr.bf16.gmra.mrb[0].mxu0 %v1647
    %v2170 = vpop.f32.mrb[0].mxu0
    %v2171 = vadd.f32 0.0, %v2170
    %v2172 = vpop.f32.mrb[0].mxu0
    %v2173 = vpop.f32.mrb[0].mxu0
    %v2174 = vadd.f32 0.0, %v2173
    %v2175 = vpop.f32.mrb[0].mxu0
    %2176 = vmatprep.mubr.bf16.mxu0 0
    %2177 = vmatmul.mubr.bf16.gmra.mrb[0].mxu0 %v1650
    %v2178 = vpop.f32.mrb[0].mxu0
    %v2179 = vadd.f32 0.0, %v2178
    %v2180 = vpop.f32.mrb[0].mxu0
    %v2181 = vpop.f32.mrb[0].mxu0
    %v2182 = vadd.f32 0.0, %v2181
    %v2183 = vpop.f32.mrb[0].mxu0
    %2184 = vmatprep.mubr.bf16.mxu0 0
    %2185 = vmatmul.mubr.bf16.gmra.mrb[0].mxu0 %v1653
    %v2186 = vpop.f32.mrb[0].mxu0
    %v2187 = vadd.f32 0.0, %v2186
    %v2188 = vpop.f32.mrb[0].mxu0
    %v2189 = vpop.f32.mrb[0].mxu0
    %v2190 = vadd.f32 0.0, %v2189
    %v2191 = vpop.f32.mrb[0].mxu0
    %2192 = vmatprep.mubr.bf16.mxu0 0
    %2193 = vmatmul.mubr.bf16.gmra.mrb[0].mxu0 %v1656
    %v2194 = vpop.f32.mrb[0].mxu0
    %v2195 = vadd.f32 0.0, %v2194
    %v2196 = vpop.f32.mrb[0].mxu0
    %v2197 = vpop.f32.mrb[0].mxu0
    %v2198 = vadd.f32 0.0, %v2197
    %v2199 = vpop.f32.mrb[0].mxu0
    %2200 = vmatprep.mubr.bf16.mxu0 0
    %2201 = vmatmul.mubr.bf16.gmra.mrb[0].mxu0 %v1659
    %v2202 = vpop.f32.mrb[0].mxu0
    %v2203 = vadd.f32 0.0, %v2202
    %v2204 = vpop.f32.mrb[0].mxu0
    %v2205 = vpop.f32.mrb[0].mxu0
    %v2206 = vadd.f32 0.0, %v2205
    %v2207 = vpop.f32.mrb[0].mxu0
    %2208 = vmatprep.mubr.bf16.mxu0 0
    %2209 = vmatmul.mubr.bf16.gmra.mrb[0].mxu0 %v1662
    %v2210 = vpop.f32.mrb[0].mxu0
    %v2211 = vadd.f32 0.0, %v2210
    %v2212 = vpop.f32.mrb[0].mxu0
    %v2213 = vpop.f32.mrb[0].mxu0
    %v2214 = vadd.f32 0.0, %v2213
    %v2215 = vpop.f32.mrb[0].mxu0
    %2216 = vmatprep.mubr.bf16.mxu0 0
    %2217 = vmatmul.mubr.bf16.gmra.mrb[0].mxu0 %v1665
    %v2218 = vpop.f32.mrb[0].mxu0
    %v2219 = vadd.f32 0.0, %v2218
    %v2220 = vpop.f32.mrb[0].mxu0
    %v2221 = vpop.f32.mrb[0].mxu0
    %v2222 = vadd.f32 0.0, %v2221
    %v2223 = vpop.f32.mrb[0].mxu0
    %2224 = vmatprep.mubr.bf16.mxu0 0
    %2225 = vmatmul.mubr.bf16.gmra.mrb[0].mxu0 %v1668
    %v2226 = vpop.f32.mrb[0].mxu0
    %v2227 = vadd.f32 0.0, %v2226
    %v2228 = vpop.f32.mrb[0].mxu0
    %v2229 = vpop.f32.mrb[0].mxu0
    %v2230 = vadd.f32 0.0, %v2229
    %v2231 = vpop.f32.mrb[0].mxu0
    %2232 = vmatprep.mubr.bf16.mxu0 0
    %2233 = vmatmul.mubr.bf16.gmra.mrb[0].mxu0 %v1671
    %v2234 = vpop.f32.mrb[0].mxu0
    %v2235 = vadd.f32 0.0, %v2234
    %v2236 = vpop.f32.mrb[0].mxu0
    %v2237 = vpop.f32.mrb[0].mxu0
    %v2238 = vadd.f32 0.0, %v2237
    %v2239 = vpop.f32.mrb[0].mxu0
    %2240 = vmatprep.mubr.bf16.mxu0 0
    %2241 = vmatmul.mubr.bf16.gmra.mrb[0].mxu0 %v1674
    %v2242 = vpop.f32.mrb[0].mxu0
    %v2243 = vadd.f32 0.0, %v2242
    %v2244 = vpop.f32.mrb[0].mxu0
    %v2245 = vpop.f32.mrb[0].mxu0
    %v2246 = vadd.f32 0.0, %v2245
    %v2247 = vpop.f32.mrb[0].mxu0
    %2248 = vmatprep.mubr.bf16.mxu0 0
    %2249 = vmatmul.mubr.bf16.gmra.mrb[0].mxu0 %v1677
    %v2250 = vpop.f32.mrb[0].mxu0
    %v2251 = vadd.f32 0.0, %v2250
    %v2252 = vpop.f32.mrb[0].mxu0
    %v2253 = vpop.f32.mrb[0].mxu0
    %v2254 = vadd.f32 0.0, %v2253
    %v2255 = vpop.f32.mrb[0].mxu0
    %2256 = vmatprep.mubr.bf16.mxu0 0
    %2257 = vmatmul.mubr.bf16.gmra.mrb[0].mxu0 %v1680
    %v2258 = vpop.f32.mrb[0].mxu0
    %v2259 = vadd.f32 0.0, %v2258
    %v2260 = vpop.f32.mrb[0].mxu0
    %v2261 = vpop.f32.mrb[0].mxu0
    %v2262 = vadd.f32 0.0, %v2261
    %v2263 = vpop.f32.mrb[0].mxu0
    %2264 = vmatprep.mubr.bf16.mxu0 0
    %2265 = vmatmul.mubr.bf16.gmra.mrb[0].mxu0 %v1982
    %v2266 = vpop.f32.mrb[0].mxu0
    %v2267 = vadd.f32 0.0, %v2266
    %v2268 = vpop.f32.mrb[0].mxu0
    %v2269 = vpop.f32.mrb[0].mxu0
    %v2270 = vadd.f32 0.0, %v2269
    %v2271 = vpop.f32.mrb[0].mxu0
    %2272 = vdwg.mxu0
    %v2273 = vadd.f32 %v1717, %v2019
    %v2274 = vadd.f32 %v1720, %v2022
    %v2275 = vadd.f32 %v1725, %v2027
    %v2276 = vadd.f32 %v1728, %v2030
    %v2277 = vadd.f32 %v1733, %v2035
    %v2278 = vadd.f32 %v1736, %v2038
    %v2279 = vadd.f32 %v1741, %v2043
    %v2280 = vadd.f32 %v1744, %v2046
    %v2281 = vadd.f32 %v1749, %v2051
    %v2282 = vadd.f32 %v1752, %v2054
    %v2283 = vadd.f32 %v1757, %v2059
    %v2284 = vadd.f32 %v1760, %v2062
    %v2285 = vadd.f32 %v1765, %v2067
    %v2286 = vadd.f32 %v1768, %v2070
    %v2287 = vadd.f32 %v1773, %v2075
    %v2288 = vadd.f32 %v1776, %v2078
    %v2289 = vadd.f32 %v1781, %v2083
    %v2290 = vadd.f32 %v1784, %v2086
    %v2291 = vadd.f32 %v1789, %v2091
    %v2292 = vadd.f32 %v1792, %v2094
    %v2293 = vadd.f32 %v1797, %v2099
    %v2294 = vadd.f32 %v1800, %v2102
    %v2295 = vadd.f32 %v1805, %v2107
    %v2296 = vadd.f32 %v1808, %v2110
    %v2297 = vadd.f32 %v1813, %v2115
    %v2298 = vadd.f32 %v1816, %v2118
    %v2299 = vadd.f32 %v1821, %v2123
    %v2300 = vadd.f32 %v1824, %v2126
    %v2301 = vadd.f32 %v1829, %v2131
    %v2302 = vadd.f32 %v1832, %v2134
    %v2303 = vadd.f32 %v1837, %v2139
    %v2304 = vadd.f32 %v1840, %v2142
    %v2305 = vadd.f32 %v1845, %v2147
    %v2306 = vadd.f32 %v1848, %v2150
    %v2307 = vadd.f32 %v1853, %v2155
    %v2308 = vadd.f32 %v1856, %v2158
    %v2309 = vadd.f32 %v1861, %v2163
    %v2310 = vadd.f32 %v1864, %v2166
    %v2311 = vadd.f32 %v1869, %v2171
    %v2312 = vadd.f32 %v1872, %v2174
    %v2313 = vadd.f32 %v1877, %v2179
    %v2314 = vadd.f32 %v1880, %v2182
    %v2315 = vadd.f32 %v1885, %v2187
    %v2316 = vadd.f32 %v1888, %v2190
    %v2317 = vadd.f32 %v1893, %v2195
    %v2318 = vadd.f32 %v1896, %v2198
    %v2319 = vadd.f32 %v1901, %v2203
    %v2320 = vadd.f32 %v1904, %v2206
    %v2321 = vadd.f32 %v1909, %v2211
    %v2322 = vadd.f32 %v1912, %v2214
    %v2323 = vadd.f32 %v1917, %v2219
    %v2324 = vadd.f32 %v1920, %v2222
    %v2325 = vadd.f32 %v1925, %v2227
    %v2326 = vadd.f32 %v1928, %v2230
    %v2327 = vadd.f32 %v1933, %v2235
    %v2328 = vadd.f32 %v1936, %v2238
    %v2329 = vadd.f32 %v1941, %v2243
    %v2330 = vadd.f32 %v1944, %v2246
    %v2331 = vadd.f32 %v1949, %v2251
    %v2332 = vadd.f32 %v1952, %v2254
    %v2333 = vadd.f32 %v1957, %v2259
    %v2334 = vadd.f32 %v1960, %v2262
    %v2335 = vadd.f32 %v1965, %v2267
    %v2336 = vadd.f32 %v1968, %v2270
    %v2337 = vld [vmem:[%s4] sm:$0x1]
    %v2339 = vlaneseq
    %v2340 = vshrl.u32 %v2339, 7
    %v2341 = vsub.s32 0, %v2340
    %v2342 = vrot.slane %v2337, %v2341
    %v2344 = vadd.f32 %v2273, %v2342
    %v2345 = vadd.f32 %v2274, %v2342
    %v2346 = vadd.f32 %v2275, %v2342
    %v2347 = vadd.f32 %v2276, %v2342
    %v2348 = vadd.f32 %v2277, %v2342
    %v2349 = vadd.f32 %v2278, %v2342
    %v2350 = vadd.f32 %v2279, %v2342
    %v2351 = vadd.f32 %v2280, %v2342
    %v2352 = vadd.f32 %v2281, %v2342
    %v2353 = vadd.f32 %v2282, %v2342
    %v2354 = vadd.f32 %v2283, %v2342
    %v2355 = vadd.f32 %v2284, %v2342
    %v2356 = vadd.f32 %v2285, %v2342
    %v2357 = vadd.f32 %v2286, %v2342
    %v2358 = vadd.f32 %v2287, %v2342
    %v2359 = vadd.f32 %v2288, %v2342
    %v2360 = vadd.f32 %v2289, %v2342
    %v2361 = vadd.f32 %v2290, %v2342
    %v2362 = vadd.f32 %v2291, %v2342
    %v2363 = vadd.f32 %v2292, %v2342
    %v2364 = vadd.f32 %v2293, %v2342
    %v2365 = vadd.f32 %v2294, %v2342
    %v2366 = vadd.f32 %v2295, %v2342
    %v2367 = vadd.f32 %v2296, %v2342
    %v2368 = vadd.f32 %v2297, %v2342
    %v2369 = vadd.f32 %v2298, %v2342
    %v2370 = vadd.f32 %v2299, %v2342
    %v2371 = vadd.f32 %v2300, %v2342
    %v2372 = vadd.f32 %v2301, %v2342
    %v2373 = vadd.f32 %v2302, %v2342
    %v2374 = vadd.f32 %v2303, %v2342
    %v2375 = vadd.f32 %v2304, %v2342
    %v2376 = vadd.f32 %v2305, %v2342
    %v2377 = vadd.f32 %v2306, %v2342
    %v2378 = vadd.f32 %v2307, %v2342
    %v2379 = vadd.f32 %v2308, %v2342
    %v2380 = vadd.f32 %v2309, %v2342
    %v2381 = vadd.f32 %v2310, %v2342
    %v2382 = vadd.f32 %v2311, %v2342
    %v2383 = vadd.f32 %v2312, %v2342
    %v2384 = vadd.f32 %v2313, %v2342
    %v2385 = vadd.f32 %v2314, %v2342
    %v2386 = vadd.f32 %v2315, %v2342
    %v2387 = vadd.f32 %v2316, %v2342
    %v2388 = vadd.f32 %v2317, %v2342
    %v2389 = vadd.f32 %v2318, %v2342
    %v2390 = vadd.f32 %v2319, %v2342
    %v2391 = vadd.f32 %v2320, %v2342
    %v2392 = vadd.f32 %v2321, %v2342
    %v2393 = vadd.f32 %v2322, %v2342
    %v2394 = vadd.f32 %v2323, %v2342
    %v2395 = vadd.f32 %v2324, %v2342
    %v2396 = vadd.f32 %v2325, %v2342
    %v2397 = vadd.f32 %v2326, %v2342
    %v2398 = vadd.f32 %v2327, %v2342
    %v2399 = vadd.f32 %v2328, %v2342
    %v2400 = vadd.f32 %v2329, %v2342
    %v2401 = vadd.f32 %v2330, %v2342
    %v2402 = vadd.f32 %v2331, %v2342
    %v2403 = vadd.f32 %v2332, %v2342
    %v2404 = vadd.f32 %v2333, %v2342
    %v2405 = vadd.f32 %v2334, %v2342
    %v2406 = vadd.f32 %v2335, %v2342
    %v2407 = vadd.f32 %v2336, %v2342
    %v2408 = vmax.f32 %v2344, 0.0
    %v2409 = vmax.f32 %v2345, 0.0
    %v2410 = vmax.f32 %v2346, 0.0
    %v2411 = vmax.f32 %v2347, 0.0
    %v2412 = vmax.f32 %v2348, 0.0
    %v2413 = vmax.f32 %v2349, 0.0
    %v2414 = vmax.f32 %v2350, 0.0
    %v2415 = vmax.f32 %v2351, 0.0
    %v2416 = vmax.f32 %v2352, 0.0
    %v2417 = vmax.f32 %v2353, 0.0
    %v2418 = vmax.f32 %v2354, 0.0
    %v2419 = vmax.f32 %v2355, 0.0
    %v2420 = vmax.f32 %v2356, 0.0
    %v2421 = vmax.f32 %v2357, 0.0
    %v2422 = vmax.f32 %v2358, 0.0
    %v2423 = vmax.f32 %v2359, 0.0
    %v2424 = vmax.f32 %v2360, 0.0
    %v2425 = vmax.f32 %v2361, 0.0
    %v2426 = vmax.f32 %v2362, 0.0
    %v2427 = vmax.f32 %v2363, 0.0
    %v2428 = vmax.f32 %v2364, 0.0
    %v2429 = vmax.f32 %v2365, 0.0
    %v2430 = vmax.f32 %v2366, 0.0
    %v2431 = vmax.f32 %v2367, 0.0
    %v2432 = vmax.f32 %v2368, 0.0
    %v2433 = vmax.f32 %v2369, 0.0
    %v2434 = vmax.f32 %v2370, 0.0
    %v2435 = vmax.f32 %v2371, 0.0
    %v2436 = vmax.f32 %v2372, 0.0
    %v2437 = vmax.f32 %v2373, 0.0
    %v2438 = vmax.f32 %v2374, 0.0
    %v2439 = vmax.f32 %v2375, 0.0
    %v2440 = vmax.f32 %v2376, 0.0
    %v2441 = vmax.f32 %v2377, 0.0
    %v2442 = vmax.f32 %v2378, 0.0
    %v2443 = vmax.f32 %v2379, 0.0
    %v2444 = vmax.f32 %v2380, 0.0
    %v2445 = vmax.f32 %v2381, 0.0
    %v2446 = vmax.f32 %v2382, 0.0
    %v2447 = vmax.f32 %v2383, 0.0
    %v2448 = vmax.f32 %v2384, 0.0
    %v2449 = vmax.f32 %v2385, 0.0
    %v2450 = vmax.f32 %v2386, 0.0
    %v2451 = vmax.f32 %v2387, 0.0
    %v2452 = vmax.f32 %v2388, 0.0
    %v2453 = vmax.f32 %v2389, 0.0
    %v2454 = vmax.f32 %v2390, 0.0
    %v2455 = vmax.f32 %v2391, 0.0
    %v2456 = vmax.f32 %v2392, 0.0
    %v2457 = vmax.f32 %v2393, 0.0
    %v2458 = vmax.f32 %v2394, 0.0
    %v2459 = vmax.f32 %v2395, 0.0
    %v2460 = vmax.f32 %v2396, 0.0
    %v2461 = vmax.f32 %v2397, 0.0
    %v2462 = vmax.f32 %v2398, 0.0
    %v2463 = vmax.f32 %v2399, 0.0
    %v2464 = vmax.f32 %v2400, 0.0
    %v2465 = vmax.f32 %v2401, 0.0
    %v2466 = vmax.f32 %v2402, 0.0
    %v2467 = vmax.f32 %v2403, 0.0
    %v2468 = vmax.f32 %v2404, 0.0
    %v2469 = vmax.f32 %v2405, 0.0
    %v2470 = vmax.f32 %v2406, 0.0
    %v2471 = vmax.f32 %v2407, 0.0
    %v2472 = vpack.c.bf16 %v2408, %v2408
    %v2473 = vpack.c.bf16 %v2409, %v2409
    %v2474 = vpack.c.bf16 %v2410, %v2410
    %v2475 = vpack.c.bf16 %v2411, %v2411
    %v2476 = vpack.c.bf16 %v2412, %v2412
    %v2477 = vpack.c.bf16 %v2413, %v2413
    %v2478 = vpack.c.bf16 %v2414, %v2414
    %v2479 = vpack.c.bf16 %v2415, %v2415
    %v2480 = vpack.c.bf16 %v2416, %v2416
    %v2481 = vpack.c.bf16 %v2417, %v2417
    %v2482 = vpack.c.bf16 %v2418, %v2418
    %v2483 = vpack.c.bf16 %v2419, %v2419
    %v2484 = vpack.c.bf16 %v2420, %v2420
    %v2485 = vpack.c.bf16 %v2421, %v2421
    %v2486 = vpack.c.bf16 %v2422, %v2422
    %v2487 = vpack.c.bf16 %v2423, %v2423
    %v2488 = vpack.c.bf16 %v2424, %v2424
    %v2489 = vpack.c.bf16 %v2425, %v2425
    %v2490 = vpack.c.bf16 %v2426, %v2426
    %v2491 = vpack.c.bf16 %v2427, %v2427
    %v2492 = vpack.c.bf16 %v2428, %v2428
    %v2493 = vpack.c.bf16 %v2429, %v2429
    %v2494 = vpack.c.bf16 %v2430, %v2430
    %v2495 = vpack.c.bf16 %v2431, %v2431
    %v2496 = vpack.c.bf16 %v2432, %v2432
    %v2497 = vpack.c.bf16 %v2433, %v2433
    %v2498 = vpack.c.bf16 %v2434, %v2434
    %v2499 = vpack.c.bf16 %v2435, %v2435
    %v2500 = vpack.c.bf16 %v2436, %v2436
    %v2501 = vpack.c.bf16 %v2437, %v2437
    %v2502 = vpack.c.bf16 %v2438, %v2438
    %v2503 = vpack.c.bf16 %v2439, %v2439
    %v2504 = vpack.c.bf16 %v2440, %v2440
    %v2505 = vpack.c.bf16 %v2441, %v2441
    %v2506 = vpack.c.bf16 %v2442, %v2442
    %v2507 = vpack.c.bf16 %v2443, %v2443
    %v2508 = vpack.c.bf16 %v2444, %v2444
    %v2509 = vpack.c.bf16 %v2445, %v2445
    %v2510 = vpack.c.bf16 %v2446, %v2446
    %v2511 = vpack.c.bf16 %v2447, %v2447
    %v2512 = vpack.c.bf16 %v2448, %v2448
    %v2513 = vpack.c.bf16 %v2449, %v2449
    %v2514 = vpack.c.bf16 %v2450, %v2450
    %v2515 = vpack.c.bf16 %v2451, %v2451
    %v2516 = vpack.c.bf16 %v2452, %v2452
    %v2517 = vpack.c.bf16 %v2453, %v2453
    %v2518 = vpack.c.bf16 %v2454, %v2454
    %v2519 = vpack.c.bf16 %v2455, %v2455
    %v2520 = vpack.c.bf16 %v2456, %v2456
    %v2521 = vpack.c.bf16 %v2457, %v2457
    %v2522 = vpack.c.bf16 %v2458, %v2458
    %v2523 = vpack.c.bf16 %v2459, %v2459
    %v2524 = vpack.c.bf16 %v2460, %v2460
    %v2525 = vpack.c.bf16 %v2461, %v2461
    %v2526 = vpack.c.bf16 %v2462, %v2462
    %v2527 = vpack.c.bf16 %v2463, %v2463
    %v2528 = vpack.c.bf16 %v2464, %v2464
    %v2529 = vpack.c.bf16 %v2465, %v2465
    %v2530 = vpack.c.bf16 %v2466, %v2466
    %v2531 = vpack.c.bf16 %v2467, %v2467
    %v2532 = vpack.c.bf16 %v2468, %v2468
    %v2533 = vpack.c.bf16 %v2469, %v2469
    %v2534 = vpack.c.bf16 %v2470, %v2470
    %v2535 = vpack.c.bf16 %v2471, %v2471
    %v2536 = vld [vmem:[%s5] sm:$0xf]
    %v2537 = vld [vmem:[%s5 + $0x4] sm:$0xf]
    %v2538 = vld [vmem:[%s5 + $0x8] sm:$0xf]
    %v2539 = vld [vmem:[%s5 + $0xc] sm:$0xf]
    %s2540 = scalar_lea.vmem %s5, 16
    %v2541 = vld [vmem:[%s2540] sm:$0xf]
    %v2542 = vld [vmem:[%s2540 + $0x4] sm:$0xf]
    %v2543 = vld [vmem:[%s2540 + $0x8] sm:$0xf]
    %v2544 = vld [vmem:[%s2540 + $0xc] sm:$0xf]
    %v2609 = vunpack.c.l.b16 %v2472
    %v2610 = vunpack.c.l.b16 %v2473
    %v2611 = vunpack.c.l.b16 %v2474
    %v2612 = vunpack.c.l.b16 %v2475
    %v2613 = vunpack.c.l.b16 %v2476
    %v2614 = vunpack.c.l.b16 %v2477
    %v2615 = vunpack.c.l.b16 %v2478
    %v2616 = vunpack.c.l.b16 %v2479
    %v2617 = vunpack.c.l.b16 %v2480
    %v2618 = vunpack.c.l.b16 %v2481
    %v2619 = vunpack.c.l.b16 %v2482
    %v2620 = vunpack.c.l.b16 %v2483
    %v2621 = vunpack.c.l.b16 %v2484
    %v2622 = vunpack.c.l.b16 %v2485
    %v2623 = vunpack.c.l.b16 %v2486
    %v2624 = vunpack.c.l.b16 %v2487
    %v2625 = vunpack.c.l.b16 %v2488
    %v2626 = vunpack.c.l.b16 %v2489
    %v2627 = vunpack.c.l.b16 %v2490
    %v2628 = vunpack.c.l.b16 %v2491
    %v2629 = vunpack.c.l.b16 %v2492
    %v2630 = vunpack.c.l.b16 %v2493
    %v2631 = vunpack.c.l.b16 %v2494
    %v2632 = vunpack.c.l.b16 %v2495
    %v2633 = vunpack.c.l.b16 %v2496
    %v2634 = vunpack.c.l.b16 %v2497
    %v2635 = vunpack.c.l.b16 %v2498
    %v2636 = vunpack.c.l.b16 %v2499
    %v2637 = vunpack.c.l.b16 %v2500
    %v2638 = vunpack.c.l.b16 %v2501
    %v2639 = vunpack.c.l.b16 %v2502
    %v2640 = vunpack.c.l.b16 %v2503
    %v2641 = vunpack.c.l.b16 %v2504
    %v2642 = vunpack.c.l.b16 %v2505
    %v2643 = vunpack.c.l.b16 %v2506
    %v2644 = vunpack.c.l.b16 %v2507
    %v2645 = vunpack.c.l.b16 %v2508
    %v2646 = vunpack.c.l.b16 %v2509
    %v2647 = vunpack.c.l.b16 %v2510
    %v2648 = vunpack.c.l.b16 %v2511
    %v2649 = vunpack.c.l.b16 %v2512
    %v2650 = vunpack.c.l.b16 %v2513
    %v2651 = vunpack.c.l.b16 %v2514
    %v2652 = vunpack.c.l.b16 %v2515
    %v2653 = vunpack.c.l.b16 %v2516
    %v2654 = vunpack.c.l.b16 %v2517
    %v2655 = vunpack.c.l.b16 %v2518
    %v2656 = vunpack.c.l.b16 %v2519
    %v2657 = vunpack.c.l.b16 %v2520
    %v2658 = vunpack.c.l.b16 %v2521
    %v2659 = vunpack.c.l.b16 %v2522
    %v2660 = vunpack.c.l.b16 %v2523
    %v2661 = vunpack.c.l.b16 %v2524
    %v2662 = vunpack.c.l.b16 %v2525
    %v2663 = vunpack.c.l.b16 %v2526
    %v2664 = vunpack.c.l.b16 %v2527
    %v2665 = vunpack.c.l.b16 %v2528
    %v2666 = vunpack.c.l.b16 %v2529
    %v2667 = vunpack.c.l.b16 %v2530
    %v2668 = vunpack.c.l.b16 %v2531
    %v2669 = vunpack.c.l.b16 %v2532
    %v2670 = vunpack.c.l.b16 %v2533
    %v2671 = vunpack.c.l.b16 %v2534
    %v2672 = vunpack.c.l.b16 %v2535
    %v2673 = vpack.c.b16 %v2610, %v2609
    %v2674 = vpack.c.b16 %v2612, %v2611
    %v2675 = vpack.c.b16 %v2614, %v2613
    %v2676 = vpack.c.b16 %v2616, %v2615
    %v2677 = vpack.c.b16 %v2618, %v2617
    %v2678 = vpack.c.b16 %v2620, %v2619
    %v2679 = vpack.c.b16 %v2622, %v2621
    %v2680 = vpack.c.b16 %v2624, %v2623
    %v2681 = vpack.c.b16 %v2626, %v2625
    %v2682 = vpack.c.b16 %v2628, %v2627
    %v2683 = vpack.c.b16 %v2630, %v2629
    %v2684 = vpack.c.b16 %v2632, %v2631
    %v2685 = vpack.c.b16 %v2634, %v2633
    %v2686 = vpack.c.b16 %v2636, %v2635
    %v2687 = vpack.c.b16 %v2638, %v2637
    %v2688 = vpack.c.b16 %v2640, %v2639
    %v2689 = vpack.c.b16 %v2642, %v2641
    %v2690 = vpack.c.b16 %v2644, %v2643
    %v2691 = vpack.c.b16 %v2646, %v2645
    %v2692 = vpack.c.b16 %v2648, %v2647
    %v2693 = vpack.c.b16 %v2650, %v2649
    %v2694 = vpack.c.b16 %v2652, %v2651
    %v2695 = vpack.c.b16 %v2654, %v2653
    %v2696 = vpack.c.b16 %v2656, %v2655
    %v2697 = vpack.c.b16 %v2658, %v2657
    %v2698 = vpack.c.b16 %v2660, %v2659
    %v2699 = vpack.c.b16 %v2662, %v2661
    %v2700 = vpack.c.b16 %v2664, %v2663
    %v2701 = vpack.c.b16 %v2666, %v2665
    %v2702 = vpack.c.b16 %v2668, %v2667
    %v2703 = vpack.c.b16 %v2670, %v2669
    %v2704 = vpack.c.b16 %v2672, %v2671
    %v2709 = vunpack.c.l.b16 %v2541
    %v2710 = vunpack.c.l.b16 %v2542
    %v2711 = vunpack.c.l.b16 %v2543
    %v2712 = vunpack.c.l.b16 %v2544
    %v2713 = vpack.c.b16 %v2710, %v2709
    %v2714 = vpack.c.b16 %v2712, %v2711
    %vm2717 = vcmask 261120
    %v2719 = vsel %vm2717, %v2673, 0
    %v2722 = vsel %vm2717, %v2674, 0
    %v2725 = vsel %vm2717, %v2675, 0
    %v2728 = vsel %vm2717, %v2676, 0
    %v2731 = vsel %vm2717, %v2677, 0
    %v2734 = vsel %vm2717, %v2678, 0
    %v2737 = vsel %vm2717, %v2679, 0
    %v2740 = vsel %vm2717, %v2680, 0
    %v2743 = vsel %vm2717, %v2681, 0
    %v2746 = vsel %vm2717, %v2682, 0
    %v2749 = vsel %vm2717, %v2683, 0
    %v2752 = vsel %vm2717, %v2684, 0
    %v2755 = vsel %vm2717, %v2685, 0
    %v2758 = vsel %vm2717, %v2686, 0
    %v2761 = vsel %vm2717, %v2687, 0
    %v2764 = vsel %vm2717, %v2688, 0
    %v2767 = vsel %vm2717, %v2689, 0
    %v2770 = vsel %vm2717, %v2690, 0
    %v2773 = vsel %vm2717, %v2691, 0
    %v2776 = vsel %vm2717, %v2692, 0
    %v2779 = vsel %vm2717, %v2693, 0
    %v2782 = vsel %vm2717, %v2694, 0
    %v2785 = vsel %vm2717, %v2695, 0
    %v2788 = vsel %vm2717, %v2696, 0
    %v2791 = vsel %vm2717, %v2697, 0
    %v2794 = vsel %vm2717, %v2698, 0
    %v2797 = vsel %vm2717, %v2699, 0
    %v2800 = vsel %vm2717, %v2700, 0
    %v2803 = vsel %vm2717, %v2701, 0
    %v2806 = vsel %vm2717, %v2702, 0
    %v2809 = vsel %vm2717, %v2703, 0
    %v2812 = vsel %vm2717, %v2704, 0
    %2814 = vmatprep.subr.bf16.mxu0 0
    %2815 = vmatpush1.bf16.msra.mxu0 %v2713
    %2816 = vmatprep.subr.bf16.mxu0 0
    %2817 = vmatpush1.bf16.msra.mxu0 %v2714
    %2818 = vmatprep.subr.bf16.mxu0 0
    %2819 = vmatpush1.bf16.msra.mxu0 0
    %2820 = vmatprep.subr.bf16.mxu0 0
    %2821 = vmatpush1.bf16.msra.mxu0 0
    %2822 = vmatprep.subr.bf16.mxu0 0
    %2823 = vmatpush1.bf16.msra.mxu0 0
    %2824 = vmatprep.subr.bf16.mxu0 0
    %2825 = vmatpush1.bf16.msra.mxu0 0
    %2826 = vmatprep.subr.bf16.mxu0 0
    %2827 = vmatpush1.bf16.msra.mxu0 0
    %2828 = vmatprep.subr.bf16.mxu0 0
    %2829 = vmatpush1.bf16.msra.mxu0 0
    %2830 = vmatprep.subr.bf16.mxu0 0
    %2831 = vmatpush1.bf16.msra.mxu0 0
    %2832 = vmatprep.subr.bf16.mxu0 0
    %2833 = vmatpush1.bf16.msra.mxu0 0
    %2834 = vmatprep.subr.bf16.mxu0 0
    %2835 = vmatpush1.bf16.msra.mxu0 0
    %2836 = vmatprep.subr.bf16.mxu0 0
    %2837 = vmatpush1.bf16.msra.mxu0 0
    %2838 = vmatprep.subr.bf16.mxu0 0
    %2839 = vmatpush1.bf16.msra.mxu0 0
    %2840 = vmatprep.subr.bf16.mxu0 0
    %2841 = vmatpush1.bf16.msra.mxu0 0
    %2842 = vmatprep.subr.bf16.mxu0 0
    %2843 = vmatpush1.bf16.msra.mxu0 0
    %2844 = vmatprep.subr.bf16.mxu0 0
    %2845 = vmatpush1.bf16.msra.mxu0 0
    %2846 = vmatprep.mubr.bf16.mxu0 0
    %2847 = vmatmul.mubr.bf16.gmra.mrb[0].mxu0 %v2719
    %v2848 = vpop.f32.mrb[0].mxu0
    %v2849 = vadd.f32 0.0, %v2848
    %v2850 = vpop.f32.mrb[0].mxu0
    %v2851 = vpop.f32.mrb[0].mxu0
    %v2852 = vadd.f32 0.0, %v2851
    %v2853 = vpop.f32.mrb[0].mxu0
    %2854 = vmatprep.mubr.bf16.mxu0 0
    %2855 = vmatmul.mubr.bf16.gmra.mrb[0].mxu0 %v2722
    %v2856 = vpop.f32.mrb[0].mxu0
    %v2857 = vadd.f32 0.0, %v2856
    %v2858 = vpop.f32.mrb[0].mxu0
    %v2859 = vpop.f32.mrb[0].mxu0
    %v2860 = vadd.f32 0.0, %v2859
    %v2861 = vpop.f32.mrb[0].mxu0
    %2862 = vmatprep.mubr.bf16.mxu0 0
    %2863 = vmatmul.mubr.bf16.gmra.mrb[0].mxu0 %v2725
    %v2864 = vpop.f32.mrb[0].mxu0
    %v2865 = vadd.f32 0.0, %v2864
    %v2866 = vpop.f32.mrb[0].mxu0
    %v2867 = vpop.f32.mrb[0].mxu0
    %v2868 = vadd.f32 0.0, %v2867
    %v2869 = vpop.f32.mrb[0].mxu0
    %2870 = vmatprep.mubr.bf16.mxu0 0
    %2871 = vmatmul.mubr.bf16.gmra.mrb[0].mxu0 %v2728
    %v2872 = vpop.f32.mrb[0].mxu0
    %v2873 = vadd.f32 0.0, %v2872
    %v2874 = vpop.f32.mrb[0].mxu0
    %v2875 = vpop.f32.mrb[0].mxu0
    %v2876 = vadd.f32 0.0, %v2875
    %v2877 = vpop.f32.mrb[0].mxu0
    %2878 = vmatprep.mubr.bf16.mxu0 0
    %2879 = vmatmul.mubr.bf16.gmra.mrb[0].mxu0 %v2731
    %v2880 = vpop.f32.mrb[0].mxu0
    %v2881 = vadd.f32 0.0, %v2880
    %v2882 = vpop.f32.mrb[0].mxu0
    %v2883 = vpop.f32.mrb[0].mxu0
    %v2884 = vadd.f32 0.0, %v2883
    %v2885 = vpop.f32.mrb[0].mxu0
    %2886 = vmatprep.mubr.bf16.mxu0 0
    %2887 = vmatmul.mubr.bf16.gmra.mrb[0].mxu0 %v2734
    %v2888 = vpop.f32.mrb[0].mxu0
    %v2889 = vadd.f32 0.0, %v2888
    %v2890 = vpop.f32.mrb[0].mxu0
    %v2891 = vpop.f32.mrb[0].mxu0
    %v2892 = vadd.f32 0.0, %v2891
    %v2893 = vpop.f32.mrb[0].mxu0
    %2894 = vmatprep.mubr.bf16.mxu0 0
    %2895 = vmatmul.mubr.bf16.gmra.mrb[0].mxu0 %v2737
    %v2896 = vpop.f32.mrb[0].mxu0
    %v2897 = vadd.f32 0.0, %v2896
    %v2898 = vpop.f32.mrb[0].mxu0
    %v2899 = vpop.f32.mrb[0].mxu0
    %v2900 = vadd.f32 0.0, %v2899
    %v2901 = vpop.f32.mrb[0].mxu0
    %2902 = vmatprep.mubr.bf16.mxu0 0
    %2903 = vmatmul.mubr.bf16.gmra.mrb[0].mxu0 %v2740
    %v2904 = vpop.f32.mrb[0].mxu0
    %v2905 = vadd.f32 0.0, %v2904
    %v2906 = vpop.f32.mrb[0].mxu0
    %v2907 = vpop.f32.mrb[0].mxu0
    %v2908 = vadd.f32 0.0, %v2907
    %v2909 = vpop.f32.mrb[0].mxu0
    %2910 = vmatprep.mubr.bf16.mxu0 0
    %2911 = vmatmul.mubr.bf16.gmra.mrb[0].mxu0 %v2743
    %v2912 = vpop.f32.mrb[0].mxu0
    %v2913 = vadd.f32 0.0, %v2912
    %v2914 = vpop.f32.mrb[0].mxu0
    %v2915 = vpop.f32.mrb[0].mxu0
    %v2916 = vadd.f32 0.0, %v2915
    %v2917 = vpop.f32.mrb[0].mxu0
    %2918 = vmatprep.mubr.bf16.mxu0 0
    %2919 = vmatmul.mubr.bf16.gmra.mrb[0].mxu0 %v2746
    %v2920 = vpop.f32.mrb[0].mxu0
    %v2921 = vadd.f32 0.0, %v2920
    %v2922 = vpop.f32.mrb[0].mxu0
    %v2923 = vpop.f32.mrb[0].mxu0
    %v2924 = vadd.f32 0.0, %v2923
    %v2925 = vpop.f32.mrb[0].mxu0
    %2926 = vmatprep.mubr.bf16.mxu0 0
    %2927 = vmatmul.mubr.bf16.gmra.mrb[0].mxu0 %v2749
    %v2928 = vpop.f32.mrb[0].mxu0
    %v2929 = vadd.f32 0.0, %v2928
    %v2930 = vpop.f32.mrb[0].mxu0
    %v2931 = vpop.f32.mrb[0].mxu0
    %v2932 = vadd.f32 0.0, %v2931
    %v2933 = vpop.f32.mrb[0].mxu0
    %2934 = vmatprep.mubr.bf16.mxu0 0
    %2935 = vmatmul.mubr.bf16.gmra.mrb[0].mxu0 %v2752
    %v2936 = vpop.f32.mrb[0].mxu0
    %v2937 = vadd.f32 0.0, %v2936
    %v2938 = vpop.f32.mrb[0].mxu0
    %v2939 = vpop.f32.mrb[0].mxu0
    %v2940 = vadd.f32 0.0, %v2939
    %v2941 = vpop.f32.mrb[0].mxu0
    %2942 = vmatprep.mubr.bf16.mxu0 0
    %2943 = vmatmul.mubr.bf16.gmra.mrb[0].mxu0 %v2755
    %v2944 = vpop.f32.mrb[0].mxu0
    %v2945 = vadd.f32 0.0, %v2944
    %v2946 = vpop.f32.mrb[0].mxu0
    %v2947 = vpop.f32.mrb[0].mxu0
    %v2948 = vadd.f32 0.0, %v2947
    %v2949 = vpop.f32.mrb[0].mxu0
    %2950 = vmatprep.mubr.bf16.mxu0 0
    %2951 = vmatmul.mubr.bf16.gmra.mrb[0].mxu0 %v2758
    %v2952 = vpop.f32.mrb[0].mxu0
    %v2953 = vadd.f32 0.0, %v2952
    %v2954 = vpop.f32.mrb[0].mxu0
    %v2955 = vpop.f32.mrb[0].mxu0
    %v2956 = vadd.f32 0.0, %v2955
    %v2957 = vpop.f32.mrb[0].mxu0
    %2958 = vmatprep.mubr.bf16.mxu0 0
    %2959 = vmatmul.mubr.bf16.gmra.mrb[0].mxu0 %v2761
    %v2960 = vpop.f32.mrb[0].mxu0
    %v2961 = vadd.f32 0.0, %v2960
    %v2962 = vpop.f32.mrb[0].mxu0
    %v2963 = vpop.f32.mrb[0].mxu0
    %v2964 = vadd.f32 0.0, %v2963
    %v2965 = vpop.f32.mrb[0].mxu0
    %2966 = vmatprep.mubr.bf16.mxu0 0
    %2967 = vmatmul.mubr.bf16.gmra.mrb[0].mxu0 %v2764
    %v2968 = vpop.f32.mrb[0].mxu0
    %v2969 = vadd.f32 0.0, %v2968
    %v2970 = vpop.f32.mrb[0].mxu0
    %v2971 = vpop.f32.mrb[0].mxu0
    %v2972 = vadd.f32 0.0, %v2971
    %v2973 = vpop.f32.mrb[0].mxu0
    %2974 = vmatprep.mubr.bf16.mxu0 0
    %2975 = vmatmul.mubr.bf16.gmra.mrb[0].mxu0 %v2767
    %v2976 = vpop.f32.mrb[0].mxu0
    %v2977 = vadd.f32 0.0, %v2976
    %v2978 = vpop.f32.mrb[0].mxu0
    %v2979 = vpop.f32.mrb[0].mxu0
    %v2980 = vadd.f32 0.0, %v2979
    %v2981 = vpop.f32.mrb[0].mxu0
    %2982 = vmatprep.mubr.bf16.mxu0 0
    %2983 = vmatmul.mubr.bf16.gmra.mrb[0].mxu0 %v2770
    %v2984 = vpop.f32.mrb[0].mxu0
    %v2985 = vadd.f32 0.0, %v2984
    %v2986 = vpop.f32.mrb[0].mxu0
    %v2987 = vpop.f32.mrb[0].mxu0
    %v2988 = vadd.f32 0.0, %v2987
    %v2989 = vpop.f32.mrb[0].mxu0
    %2990 = vmatprep.mubr.bf16.mxu0 0
    %2991 = vmatmul.mubr.bf16.gmra.mrb[0].mxu0 %v2773
    %v2992 = vpop.f32.mrb[0].mxu0
    %v2993 = vadd.f32 0.0, %v2992
    %v2994 = vpop.f32.mrb[0].mxu0
    %v2995 = vpop.f32.mrb[0].mxu0
    %v2996 = vadd.f32 0.0, %v2995
    %v2997 = vpop.f32.mrb[0].mxu0
    %2998 = vmatprep.mubr.bf16.mxu0 0
    %2999 = vmatmul.mubr.bf16.gmra.mrb[0].mxu0 %v2776
    %v3000 = vpop.f32.mrb[0].mxu0
    %v3001 = vadd.f32 0.0, %v3000
    %v3002 = vpop.f32.mrb[0].mxu0
    %v3003 = vpop.f32.mrb[0].mxu0
    %v3004 = vadd.f32 0.0, %v3003
    %v3005 = vpop.f32.mrb[0].mxu0
    %3006 = vmatprep.mubr.bf16.mxu0 0
    %3007 = vmatmul.mubr.bf16.gmra.mrb[0].mxu0 %v2779
    %v3008 = vpop.f32.mrb[0].mxu0
    %v3009 = vadd.f32 0.0, %v3008
    %v3010 = vpop.f32.mrb[0].mxu0
    %v3011 = vpop.f32.mrb[0].mxu0
    %v3012 = vadd.f32 0.0, %v3011
    %v3013 = vpop.f32.mrb[0].mxu0
    %3014 = vmatprep.mubr.bf16.mxu0 0
    %3015 = vmatmul.mubr.bf16.gmra.mrb[0].mxu0 %v2782
    %v3016 = vpop.f32.mrb[0].mxu0
    %v3017 = vadd.f32 0.0, %v3016
    %v3018 = vpop.f32.mrb[0].mxu0
    %v3019 = vpop.f32.mrb[0].mxu0
    %v3020 = vadd.f32 0.0, %v3019
    %v3021 = vpop.f32.mrb[0].mxu0
    %3022 = vmatprep.mubr.bf16.mxu0 0
    %3023 = vmatmul.mubr.bf16.gmra.mrb[0].mxu0 %v2785
    %v3024 = vpop.f32.mrb[0].mxu0
    %v3025 = vadd.f32 0.0, %v3024
    %v3026 = vpop.f32.mrb[0].mxu0
    %v3027 = vpop.f32.mrb[0].mxu0
    %v3028 = vadd.f32 0.0, %v3027
    %v3029 = vpop.f32.mrb[0].mxu0
    %3030 = vmatprep.mubr.bf16.mxu0 0
    %3031 = vmatmul.mubr.bf16.gmra.mrb[0].mxu0 %v2788
    %v3032 = vpop.f32.mrb[0].mxu0
    %v3033 = vadd.f32 0.0, %v3032
    %v3034 = vpop.f32.mrb[0].mxu0
    %v3035 = vpop.f32.mrb[0].mxu0
    %v3036 = vadd.f32 0.0, %v3035
    %v3037 = vpop.f32.mrb[0].mxu0
    %3038 = vmatprep.mubr.bf16.mxu0 0
    %3039 = vmatmul.mubr.bf16.gmra.mrb[0].mxu0 %v2791
    %v3040 = vpop.f32.mrb[0].mxu0
    %v3041 = vadd.f32 0.0, %v3040
    %v3042 = vpop.f32.mrb[0].mxu0
    %v3043 = vpop.f32.mrb[0].mxu0
    %v3044 = vadd.f32 0.0, %v3043
    %v3045 = vpop.f32.mrb[0].mxu0
    %3046 = vmatprep.mubr.bf16.mxu0 0
    %3047 = vmatmul.mubr.bf16.gmra.mrb[0].mxu0 %v2794
    %v3048 = vpop.f32.mrb[0].mxu0
    %v3049 = vadd.f32 0.0, %v3048
    %v3050 = vpop.f32.mrb[0].mxu0
    %v3051 = vpop.f32.mrb[0].mxu0
    %v3052 = vadd.f32 0.0, %v3051
    %v3053 = vpop.f32.mrb[0].mxu0
    %3054 = vmatprep.mubr.bf16.mxu0 0
    %3055 = vmatmul.mubr.bf16.gmra.mrb[0].mxu0 %v2797
    %v3056 = vpop.f32.mrb[0].mxu0
    %v3057 = vadd.f32 0.0, %v3056
    %v3058 = vpop.f32.mrb[0].mxu0
    %v3059 = vpop.f32.mrb[0].mxu0
    %v3060 = vadd.f32 0.0, %v3059
    %v3061 = vpop.f32.mrb[0].mxu0
    %3062 = vmatprep.mubr.bf16.mxu0 0
    %3063 = vmatmul.mubr.bf16.gmra.mrb[0].mxu0 %v2800
    %v3064 = vpop.f32.mrb[0].mxu0
    %v3065 = vadd.f32 0.0, %v3064
    %v3066 = vpop.f32.mrb[0].mxu0
    %v3067 = vpop.f32.mrb[0].mxu0
    %v3068 = vadd.f32 0.0, %v3067
    %v3069 = vpop.f32.mrb[0].mxu0
    %3070 = vmatprep.mubr.bf16.mxu0 0
    %3071 = vmatmul.mubr.bf16.gmra.mrb[0].mxu0 %v2803
    %v3072 = vpop.f32.mrb[0].mxu0
    %v3073 = vadd.f32 0.0, %v3072
    %v3074 = vpop.f32.mrb[0].mxu0
    %v3075 = vpop.f32.mrb[0].mxu0
    %v3076 = vadd.f32 0.0, %v3075
    %v3077 = vpop.f32.mrb[0].mxu0
    %3078 = vmatprep.mubr.bf16.mxu0 0
    %3079 = vmatmul.mubr.bf16.gmra.mrb[0].mxu0 %v2806
    %v3080 = vpop.f32.mrb[0].mxu0
    %v3081 = vadd.f32 0.0, %v3080
    %v3082 = vpop.f32.mrb[0].mxu0
    %v3083 = vpop.f32.mrb[0].mxu0
    %v3084 = vadd.f32 0.0, %v3083
    %v3085 = vpop.f32.mrb[0].mxu0
    %3086 = vmatprep.mubr.bf16.mxu0 0
    %3087 = vmatmul.mubr.bf16.gmra.mrb[0].mxu0 %v2809
    %v3088 = vpop.f32.mrb[0].mxu0
    %v3089 = vadd.f32 0.0, %v3088
    %v3090 = vpop.f32.mrb[0].mxu0
    %v3091 = vpop.f32.mrb[0].mxu0
    %v3092 = vadd.f32 0.0, %v3091
    %v3093 = vpop.f32.mrb[0].mxu0
    %3094 = vmatprep.mubr.bf16.mxu0 0
    %3095 = vmatmul.mubr.bf16.gmra.mrb[0].mxu0 %v2812
    %v3096 = vpop.f32.mrb[0].mxu0
    %v3097 = vadd.f32 0.0, %v3096
    %v3098 = vpop.f32.mrb[0].mxu0
    %v3099 = vpop.f32.mrb[0].mxu0
    %v3100 = vadd.f32 0.0, %v3099
    %v3101 = vpop.f32.mrb[0].mxu0
    %3102 = vdwg.mxu0
    %v3103 = vpack.c.b16 %v2609, %v1547
    %v3104 = vpack.c.b16 %v2611, %v2610
    %v3105 = vpack.c.b16 %v2613, %v2612
    %v3106 = vpack.c.b16 %v2615, %v2614
    %v3107 = vpack.c.b16 %v2617, %v2616
    %v3108 = vpack.c.b16 %v2619, %v2618
    %v3109 = vpack.c.b16 %v2621, %v2620
    %v3110 = vpack.c.b16 %v2623, %v2622
    %v3111 = vpack.c.b16 %v2625, %v2624
    %v3112 = vpack.c.b16 %v2627, %v2626
    %v3113 = vpack.c.b16 %v2629, %v2628
    %v3114 = vpack.c.b16 %v2631, %v2630
    %v3115 = vpack.c.b16 %v2633, %v2632
    %v3116 = vpack.c.b16 %v2635, %v2634
    %v3117 = vpack.c.b16 %v2637, %v2636
    %v3118 = vpack.c.b16 %v2639, %v2638
    %v3119 = vpack.c.b16 %v2641, %v2640
    %v3120 = vpack.c.b16 %v2643, %v2642
    %v3121 = vpack.c.b16 %v2645, %v2644
    %v3122 = vpack.c.b16 %v2647, %v2646
    %v3123 = vpack.c.b16 %v2649, %v2648
    %v3124 = vpack.c.b16 %v2651, %v2650
    %v3125 = vpack.c.b16 %v2653, %v2652
    %v3126 = vpack.c.b16 %v2655, %v2654
    %v3127 = vpack.c.b16 %v2657, %v2656
    %v3128 = vpack.c.b16 %v2659, %v2658
    %v3129 = vpack.c.b16 %v2661, %v2660
    %v3130 = vpack.c.b16 %v2663, %v2662
    %v3131 = vpack.c.b16 %v2665, %v2664
    %v3132 = vpack.c.b16 %v2667, %v2666
    %v3133 = vpack.c.b16 %v2669, %v2668
    %v3134 = vpack.c.b16 %v2671, %v2670
    %v3139 = vunpack.c.l.b16 %v2536
    %v3140 = vunpack.c.l.b16 %v2537
    %v3141 = vunpack.c.l.b16 %v2538
    %v3142 = vunpack.c.l.b16 %v2539
    %v3143 = vpack.c.b16 %v3140, %v3139
    %v3144 = vpack.c.b16 %v3142, %v3141
    %v3148 = vsel %vm2717, %v3103, 0
    %v3151 = vsel %vm2717, %v3104, 0
    %v3154 = vsel %vm2717, %v3105, 0
    %v3157 = vsel %vm2717, %v3106, 0
    %v3160 = vsel %vm2717, %v3107, 0
    %v3163 = vsel %vm2717, %v3108, 0
    %v3166 = vsel %vm2717, %v3109, 0
    %v3169 = vsel %vm2717, %v3110, 0
    %v3172 = vsel %vm2717, %v3111, 0
    %v3175 = vsel %vm2717, %v3112, 0
    %v3178 = vsel %vm2717, %v3113, 0
    %v3181 = vsel %vm2717, %v3114, 0
    %v3184 = vsel %vm2717, %v3115, 0
    %v3187 = vsel %vm2717, %v3116, 0
    %v3190 = vsel %vm2717, %v3117, 0
    %v3193 = vsel %vm2717, %v3118, 0
    %v3196 = vsel %vm2717, %v3119, 0
    %v3199 = vsel %vm2717, %v3120, 0
    %v3202 = vsel %vm2717, %v3121, 0
    %v3205 = vsel %vm2717, %v3122, 0
    %v3208 = vsel %vm2717, %v3123, 0
    %v3211 = vsel %vm2717, %v3124, 0
    %v3214 = vsel %vm2717, %v3125, 0
    %v3217 = vsel %vm2717, %v3126, 0
    %v3220 = vsel %vm2717, %v3127, 0
    %v3223 = vsel %vm2717, %v3128, 0
    %v3226 = vsel %vm2717, %v3129, 0
    %v3229 = vsel %vm2717, %v3130, 0
    %v3232 = vsel %vm2717, %v3131, 0
    %v3235 = vsel %vm2717, %v3132, 0
    %v3238 = vsel %vm2717, %v3133, 0
    %v3241 = vsel %vm2717, %v3134, 0
    %3243 = vmatprep.subr.bf16.mxu0 0
    %3244 = vmatpush1.bf16.msra.mxu0 %v3143
    %3245 = vmatprep.subr.bf16.mxu0 0
    %3246 = vmatpush1.bf16.msra.mxu0 %v3144
    %3247 = vmatprep.subr.bf16.mxu0 0
    %3248 = vmatpush1.bf16.msra.mxu0 0
    %3249 = vmatprep.subr.bf16.mxu0 0
    %3250 = vmatpush1.bf16.msra.mxu0 0
    %3251 = vmatprep.subr.bf16.mxu0 0
    %3252 = vmatpush1.bf16.msra.mxu0 0
    %3253 = vmatprep.subr.bf16.mxu0 0
    %3254 = vmatpush1.bf16.msra.mxu0 0
    %3255 = vmatprep.subr.bf16.mxu0 0
    %3256 = vmatpush1.bf16.msra.mxu0 0
    %3257 = vmatprep.subr.bf16.mxu0 0
    %3258 = vmatpush1.bf16.msra.mxu0 0
    %3259 = vmatprep.subr.bf16.mxu0 0
    %3260 = vmatpush1.bf16.msra.mxu0 0
    %3261 = vmatprep.subr.bf16.mxu0 0
    %3262 = vmatpush1.bf16.msra.mxu0 0
    %3263 = vmatprep.subr.bf16.mxu0 0
    %3264 = vmatpush1.bf16.msra.mxu0 0
    %3265 = vmatprep.subr.bf16.mxu0 0
    %3266 = vmatpush1.bf16.msra.mxu0 0
    %3267 = vmatprep.subr.bf16.mxu0 0
    %3268 = vmatpush1.bf16.msra.mxu0 0
    %3269 = vmatprep.subr.bf16.mxu0 0
    %3270 = vmatpush1.bf16.msra.mxu0 0
    %3271 = vmatprep.subr.bf16.mxu0 0
    %3272 = vmatpush1.bf16.msra.mxu0 0
    %3273 = vmatprep.subr.bf16.mxu0 0
    %3274 = vmatpush1.bf16.msra.mxu0 0
    %3275 = vmatprep.mubr.bf16.mxu0 0
    %3276 = vmatmul.mubr.bf16.gmra.mrb[0].mxu0 %v3148
    %v3277 = vpop.f32.mrb[0].mxu0
    %v3278 = vadd.f32 %v2849, %v3277
    %v3279 = vpop.f32.mrb[0].mxu0
    %v3280 = vpop.f32.mrb[0].mxu0
    %v3281 = vadd.f32 %v2852, %v3280
    %v3282 = vpop.f32.mrb[0].mxu0
    %3283 = vmatprep.mubr.bf16.mxu0 0
    %3284 = vmatmul.mubr.bf16.gmra.mrb[0].mxu0 %v3151
    %v3285 = vpop.f32.mrb[0].mxu0
    %v3286 = vadd.f32 %v2857, %v3285
    %v3287 = vpop.f32.mrb[0].mxu0
    %v3288 = vpop.f32.mrb[0].mxu0
    %v3289 = vadd.f32 %v2860, %v3288
    %v3290 = vpop.f32.mrb[0].mxu0
    %3291 = vmatprep.mubr.bf16.mxu0 0
    %3292 = vmatmul.mubr.bf16.gmra.mrb[0].mxu0 %v3154
    %v3293 = vpop.f32.mrb[0].mxu0
    %v3294 = vadd.f32 %v2865, %v3293
    %v3295 = vpop.f32.mrb[0].mxu0
    %v3296 = vpop.f32.mrb[0].mxu0
    %v3297 = vadd.f32 %v2868, %v3296
    %v3298 = vpop.f32.mrb[0].mxu0
    %3299 = vmatprep.mubr.bf16.mxu0 0
    %3300 = vmatmul.mubr.bf16.gmra.mrb[0].mxu0 %v3157
    %v3301 = vpop.f32.mrb[0].mxu0
    %v3302 = vadd.f32 %v2873, %v3301
    %v3303 = vpop.f32.mrb[0].mxu0
    %v3304 = vpop.f32.mrb[0].mxu0
    %v3305 = vadd.f32 %v2876, %v3304
    %v3306 = vpop.f32.mrb[0].mxu0
    %3307 = vmatprep.mubr.bf16.mxu0 0
    %3308 = vmatmul.mubr.bf16.gmra.mrb[0].mxu0 %v3160
    %v3309 = vpop.f32.mrb[0].mxu0
    %v3310 = vadd.f32 %v2881, %v3309
    %v3311 = vpop.f32.mrb[0].mxu0
    %v3312 = vpop.f32.mrb[0].mxu0
    %v3313 = vadd.f32 %v2884, %v3312
    %v3314 = vpop.f32.mrb[0].mxu0
    %3315 = vmatprep.mubr.bf16.mxu0 0
    %3316 = vmatmul.mubr.bf16.gmra.mrb[0].mxu0 %v3163
    %v3317 = vpop.f32.mrb[0].mxu0
    %v3318 = vadd.f32 %v2889, %v3317
    %v3319 = vpop.f32.mrb[0].mxu0
    %v3320 = vpop.f32.mrb[0].mxu0
    %v3321 = vadd.f32 %v2892, %v3320
    %v3322 = vpop.f32.mrb[0].mxu0
    %3323 = vmatprep.mubr.bf16.mxu0 0
    %3324 = vmatmul.mubr.bf16.gmra.mrb[0].mxu0 %v3166
    %v3325 = vpop.f32.mrb[0].mxu0
    %v3326 = vadd.f32 %v2897, %v3325
    %v3327 = vpop.f32.mrb[0].mxu0
    %v3328 = vpop.f32.mrb[0].mxu0
    %v3329 = vadd.f32 %v2900, %v3328
    %v3330 = vpop.f32.mrb[0].mxu0
    %3331 = vmatprep.mubr.bf16.mxu0 0
    %3332 = vmatmul.mubr.bf16.gmra.mrb[0].mxu0 %v3169
    %v3333 = vpop.f32.mrb[0].mxu0
    %v3334 = vadd.f32 %v2905, %v3333
    %v3335 = vpop.f32.mrb[0].mxu0
    %v3336 = vpop.f32.mrb[0].mxu0
    %v3337 = vadd.f32 %v2908, %v3336
    %v3338 = vpop.f32.mrb[0].mxu0
    %3339 = vmatprep.mubr.bf16.mxu0 0
    %3340 = vmatmul.mubr.bf16.gmra.mrb[0].mxu0 %v3172
    %v3341 = vpop.f32.mrb[0].mxu0
    %v3342 = vadd.f32 %v2913, %v3341
    %v3343 = vpop.f32.mrb[0].mxu0
    %v3344 = vpop.f32.mrb[0].mxu0
    %v3345 = vadd.f32 %v2916, %v3344
    %v3346 = vpop.f32.mrb[0].mxu0
    %3347 = vmatprep.mubr.bf16.mxu0 0
    %3348 = vmatmul.mubr.bf16.gmra.mrb[0].mxu0 %v3175
    %v3349 = vpop.f32.mrb[0].mxu0
    %v3350 = vadd.f32 %v2921, %v3349
    %v3351 = vpop.f32.mrb[0].mxu0
    %v3352 = vpop.f32.mrb[0].mxu0
    %v3353 = vadd.f32 %v2924, %v3352
    %v3354 = vpop.f32.mrb[0].mxu0
    %3355 = vmatprep.mubr.bf16.mxu0 0
    %3356 = vmatmul.mubr.bf16.gmra.mrb[0].mxu0 %v3178
    %v3357 = vpop.f32.mrb[0].mxu0
    %v3358 = vadd.f32 %v2929, %v3357
    %v3359 = vpop.f32.mrb[0].mxu0
    %v3360 = vpop.f32.mrb[0].mxu0
    %v3361 = vadd.f32 %v2932, %v3360
    %v3362 = vpop.f32.mrb[0].mxu0
    %3363 = vmatprep.mubr.bf16.mxu0 0
    %3364 = vmatmul.mubr.bf16.gmra.mrb[0].mxu0 %v3181
    %v3365 = vpop.f32.mrb[0].mxu0
    %v3366 = vadd.f32 %v2937, %v3365
    %v3367 = vpop.f32.mrb[0].mxu0
    %v3368 = vpop.f32.mrb[0].mxu0
    %v3369 = vadd.f32 %v2940, %v3368
    %v3370 = vpop.f32.mrb[0].mxu0
    %3371 = vmatprep.mubr.bf16.mxu0 0
    %3372 = vmatmul.mubr.bf16.gmra.mrb[0].mxu0 %v3184
    %v3373 = vpop.f32.mrb[0].mxu0
    %v3374 = vadd.f32 %v2945, %v3373
    %v3375 = vpop.f32.mrb[0].mxu0
    %v3376 = vpop.f32.mrb[0].mxu0
    %v3377 = vadd.f32 %v2948, %v3376
    %v3378 = vpop.f32.mrb[0].mxu0
    %3379 = vmatprep.mubr.bf16.mxu0 0
    %3380 = vmatmul.mubr.bf16.gmra.mrb[0].mxu0 %v3187
    %v3381 = vpop.f32.mrb[0].mxu0
    %v3382 = vadd.f32 %v2953, %v3381
    %v3383 = vpop.f32.mrb[0].mxu0
    %v3384 = vpop.f32.mrb[0].mxu0
    %v3385 = vadd.f32 %v2956, %v3384
    %v3386 = vpop.f32.mrb[0].mxu0
    %3387 = vmatprep.mubr.bf16.mxu0 0
    %3388 = vmatmul.mubr.bf16.gmra.mrb[0].mxu0 %v3190
    %v3389 = vpop.f32.mrb[0].mxu0
    %v3390 = vadd.f32 %v2961, %v3389
    %v3391 = vpop.f32.mrb[0].mxu0
    %v3392 = vpop.f32.mrb[0].mxu0
    %v3393 = vadd.f32 %v2964, %v3392
    %v3394 = vpop.f32.mrb[0].mxu0
    %3395 = vmatprep.mubr.bf16.mxu0 0
    %3396 = vmatmul.mubr.bf16.gmra.mrb[0].mxu0 %v3193
    %v3397 = vpop.f32.mrb[0].mxu0
    %v3398 = vadd.f32 %v2969, %v3397
    %v3399 = vpop.f32.mrb[0].mxu0
    %v3400 = vpop.f32.mrb[0].mxu0
    %v3401 = vadd.f32 %v2972, %v3400
    %v3402 = vpop.f32.mrb[0].mxu0
    %3403 = vmatprep.mubr.bf16.mxu0 0
    %3404 = vmatmul.mubr.bf16.gmra.mrb[0].mxu0 %v3196
    %v3405 = vpop.f32.mrb[0].mxu0
    %v3406 = vadd.f32 %v2977, %v3405
    %v3407 = vpop.f32.mrb[0].mxu0
    %v3408 = vpop.f32.mrb[0].mxu0
    %v3409 = vadd.f32 %v2980, %v3408
    %v3410 = vpop.f32.mrb[0].mxu0
    %3411 = vmatprep.mubr.bf16.mxu0 0
    %3412 = vmatmul.mubr.bf16.gmra.mrb[0].mxu0 %v3199
    %v3413 = vpop.f32.mrb[0].mxu0
    %v3414 = vadd.f32 %v2985, %v3413
    %v3415 = vpop.f32.mrb[0].mxu0
    %v3416 = vpop.f32.mrb[0].mxu0
    %v3417 = vadd.f32 %v2988, %v3416
    %v3418 = vpop.f32.mrb[0].mxu0
    %3419 = vmatprep.mubr.bf16.mxu0 0
    %3420 = vmatmul.mubr.bf16.gmra.mrb[0].mxu0 %v3202
    %v3421 = vpop.f32.mrb[0].mxu0
    %v3422 = vadd.f32 %v2993, %v3421
    %v3423 = vpop.f32.mrb[0].mxu0
    %v3424 = vpop.f32.mrb[0].mxu0
    %v3425 = vadd.f32 %v2996, %v3424
    %v3426 = vpop.f32.mrb[0].mxu0
    %3427 = vmatprep.mubr.bf16.mxu0 0
    %3428 = vmatmul.mubr.bf16.gmra.mrb[0].mxu0 %v3205
    %v3429 = vpop.f32.mrb[0].mxu0
    %v3430 = vadd.f32 %v3001, %v3429
    %v3431 = vpop.f32.mrb[0].mxu0
    %v3432 = vpop.f32.mrb[0].mxu0
    %v3433 = vadd.f32 %v3004, %v3432
    %v3434 = vpop.f32.mrb[0].mxu0
    %3435 = vmatprep.mubr.bf16.mxu0 0
    %3436 = vmatmul.mubr.bf16.gmra.mrb[0].mxu0 %v3208
    %v3437 = vpop.f32.mrb[0].mxu0
    %v3438 = vadd.f32 %v3009, %v3437
    %v3439 = vpop.f32.mrb[0].mxu0
    %v3440 = vpop.f32.mrb[0].mxu0
    %v3441 = vadd.f32 %v3012, %v3440
    %v3442 = vpop.f32.mrb[0].mxu0
    %3443 = vmatprep.mubr.bf16.mxu0 0
    %3444 = vmatmul.mubr.bf16.gmra.mrb[0].mxu0 %v3211
    %v3445 = vpop.f32.mrb[0].mxu0
    %v3446 = vadd.f32 %v3017, %v3445
    %v3447 = vpop.f32.mrb[0].mxu0
    %v3448 = vpop.f32.mrb[0].mxu0
    %v3449 = vadd.f32 %v3020, %v3448
    %v3450 = vpop.f32.mrb[0].mxu0
    %3451 = vmatprep.mubr.bf16.mxu0 0
    %3452 = vmatmul.mubr.bf16.gmra.mrb[0].mxu0 %v3214
    %v3453 = vpop.f32.mrb[0].mxu0
    %v3454 = vadd.f32 %v3025, %v3453
    %v3455 = vpop.f32.mrb[0].mxu0
    %v3456 = vpop.f32.mrb[0].mxu0
    %v3457 = vadd.f32 %v3028, %v3456
    %v3458 = vpop.f32.mrb[0].mxu0
    %3459 = vmatprep.mubr.bf16.mxu0 0
    %3460 = vmatmul.mubr.bf16.gmra.mrb[0].mxu0 %v3217
    %v3461 = vpop.f32.mrb[0].mxu0
    %v3462 = vadd.f32 %v3033, %v3461
    %v3463 = vpop.f32.mrb[0].mxu0
    %v3464 = vpop.f32.mrb[0].mxu0
    %v3465 = vadd.f32 %v3036, %v3464
    %v3466 = vpop.f32.mrb[0].mxu0
    %3467 = vmatprep.mubr.bf16.mxu0 0
    %3468 = vmatmul.mubr.bf16.gmra.mrb[0].mxu0 %v3220
    %v3469 = vpop.f32.mrb[0].mxu0
    %v3470 = vadd.f32 %v3041, %v3469
    %v3471 = vpop.f32.mrb[0].mxu0
    %v3472 = vpop.f32.mrb[0].mxu0
    %v3473 = vadd.f32 %v3044, %v3472
    %v3474 = vpop.f32.mrb[0].mxu0
    %3475 = vmatprep.mubr.bf16.mxu0 0
    %3476 = vmatmul.mubr.bf16.gmra.mrb[0].mxu0 %v3223
    %v3477 = vpop.f32.mrb[0].mxu0
    %v3478 = vadd.f32 %v3049, %v3477
    %v3479 = vpop.f32.mrb[0].mxu0
    %v3480 = vpop.f32.mrb[0].mxu0
    %v3481 = vadd.f32 %v3052, %v3480
    %v3482 = vpop.f32.mrb[0].mxu0
    %3483 = vmatprep.mubr.bf16.mxu0 0
    %3484 = vmatmul.mubr.bf16.gmra.mrb[0].mxu0 %v3226
    %v3485 = vpop.f32.mrb[0].mxu0
    %v3486 = vadd.f32 %v3057, %v3485
    %v3487 = vpop.f32.mrb[0].mxu0
    %v3488 = vpop.f32.mrb[0].mxu0
    %v3489 = vadd.f32 %v3060, %v3488
    %v3490 = vpop.f32.mrb[0].mxu0
    %3491 = vmatprep.mubr.bf16.mxu0 0
    %3492 = vmatmul.mubr.bf16.gmra.mrb[0].mxu0 %v3229
    %v3493 = vpop.f32.mrb[0].mxu0
    %v3494 = vadd.f32 %v3065, %v3493
    %v3495 = vpop.f32.mrb[0].mxu0
    %v3496 = vpop.f32.mrb[0].mxu0
    %v3497 = vadd.f32 %v3068, %v3496
    %v3498 = vpop.f32.mrb[0].mxu0
    %3499 = vmatprep.mubr.bf16.mxu0 0
    %3500 = vmatmul.mubr.bf16.gmra.mrb[0].mxu0 %v3232
    %v3501 = vpop.f32.mrb[0].mxu0
    %v3502 = vadd.f32 %v3073, %v3501
    %v3503 = vpop.f32.mrb[0].mxu0
    %v3504 = vpop.f32.mrb[0].mxu0
    %v3505 = vadd.f32 %v3076, %v3504
    %v3506 = vpop.f32.mrb[0].mxu0
    %3507 = vmatprep.mubr.bf16.mxu0 0
    %3508 = vmatmul.mubr.bf16.gmra.mrb[0].mxu0 %v3235
    %v3509 = vpop.f32.mrb[0].mxu0
    %v3510 = vadd.f32 %v3081, %v3509
    %v3511 = vpop.f32.mrb[0].mxu0
    %v3512 = vpop.f32.mrb[0].mxu0
    %v3513 = vadd.f32 %v3084, %v3512
    %v3514 = vpop.f32.mrb[0].mxu0
    %3515 = vmatprep.mubr.bf16.mxu0 0
    %3516 = vmatmul.mubr.bf16.gmra.mrb[0].mxu0 %v3238
    %v3517 = vpop.f32.mrb[0].mxu0
    %v3518 = vadd.f32 %v3089, %v3517
    %v3519 = vpop.f32.mrb[0].mxu0
    %v3520 = vpop.f32.mrb[0].mxu0
    %v3521 = vadd.f32 %v3092, %v3520
    %v3522 = vpop.f32.mrb[0].mxu0
    %3523 = vmatprep.mubr.bf16.mxu0 0
    %3524 = vmatmul.mubr.bf16.gmra.mrb[0].mxu0 %v3241
    %v3525 = vpop.f32.mrb[0].mxu0
    %v3526 = vadd.f32 %v3097, %v3525
    %v3527 = vpop.f32.mrb[0].mxu0
    %v3528 = vpop.f32.mrb[0].mxu0
    %v3529 = vadd.f32 %v3100, %v3528
    %v3530 = vpop.f32.mrb[0].mxu0
    %3531 = vdwg.mxu0
    %s3532 = scalar_lea.vmem %s5, 32
    %v3533 = vld [vmem:[%s3532] sm:$0xf]
    %v3534 = vld [vmem:[%s3532 + $0x4] sm:$0xf]
    %v3535 = vld [vmem:[%s3532 + $0x8] sm:$0xf]
    %v3536 = vld [vmem:[%s3532 + $0xc] sm:$0xf]
    %v3537 = vpack.c.b16 %v1547, %v2672
    %v3542 = vunpack.c.l.b16 %v3533
    %v3543 = vunpack.c.l.b16 %v3534
    %v3544 = vunpack.c.l.b16 %v3535
    %v3545 = vunpack.c.l.b16 %v3536
    %v3546 = vpack.c.b16 %v3543, %v3542
    %v3547 = vpack.c.b16 %v3545, %v3544
    %v3551 = vsel %vm2717, %v3537, 0
    %3553 = vmatprep.subr.bf16.mxu0 0
    %3554 = vmatpush1.bf16.msra.mxu0 %v3546
    %3555 = vmatprep.subr.bf16.mxu0 0
    %3556 = vmatpush1.bf16.msra.mxu0 %v3547
    %3557 = vmatprep.subr.bf16.mxu0 0
    %3558 = vmatpush1.bf16.msra.mxu0 0
    %3559 = vmatprep.subr.bf16.mxu0 0
    %3560 = vmatpush1.bf16.msra.mxu0 0
    %3561 = vmatprep.subr.bf16.mxu0 0
    %3562 = vmatpush1.bf16.msra.mxu0 0
    %3563 = vmatprep.subr.bf16.mxu0 0
    %3564 = vmatpush1.bf16.msra.mxu0 0
    %3565 = vmatprep.subr.bf16.mxu0 0
    %3566 = vmatpush1.bf16.msra.mxu0 0
    %3567 = vmatprep.subr.bf16.mxu0 0
    %3568 = vmatpush1.bf16.msra.mxu0 0
    %3569 = vmatprep.subr.bf16.mxu0 0
    %3570 = vmatpush1.bf16.msra.mxu0 0
    %3571 = vmatprep.subr.bf16.mxu0 0
    %3572 = vmatpush1.bf16.msra.mxu0 0
    %3573 = vmatprep.subr.bf16.mxu0 0
    %3574 = vmatpush1.bf16.msra.mxu0 0
    %3575 = vmatprep.subr.bf16.mxu0 0
    %3576 = vmatpush1.bf16.msra.mxu0 0
    %3577 = vmatprep.subr.bf16.mxu0 0
    %3578 = vmatpush1.bf16.msra.mxu0 0
    %3579 = vmatprep.subr.bf16.mxu0 0
    %3580 = vmatpush1.bf16.msra.mxu0 0
    %3581 = vmatprep.subr.bf16.mxu0 0
    %3582 = vmatpush1.bf16.msra.mxu0 0
    %3583 = vmatprep.subr.bf16.mxu0 0
    %3584 = vmatpush1.bf16.msra.mxu0 0
    %3585 = vmatprep.mubr.bf16.mxu0 0
    %3586 = vmatmul.mubr.bf16.gmra.mrb[0].mxu0 %v3151
    %v3587 = vpop.f32.mrb[0].mxu0
    %v3588 = vadd.f32 0.0, %v3587
    %v3589 = vpop.f32.mrb[0].mxu0
    %v3590 = vpop.f32.mrb[0].mxu0
    %v3591 = vadd.f32 0.0, %v3590
    %v3592 = vpop.f32.mrb[0].mxu0
    %3593 = vmatprep.mubr.bf16.mxu0 0
    %3594 = vmatmul.mubr.bf16.gmra.mrb[0].mxu0 %v3154
    %v3595 = vpop.f32.mrb[0].mxu0
    %v3596 = vadd.f32 0.0, %v3595
    %v3597 = vpop.f32.mrb[0].mxu0
    %v3598 = vpop.f32.mrb[0].mxu0
    %v3599 = vadd.f32 0.0, %v3598
    %v3600 = vpop.f32.mrb[0].mxu0
    %3601 = vmatprep.mubr.bf16.mxu0 0
    %3602 = vmatmul.mubr.bf16.gmra.mrb[0].mxu0 %v3157
    %v3603 = vpop.f32.mrb[0].mxu0
    %v3604 = vadd.f32 0.0, %v3603
    %v3605 = vpop.f32.mrb[0].mxu0
    %v3606 = vpop.f32.mrb[0].mxu0
    %v3607 = vadd.f32 0.0, %v3606
    %v3608 = vpop.f32.mrb[0].mxu0
    %3609 = vmatprep.mubr.bf16.mxu0 0
    %3610 = vmatmul.mubr.bf16.gmra.mrb[0].mxu0 %v3160
    %v3611 = vpop.f32.mrb[0].mxu0
    %v3612 = vadd.f32 0.0, %v3611
    %v3613 = vpop.f32.mrb[0].mxu0
    %v3614 = vpop.f32.mrb[0].mxu0
    %v3615 = vadd.f32 0.0, %v3614
    %v3616 = vpop.f32.mrb[0].mxu0
    %3617 = vmatprep.mubr.bf16.mxu0 0
    %3618 = vmatmul.mubr.bf16.gmra.mrb[0].mxu0 %v3163
    %v3619 = vpop.f32.mrb[0].mxu0
    %v3620 = vadd.f32 0.0, %v3619
    %v3621 = vpop.f32.mrb[0].mxu0
    %v3622 = vpop.f32.mrb[0].mxu0
    %v3623 = vadd.f32 0.0, %v3622
    %v3624 = vpop.f32.mrb[0].mxu0
    %3625 = vmatprep.mubr.bf16.mxu0 0
    %3626 = vmatmul.mubr.bf16.gmra.mrb[0].mxu0 %v3166
    %v3627 = vpop.f32.mrb[0].mxu0
    %v3628 = vadd.f32 0.0, %v3627
    %v3629 = vpop.f32.mrb[0].mxu0
    %v3630 = vpop.f32.mrb[0].mxu0
    %v3631 = vadd.f32 0.0, %v3630
    %v3632 = vpop.f32.mrb[0].mxu0
    %3633 = vmatprep.mubr.bf16.mxu0 0
    %3634 = vmatmul.mubr.bf16.gmra.mrb[0].mxu0 %v3169
    %v3635 = vpop.f32.mrb[0].mxu0
    %v3636 = vadd.f32 0.0, %v3635
    %v3637 = vpop.f32.mrb[0].mxu0
    %v3638 = vpop.f32.mrb[0].mxu0
    %v3639 = vadd.f32 0.0, %v3638
    %v3640 = vpop.f32.mrb[0].mxu0
    %3641 = vmatprep.mubr.bf16.mxu0 0
    %3642 = vmatmul.mubr.bf16.gmra.mrb[0].mxu0 %v3172
    %v3643 = vpop.f32.mrb[0].mxu0
    %v3644 = vadd.f32 0.0, %v3643
    %v3645 = vpop.f32.mrb[0].mxu0
    %v3646 = vpop.f32.mrb[0].mxu0
    %v3647 = vadd.f32 0.0, %v3646
    %v3648 = vpop.f32.mrb[0].mxu0
    %3649 = vmatprep.mubr.bf16.mxu0 0
    %3650 = vmatmul.mubr.bf16.gmra.mrb[0].mxu0 %v3175
    %v3651 = vpop.f32.mrb[0].mxu0
    %v3652 = vadd.f32 0.0, %v3651
    %v3653 = vpop.f32.mrb[0].mxu0
    %v3654 = vpop.f32.mrb[0].mxu0
    %v3655 = vadd.f32 0.0, %v3654
    %v3656 = vpop.f32.mrb[0].mxu0
    %3657 = vmatprep.mubr.bf16.mxu0 0
    %3658 = vmatmul.mubr.bf16.gmra.mrb[0].mxu0 %v3178
    %v3659 = vpop.f32.mrb[0].mxu0
    %v3660 = vadd.f32 0.0, %v3659
    %v3661 = vpop.f32.mrb[0].mxu0
    %v3662 = vpop.f32.mrb[0].mxu0
    %v3663 = vadd.f32 0.0, %v3662
    %v3664 = vpop.f32.mrb[0].mxu0
    %3665 = vmatprep.mubr.bf16.mxu0 0
    %3666 = vmatmul.mubr.bf16.gmra.mrb[0].mxu0 %v3181
    %v3667 = vpop.f32.mrb[0].mxu0
    %v3668 = vadd.f32 0.0, %v3667
    %v3669 = vpop.f32.mrb[0].mxu0
    %v3670 = vpop.f32.mrb[0].mxu0
    %v3671 = vadd.f32 0.0, %v3670
    %v3672 = vpop.f32.mrb[0].mxu0
    %3673 = vmatprep.mubr.bf16.mxu0 0
    %3674 = vmatmul.mubr.bf16.gmra.mrb[0].mxu0 %v3184
    %v3675 = vpop.f32.mrb[0].mxu0
    %v3676 = vadd.f32 0.0, %v3675
    %v3677 = vpop.f32.mrb[0].mxu0
    %v3678 = vpop.f32.mrb[0].mxu0
    %v3679 = vadd.f32 0.0, %v3678
    %v3680 = vpop.f32.mrb[0].mxu0
    %3681 = vmatprep.mubr.bf16.mxu0 0
    %3682 = vmatmul.mubr.bf16.gmra.mrb[0].mxu0 %v3187
    %v3683 = vpop.f32.mrb[0].mxu0
    %v3684 = vadd.f32 0.0, %v3683
    %v3685 = vpop.f32.mrb[0].mxu0
    %v3686 = vpop.f32.mrb[0].mxu0
    %v3687 = vadd.f32 0.0, %v3686
    %v3688 = vpop.f32.mrb[0].mxu0
    %3689 = vmatprep.mubr.bf16.mxu0 0
    %3690 = vmatmul.mubr.bf16.gmra.mrb[0].mxu0 %v3190
    %v3691 = vpop.f32.mrb[0].mxu0
    %v3692 = vadd.f32 0.0, %v3691
    %v3693 = vpop.f32.mrb[0].mxu0
    %v3694 = vpop.f32.mrb[0].mxu0
    %v3695 = vadd.f32 0.0, %v3694
    %v3696 = vpop.f32.mrb[0].mxu0
    %3697 = vmatprep.mubr.bf16.mxu0 0
    %3698 = vmatmul.mubr.bf16.gmra.mrb[0].mxu0 %v3193
    %v3699 = vpop.f32.mrb[0].mxu0
    %v3700 = vadd.f32 0.0, %v3699
    %v3701 = vpop.f32.mrb[0].mxu0
    %v3702 = vpop.f32.mrb[0].mxu0
    %v3703 = vadd.f32 0.0, %v3702
    %v3704 = vpop.f32.mrb[0].mxu0
    %3705 = vmatprep.mubr.bf16.mxu0 0
    %3706 = vmatmul.mubr.bf16.gmra.mrb[0].mxu0 %v3196
    %v3707 = vpop.f32.mrb[0].mxu0
    %v3708 = vadd.f32 0.0, %v3707
    %v3709 = vpop.f32.mrb[0].mxu0
    %v3710 = vpop.f32.mrb[0].mxu0
    %v3711 = vadd.f32 0.0, %v3710
    %v3712 = vpop.f32.mrb[0].mxu0
    %3713 = vmatprep.mubr.bf16.mxu0 0
    %3714 = vmatmul.mubr.bf16.gmra.mrb[0].mxu0 %v3199
    %v3715 = vpop.f32.mrb[0].mxu0
    %v3716 = vadd.f32 0.0, %v3715
    %v3717 = vpop.f32.mrb[0].mxu0
    %v3718 = vpop.f32.mrb[0].mxu0
    %v3719 = vadd.f32 0.0, %v3718
    %v3720 = vpop.f32.mrb[0].mxu0
    %3721 = vmatprep.mubr.bf16.mxu0 0
    %3722 = vmatmul.mubr.bf16.gmra.mrb[0].mxu0 %v3202
    %v3723 = vpop.f32.mrb[0].mxu0
    %v3724 = vadd.f32 0.0, %v3723
    %v3725 = vpop.f32.mrb[0].mxu0
    %v3726 = vpop.f32.mrb[0].mxu0
    %v3727 = vadd.f32 0.0, %v3726
    %v3728 = vpop.f32.mrb[0].mxu0
    %3729 = vmatprep.mubr.bf16.mxu0 0
    %3730 = vmatmul.mubr.bf16.gmra.mrb[0].mxu0 %v3205
    %v3731 = vpop.f32.mrb[0].mxu0
    %v3732 = vadd.f32 0.0, %v3731
    %v3733 = vpop.f32.mrb[0].mxu0
    %v3734 = vpop.f32.mrb[0].mxu0
    %v3735 = vadd.f32 0.0, %v3734
    %v3736 = vpop.f32.mrb[0].mxu0
    %3737 = vmatprep.mubr.bf16.mxu0 0
    %3738 = vmatmul.mubr.bf16.gmra.mrb[0].mxu0 %v3208
    %v3739 = vpop.f32.mrb[0].mxu0
    %v3740 = vadd.f32 0.0, %v3739
    %v3741 = vpop.f32.mrb[0].mxu0
    %v3742 = vpop.f32.mrb[0].mxu0
    %v3743 = vadd.f32 0.0, %v3742
    %v3744 = vpop.f32.mrb[0].mxu0
    %3745 = vmatprep.mubr.bf16.mxu0 0
    %3746 = vmatmul.mubr.bf16.gmra.mrb[0].mxu0 %v3211
    %v3747 = vpop.f32.mrb[0].mxu0
    %v3748 = vadd.f32 0.0, %v3747
    %v3749 = vpop.f32.mrb[0].mxu0
    %v3750 = vpop.f32.mrb[0].mxu0
    %v3751 = vadd.f32 0.0, %v3750
    %v3752 = vpop.f32.mrb[0].mxu0
    %3753 = vmatprep.mubr.bf16.mxu0 0
    %3754 = vmatmul.mubr.bf16.gmra.mrb[0].mxu0 %v3214
    %v3755 = vpop.f32.mrb[0].mxu0
    %v3756 = vadd.f32 0.0, %v3755
    %v3757 = vpop.f32.mrb[0].mxu0
    %v3758 = vpop.f32.mrb[0].mxu0
    %v3759 = vadd.f32 0.0, %v3758
    %v3760 = vpop.f32.mrb[0].mxu0
    %3761 = vmatprep.mubr.bf16.mxu0 0
    %3762 = vmatmul.mubr.bf16.gmra.mrb[0].mxu0 %v3217
    %v3763 = vpop.f32.mrb[0].mxu0
    %v3764 = vadd.f32 0.0, %v3763
    %v3765 = vpop.f32.mrb[0].mxu0
    %v3766 = vpop.f32.mrb[0].mxu0
    %v3767 = vadd.f32 0.0, %v3766
    %v3768 = vpop.f32.mrb[0].mxu0
    %3769 = vmatprep.mubr.bf16.mxu0 0
    %3770 = vmatmul.mubr.bf16.gmra.mrb[0].mxu0 %v3220
    %v3771 = vpop.f32.mrb[0].mxu0
    %v3772 = vadd.f32 0.0, %v3771
    %v3773 = vpop.f32.mrb[0].mxu0
    %v3774 = vpop.f32.mrb[0].mxu0
    %v3775 = vadd.f32 0.0, %v3774
    %v3776 = vpop.f32.mrb[0].mxu0
    %3777 = vmatprep.mubr.bf16.mxu0 0
    %3778 = vmatmul.mubr.bf16.gmra.mrb[0].mxu0 %v3223
    %v3779 = vpop.f32.mrb[0].mxu0
    %v3780 = vadd.f32 0.0, %v3779
    %v3781 = vpop.f32.mrb[0].mxu0
    %v3782 = vpop.f32.mrb[0].mxu0
    %v3783 = vadd.f32 0.0, %v3782
    %v3784 = vpop.f32.mrb[0].mxu0
    %3785 = vmatprep.mubr.bf16.mxu0 0
    %3786 = vmatmul.mubr.bf16.gmra.mrb[0].mxu0 %v3226
    %v3787 = vpop.f32.mrb[0].mxu0
    %v3788 = vadd.f32 0.0, %v3787
    %v3789 = vpop.f32.mrb[0].mxu0
    %v3790 = vpop.f32.mrb[0].mxu0
    %v3791 = vadd.f32 0.0, %v3790
    %v3792 = vpop.f32.mrb[0].mxu0
    %3793 = vmatprep.mubr.bf16.mxu0 0
    %3794 = vmatmul.mubr.bf16.gmra.mrb[0].mxu0 %v3229
    %v3795 = vpop.f32.mrb[0].mxu0
    %v3796 = vadd.f32 0.0, %v3795
    %v3797 = vpop.f32.mrb[0].mxu0
    %v3798 = vpop.f32.mrb[0].mxu0
    %v3799 = vadd.f32 0.0, %v3798
    %v3800 = vpop.f32.mrb[0].mxu0
    %3801 = vmatprep.mubr.bf16.mxu0 0
    %3802 = vmatmul.mubr.bf16.gmra.mrb[0].mxu0 %v3232
    %v3803 = vpop.f32.mrb[0].mxu0
    %v3804 = vadd.f32 0.0, %v3803
    %v3805 = vpop.f32.mrb[0].mxu0
    %v3806 = vpop.f32.mrb[0].mxu0
    %v3807 = vadd.f32 0.0, %v3806
    %v3808 = vpop.f32.mrb[0].mxu0
    %3809 = vmatprep.mubr.bf16.mxu0 0
    %3810 = vmatmul.mubr.bf16.gmra.mrb[0].mxu0 %v3235
    %v3811 = vpop.f32.mrb[0].mxu0
    %v3812 = vadd.f32 0.0, %v3811
    %v3813 = vpop.f32.mrb[0].mxu0
    %v3814 = vpop.f32.mrb[0].mxu0
    %v3815 = vadd.f32 0.0, %v3814
    %v3816 = vpop.f32.mrb[0].mxu0
    %3817 = vmatprep.mubr.bf16.mxu0 0
    %3818 = vmatmul.mubr.bf16.gmra.mrb[0].mxu0 %v3238
    %v3819 = vpop.f32.mrb[0].mxu0
    %v3820 = vadd.f32 0.0, %v3819
    %v3821 = vpop.f32.mrb[0].mxu0
    %v3822 = vpop.f32.mrb[0].mxu0
    %v3823 = vadd.f32 0.0, %v3822
    %v3824 = vpop.f32.mrb[0].mxu0
    %3825 = vmatprep.mubr.bf16.mxu0 0
    %3826 = vmatmul.mubr.bf16.gmra.mrb[0].mxu0 %v3241
    %v3827 = vpop.f32.mrb[0].mxu0
    %v3828 = vadd.f32 0.0, %v3827
    %v3829 = vpop.f32.mrb[0].mxu0
    %v3830 = vpop.f32.mrb[0].mxu0
    %v3831 = vadd.f32 0.0, %v3830
    %v3832 = vpop.f32.mrb[0].mxu0
    %3833 = vmatprep.mubr.bf16.mxu0 0
    %3834 = vmatmul.mubr.bf16.gmra.mrb[0].mxu0 %v3551
    %v3835 = vpop.f32.mrb[0].mxu0
    %v3836 = vadd.f32 0.0, %v3835
    %v3837 = vpop.f32.mrb[0].mxu0
    %v3838 = vpop.f32.mrb[0].mxu0
    %v3839 = vadd.f32 0.0, %v3838
    %v3840 = vpop.f32.mrb[0].mxu0
    %3841 = vdwg.mxu0
    %v3842 = vadd.f32 %v3278, %v3588
    %v3843 = vadd.f32 %v3281, %v3591
    %v3844 = vadd.f32 %v3286, %v3596
    %v3845 = vadd.f32 %v3289, %v3599
    %v3846 = vadd.f32 %v3294, %v3604
    %v3847 = vadd.f32 %v3297, %v3607
    %v3848 = vadd.f32 %v3302, %v3612
    %v3849 = vadd.f32 %v3305, %v3615
    %v3850 = vadd.f32 %v3310, %v3620
    %v3851 = vadd.f32 %v3313, %v3623
    %v3852 = vadd.f32 %v3318, %v3628
    %v3853 = vadd.f32 %v3321, %v3631
    %v3854 = vadd.f32 %v3326, %v3636
    %v3855 = vadd.f32 %v3329, %v3639
    %v3856 = vadd.f32 %v3334, %v3644
    %v3857 = vadd.f32 %v3337, %v3647
    %v3858 = vadd.f32 %v3342, %v3652
    %v3859 = vadd.f32 %v3345, %v3655
    %v3860 = vadd.f32 %v3350, %v3660
    %v3861 = vadd.f32 %v3353, %v3663
    %v3862 = vadd.f32 %v3358, %v3668
    %v3863 = vadd.f32 %v3361, %v3671
    %v3864 = vadd.f32 %v3366, %v3676
    %v3865 = vadd.f32 %v3369, %v3679
    %v3866 = vadd.f32 %v3374, %v3684
    %v3867 = vadd.f32 %v3377, %v3687
    %v3868 = vadd.f32 %v3382, %v3692
    %v3869 = vadd.f32 %v3385, %v3695
    %v3870 = vadd.f32 %v3390, %v3700
    %v3871 = vadd.f32 %v3393, %v3703
    %v3872 = vadd.f32 %v3398, %v3708
    %v3873 = vadd.f32 %v3401, %v3711
    %v3874 = vadd.f32 %v3406, %v3716
    %v3875 = vadd.f32 %v3409, %v3719
    %v3876 = vadd.f32 %v3414, %v3724
    %v3877 = vadd.f32 %v3417, %v3727
    %v3878 = vadd.f32 %v3422, %v3732
    %v3879 = vadd.f32 %v3425, %v3735
    %v3880 = vadd.f32 %v3430, %v3740
    %v3881 = vadd.f32 %v3433, %v3743
    %v3882 = vadd.f32 %v3438, %v3748
    %v3883 = vadd.f32 %v3441, %v3751
    %v3884 = vadd.f32 %v3446, %v3756
    %v3885 = vadd.f32 %v3449, %v3759
    %v3886 = vadd.f32 %v3454, %v3764
    %v3887 = vadd.f32 %v3457, %v3767
    %v3888 = vadd.f32 %v3462, %v3772
    %v3889 = vadd.f32 %v3465, %v3775
    %v3890 = vadd.f32 %v3470, %v3780
    %v3891 = vadd.f32 %v3473, %v3783
    %v3892 = vadd.f32 %v3478, %v3788
    %v3893 = vadd.f32 %v3481, %v3791
    %v3894 = vadd.f32 %v3486, %v3796
    %v3895 = vadd.f32 %v3489, %v3799
    %v3896 = vadd.f32 %v3494, %v3804
    %v3897 = vadd.f32 %v3497, %v3807
    %v3898 = vadd.f32 %v3502, %v3812
    %v3899 = vadd.f32 %v3505, %v3815
    %v3900 = vadd.f32 %v3510, %v3820
    %v3901 = vadd.f32 %v3513, %v3823
    %v3902 = vadd.f32 %v3518, %v3828
    %v3903 = vadd.f32 %v3521, %v3831
    %v3904 = vadd.f32 %v3526, %v3836
    %v3905 = vadd.f32 %v3529, %v3839
    %v3906 = vld [vmem:[%s6] sm:$0x1]
    %v3908 = vlaneseq
    %v3909 = vshrl.u32 %v3908, 7
    %v3910 = vsub.s32 0, %v3909
    %v3911 = vrot.slane %v3906, %v3910
    %v3913 = vadd.f32 %v3842, %v3911
    %v3914 = vadd.f32 %v3843, %v3911
    %v3915 = vadd.f32 %v3844, %v3911
    %v3916 = vadd.f32 %v3845, %v3911
    %v3917 = vadd.f32 %v3846, %v3911
    %v3918 = vadd.f32 %v3847, %v3911
    %v3919 = vadd.f32 %v3848, %v3911
    %v3920 = vadd.f32 %v3849, %v3911
    %v3921 = vadd.f32 %v3850, %v3911
    %v3922 = vadd.f32 %v3851, %v3911
    %v3923 = vadd.f32 %v3852, %v3911
    %v3924 = vadd.f32 %v3853, %v3911
    %v3925 = vadd.f32 %v3854, %v3911
    %v3926 = vadd.f32 %v3855, %v3911
    %v3927 = vadd.f32 %v3856, %v3911
    %v3928 = vadd.f32 %v3857, %v3911
    %v3929 = vadd.f32 %v3858, %v3911
    %v3930 = vadd.f32 %v3859, %v3911
    %v3931 = vadd.f32 %v3860, %v3911
    %v3932 = vadd.f32 %v3861, %v3911
    %v3933 = vadd.f32 %v3862, %v3911
    %v3934 = vadd.f32 %v3863, %v3911
    %v3935 = vadd.f32 %v3864, %v3911
    %v3936 = vadd.f32 %v3865, %v3911
    %v3937 = vadd.f32 %v3866, %v3911
    %v3938 = vadd.f32 %v3867, %v3911
    %v3939 = vadd.f32 %v3868, %v3911
    %v3940 = vadd.f32 %v3869, %v3911
    %v3941 = vadd.f32 %v3870, %v3911
    %v3942 = vadd.f32 %v3871, %v3911
    %v3943 = vadd.f32 %v3872, %v3911
    %v3944 = vadd.f32 %v3873, %v3911
    %v3945 = vadd.f32 %v3874, %v3911
    %v3946 = vadd.f32 %v3875, %v3911
    %v3947 = vadd.f32 %v3876, %v3911
    %v3948 = vadd.f32 %v3877, %v3911
    %v3949 = vadd.f32 %v3878, %v3911
    %v3950 = vadd.f32 %v3879, %v3911
    %v3951 = vadd.f32 %v3880, %v3911
    %v3952 = vadd.f32 %v3881, %v3911
    %v3953 = vadd.f32 %v3882, %v3911
    %v3954 = vadd.f32 %v3883, %v3911
    %v3955 = vadd.f32 %v3884, %v3911
    %v3956 = vadd.f32 %v3885, %v3911
    %v3957 = vadd.f32 %v3886, %v3911
    %v3958 = vadd.f32 %v3887, %v3911
    %v3959 = vadd.f32 %v3888, %v3911
    %v3960 = vadd.f32 %v3889, %v3911
    %v3961 = vadd.f32 %v3890, %v3911
    %v3962 = vadd.f32 %v3891, %v3911
    %v3963 = vadd.f32 %v3892, %v3911
    %v3964 = vadd.f32 %v3893, %v3911
    %v3965 = vadd.f32 %v3894, %v3911
    %v3966 = vadd.f32 %v3895, %v3911
    %v3967 = vadd.f32 %v3896, %v3911
    %v3968 = vadd.f32 %v3897, %v3911
    %v3969 = vadd.f32 %v3898, %v3911
    %v3970 = vadd.f32 %v3899, %v3911
    %v3971 = vadd.f32 %v3900, %v3911
    %v3972 = vadd.f32 %v3901, %v3911
    %v3973 = vadd.f32 %v3902, %v3911
    %v3974 = vadd.f32 %v3903, %v3911
    %v3975 = vadd.f32 %v3904, %v3911
    %v3976 = vadd.f32 %v3905, %v3911
    %v3977 = vmax.f32 %v3913, 0.0
    %v3978 = vmax.f32 %v3914, 0.0
    %v3979 = vmax.f32 %v3915, 0.0
    %v3980 = vmax.f32 %v3916, 0.0
    %v3981 = vmax.f32 %v3917, 0.0
    %v3982 = vmax.f32 %v3918, 0.0
    %v3983 = vmax.f32 %v3919, 0.0
    %v3984 = vmax.f32 %v3920, 0.0
    %v3985 = vmax.f32 %v3921, 0.0
    %v3986 = vmax.f32 %v3922, 0.0
    %v3987 = vmax.f32 %v3923, 0.0
    %v3988 = vmax.f32 %v3924, 0.0
    %v3989 = vmax.f32 %v3925, 0.0
    %v3990 = vmax.f32 %v3926, 0.0
    %v3991 = vmax.f32 %v3927, 0.0
    %v3992 = vmax.f32 %v3928, 0.0
    %v3993 = vmax.f32 %v3929, 0.0
    %v3994 = vmax.f32 %v3930, 0.0
    %v3995 = vmax.f32 %v3931, 0.0
    %v3996 = vmax.f32 %v3932, 0.0
    %v3997 = vmax.f32 %v3933, 0.0
    %v3998 = vmax.f32 %v3934, 0.0
    %v3999 = vmax.f32 %v3935, 0.0
    %v4000 = vmax.f32 %v3936, 0.0
    %v4001 = vmax.f32 %v3937, 0.0
    %v4002 = vmax.f32 %v3938, 0.0
    %v4003 = vmax.f32 %v3939, 0.0
    %v4004 = vmax.f32 %v3940, 0.0
    %v4005 = vmax.f32 %v3941, 0.0
    %v4006 = vmax.f32 %v3942, 0.0
    %v4007 = vmax.f32 %v3943, 0.0
    %v4008 = vmax.f32 %v3944, 0.0
    %v4009 = vmax.f32 %v3945, 0.0
    %v4010 = vmax.f32 %v3946, 0.0
    %v4011 = vmax.f32 %v3947, 0.0
    %v4012 = vmax.f32 %v3948, 0.0
    %v4013 = vmax.f32 %v3949, 0.0
    %v4014 = vmax.f32 %v3950, 0.0
    %v4015 = vmax.f32 %v3951, 0.0
    %v4016 = vmax.f32 %v3952, 0.0
    %v4017 = vmax.f32 %v3953, 0.0
    %v4018 = vmax.f32 %v3954, 0.0
    %v4019 = vmax.f32 %v3955, 0.0
    %v4020 = vmax.f32 %v3956, 0.0
    %v4021 = vmax.f32 %v3957, 0.0
    %v4022 = vmax.f32 %v3958, 0.0
    %v4023 = vmax.f32 %v3959, 0.0
    %v4024 = vmax.f32 %v3960, 0.0
    %v4025 = vmax.f32 %v3961, 0.0
    %v4026 = vmax.f32 %v3962, 0.0
    %v4027 = vmax.f32 %v3963, 0.0
    %v4028 = vmax.f32 %v3964, 0.0
    %v4029 = vmax.f32 %v3965, 0.0
    %v4030 = vmax.f32 %v3966, 0.0
    %v4031 = vmax.f32 %v3967, 0.0
    %v4032 = vmax.f32 %v3968, 0.0
    %v4033 = vmax.f32 %v3969, 0.0
    %v4034 = vmax.f32 %v3970, 0.0
    %v4035 = vmax.f32 %v3971, 0.0
    %v4036 = vmax.f32 %v3972, 0.0
    %v4037 = vmax.f32 %v3973, 0.0
    %v4038 = vmax.f32 %v3974, 0.0
    %v4039 = vmax.f32 %v3975, 0.0
    %v4040 = vmax.f32 %v3976, 0.0
    %v4041 = vpack.c.bf16 %v3977, %v3977
    %v4042 = vpack.c.bf16 %v3978, %v3978
    %v4043 = vpack.c.bf16 %v3979, %v3979
    %v4044 = vpack.c.bf16 %v3980, %v3980
    %v4045 = vpack.c.bf16 %v3981, %v3981
    %v4046 = vpack.c.bf16 %v3982, %v3982
    %v4047 = vpack.c.bf16 %v3983, %v3983
    %v4048 = vpack.c.bf16 %v3984, %v3984
    %v4049 = vpack.c.bf16 %v3985, %v3985
    %v4050 = vpack.c.bf16 %v3986, %v3986
    %v4051 = vpack.c.bf16 %v3987, %v3987
    %v4052 = vpack.c.bf16 %v3988, %v3988
    %v4053 = vpack.c.bf16 %v3989, %v3989
    %v4054 = vpack.c.bf16 %v3990, %v3990
    %v4055 = vpack.c.bf16 %v3991, %v3991
    %v4056 = vpack.c.bf16 %v3992, %v3992
    %v4057 = vpack.c.bf16 %v3993, %v3993
    %v4058 = vpack.c.bf16 %v3994, %v3994
    %v4059 = vpack.c.bf16 %v3995, %v3995
    %v4060 = vpack.c.bf16 %v3996, %v3996
    %v4061 = vpack.c.bf16 %v3997, %v3997
    %v4062 = vpack.c.bf16 %v3998, %v3998
    %v4063 = vpack.c.bf16 %v3999, %v3999
    %v4064 = vpack.c.bf16 %v4000, %v4000
    %v4065 = vpack.c.bf16 %v4001, %v4001
    %v4066 = vpack.c.bf16 %v4002, %v4002
    %v4067 = vpack.c.bf16 %v4003, %v4003
    %v4068 = vpack.c.bf16 %v4004, %v4004
    %v4069 = vpack.c.bf16 %v4005, %v4005
    %v4070 = vpack.c.bf16 %v4006, %v4006
    %v4071 = vpack.c.bf16 %v4007, %v4007
    %v4072 = vpack.c.bf16 %v4008, %v4008
    %v4073 = vpack.c.bf16 %v4009, %v4009
    %v4074 = vpack.c.bf16 %v4010, %v4010
    %v4075 = vpack.c.bf16 %v4011, %v4011
    %v4076 = vpack.c.bf16 %v4012, %v4012
    %v4077 = vpack.c.bf16 %v4013, %v4013
    %v4078 = vpack.c.bf16 %v4014, %v4014
    %v4079 = vpack.c.bf16 %v4015, %v4015
    %v4080 = vpack.c.bf16 %v4016, %v4016
    %v4081 = vpack.c.bf16 %v4017, %v4017
    %v4082 = vpack.c.bf16 %v4018, %v4018
    %v4083 = vpack.c.bf16 %v4019, %v4019
    %v4084 = vpack.c.bf16 %v4020, %v4020
    %v4085 = vpack.c.bf16 %v4021, %v4021
    %v4086 = vpack.c.bf16 %v4022, %v4022
    %v4087 = vpack.c.bf16 %v4023, %v4023
    %v4088 = vpack.c.bf16 %v4024, %v4024
    %v4089 = vpack.c.bf16 %v4025, %v4025
    %v4090 = vpack.c.bf16 %v4026, %v4026
    %v4091 = vpack.c.bf16 %v4027, %v4027
    %v4092 = vpack.c.bf16 %v4028, %v4028
    %v4093 = vpack.c.bf16 %v4029, %v4029
    %v4094 = vpack.c.bf16 %v4030, %v4030
    %v4095 = vpack.c.bf16 %v4031, %v4031
    %v4096 = vpack.c.bf16 %v4032, %v4032
    %v4097 = vpack.c.bf16 %v4033, %v4033
    %v4098 = vpack.c.bf16 %v4034, %v4034
    %v4099 = vpack.c.bf16 %v4035, %v4035
    %v4100 = vpack.c.bf16 %v4036, %v4036
    %v4101 = vpack.c.bf16 %v4037, %v4037
    %v4102 = vpack.c.bf16 %v4038, %v4038
    %v4103 = vpack.c.bf16 %v4039, %v4039
    %v4104 = vpack.c.bf16 %v4040, %v4040
    %v4105 = vld [vmem:[%s7] sm:$0xf]
    %v4106 = vld [vmem:[%s7 + $0x4] sm:$0xf]
    %v4107 = vld [vmem:[%s7 + $0x8] sm:$0xf]
    %v4108 = vld [vmem:[%s7 + $0xc] sm:$0xf]
    %v4109 = vld [vmem:[%s7 + $0x10] sm:$0xf]
    %v4110 = vld [vmem:[%s7 + $0x14] sm:$0xf]
    %v4111 = vld [vmem:[%s7 + $0x18] sm:$0xf]
    %v4112 = vld [vmem:[%s7 + $0x1c] sm:$0xf]
    %s4113 = scalar_lea.vmem %s7, 32
    %v4114 = vld [vmem:[%s4113] sm:$0xf]
    %v4115 = vld [vmem:[%s4113 + $0x4] sm:$0xf]
    %v4116 = vld [vmem:[%s4113 + $0x8] sm:$0xf]
    %v4117 = vld [vmem:[%s4113 + $0xc] sm:$0xf]
    %v4118 = vld [vmem:[%s4113 + $0x10] sm:$0xf]
    %v4119 = vld [vmem:[%s4113 + $0x14] sm:$0xf]
    %v4120 = vld [vmem:[%s4113 + $0x18] sm:$0xf]
    %v4121 = vld [vmem:[%s4113 + $0x1c] sm:$0xf]
    %v4186 = vunpack.c.l.b16 %v4041
    %v4187 = vunpack.c.l.b16 %v4042
    %v4188 = vunpack.c.l.b16 %v4043
    %v4189 = vunpack.c.l.b16 %v4044
    %v4190 = vunpack.c.l.b16 %v4045
    %v4191 = vunpack.c.l.b16 %v4046
    %v4192 = vunpack.c.l.b16 %v4047
    %v4193 = vunpack.c.l.b16 %v4048
    %v4194 = vunpack.c.l.b16 %v4049
    %v4195 = vunpack.c.l.b16 %v4050
    %v4196 = vunpack.c.l.b16 %v4051
    %v4197 = vunpack.c.l.b16 %v4052
    %v4198 = vunpack.c.l.b16 %v4053
    %v4199 = vunpack.c.l.b16 %v4054
    %v4200 = vunpack.c.l.b16 %v4055
    %v4201 = vunpack.c.l.b16 %v4056
    %v4202 = vunpack.c.l.b16 %v4057
    %v4203 = vunpack.c.l.b16 %v4058
    %v4204 = vunpack.c.l.b16 %v4059
    %v4205 = vunpack.c.l.b16 %v4060
    %v4206 = vunpack.c.l.b16 %v4061
    %v4207 = vunpack.c.l.b16 %v4062
    %v4208 = vunpack.c.l.b16 %v4063
    %v4209 = vunpack.c.l.b16 %v4064
    %v4210 = vunpack.c.l.b16 %v4065
    %v4211 = vunpack.c.l.b16 %v4066
    %v4212 = vunpack.c.l.b16 %v4067
    %v4213 = vunpack.c.l.b16 %v4068
    %v4214 = vunpack.c.l.b16 %v4069
    %v4215 = vunpack.c.l.b16 %v4070
    %v4216 = vunpack.c.l.b16 %v4071
    %v4217 = vunpack.c.l.b16 %v4072
    %v4218 = vunpack.c.l.b16 %v4073
    %v4219 = vunpack.c.l.b16 %v4074
    %v4220 = vunpack.c.l.b16 %v4075
    %v4221 = vunpack.c.l.b16 %v4076
    %v4222 = vunpack.c.l.b16 %v4077
    %v4223 = vunpack.c.l.b16 %v4078
    %v4224 = vunpack.c.l.b16 %v4079
    %v4225 = vunpack.c.l.b16 %v4080
    %v4226 = vunpack.c.l.b16 %v4081
    %v4227 = vunpack.c.l.b16 %v4082
    %v4228 = vunpack.c.l.b16 %v4083
    %v4229 = vunpack.c.l.b16 %v4084
    %v4230 = vunpack.c.l.b16 %v4085
    %v4231 = vunpack.c.l.b16 %v4086
    %v4232 = vunpack.c.l.b16 %v4087
    %v4233 = vunpack.c.l.b16 %v4088
    %v4234 = vunpack.c.l.b16 %v4089
    %v4235 = vunpack.c.l.b16 %v4090
    %v4236 = vunpack.c.l.b16 %v4091
    %v4237 = vunpack.c.l.b16 %v4092
    %v4238 = vunpack.c.l.b16 %v4093
    %v4239 = vunpack.c.l.b16 %v4094
    %v4240 = vunpack.c.l.b16 %v4095
    %v4241 = vunpack.c.l.b16 %v4096
    %v4242 = vunpack.c.l.b16 %v4097
    %v4243 = vunpack.c.l.b16 %v4098
    %v4244 = vunpack.c.l.b16 %v4099
    %v4245 = vunpack.c.l.b16 %v4100
    %v4246 = vunpack.c.l.b16 %v4101
    %v4247 = vunpack.c.l.b16 %v4102
    %v4248 = vunpack.c.l.b16 %v4103
    %v4249 = vunpack.c.l.b16 %v4104
    %v4250 = vpack.c.b16 %v4187, %v4186
    %v4251 = vpack.c.b16 %v4189, %v4188
    %v4252 = vpack.c.b16 %v4191, %v4190
    %v4253 = vpack.c.b16 %v4193, %v4192
    %v4254 = vpack.c.b16 %v4195, %v4194
    %v4255 = vpack.c.b16 %v4197, %v4196
    %v4256 = vpack.c.b16 %v4199, %v4198
    %v4257 = vpack.c.b16 %v4201, %v4200
    %v4258 = vpack.c.b16 %v4203, %v4202
    %v4259 = vpack.c.b16 %v4205, %v4204
    %v4260 = vpack.c.b16 %v4207, %v4206
    %v4261 = vpack.c.b16 %v4209, %v4208
    %v4262 = vpack.c.b16 %v4211, %v4210
    %v4263 = vpack.c.b16 %v4213, %v4212
    %v4264 = vpack.c.b16 %v4215, %v4214
    %v4265 = vpack.c.b16 %v4217, %v4216
    %v4266 = vpack.c.b16 %v4219, %v4218
    %v4267 = vpack.c.b16 %v4221, %v4220
    %v4268 = vpack.c.b16 %v4223, %v4222
    %v4269 = vpack.c.b16 %v4225, %v4224
    %v4270 = vpack.c.b16 %v4227, %v4226
    %v4271 = vpack.c.b16 %v4229, %v4228
    %v4272 = vpack.c.b16 %v4231, %v4230
    %v4273 = vpack.c.b16 %v4233, %v4232
    %v4274 = vpack.c.b16 %v4235, %v4234
    %v4275 = vpack.c.b16 %v4237, %v4236
    %v4276 = vpack.c.b16 %v4239, %v4238
    %v4277 = vpack.c.b16 %v4241, %v4240
    %v4278 = vpack.c.b16 %v4243, %v4242
    %v4279 = vpack.c.b16 %v4245, %v4244
    %v4280 = vpack.c.b16 %v4247, %v4246
    %v4281 = vpack.c.b16 %v4249, %v4248
    %v4290 = vunpack.c.l.b16 %v4114
    %v4291 = vunpack.c.l.b16 %v4115
    %v4292 = vunpack.c.l.b16 %v4116
    %v4293 = vunpack.c.l.b16 %v4117
    %v4294 = vunpack.c.l.b16 %v4118
    %v4295 = vunpack.c.l.b16 %v4119
    %v4296 = vunpack.c.l.b16 %v4120
    %v4297 = vunpack.c.l.b16 %v4121
    %v4298 = vpack.c.b16 %v4291, %v4290
    %v4299 = vpack.c.b16 %v4293, %v4292
    %v4300 = vpack.c.b16 %v4295, %v4294
    %v4301 = vpack.c.b16 %v4297, %v4296
    %vm4306 = vcmask 523264
    %v4308 = vsel %vm4306, %v4250, 0
    %v4311 = vsel %vm4306, %v4251, 0
    %v4314 = vsel %vm4306, %v4252, 0
    %v4317 = vsel %vm4306, %v4253, 0
    %v4320 = vsel %vm4306, %v4254, 0
    %v4323 = vsel %vm4306, %v4255, 0
    %v4326 = vsel %vm4306, %v4256, 0
    %v4329 = vsel %vm4306, %v4257, 0
    %v4332 = vsel %vm4306, %v4258, 0
    %v4335 = vsel %vm4306, %v4259, 0
    %v4338 = vsel %vm4306, %v4260, 0
    %v4341 = vsel %vm4306, %v4261, 0
    %v4344 = vsel %vm4306, %v4262, 0
    %v4347 = vsel %vm4306, %v4263, 0
    %v4350 = vsel %vm4306, %v4264, 0
    %v4353 = vsel %vm4306, %v4265, 0
    %v4356 = vsel %vm4306, %v4266, 0
    %v4359 = vsel %vm4306, %v4267, 0
    %v4362 = vsel %vm4306, %v4268, 0
    %v4365 = vsel %vm4306, %v4269, 0
    %v4368 = vsel %vm4306, %v4270, 0
    %v4371 = vsel %vm4306, %v4271, 0
    %v4374 = vsel %vm4306, %v4272, 0
    %v4377 = vsel %vm4306, %v4273, 0
    %v4380 = vsel %vm4306, %v4274, 0
    %v4383 = vsel %vm4306, %v4275, 0
    %v4386 = vsel %vm4306, %v4276, 0
    %v4389 = vsel %vm4306, %v4277, 0
    %v4392 = vsel %vm4306, %v4278, 0
    %v4395 = vsel %vm4306, %v4279, 0
    %v4398 = vsel %vm4306, %v4280, 0
    %v4401 = vsel %vm4306, %v4281, 0
    %4403 = vmatprep.subr.bf16.mxu0 0
    %4404 = vmatpush1.bf16.msra.mxu0 %v4298
    %4405 = vmatprep.subr.bf16.mxu0 0
    %4406 = vmatpush1.bf16.msra.mxu0 %v4299
    %4407 = vmatprep.subr.bf16.mxu0 0
    %4408 = vmatpush1.bf16.msra.mxu0 %v4300
    %4409 = vmatprep.subr.bf16.mxu0 0
    %4410 = vmatpush1.bf16.msra.mxu0 %v4301
    %4411 = vmatprep.subr.bf16.mxu0 0
    %4412 = vmatpush1.bf16.msra.mxu0 0
    %4413 = vmatprep.subr.bf16.mxu0 0
    %4414 = vmatpush1.bf16.msra.mxu0 0
    %4415 = vmatprep.subr.bf16.mxu0 0
    %4416 = vmatpush1.bf16.msra.mxu0 0
    %4417 = vmatprep.subr.bf16.mxu0 0
    %4418 = vmatpush1.bf16.msra.mxu0 0
    %4419 = vmatprep.subr.bf16.mxu0 0
    %4420 = vmatpush1.bf16.msra.mxu0 0
    %4421 = vmatprep.subr.bf16.mxu0 0
    %4422 = vmatpush1.bf16.msra.mxu0 0
    %4423 = vmatprep.subr.bf16.mxu0 0
    %4424 = vmatpush1.bf16.msra.mxu0 0
    %4425 = vmatprep.subr.bf16.mxu0 0
    %4426 = vmatpush1.bf16.msra.mxu0 0
    %4427 = vmatprep.subr.bf16.mxu0 0
    %4428 = vmatpush1.bf16.msra.mxu0 0
    %4429 = vmatprep.subr.bf16.mxu0 0
    %4430 = vmatpush1.bf16.msra.mxu0 0
    %4431 = vmatprep.subr.bf16.mxu0 0
    %4432 = vmatpush1.bf16.msra.mxu0 0
    %4433 = vmatprep.subr.bf16.mxu0 0
    %4434 = vmatpush1.bf16.msra.mxu0 0
    %4435 = vmatprep.mubr.bf16.mxu0 0
    %4436 = vmatmul.mubr.bf16.gmra.mrb[0].mxu0 %v4308
    %v4437 = vpop.f32.mrb[0].mxu0
    %v4438 = vadd.f32 0.0, %v4437
    %v4439 = vpop.f32.mrb[0].mxu0
    %v4440 = vpop.f32.mrb[0].mxu0
    %v4441 = vadd.f32 0.0, %v4440
    %v4442 = vpop.f32.mrb[0].mxu0
    %4443 = vmatprep.mubr.bf16.mxu0 0
    %4444 = vmatmul.mubr.bf16.gmra.mrb[0].mxu0 %v4311
    %v4445 = vpop.f32.mrb[0].mxu0
    %v4446 = vadd.f32 0.0, %v4445
    %v4447 = vpop.f32.mrb[0].mxu0
    %v4448 = vpop.f32.mrb[0].mxu0
    %v4449 = vadd.f32 0.0, %v4448
    %v4450 = vpop.f32.mrb[0].mxu0
    %4451 = vmatprep.mubr.bf16.mxu0 0
    %4452 = vmatmul.mubr.bf16.gmra.mrb[0].mxu0 %v4314
    %v4453 = vpop.f32.mrb[0].mxu0
    %v4454 = vadd.f32 0.0, %v4453
    %v4455 = vpop.f32.mrb[0].mxu0
    %v4456 = vpop.f32.mrb[0].mxu0
    %v4457 = vadd.f32 0.0, %v4456
    %v4458 = vpop.f32.mrb[0].mxu0
    %4459 = vmatprep.mubr.bf16.mxu0 0
    %4460 = vmatmul.mubr.bf16.gmra.mrb[0].mxu0 %v4317
    %v4461 = vpop.f32.mrb[0].mxu0
    %v4462 = vadd.f32 0.0, %v4461
    %v4463 = vpop.f32.mrb[0].mxu0
    %v4464 = vpop.f32.mrb[0].mxu0
    %v4465 = vadd.f32 0.0, %v4464
    %v4466 = vpop.f32.mrb[0].mxu0
    %4467 = vmatprep.mubr.bf16.mxu0 0
    %4468 = vmatmul.mubr.bf16.gmra.mrb[0].mxu0 %v4320
    %v4469 = vpop.f32.mrb[0].mxu0
    %v4470 = vadd.f32 0.0, %v4469
    %v4471 = vpop.f32.mrb[0].mxu0
    %v4472 = vpop.f32.mrb[0].mxu0
    %v4473 = vadd.f32 0.0, %v4472
    %v4474 = vpop.f32.mrb[0].mxu0
    %4475 = vmatprep.mubr.bf16.mxu0 0
    %4476 = vmatmul.mubr.bf16.gmra.mrb[0].mxu0 %v4323
    %v4477 = vpop.f32.mrb[0].mxu0
    %v4478 = vadd.f32 0.0, %v4477
    %v4479 = vpop.f32.mrb[0].mxu0
    %v4480 = vpop.f32.mrb[0].mxu0
    %v4481 = vadd.f32 0.0, %v4480
    %v4482 = vpop.f32.mrb[0].mxu0
    %4483 = vmatprep.mubr.bf16.mxu0 0
    %4484 = vmatmul.mubr.bf16.gmra.mrb[0].mxu0 %v4326
    %v4485 = vpop.f32.mrb[0].mxu0
    %v4486 = vadd.f32 0.0, %v4485
    %v4487 = vpop.f32.mrb[0].mxu0
    %v4488 = vpop.f32.mrb[0].mxu0
    %v4489 = vadd.f32 0.0, %v4488
    %v4490 = vpop.f32.mrb[0].mxu0
    %4491 = vmatprep.mubr.bf16.mxu0 0
    %4492 = vmatmul.mubr.bf16.gmra.mrb[0].mxu0 %v4329
    %v4493 = vpop.f32.mrb[0].mxu0
    %v4494 = vadd.f32 0.0, %v4493
    %v4495 = vpop.f32.mrb[0].mxu0
    %v4496 = vpop.f32.mrb[0].mxu0
    %v4497 = vadd.f32 0.0, %v4496
    %v4498 = vpop.f32.mrb[0].mxu0
    %4499 = vmatprep.mubr.bf16.mxu0 0
    %4500 = vmatmul.mubr.bf16.gmra.mrb[0].mxu0 %v4332
    %v4501 = vpop.f32.mrb[0].mxu0
    %v4502 = vadd.f32 0.0, %v4501
    %v4503 = vpop.f32.mrb[0].mxu0
    %v4504 = vpop.f32.mrb[0].mxu0
    %v4505 = vadd.f32 0.0, %v4504
    %v4506 = vpop.f32.mrb[0].mxu0
    %4507 = vmatprep.mubr.bf16.mxu0 0
    %4508 = vmatmul.mubr.bf16.gmra.mrb[0].mxu0 %v4335
    %v4509 = vpop.f32.mrb[0].mxu0
    %v4510 = vadd.f32 0.0, %v4509
    %v4511 = vpop.f32.mrb[0].mxu0
    %v4512 = vpop.f32.mrb[0].mxu0
    %v4513 = vadd.f32 0.0, %v4512
    %v4514 = vpop.f32.mrb[0].mxu0
    %4515 = vmatprep.mubr.bf16.mxu0 0
    %4516 = vmatmul.mubr.bf16.gmra.mrb[0].mxu0 %v4338
    %v4517 = vpop.f32.mrb[0].mxu0
    %v4518 = vadd.f32 0.0, %v4517
    %v4519 = vpop.f32.mrb[0].mxu0
    %v4520 = vpop.f32.mrb[0].mxu0
    %v4521 = vadd.f32 0.0, %v4520
    %v4522 = vpop.f32.mrb[0].mxu0
    %4523 = vmatprep.mubr.bf16.mxu0 0
    %4524 = vmatmul.mubr.bf16.gmra.mrb[0].mxu0 %v4341
    %v4525 = vpop.f32.mrb[0].mxu0
    %v4526 = vadd.f32 0.0, %v4525
    %v4527 = vpop.f32.mrb[0].mxu0
    %v4528 = vpop.f32.mrb[0].mxu0
    %v4529 = vadd.f32 0.0, %v4528
    %v4530 = vpop.f32.mrb[0].mxu0
    %4531 = vmatprep.mubr.bf16.mxu0 0
    %4532 = vmatmul.mubr.bf16.gmra.mrb[0].mxu0 %v4344
    %v4533 = vpop.f32.mrb[0].mxu0
    %v4534 = vadd.f32 0.0, %v4533
    %v4535 = vpop.f32.mrb[0].mxu0
    %v4536 = vpop.f32.mrb[0].mxu0
    %v4537 = vadd.f32 0.0, %v4536
    %v4538 = vpop.f32.mrb[0].mxu0
    %4539 = vmatprep.mubr.bf16.mxu0 0
    %4540 = vmatmul.mubr.bf16.gmra.mrb[0].mxu0 %v4347
    %v4541 = vpop.f32.mrb[0].mxu0
    %v4542 = vadd.f32 0.0, %v4541
    %v4543 = vpop.f32.mrb[0].mxu0
    %v4544 = vpop.f32.mrb[0].mxu0
    %v4545 = vadd.f32 0.0, %v4544
    %v4546 = vpop.f32.mrb[0].mxu0
    %4547 = vmatprep.mubr.bf16.mxu0 0
    %4548 = vmatmul.mubr.bf16.gmra.mrb[0].mxu0 %v4350
    %v4549 = vpop.f32.mrb[0].mxu0
    %v4550 = vadd.f32 0.0, %v4549
    %v4551 = vpop.f32.mrb[0].mxu0
    %v4552 = vpop.f32.mrb[0].mxu0
    %v4553 = vadd.f32 0.0, %v4552
    %v4554 = vpop.f32.mrb[0].mxu0
    %4555 = vmatprep.mubr.bf16.mxu0 0
    %4556 = vmatmul.mubr.bf16.gmra.mrb[0].mxu0 %v4353
    %v4557 = vpop.f32.mrb[0].mxu0
    %v4558 = vadd.f32 0.0, %v4557
    %v4559 = vpop.f32.mrb[0].mxu0
    %v4560 = vpop.f32.mrb[0].mxu0
    %v4561 = vadd.f32 0.0, %v4560
    %v4562 = vpop.f32.mrb[0].mxu0
    %4563 = vmatprep.mubr.bf16.mxu0 0
    %4564 = vmatmul.mubr.bf16.gmra.mrb[0].mxu0 %v4356
    %v4565 = vpop.f32.mrb[0].mxu0
    %v4566 = vadd.f32 0.0, %v4565
    %v4567 = vpop.f32.mrb[0].mxu0
    %v4568 = vpop.f32.mrb[0].mxu0
    %v4569 = vadd.f32 0.0, %v4568
    %v4570 = vpop.f32.mrb[0].mxu0
    %4571 = vmatprep.mubr.bf16.mxu0 0
    %4572 = vmatmul.mubr.bf16.gmra.mrb[0].mxu0 %v4359
    %v4573 = vpop.f32.mrb[0].mxu0
    %v4574 = vadd.f32 0.0, %v4573
    %v4575 = vpop.f32.mrb[0].mxu0
    %v4576 = vpop.f32.mrb[0].mxu0
    %v4577 = vadd.f32 0.0, %v4576
    %v4578 = vpop.f32.mrb[0].mxu0
    %4579 = vmatprep.mubr.bf16.mxu0 0
    %4580 = vmatmul.mubr.bf16.gmra.mrb[0].mxu0 %v4362
    %v4581 = vpop.f32.mrb[0].mxu0
    %v4582 = vadd.f32 0.0, %v4581
    %v4583 = vpop.f32.mrb[0].mxu0
    %v4584 = vpop.f32.mrb[0].mxu0
    %v4585 = vadd.f32 0.0, %v4584
    %v4586 = vpop.f32.mrb[0].mxu0
    %4587 = vmatprep.mubr.bf16.mxu0 0
    %4588 = vmatmul.mubr.bf16.gmra.mrb[0].mxu0 %v4365
    %v4589 = vpop.f32.mrb[0].mxu0
    %v4590 = vadd.f32 0.0, %v4589
    %v4591 = vpop.f32.mrb[0].mxu0
    %v4592 = vpop.f32.mrb[0].mxu0
    %v4593 = vadd.f32 0.0, %v4592
    %v4594 = vpop.f32.mrb[0].mxu0
    %4595 = vmatprep.mubr.bf16.mxu0 0
    %4596 = vmatmul.mubr.bf16.gmra.mrb[0].mxu0 %v4368
    %v4597 = vpop.f32.mrb[0].mxu0
    %v4598 = vadd.f32 0.0, %v4597
    %v4599 = vpop.f32.mrb[0].mxu0
    %v4600 = vpop.f32.mrb[0].mxu0
    %v4601 = vadd.f32 0.0, %v4600
    %v4602 = vpop.f32.mrb[0].mxu0
    %4603 = vmatprep.mubr.bf16.mxu0 0
    %4604 = vmatmul.mubr.bf16.gmra.mrb[0].mxu0 %v4371
    %v4605 = vpop.f32.mrb[0].mxu0
    %v4606 = vadd.f32 0.0, %v4605
    %v4607 = vpop.f32.mrb[0].mxu0
    %v4608 = vpop.f32.mrb[0].mxu0
    %v4609 = vadd.f32 0.0, %v4608
    %v4610 = vpop.f32.mrb[0].mxu0
    %4611 = vmatprep.mubr.bf16.mxu0 0
    %4612 = vmatmul.mubr.bf16.gmra.mrb[0].mxu0 %v4374
    %v4613 = vpop.f32.mrb[0].mxu0
    %v4614 = vadd.f32 0.0, %v4613
    %v4615 = vpop.f32.mrb[0].mxu0
    %v4616 = vpop.f32.mrb[0].mxu0
    %v4617 = vadd.f32 0.0, %v4616
    %v4618 = vpop.f32.mrb[0].mxu0
    %4619 = vmatprep.mubr.bf16.mxu0 0
    %4620 = vmatmul.mubr.bf16.gmra.mrb[0].mxu0 %v4377
    %v4621 = vpop.f32.mrb[0].mxu0
    %v4622 = vadd.f32 0.0, %v4621
    %v4623 = vpop.f32.mrb[0].mxu0
    %v4624 = vpop.f32.mrb[0].mxu0
    %v4625 = vadd.f32 0.0, %v4624
    %v4626 = vpop.f32.mrb[0].mxu0
    %4627 = vmatprep.mubr.bf16.mxu0 0
    %4628 = vmatmul.mubr.bf16.gmra.mrb[0].mxu0 %v4380
    %v4629 = vpop.f32.mrb[0].mxu0
    %v4630 = vadd.f32 0.0, %v4629
    %v4631 = vpop.f32.mrb[0].mxu0
    %v4632 = vpop.f32.mrb[0].mxu0
    %v4633 = vadd.f32 0.0, %v4632
    %v4634 = vpop.f32.mrb[0].mxu0
    %4635 = vmatprep.mubr.bf16.mxu0 0
    %4636 = vmatmul.mubr.bf16.gmra.mrb[0].mxu0 %v4383
    %v4637 = vpop.f32.mrb[0].mxu0
    %v4638 = vadd.f32 0.0, %v4637
    %v4639 = vpop.f32.mrb[0].mxu0
    %v4640 = vpop.f32.mrb[0].mxu0
    %v4641 = vadd.f32 0.0, %v4640
    %v4642 = vpop.f32.mrb[0].mxu0
    %4643 = vmatprep.mubr.bf16.mxu0 0
    %4644 = vmatmul.mubr.bf16.gmra.mrb[0].mxu0 %v4386
    %v4645 = vpop.f32.mrb[0].mxu0
    %v4646 = vadd.f32 0.0, %v4645
    %v4647 = vpop.f32.mrb[0].mxu0
    %v4648 = vpop.f32.mrb[0].mxu0
    %v4649 = vadd.f32 0.0, %v4648
    %v4650 = vpop.f32.mrb[0].mxu0
    %4651 = vmatprep.mubr.bf16.mxu0 0
    %4652 = vmatmul.mubr.bf16.gmra.mrb[0].mxu0 %v4389
    %v4653 = vpop.f32.mrb[0].mxu0
    %v4654 = vadd.f32 0.0, %v4653
    %v4655 = vpop.f32.mrb[0].mxu0
    %v4656 = vpop.f32.mrb[0].mxu0
    %v4657 = vadd.f32 0.0, %v4656
    %v4658 = vpop.f32.mrb[0].mxu0
    %4659 = vmatprep.mubr.bf16.mxu0 0
    %4660 = vmatmul.mubr.bf16.gmra.mrb[0].mxu0 %v4392
    %v4661 = vpop.f32.mrb[0].mxu0
    %v4662 = vadd.f32 0.0, %v4661
    %v4663 = vpop.f32.mrb[0].mxu0
    %v4664 = vpop.f32.mrb[0].mxu0
    %v4665 = vadd.f32 0.0, %v4664
    %v4666 = vpop.f32.mrb[0].mxu0
    %4667 = vmatprep.mubr.bf16.mxu0 0
    %4668 = vmatmul.mubr.bf16.gmra.mrb[0].mxu0 %v4395
    %v4669 = vpop.f32.mrb[0].mxu0
    %v4670 = vadd.f32 0.0, %v4669
    %v4671 = vpop.f32.mrb[0].mxu0
    %v4672 = vpop.f32.mrb[0].mxu0
    %v4673 = vadd.f32 0.0, %v4672
    %v4674 = vpop.f32.mrb[0].mxu0
    %4675 = vmatprep.mubr.bf16.mxu0 0
    %4676 = vmatmul.mubr.bf16.gmra.mrb[0].mxu0 %v4398
    %v4677 = vpop.f32.mrb[0].mxu0
    %v4678 = vadd.f32 0.0, %v4677
    %v4679 = vpop.f32.mrb[0].mxu0
    %v4680 = vpop.f32.mrb[0].mxu0
    %v4681 = vadd.f32 0.0, %v4680
    %v4682 = vpop.f32.mrb[0].mxu0
    %4683 = vmatprep.mubr.bf16.mxu0 0
    %4684 = vmatmul.mubr.bf16.gmra.mrb[0].mxu0 %v4401
    %v4685 = vpop.f32.mrb[0].mxu0
    %v4686 = vadd.f32 0.0, %v4685
    %v4687 = vpop.f32.mrb[0].mxu0
    %v4688 = vpop.f32.mrb[0].mxu0
    %v4689 = vadd.f32 0.0, %v4688
    %v4690 = vpop.f32.mrb[0].mxu0
    %4691 = vdwg.mxu0
    %v4692 = vpack.c.b16 %v4186, %v1547
    %v4693 = vpack.c.b16 %v4188, %v4187
    %v4694 = vpack.c.b16 %v4190, %v4189
    %v4695 = vpack.c.b16 %v4192, %v4191
    %v4696 = vpack.c.b16 %v4194, %v4193
    %v4697 = vpack.c.b16 %v4196, %v4195
    %v4698 = vpack.c.b16 %v4198, %v4197
    %v4699 = vpack.c.b16 %v4200, %v4199
    %v4700 = vpack.c.b16 %v4202, %v4201
    %v4701 = vpack.c.b16 %v4204, %v4203
    %v4702 = vpack.c.b16 %v4206, %v4205
    %v4703 = vpack.c.b16 %v4208, %v4207
    %v4704 = vpack.c.b16 %v4210, %v4209
    %v4705 = vpack.c.b16 %v4212, %v4211
    %v4706 = vpack.c.b16 %v4214, %v4213
    %v4707 = vpack.c.b16 %v4216, %v4215
    %v4708 = vpack.c.b16 %v4218, %v4217
    %v4709 = vpack.c.b16 %v4220, %v4219
    %v4710 = vpack.c.b16 %v4222, %v4221
    %v4711 = vpack.c.b16 %v4224, %v4223
    %v4712 = vpack.c.b16 %v4226, %v4225
    %v4713 = vpack.c.b16 %v4228, %v4227
    %v4714 = vpack.c.b16 %v4230, %v4229
    %v4715 = vpack.c.b16 %v4232, %v4231
    %v4716 = vpack.c.b16 %v4234, %v4233
    %v4717 = vpack.c.b16 %v4236, %v4235
    %v4718 = vpack.c.b16 %v4238, %v4237
    %v4719 = vpack.c.b16 %v4240, %v4239
    %v4720 = vpack.c.b16 %v4242, %v4241
    %v4721 = vpack.c.b16 %v4244, %v4243
    %v4722 = vpack.c.b16 %v4246, %v4245
    %v4723 = vpack.c.b16 %v4248, %v4247
    %v4732 = vunpack.c.l.b16 %v4105
    %v4733 = vunpack.c.l.b16 %v4106
    %v4734 = vunpack.c.l.b16 %v4107
    %v4735 = vunpack.c.l.b16 %v4108
    %v4736 = vunpack.c.l.b16 %v4109
    %v4737 = vunpack.c.l.b16 %v4110
    %v4738 = vunpack.c.l.b16 %v4111
    %v4739 = vunpack.c.l.b16 %v4112
    %v4740 = vpack.c.b16 %v4733, %v4732
    %v4741 = vpack.c.b16 %v4735, %v4734
    %v4742 = vpack.c.b16 %v4737, %v4736
    %v4743 = vpack.c.b16 %v4739, %v4738
    %v4749 = vsel %vm4306, %v4692, 0
    %v4752 = vsel %vm4306, %v4693, 0
    %v4755 = vsel %vm4306, %v4694, 0
    %v4758 = vsel %vm4306, %v4695, 0
    %v4761 = vsel %vm4306, %v4696, 0
    %v4764 = vsel %vm4306, %v4697, 0
    %v4767 = vsel %vm4306, %v4698, 0
    %v4770 = vsel %vm4306, %v4699, 0
    %v4773 = vsel %vm4306, %v4700, 0
    %v4776 = vsel %vm4306, %v4701, 0
    %v4779 = vsel %vm4306, %v4702, 0
    %v4782 = vsel %vm4306, %v4703, 0
    %v4785 = vsel %vm4306, %v4704, 0
    %v4788 = vsel %vm4306, %v4705, 0
    %v4791 = vsel %vm4306, %v4706, 0
    %v4794 = vsel %vm4306, %v4707, 0
    %v4797 = vsel %vm4306, %v4708, 0
    %v4800 = vsel %vm4306, %v4709, 0
    %v4803 = vsel %vm4306, %v4710, 0
    %v4806 = vsel %vm4306, %v4711, 0
    %v4809 = vsel %vm4306, %v4712, 0
    %v4812 = vsel %vm4306, %v4713, 0
    %v4815 = vsel %vm4306, %v4714, 0
    %v4818 = vsel %vm4306, %v4715, 0
    %v4821 = vsel %vm4306, %v4716, 0
    %v4824 = vsel %vm4306, %v4717, 0
    %v4827 = vsel %vm4306, %v4718, 0
    %v4830 = vsel %vm4306, %v4719, 0
    %v4833 = vsel %vm4306, %v4720, 0
    %v4836 = vsel %vm4306, %v4721, 0
    %v4839 = vsel %vm4306, %v4722, 0
    %v4842 = vsel %vm4306, %v4723, 0
    %4844 = vmatprep.subr.bf16.mxu0 0
    %4845 = vmatpush1.bf16.msra.mxu0 %v4740
    %4846 = vmatprep.subr.bf16.mxu0 0
    %4847 = vmatpush1.bf16.msra.mxu0 %v4741
    %4848 = vmatprep.subr.bf16.mxu0 0
    %4849 = vmatpush1.bf16.msra.mxu0 %v4742
    %4850 = vmatprep.subr.bf16.mxu0 0
    %4851 = vmatpush1.bf16.msra.mxu0 %v4743
    %4852 = vmatprep.subr.bf16.mxu0 0
    %4853 = vmatpush1.bf16.msra.mxu0 0
    %4854 = vmatprep.subr.bf16.mxu0 0
    %4855 = vmatpush1.bf16.msra.mxu0 0
    %4856 = vmatprep.subr.bf16.mxu0 0
    %4857 = vmatpush1.bf16.msra.mxu0 0
    %4858 = vmatprep.subr.bf16.mxu0 0
    %4859 = vmatpush1.bf16.msra.mxu0 0
    %4860 = vmatprep.subr.bf16.mxu0 0
    %4861 = vmatpush1.bf16.msra.mxu0 0
    %4862 = vmatprep.subr.bf16.mxu0 0
    %4863 = vmatpush1.bf16.msra.mxu0 0
    %4864 = vmatprep.subr.bf16.mxu0 0
    %4865 = vmatpush1.bf16.msra.mxu0 0
    %4866 = vmatprep.subr.bf16.mxu0 0
    %4867 = vmatpush1.bf16.msra.mxu0 0
    %4868 = vmatprep.subr.bf16.mxu0 0
    %4869 = vmatpush1.bf16.msra.mxu0 0
    %4870 = vmatprep.subr.bf16.mxu0 0
    %4871 = vmatpush1.bf16.msra.mxu0 0
    %4872 = vmatprep.subr.bf16.mxu0 0
    %4873 = vmatpush1.bf16.msra.mxu0 0
    %4874 = vmatprep.subr.bf16.mxu0 0
    %4875 = vmatpush1.bf16.msra.mxu0 0
    %4876 = vmatprep.mubr.bf16.mxu0 0
    %4877 = vmatmul.mubr.bf16.gmra.mrb[0].mxu0 %v4749
    %v4878 = vpop.f32.mrb[0].mxu0
    %v4879 = vadd.f32 %v4438, %v4878
    %v4880 = vpop.f32.mrb[0].mxu0
    %v4881 = vpop.f32.mrb[0].mxu0
    %v4882 = vadd.f32 %v4441, %v4881
    %v4883 = vpop.f32.mrb[0].mxu0
    %4884 = vmatprep.mubr.bf16.mxu0 0
    %4885 = vmatmul.mubr.bf16.gmra.mrb[0].mxu0 %v4752
    %v4886 = vpop.f32.mrb[0].mxu0
    %v4887 = vadd.f32 %v4446, %v4886
    %v4888 = vpop.f32.mrb[0].mxu0
    %v4889 = vpop.f32.mrb[0].mxu0
    %v4890 = vadd.f32 %v4449, %v4889
    %v4891 = vpop.f32.mrb[0].mxu0
    %4892 = vmatprep.mubr.bf16.mxu0 0
    %4893 = vmatmul.mubr.bf16.gmra.mrb[0].mxu0 %v4755
    %v4894 = vpop.f32.mrb[0].mxu0
    %v4895 = vadd.f32 %v4454, %v4894
    %v4896 = vpop.f32.mrb[0].mxu0
    %v4897 = vpop.f32.mrb[0].mxu0
    %v4898 = vadd.f32 %v4457, %v4897
    %v4899 = vpop.f32.mrb[0].mxu0
    %4900 = vmatprep.mubr.bf16.mxu0 0
    %4901 = vmatmul.mubr.bf16.gmra.mrb[0].mxu0 %v4758
    %v4902 = vpop.f32.mrb[0].mxu0
    %v4903 = vadd.f32 %v4462, %v4902
    %v4904 = vpop.f32.mrb[0].mxu0
    %v4905 = vpop.f32.mrb[0].mxu0
    %v4906 = vadd.f32 %v4465, %v4905
    %v4907 = vpop.f32.mrb[0].mxu0
    %4908 = vmatprep.mubr.bf16.mxu0 0
    %4909 = vmatmul.mubr.bf16.gmra.mrb[0].mxu0 %v4761
    %v4910 = vpop.f32.mrb[0].mxu0
    %v4911 = vadd.f32 %v4470, %v4910
    %v4912 = vpop.f32.mrb[0].mxu0
    %v4913 = vpop.f32.mrb[0].mxu0
    %v4914 = vadd.f32 %v4473, %v4913
    %v4915 = vpop.f32.mrb[0].mxu0
    %4916 = vmatprep.mubr.bf16.mxu0 0
    %4917 = vmatmul.mubr.bf16.gmra.mrb[0].mxu0 %v4764
    %v4918 = vpop.f32.mrb[0].mxu0
    %v4919 = vadd.f32 %v4478, %v4918
    %v4920 = vpop.f32.mrb[0].mxu0
    %v4921 = vpop.f32.mrb[0].mxu0
    %v4922 = vadd.f32 %v4481, %v4921
    %v4923 = vpop.f32.mrb[0].mxu0
    %4924 = vmatprep.mubr.bf16.mxu0 0
    %4925 = vmatmul.mubr.bf16.gmra.mrb[0].mxu0 %v4767
    %v4926 = vpop.f32.mrb[0].mxu0
    %v4927 = vadd.f32 %v4486, %v4926
    %v4928 = vpop.f32.mrb[0].mxu0
    %v4929 = vpop.f32.mrb[0].mxu0
    %v4930 = vadd.f32 %v4489, %v4929
    %v4931 = vpop.f32.mrb[0].mxu0
    %4932 = vmatprep.mubr.bf16.mxu0 0
    %4933 = vmatmul.mubr.bf16.gmra.mrb[0].mxu0 %v4770
    %v4934 = vpop.f32.mrb[0].mxu0
    %v4935 = vadd.f32 %v4494, %v4934
    %v4936 = vpop.f32.mrb[0].mxu0
    %v4937 = vpop.f32.mrb[0].mxu0
    %v4938 = vadd.f32 %v4497, %v4937
    %v4939 = vpop.f32.mrb[0].mxu0
    %4940 = vmatprep.mubr.bf16.mxu0 0
    %4941 = vmatmul.mubr.bf16.gmra.mrb[0].mxu0 %v4773
    %v4942 = vpop.f32.mrb[0].mxu0
    %v4943 = vadd.f32 %v4502, %v4942
    %v4944 = vpop.f32.mrb[0].mxu0
    %v4945 = vpop.f32.mrb[0].mxu0
    %v4946 = vadd.f32 %v4505, %v4945
    %v4947 = vpop.f32.mrb[0].mxu0
    %4948 = vmatprep.mubr.bf16.mxu0 0
    %4949 = vmatmul.mubr.bf16.gmra.mrb[0].mxu0 %v4776
    %v4950 = vpop.f32.mrb[0].mxu0
    %v4951 = vadd.f32 %v4510, %v4950
    %v4952 = vpop.f32.mrb[0].mxu0
    %v4953 = vpop.f32.mrb[0].mxu0
    %v4954 = vadd.f32 %v4513, %v4953
    %v4955 = vpop.f32.mrb[0].mxu0
    %4956 = vmatprep.mubr.bf16.mxu0 0
    %4957 = vmatmul.mubr.bf16.gmra.mrb[0].mxu0 %v4779
    %v4958 = vpop.f32.mrb[0].mxu0
    %v4959 = vadd.f32 %v4518, %v4958
    %v4960 = vpop.f32.mrb[0].mxu0
    %v4961 = vpop.f32.mrb[0].mxu0
    %v4962 = vadd.f32 %v4521, %v4961
    %v4963 = vpop.f32.mrb[0].mxu0
    %4964 = vmatprep.mubr.bf16.mxu0 0
    %4965 = vmatmul.mubr.bf16.gmra.mrb[0].mxu0 %v4782
    %v4966 = vpop.f32.mrb[0].mxu0
    %v4967 = vadd.f32 %v4526, %v4966
    %v4968 = vpop.f32.mrb[0].mxu0
    %v4969 = vpop.f32.mrb[0].mxu0
    %v4970 = vadd.f32 %v4529, %v4969
    %v4971 = vpop.f32.mrb[0].mxu0
    %4972 = vmatprep.mubr.bf16.mxu0 0
    %4973 = vmatmul.mubr.bf16.gmra.mrb[0].mxu0 %v4785
    %v4974 = vpop.f32.mrb[0].mxu0
    %v4975 = vadd.f32 %v4534, %v4974
    %v4976 = vpop.f32.mrb[0].mxu0
    %v4977 = vpop.f32.mrb[0].mxu0
    %v4978 = vadd.f32 %v4537, %v4977
    %v4979 = vpop.f32.mrb[0].mxu0
    %4980 = vmatprep.mubr.bf16.mxu0 0
    %4981 = vmatmul.mubr.bf16.gmra.mrb[0].mxu0 %v4788
    %v4982 = vpop.f32.mrb[0].mxu0
    %v4983 = vadd.f32 %v4542, %v4982
    %v4984 = vpop.f32.mrb[0].mxu0
    %v4985 = vpop.f32.mrb[0].mxu0
    %v4986 = vadd.f32 %v4545, %v4985
    %v4987 = vpop.f32.mrb[0].mxu0
    %4988 = vmatprep.mubr.bf16.mxu0 0
    %4989 = vmatmul.mubr.bf16.gmra.mrb[0].mxu0 %v4791
    %v4990 = vpop.f32.mrb[0].mxu0
    %v4991 = vadd.f32 %v4550, %v4990
    %v4992 = vpop.f32.mrb[0].mxu0
    %v4993 = vpop.f32.mrb[0].mxu0
    %v4994 = vadd.f32 %v4553, %v4993
    %v4995 = vpop.f32.mrb[0].mxu0
    %4996 = vmatprep.mubr.bf16.mxu0 0
    %4997 = vmatmul.mubr.bf16.gmra.mrb[0].mxu0 %v4794
    %v4998 = vpop.f32.mrb[0].mxu0
    %v4999 = vadd.f32 %v4558, %v4998
    %v5000 = vpop.f32.mrb[0].mxu0
    %v5001 = vpop.f32.mrb[0].mxu0
    %v5002 = vadd.f32 %v4561, %v5001
    %v5003 = vpop.f32.mrb[0].mxu0
    %5004 = vmatprep.mubr.bf16.mxu0 0
    %5005 = vmatmul.mubr.bf16.gmra.mrb[0].mxu0 %v4797
    %v5006 = vpop.f32.mrb[0].mxu0
    %v5007 = vadd.f32 %v4566, %v5006
    %v5008 = vpop.f32.mrb[0].mxu0
    %v5009 = vpop.f32.mrb[0].mxu0
    %v5010 = vadd.f32 %v4569, %v5009
    %v5011 = vpop.f32.mrb[0].mxu0
    %5012 = vmatprep.mubr.bf16.mxu0 0
    %5013 = vmatmul.mubr.bf16.gmra.mrb[0].mxu0 %v4800
    %v5014 = vpop.f32.mrb[0].mxu0
    %v5015 = vadd.f32 %v4574, %v5014
    %v5016 = vpop.f32.mrb[0].mxu0
    %v5017 = vpop.f32.mrb[0].mxu0
    %v5018 = vadd.f32 %v4577, %v5017
    %v5019 = vpop.f32.mrb[0].mxu0
    %5020 = vmatprep.mubr.bf16.mxu0 0
    %5021 = vmatmul.mubr.bf16.gmra.mrb[0].mxu0 %v4803
    %v5022 = vpop.f32.mrb[0].mxu0
    %v5023 = vadd.f32 %v4582, %v5022
    %v5024 = vpop.f32.mrb[0].mxu0
    %v5025 = vpop.f32.mrb[0].mxu0
    %v5026 = vadd.f32 %v4585, %v5025
    %v5027 = vpop.f32.mrb[0].mxu0
    %5028 = vmatprep.mubr.bf16.mxu0 0
    %5029 = vmatmul.mubr.bf16.gmra.mrb[0].mxu0 %v4806
    %v5030 = vpop.f32.mrb[0].mxu0
    %v5031 = vadd.f32 %v4590, %v5030
    %v5032 = vpop.f32.mrb[0].mxu0
    %v5033 = vpop.f32.mrb[0].mxu0
    %v5034 = vadd.f32 %v4593, %v5033
    %v5035 = vpop.f32.mrb[0].mxu0
    %5036 = vmatprep.mubr.bf16.mxu0 0
    %5037 = vmatmul.mubr.bf16.gmra.mrb[0].mxu0 %v4809
    %v5038 = vpop.f32.mrb[0].mxu0
    %v5039 = vadd.f32 %v4598, %v5038
    %v5040 = vpop.f32.mrb[0].mxu0
    %v5041 = vpop.f32.mrb[0].mxu0
    %v5042 = vadd.f32 %v4601, %v5041
    %v5043 = vpop.f32.mrb[0].mxu0
    %5044 = vmatprep.mubr.bf16.mxu0 0
    %5045 = vmatmul.mubr.bf16.gmra.mrb[0].mxu0 %v4812
    %v5046 = vpop.f32.mrb[0].mxu0
    %v5047 = vadd.f32 %v4606, %v5046
    %v5048 = vpop.f32.mrb[0].mxu0
    %v5049 = vpop.f32.mrb[0].mxu0
    %v5050 = vadd.f32 %v4609, %v5049
    %v5051 = vpop.f32.mrb[0].mxu0
    %5052 = vmatprep.mubr.bf16.mxu0 0
    %5053 = vmatmul.mubr.bf16.gmra.mrb[0].mxu0 %v4815
    %v5054 = vpop.f32.mrb[0].mxu0
    %v5055 = vadd.f32 %v4614, %v5054
    %v5056 = vpop.f32.mrb[0].mxu0
    %v5057 = vpop.f32.mrb[0].mxu0
    %v5058 = vadd.f32 %v4617, %v5057
    %v5059 = vpop.f32.mrb[0].mxu0
    %5060 = vmatprep.mubr.bf16.mxu0 0
    %5061 = vmatmul.mubr.bf16.gmra.mrb[0].mxu0 %v4818
    %v5062 = vpop.f32.mrb[0].mxu0
    %v5063 = vadd.f32 %v4622, %v5062
    %v5064 = vpop.f32.mrb[0].mxu0
    %v5065 = vpop.f32.mrb[0].mxu0
    %v5066 = vadd.f32 %v4625, %v5065
    %v5067 = vpop.f32.mrb[0].mxu0
    %5068 = vmatprep.mubr.bf16.mxu0 0
    %5069 = vmatmul.mubr.bf16.gmra.mrb[0].mxu0 %v4821
    %v5070 = vpop.f32.mrb[0].mxu0
    %v5071 = vadd.f32 %v4630, %v5070
    %v5072 = vpop.f32.mrb[0].mxu0
    %v5073 = vpop.f32.mrb[0].mxu0
    %v5074 = vadd.f32 %v4633, %v5073
    %v5075 = vpop.f32.mrb[0].mxu0
    %5076 = vmatprep.mubr.bf16.mxu0 0
    %5077 = vmatmul.mubr.bf16.gmra.mrb[0].mxu0 %v4824
    %v5078 = vpop.f32.mrb[0].mxu0
    %v5079 = vadd.f32 %v4638, %v5078
    %v5080 = vpop.f32.mrb[0].mxu0
    %v5081 = vpop.f32.mrb[0].mxu0
    %v5082 = vadd.f32 %v4641, %v5081
    %v5083 = vpop.f32.mrb[0].mxu0
    %5084 = vmatprep.mubr.bf16.mxu0 0
    %5085 = vmatmul.mubr.bf16.gmra.mrb[0].mxu0 %v4827
    %v5086 = vpop.f32.mrb[0].mxu0
    %v5087 = vadd.f32 %v4646, %v5086
    %v5088 = vpop.f32.mrb[0].mxu0
    %v5089 = vpop.f32.mrb[0].mxu0
    %v5090 = vadd.f32 %v4649, %v5089
    %v5091 = vpop.f32.mrb[0].mxu0
    %5092 = vmatprep.mubr.bf16.mxu0 0
    %5093 = vmatmul.mubr.bf16.gmra.mrb[0].mxu0 %v4830
    %v5094 = vpop.f32.mrb[0].mxu0
    %v5095 = vadd.f32 %v4654, %v5094
    %v5096 = vpop.f32.mrb[0].mxu0
    %v5097 = vpop.f32.mrb[0].mxu0
    %v5098 = vadd.f32 %v4657, %v5097
    %v5099 = vpop.f32.mrb[0].mxu0
    %5100 = vmatprep.mubr.bf16.mxu0 0
    %5101 = vmatmul.mubr.bf16.gmra.mrb[0].mxu0 %v4833
    %v5102 = vpop.f32.mrb[0].mxu0
    %v5103 = vadd.f32 %v4662, %v5102
    %v5104 = vpop.f32.mrb[0].mxu0
    %v5105 = vpop.f32.mrb[0].mxu0
    %v5106 = vadd.f32 %v4665, %v5105
    %v5107 = vpop.f32.mrb[0].mxu0
    %5108 = vmatprep.mubr.bf16.mxu0 0
    %5109 = vmatmul.mubr.bf16.gmra.mrb[0].mxu0 %v4836
    %v5110 = vpop.f32.mrb[0].mxu0
    %v5111 = vadd.f32 %v4670, %v5110
    %v5112 = vpop.f32.mrb[0].mxu0
    %v5113 = vpop.f32.mrb[0].mxu0
    %v5114 = vadd.f32 %v4673, %v5113
    %v5115 = vpop.f32.mrb[0].mxu0
    %5116 = vmatprep.mubr.bf16.mxu0 0
    %5117 = vmatmul.mubr.bf16.gmra.mrb[0].mxu0 %v4839
    %v5118 = vpop.f32.mrb[0].mxu0
    %v5119 = vadd.f32 %v4678, %v5118
    %v5120 = vpop.f32.mrb[0].mxu0
    %v5121 = vpop.f32.mrb[0].mxu0
    %v5122 = vadd.f32 %v4681, %v5121
    %v5123 = vpop.f32.mrb[0].mxu0
    %5124 = vmatprep.mubr.bf16.mxu0 0
    %5125 = vmatmul.mubr.bf16.gmra.mrb[0].mxu0 %v4842
    %v5126 = vpop.f32.mrb[0].mxu0
    %v5127 = vadd.f32 %v4686, %v5126
    %v5128 = vpop.f32.mrb[0].mxu0
    %v5129 = vpop.f32.mrb[0].mxu0
    %v5130 = vadd.f32 %v4689, %v5129
    %v5131 = vpop.f32.mrb[0].mxu0
    %5132 = vdwg.mxu0
    %s5133 = scalar_lea.vmem %s7, 64
    %v5134 = vld [vmem:[%s5133] sm:$0xf]
    %v5135 = vld [vmem:[%s5133 + $0x4] sm:$0xf]
    %v5136 = vld [vmem:[%s5133 + $0x8] sm:$0xf]
    %v5137 = vld [vmem:[%s5133 + $0xc] sm:$0xf]
    %v5138 = vld [vmem:[%s5133 + $0x10] sm:$0xf]
    %v5139 = vld [vmem:[%s5133 + $0x14] sm:$0xf]
    %v5140 = vld [vmem:[%s5133 + $0x18] sm:$0xf]
    %v5141 = vld [vmem:[%s5133 + $0x1c] sm:$0xf]
    %v5142 = vpack.c.b16 %v1547, %v4249
    %v5151 = vunpack.c.l.b16 %v5134
    %v5152 = vunpack.c.l.b16 %v5135
    %v5153 = vunpack.c.l.b16 %v5136
    %v5154 = vunpack.c.l.b16 %v5137
    %v5155 = vunpack.c.l.b16 %v5138
    %v5156 = vunpack.c.l.b16 %v5139
    %v5157 = vunpack.c.l.b16 %v5140
    %v5158 = vunpack.c.l.b16 %v5141
    %v5159 = vpack.c.b16 %v5152, %v5151
    %v5160 = vpack.c.b16 %v5154, %v5153
    %v5161 = vpack.c.b16 %v5156, %v5155
    %v5162 = vpack.c.b16 %v5158, %v5157
    %v5168 = vsel %vm4306, %v5142, 0
    %5170 = vmatprep.subr.bf16.mxu0 0
    %5171 = vmatpush1.bf16.msra.mxu0 %v5159
    %5172 = vmatprep.subr.bf16.mxu0 0
    %5173 = vmatpush1.bf16.msra.mxu0 %v5160
    %5174 = vmatprep.subr.bf16.mxu0 0
    %5175 = vmatpush1.bf16.msra.mxu0 %v5161
    %5176 = vmatprep.subr.bf16.mxu0 0
    %5177 = vmatpush1.bf16.msra.mxu0 %v5162
    %5178 = vmatprep.subr.bf16.mxu0 0
    %5179 = vmatpush1.bf16.msra.mxu0 0
    %5180 = vmatprep.subr.bf16.mxu0 0
    %5181 = vmatpush1.bf16.msra.mxu0 0
    %5182 = vmatprep.subr.bf16.mxu0 0
    %5183 = vmatpush1.bf16.msra.mxu0 0
    %5184 = vmatprep.subr.bf16.mxu0 0
    %5185 = vmatpush1.bf16.msra.mxu0 0
    %5186 = vmatprep.subr.bf16.mxu0 0
    %5187 = vmatpush1.bf16.msra.mxu0 0
    %5188 = vmatprep.subr.bf16.mxu0 0
    %5189 = vmatpush1.bf16.msra.mxu0 0
    %5190 = vmatprep.subr.bf16.mxu0 0
    %5191 = vmatpush1.bf16.msra.mxu0 0
    %5192 = vmatprep.subr.bf16.mxu0 0
    %5193 = vmatpush1.bf16.msra.mxu0 0
    %5194 = vmatprep.subr.bf16.mxu0 0
    %5195 = vmatpush1.bf16.msra.mxu0 0
    %5196 = vmatprep.subr.bf16.mxu0 0
    %5197 = vmatpush1.bf16.msra.mxu0 0
    %5198 = vmatprep.subr.bf16.mxu0 0
    %5199 = vmatpush1.bf16.msra.mxu0 0
    %5200 = vmatprep.subr.bf16.mxu0 0
    %5201 = vmatpush1.bf16.msra.mxu0 0
    %5202 = vmatprep.mubr.bf16.mxu0 0
    %5203 = vmatmul.mubr.bf16.gmra.mrb[0].mxu0 %v4752
    %v5204 = vpop.f32.mrb[0].mxu0
    %v5205 = vadd.f32 0.0, %v5204
    %v5206 = vpop.f32.mrb[0].mxu0
    %v5207 = vpop.f32.mrb[0].mxu0
    %v5208 = vadd.f32 0.0, %v5207
    %v5209 = vpop.f32.mrb[0].mxu0
    %5210 = vmatprep.mubr.bf16.mxu0 0
    %5211 = vmatmul.mubr.bf16.gmra.mrb[0].mxu0 %v4755
    %v5212 = vpop.f32.mrb[0].mxu0
    %v5213 = vadd.f32 0.0, %v5212
    %v5214 = vpop.f32.mrb[0].mxu0
    %v5215 = vpop.f32.mrb[0].mxu0
    %v5216 = vadd.f32 0.0, %v5215
    %v5217 = vpop.f32.mrb[0].mxu0
    %5218 = vmatprep.mubr.bf16.mxu0 0
    %5219 = vmatmul.mubr.bf16.gmra.mrb[0].mxu0 %v4758
    %v5220 = vpop.f32.mrb[0].mxu0
    %v5221 = vadd.f32 0.0, %v5220
    %v5222 = vpop.f32.mrb[0].mxu0
    %v5223 = vpop.f32.mrb[0].mxu0
    %v5224 = vadd.f32 0.0, %v5223
    %v5225 = vpop.f32.mrb[0].mxu0
    %5226 = vmatprep.mubr.bf16.mxu0 0
    %5227 = vmatmul.mubr.bf16.gmra.mrb[0].mxu0 %v4761
    %v5228 = vpop.f32.mrb[0].mxu0
    %v5229 = vadd.f32 0.0, %v5228
    %v5230 = vpop.f32.mrb[0].mxu0
    %v5231 = vpop.f32.mrb[0].mxu0
    %v5232 = vadd.f32 0.0, %v5231
    %v5233 = vpop.f32.mrb[0].mxu0
    %5234 = vmatprep.mubr.bf16.mxu0 0
    %5235 = vmatmul.mubr.bf16.gmra.mrb[0].mxu0 %v4764
    %v5236 = vpop.f32.mrb[0].mxu0
    %v5237 = vadd.f32 0.0, %v5236
    %v5238 = vpop.f32.mrb[0].mxu0
    %v5239 = vpop.f32.mrb[0].mxu0
    %v5240 = vadd.f32 0.0, %v5239
    %v5241 = vpop.f32.mrb[0].mxu0
    %5242 = vmatprep.mubr.bf16.mxu0 0
    %5243 = vmatmul.mubr.bf16.gmra.mrb[0].mxu0 %v4767
    %v5244 = vpop.f32.mrb[0].mxu0
    %v5245 = vadd.f32 0.0, %v5244
    %v5246 = vpop.f32.mrb[0].mxu0
    %v5247 = vpop.f32.mrb[0].mxu0
    %v5248 = vadd.f32 0.0, %v5247
    %v5249 = vpop.f32.mrb[0].mxu0
    %5250 = vmatprep.mubr.bf16.mxu0 0
    %5251 = vmatmul.mubr.bf16.gmra.mrb[0].mxu0 %v4770
    %v5252 = vpop.f32.mrb[0].mxu0
    %v5253 = vadd.f32 0.0, %v5252
    %v5254 = vpop.f32.mrb[0].mxu0
    %v5255 = vpop.f32.mrb[0].mxu0
    %v5256 = vadd.f32 0.0, %v5255
    %v5257 = vpop.f32.mrb[0].mxu0
    %5258 = vmatprep.mubr.bf16.mxu0 0
    %5259 = vmatmul.mubr.bf16.gmra.mrb[0].mxu0 %v4773
    %v5260 = vpop.f32.mrb[0].mxu0
    %v5261 = vadd.f32 0.0, %v5260
    %v5262 = vpop.f32.mrb[0].mxu0
    %v5263 = vpop.f32.mrb[0].mxu0
    %v5264 = vadd.f32 0.0, %v5263
    %v5265 = vpop.f32.mrb[0].mxu0
    %5266 = vmatprep.mubr.bf16.mxu0 0
    %5267 = vmatmul.mubr.bf16.gmra.mrb[0].mxu0 %v4776
    %v5268 = vpop.f32.mrb[0].mxu0
    %v5269 = vadd.f32 0.0, %v5268
    %v5270 = vpop.f32.mrb[0].mxu0
    %v5271 = vpop.f32.mrb[0].mxu0
    %v5272 = vadd.f32 0.0, %v5271
    %v5273 = vpop.f32.mrb[0].mxu0
    %5274 = vmatprep.mubr.bf16.mxu0 0
    %5275 = vmatmul.mubr.bf16.gmra.mrb[0].mxu0 %v4779
    %v5276 = vpop.f32.mrb[0].mxu0
    %v5277 = vadd.f32 0.0, %v5276
    %v5278 = vpop.f32.mrb[0].mxu0
    %v5279 = vpop.f32.mrb[0].mxu0
    %v5280 = vadd.f32 0.0, %v5279
    %v5281 = vpop.f32.mrb[0].mxu0
    %5282 = vmatprep.mubr.bf16.mxu0 0
    %5283 = vmatmul.mubr.bf16.gmra.mrb[0].mxu0 %v4782
    %v5284 = vpop.f32.mrb[0].mxu0
    %v5285 = vadd.f32 0.0, %v5284
    %v5286 = vpop.f32.mrb[0].mxu0
    %v5287 = vpop.f32.mrb[0].mxu0
    %v5288 = vadd.f32 0.0, %v5287
    %v5289 = vpop.f32.mrb[0].mxu0
    %5290 = vmatprep.mubr.bf16.mxu0 0
    %5291 = vmatmul.mubr.bf16.gmra.mrb[0].mxu0 %v4785
    %v5292 = vpop.f32.mrb[0].mxu0
    %v5293 = vadd.f32 0.0, %v5292
    %v5294 = vpop.f32.mrb[0].mxu0
    %v5295 = vpop.f32.mrb[0].mxu0
    %v5296 = vadd.f32 0.0, %v5295
    %v5297 = vpop.f32.mrb[0].mxu0
    %5298 = vmatprep.mubr.bf16.mxu0 0
    %5299 = vmatmul.mubr.bf16.gmra.mrb[0].mxu0 %v4788
    %v5300 = vpop.f32.mrb[0].mxu0
    %v5301 = vadd.f32 0.0, %v5300
    %v5302 = vpop.f32.mrb[0].mxu0
    %v5303 = vpop.f32.mrb[0].mxu0
    %v5304 = vadd.f32 0.0, %v5303
    %v5305 = vpop.f32.mrb[0].mxu0
    %5306 = vmatprep.mubr.bf16.mxu0 0
    %5307 = vmatmul.mubr.bf16.gmra.mrb[0].mxu0 %v4791
    %v5308 = vpop.f32.mrb[0].mxu0
    %v5309 = vadd.f32 0.0, %v5308
    %v5310 = vpop.f32.mrb[0].mxu0
    %v5311 = vpop.f32.mrb[0].mxu0
    %v5312 = vadd.f32 0.0, %v5311
    %v5313 = vpop.f32.mrb[0].mxu0
    %5314 = vmatprep.mubr.bf16.mxu0 0
    %5315 = vmatmul.mubr.bf16.gmra.mrb[0].mxu0 %v4794
    %v5316 = vpop.f32.mrb[0].mxu0
    %v5317 = vadd.f32 0.0, %v5316
    %v5318 = vpop.f32.mrb[0].mxu0
    %v5319 = vpop.f32.mrb[0].mxu0
    %v5320 = vadd.f32 0.0, %v5319
    %v5321 = vpop.f32.mrb[0].mxu0
    %5322 = vmatprep.mubr.bf16.mxu0 0
    %5323 = vmatmul.mubr.bf16.gmra.mrb[0].mxu0 %v4797
    %v5324 = vpop.f32.mrb[0].mxu0
    %v5325 = vadd.f32 0.0, %v5324
    %v5326 = vpop.f32.mrb[0].mxu0
    %v5327 = vpop.f32.mrb[0].mxu0
    %v5328 = vadd.f32 0.0, %v5327
    %v5329 = vpop.f32.mrb[0].mxu0
    %5330 = vmatprep.mubr.bf16.mxu0 0
    %5331 = vmatmul.mubr.bf16.gmra.mrb[0].mxu0 %v4800
    %v5332 = vpop.f32.mrb[0].mxu0
    %v5333 = vadd.f32 0.0, %v5332
    %v5334 = vpop.f32.mrb[0].mxu0
    %v5335 = vpop.f32.mrb[0].mxu0
    %v5336 = vadd.f32 0.0, %v5335
    %v5337 = vpop.f32.mrb[0].mxu0
    %5338 = vmatprep.mubr.bf16.mxu0 0
    %5339 = vmatmul.mubr.bf16.gmra.mrb[0].mxu0 %v4803
    %v5340 = vpop.f32.mrb[0].mxu0
    %v5341 = vadd.f32 0.0, %v5340
    %v5342 = vpop.f32.mrb[0].mxu0
    %v5343 = vpop.f32.mrb[0].mxu0
    %v5344 = vadd.f32 0.0, %v5343
    %v5345 = vpop.f32.mrb[0].mxu0
    %5346 = vmatprep.mubr.bf16.mxu0 0
    %5347 = vmatmul.mubr.bf16.gmra.mrb[0].mxu0 %v4806
    %v5348 = vpop.f32.mrb[0].mxu0
    %v5349 = vadd.f32 0.0, %v5348
    %v5350 = vpop.f32.mrb[0].mxu0
    %v5351 = vpop.f32.mrb[0].mxu0
    %v5352 = vadd.f32 0.0, %v5351
    %v5353 = vpop.f32.mrb[0].mxu0
    %5354 = vmatprep.mubr.bf16.mxu0 0
    %5355 = vmatmul.mubr.bf16.gmra.mrb[0].mxu0 %v4809
    %v5356 = vpop.f32.mrb[0].mxu0
    %v5357 = vadd.f32 0.0, %v5356
    %v5358 = vpop.f32.mrb[0].mxu0
    %v5359 = vpop.f32.mrb[0].mxu0
    %v5360 = vadd.f32 0.0, %v5359
    %v5361 = vpop.f32.mrb[0].mxu0
    %5362 = vmatprep.mubr.bf16.mxu0 0
    %5363 = vmatmul.mubr.bf16.gmra.mrb[0].mxu0 %v4812
    %v5364 = vpop.f32.mrb[0].mxu0
    %v5365 = vadd.f32 0.0, %v5364
    %v5366 = vpop.f32.mrb[0].mxu0
    %v5367 = vpop.f32.mrb[0].mxu0
    %v5368 = vadd.f32 0.0, %v5367
    %v5369 = vpop.f32.mrb[0].mxu0
    %5370 = vmatprep.mubr.bf16.mxu0 0
    %5371 = vmatmul.mubr.bf16.gmra.mrb[0].mxu0 %v4815
    %v5372 = vpop.f32.mrb[0].mxu0
    %v5373 = vadd.f32 0.0, %v5372
    %v5374 = vpop.f32.mrb[0].mxu0
    %v5375 = vpop.f32.mrb[0].mxu0
    %v5376 = vadd.f32 0.0, %v5375
    %v5377 = vpop.f32.mrb[0].mxu0
    %5378 = vmatprep.mubr.bf16.mxu0 0
    %5379 = vmatmul.mubr.bf16.gmra.mrb[0].mxu0 %v4818
    %v5380 = vpop.f32.mrb[0].mxu0
    %v5381 = vadd.f32 0.0, %v5380
    %v5382 = vpop.f32.mrb[0].mxu0
    %v5383 = vpop.f32.mrb[0].mxu0
    %v5384 = vadd.f32 0.0, %v5383
    %v5385 = vpop.f32.mrb[0].mxu0
    %5386 = vmatprep.mubr.bf16.mxu0 0
    %5387 = vmatmul.mubr.bf16.gmra.mrb[0].mxu0 %v4821
    %v5388 = vpop.f32.mrb[0].mxu0
    %v5389 = vadd.f32 0.0, %v5388
    %v5390 = vpop.f32.mrb[0].mxu0
    %v5391 = vpop.f32.mrb[0].mxu0
    %v5392 = vadd.f32 0.0, %v5391
    %v5393 = vpop.f32.mrb[0].mxu0
    %5394 = vmatprep.mubr.bf16.mxu0 0
    %5395 = vmatmul.mubr.bf16.gmra.mrb[0].mxu0 %v4824
    %v5396 = vpop.f32.mrb[0].mxu0
    %v5397 = vadd.f32 0.0, %v5396
    %v5398 = vpop.f32.mrb[0].mxu0
    %v5399 = vpop.f32.mrb[0].mxu0
    %v5400 = vadd.f32 0.0, %v5399
    %v5401 = vpop.f32.mrb[0].mxu0
    %5402 = vmatprep.mubr.bf16.mxu0 0
    %5403 = vmatmul.mubr.bf16.gmra.mrb[0].mxu0 %v4827
    %v5404 = vpop.f32.mrb[0].mxu0
    %v5405 = vadd.f32 0.0, %v5404
    %v5406 = vpop.f32.mrb[0].mxu0
    %v5407 = vpop.f32.mrb[0].mxu0
    %v5408 = vadd.f32 0.0, %v5407
    %v5409 = vpop.f32.mrb[0].mxu0
    %5410 = vmatprep.mubr.bf16.mxu0 0
    %5411 = vmatmul.mubr.bf16.gmra.mrb[0].mxu0 %v4830
    %v5412 = vpop.f32.mrb[0].mxu0
    %v5413 = vadd.f32 0.0, %v5412
    %v5414 = vpop.f32.mrb[0].mxu0
    %v5415 = vpop.f32.mrb[0].mxu0
    %v5416 = vadd.f32 0.0, %v5415
    %v5417 = vpop.f32.mrb[0].mxu0
    %5418 = vmatprep.mubr.bf16.mxu0 0
    %5419 = vmatmul.mubr.bf16.gmra.mrb[0].mxu0 %v4833
    %v5420 = vpop.f32.mrb[0].mxu0
    %v5421 = vadd.f32 0.0, %v5420
    %v5422 = vpop.f32.mrb[0].mxu0
    %v5423 = vpop.f32.mrb[0].mxu0
    %v5424 = vadd.f32 0.0, %v5423
    %v5425 = vpop.f32.mrb[0].mxu0
    %5426 = vmatprep.mubr.bf16.mxu0 0
    %5427 = vmatmul.mubr.bf16.gmra.mrb[0].mxu0 %v4836
    %v5428 = vpop.f32.mrb[0].mxu0
    %v5429 = vadd.f32 0.0, %v5428
    %v5430 = vpop.f32.mrb[0].mxu0
    %v5431 = vpop.f32.mrb[0].mxu0
    %v5432 = vadd.f32 0.0, %v5431
    %v5433 = vpop.f32.mrb[0].mxu0
    %5434 = vmatprep.mubr.bf16.mxu0 0
    %5435 = vmatmul.mubr.bf16.gmra.mrb[0].mxu0 %v4839
    %v5436 = vpop.f32.mrb[0].mxu0
    %v5437 = vadd.f32 0.0, %v5436
    %v5438 = vpop.f32.mrb[0].mxu0
    %v5439 = vpop.f32.mrb[0].mxu0
    %v5440 = vadd.f32 0.0, %v5439
    %v5441 = vpop.f32.mrb[0].mxu0
    %5442 = vmatprep.mubr.bf16.mxu0 0
    %5443 = vmatmul.mubr.bf16.gmra.mrb[0].mxu0 %v4842
    %v5444 = vpop.f32.mrb[0].mxu0
    %v5445 = vadd.f32 0.0, %v5444
    %v5446 = vpop.f32.mrb[0].mxu0
    %v5447 = vpop.f32.mrb[0].mxu0
    %v5448 = vadd.f32 0.0, %v5447
    %v5449 = vpop.f32.mrb[0].mxu0
    %5450 = vmatprep.mubr.bf16.mxu0 0
    %5451 = vmatmul.mubr.bf16.gmra.mrb[0].mxu0 %v5168
    %v5452 = vpop.f32.mrb[0].mxu0
    %v5453 = vadd.f32 0.0, %v5452
    %v5454 = vpop.f32.mrb[0].mxu0
    %v5455 = vpop.f32.mrb[0].mxu0
    %v5456 = vadd.f32 0.0, %v5455
    %v5457 = vpop.f32.mrb[0].mxu0
    %5458 = vdwg.mxu0
    %v5459 = vadd.f32 %v4879, %v5205
    %v5460 = vadd.f32 %v4882, %v5208
    %v5461 = vadd.f32 %v4887, %v5213
    %v5462 = vadd.f32 %v4890, %v5216
    %v5463 = vadd.f32 %v4895, %v5221
    %v5464 = vadd.f32 %v4898, %v5224
    %v5465 = vadd.f32 %v4903, %v5229
    %v5466 = vadd.f32 %v4906, %v5232
    %v5467 = vadd.f32 %v4911, %v5237
    %v5468 = vadd.f32 %v4914, %v5240
    %v5469 = vadd.f32 %v4919, %v5245
    %v5470 = vadd.f32 %v4922, %v5248
    %v5471 = vadd.f32 %v4927, %v5253
    %v5472 = vadd.f32 %v4930, %v5256
    %v5473 = vadd.f32 %v4935, %v5261
    %v5474 = vadd.f32 %v4938, %v5264
    %v5475 = vadd.f32 %v4943, %v5269
    %v5476 = vadd.f32 %v4946, %v5272
    %v5477 = vadd.f32 %v4951, %v5277
    %v5478 = vadd.f32 %v4954, %v5280
    %v5479 = vadd.f32 %v4959, %v5285
    %v5480 = vadd.f32 %v4962, %v5288
    %v5481 = vadd.f32 %v4967, %v5293
    %v5482 = vadd.f32 %v4970, %v5296
    %v5483 = vadd.f32 %v4975, %v5301
    %v5484 = vadd.f32 %v4978, %v5304
    %v5485 = vadd.f32 %v4983, %v5309
    %v5486 = vadd.f32 %v4986, %v5312
    %v5487 = vadd.f32 %v4991, %v5317
    %v5488 = vadd.f32 %v4994, %v5320
    %v5489 = vadd.f32 %v4999, %v5325
    %v5490 = vadd.f32 %v5002, %v5328
    %v5491 = vadd.f32 %v5007, %v5333
    %v5492 = vadd.f32 %v5010, %v5336
    %v5493 = vadd.f32 %v5015, %v5341
    %v5494 = vadd.f32 %v5018, %v5344
    %v5495 = vadd.f32 %v5023, %v5349
    %v5496 = vadd.f32 %v5026, %v5352
    %v5497 = vadd.f32 %v5031, %v5357
    %v5498 = vadd.f32 %v5034, %v5360
    %v5499 = vadd.f32 %v5039, %v5365
    %v5500 = vadd.f32 %v5042, %v5368
    %v5501 = vadd.f32 %v5047, %v5373
    %v5502 = vadd.f32 %v5050, %v5376
    %v5503 = vadd.f32 %v5055, %v5381
    %v5504 = vadd.f32 %v5058, %v5384
    %v5505 = vadd.f32 %v5063, %v5389
    %v5506 = vadd.f32 %v5066, %v5392
    %v5507 = vadd.f32 %v5071, %v5397
    %v5508 = vadd.f32 %v5074, %v5400
    %v5509 = vadd.f32 %v5079, %v5405
    %v5510 = vadd.f32 %v5082, %v5408
    %v5511 = vadd.f32 %v5087, %v5413
    %v5512 = vadd.f32 %v5090, %v5416
    %v5513 = vadd.f32 %v5095, %v5421
    %v5514 = vadd.f32 %v5098, %v5424
    %v5515 = vadd.f32 %v5103, %v5429
    %v5516 = vadd.f32 %v5106, %v5432
    %v5517 = vadd.f32 %v5111, %v5437
    %v5518 = vadd.f32 %v5114, %v5440
    %v5519 = vadd.f32 %v5119, %v5445
    %v5520 = vadd.f32 %v5122, %v5448
    %v5521 = vadd.f32 %v5127, %v5453
    %v5522 = vadd.f32 %v5130, %v5456
    %v5523 = vld [vmem:[%s8] sm:$0x1]
    %v5525 = vlaneseq
    %v5526 = vshrl.u32 %v5525, 7
    %v5527 = vsub.s32 0, %v5526
    %v5528 = vrot.slane %v5523, %v5527
    %v5530 = vadd.f32 %v5459, %v5528
    %v5531 = vadd.f32 %v5460, %v5528
    %v5532 = vadd.f32 %v5461, %v5528
    %v5533 = vadd.f32 %v5462, %v5528
    %v5534 = vadd.f32 %v5463, %v5528
    %v5535 = vadd.f32 %v5464, %v5528
    %v5536 = vadd.f32 %v5465, %v5528
    %v5537 = vadd.f32 %v5466, %v5528
    %v5538 = vadd.f32 %v5467, %v5528
    %v5539 = vadd.f32 %v5468, %v5528
    %v5540 = vadd.f32 %v5469, %v5528
    %v5541 = vadd.f32 %v5470, %v5528
    %v5542 = vadd.f32 %v5471, %v5528
    %v5543 = vadd.f32 %v5472, %v5528
    %v5544 = vadd.f32 %v5473, %v5528
    %v5545 = vadd.f32 %v5474, %v5528
    %v5546 = vadd.f32 %v5475, %v5528
    %v5547 = vadd.f32 %v5476, %v5528
    %v5548 = vadd.f32 %v5477, %v5528
    %v5549 = vadd.f32 %v5478, %v5528
    %v5550 = vadd.f32 %v5479, %v5528
    %v5551 = vadd.f32 %v5480, %v5528
    %v5552 = vadd.f32 %v5481, %v5528
    %v5553 = vadd.f32 %v5482, %v5528
    %v5554 = vadd.f32 %v5483, %v5528
    %v5555 = vadd.f32 %v5484, %v5528
    %v5556 = vadd.f32 %v5485, %v5528
    %v5557 = vadd.f32 %v5486, %v5528
    %v5558 = vadd.f32 %v5487, %v5528
    %v5559 = vadd.f32 %v5488, %v5528
    %v5560 = vadd.f32 %v5489, %v5528
    %v5561 = vadd.f32 %v5490, %v5528
    %v5562 = vadd.f32 %v5491, %v5528
    %v5563 = vadd.f32 %v5492, %v5528
    %v5564 = vadd.f32 %v5493, %v5528
    %v5565 = vadd.f32 %v5494, %v5528
    %v5566 = vadd.f32 %v5495, %v5528
    %v5567 = vadd.f32 %v5496, %v5528
    %v5568 = vadd.f32 %v5497, %v5528
    %v5569 = vadd.f32 %v5498, %v5528
    %v5570 = vadd.f32 %v5499, %v5528
    %v5571 = vadd.f32 %v5500, %v5528
    %v5572 = vadd.f32 %v5501, %v5528
    %v5573 = vadd.f32 %v5502, %v5528
    %v5574 = vadd.f32 %v5503, %v5528
    %v5575 = vadd.f32 %v5504, %v5528
    %v5576 = vadd.f32 %v5505, %v5528
    %v5577 = vadd.f32 %v5506, %v5528
    %v5578 = vadd.f32 %v5507, %v5528
    %v5579 = vadd.f32 %v5508, %v5528
    %v5580 = vadd.f32 %v5509, %v5528
    %v5581 = vadd.f32 %v5510, %v5528
    %v5582 = vadd.f32 %v5511, %v5528
    %v5583 = vadd.f32 %v5512, %v5528
    %v5584 = vadd.f32 %v5513, %v5528
    %v5585 = vadd.f32 %v5514, %v5528
    %v5586 = vadd.f32 %v5515, %v5528
    %v5587 = vadd.f32 %v5516, %v5528
    %v5588 = vadd.f32 %v5517, %v5528
    %v5589 = vadd.f32 %v5518, %v5528
    %v5590 = vadd.f32 %v5519, %v5528
    %v5591 = vadd.f32 %v5520, %v5528
    %v5592 = vadd.f32 %v5521, %v5528
    %v5593 = vadd.f32 %v5522, %v5528
    %v5594 = vmax.f32 %v5530, 0.0
    %v5595 = vmax.f32 %v5531, 0.0
    %v5596 = vmax.f32 %v5532, 0.0
    %v5597 = vmax.f32 %v5533, 0.0
    %v5598 = vmax.f32 %v5534, 0.0
    %v5599 = vmax.f32 %v5535, 0.0
    %v5600 = vmax.f32 %v5536, 0.0
    %v5601 = vmax.f32 %v5537, 0.0
    %v5602 = vmax.f32 %v5538, 0.0
    %v5603 = vmax.f32 %v5539, 0.0
    %v5604 = vmax.f32 %v5540, 0.0
    %v5605 = vmax.f32 %v5541, 0.0
    %v5606 = vmax.f32 %v5542, 0.0
    %v5607 = vmax.f32 %v5543, 0.0
    %v5608 = vmax.f32 %v5544, 0.0
    %v5609 = vmax.f32 %v5545, 0.0
    %v5610 = vmax.f32 %v5546, 0.0
    %v5611 = vmax.f32 %v5547, 0.0
    %v5612 = vmax.f32 %v5548, 0.0
    %v5613 = vmax.f32 %v5549, 0.0
    %v5614 = vmax.f32 %v5550, 0.0
    %v5615 = vmax.f32 %v5551, 0.0
    %v5616 = vmax.f32 %v5552, 0.0
    %v5617 = vmax.f32 %v5553, 0.0
    %v5618 = vmax.f32 %v5554, 0.0
    %v5619 = vmax.f32 %v5555, 0.0
    %v5620 = vmax.f32 %v5556, 0.0
    %v5621 = vmax.f32 %v5557, 0.0
    %v5622 = vmax.f32 %v5558, 0.0
    %v5623 = vmax.f32 %v5559, 0.0
    %v5624 = vmax.f32 %v5560, 0.0
    %v5625 = vmax.f32 %v5561, 0.0
    %v5626 = vmax.f32 %v5562, 0.0
    %v5627 = vmax.f32 %v5563, 0.0
    %v5628 = vmax.f32 %v5564, 0.0
    %v5629 = vmax.f32 %v5565, 0.0
    %v5630 = vmax.f32 %v5566, 0.0
    %v5631 = vmax.f32 %v5567, 0.0
    %v5632 = vmax.f32 %v5568, 0.0
    %v5633 = vmax.f32 %v5569, 0.0
    %v5634 = vmax.f32 %v5570, 0.0
    %v5635 = vmax.f32 %v5571, 0.0
    %v5636 = vmax.f32 %v5572, 0.0
    %v5637 = vmax.f32 %v5573, 0.0
    %v5638 = vmax.f32 %v5574, 0.0
    %v5639 = vmax.f32 %v5575, 0.0
    %v5640 = vmax.f32 %v5576, 0.0
    %v5641 = vmax.f32 %v5577, 0.0
    %v5642 = vmax.f32 %v5578, 0.0
    %v5643 = vmax.f32 %v5579, 0.0
    %v5644 = vmax.f32 %v5580, 0.0
    %v5645 = vmax.f32 %v5581, 0.0
    %v5646 = vmax.f32 %v5582, 0.0
    %v5647 = vmax.f32 %v5583, 0.0
    %v5648 = vmax.f32 %v5584, 0.0
    %v5649 = vmax.f32 %v5585, 0.0
    %v5650 = vmax.f32 %v5586, 0.0
    %v5651 = vmax.f32 %v5587, 0.0
    %v5652 = vmax.f32 %v5588, 0.0
    %v5653 = vmax.f32 %v5589, 0.0
    %v5654 = vmax.f32 %v5590, 0.0
    %v5655 = vmax.f32 %v5591, 0.0
    %v5656 = vmax.f32 %v5592, 0.0
    %v5657 = vmax.f32 %v5593, 0.0
    %v5658 = vpack.c.bf16 %v5594, %v5594
    %v5659 = vpack.c.bf16 %v5595, %v5595
    %v5660 = vpack.c.bf16 %v5596, %v5596
    %v5661 = vpack.c.bf16 %v5597, %v5597
    %v5662 = vpack.c.bf16 %v5598, %v5598
    %v5663 = vpack.c.bf16 %v5599, %v5599
    %v5664 = vpack.c.bf16 %v5600, %v5600
    %v5665 = vpack.c.bf16 %v5601, %v5601
    %v5666 = vpack.c.bf16 %v5602, %v5602
    %v5667 = vpack.c.bf16 %v5603, %v5603
    %v5668 = vpack.c.bf16 %v5604, %v5604
    %v5669 = vpack.c.bf16 %v5605, %v5605
    %v5670 = vpack.c.bf16 %v5606, %v5606
    %v5671 = vpack.c.bf16 %v5607, %v5607
    %v5672 = vpack.c.bf16 %v5608, %v5608
    %v5673 = vpack.c.bf16 %v5609, %v5609
    %v5674 = vpack.c.bf16 %v5610, %v5610
    %v5675 = vpack.c.bf16 %v5611, %v5611
    %v5676 = vpack.c.bf16 %v5612, %v5612
    %v5677 = vpack.c.bf16 %v5613, %v5613
    %v5678 = vpack.c.bf16 %v5614, %v5614
    %v5679 = vpack.c.bf16 %v5615, %v5615
    %v5680 = vpack.c.bf16 %v5616, %v5616
    %v5681 = vpack.c.bf16 %v5617, %v5617
    %v5682 = vpack.c.bf16 %v5618, %v5618
    %v5683 = vpack.c.bf16 %v5619, %v5619
    %v5684 = vpack.c.bf16 %v5620, %v5620
    %v5685 = vpack.c.bf16 %v5621, %v5621
    %v5686 = vpack.c.bf16 %v5622, %v5622
    %v5687 = vpack.c.bf16 %v5623, %v5623
    %v5688 = vpack.c.bf16 %v5624, %v5624
    %v5689 = vpack.c.bf16 %v5625, %v5625
    %v5690 = vpack.c.bf16 %v5626, %v5626
    %v5691 = vpack.c.bf16 %v5627, %v5627
    %v5692 = vpack.c.bf16 %v5628, %v5628
    %v5693 = vpack.c.bf16 %v5629, %v5629
    %v5694 = vpack.c.bf16 %v5630, %v5630
    %v5695 = vpack.c.bf16 %v5631, %v5631
    %v5696 = vpack.c.bf16 %v5632, %v5632
    %v5697 = vpack.c.bf16 %v5633, %v5633
    %v5698 = vpack.c.bf16 %v5634, %v5634
    %v5699 = vpack.c.bf16 %v5635, %v5635
    %v5700 = vpack.c.bf16 %v5636, %v5636
    %v5701 = vpack.c.bf16 %v5637, %v5637
    %v5702 = vpack.c.bf16 %v5638, %v5638
    %v5703 = vpack.c.bf16 %v5639, %v5639
    %v5704 = vpack.c.bf16 %v5640, %v5640
    %v5705 = vpack.c.bf16 %v5641, %v5641
    %v5706 = vpack.c.bf16 %v5642, %v5642
    %v5707 = vpack.c.bf16 %v5643, %v5643
    %v5708 = vpack.c.bf16 %v5644, %v5644
    %v5709 = vpack.c.bf16 %v5645, %v5645
    %v5710 = vpack.c.bf16 %v5646, %v5646
    %v5711 = vpack.c.bf16 %v5647, %v5647
    %v5712 = vpack.c.bf16 %v5648, %v5648
    %v5713 = vpack.c.bf16 %v5649, %v5649
    %v5714 = vpack.c.bf16 %v5650, %v5650
    %v5715 = vpack.c.bf16 %v5651, %v5651
    %v5716 = vpack.c.bf16 %v5652, %v5652
    %v5717 = vpack.c.bf16 %v5653, %v5653
    %v5718 = vpack.c.bf16 %v5654, %v5654
    %v5719 = vpack.c.bf16 %v5655, %v5655
    %v5720 = vpack.c.bf16 %v5656, %v5656
    %v5721 = vpack.c.bf16 %v5657, %v5657
    %v5722 = vld [vmem:[%s9] sm:$0xf]
    %v5723 = vld [vmem:[%s9 + $0x4] sm:$0xf]
    %v5724 = vld [vmem:[%s9 + $0x8] sm:$0xf]
    %v5725 = vld [vmem:[%s9 + $0xc] sm:$0xf]
    %v5726 = vld [vmem:[%s9 + $0x10] sm:$0xf]
    %v5727 = vld [vmem:[%s9 + $0x14] sm:$0xf]
    %v5728 = vld [vmem:[%s9 + $0x18] sm:$0xf]
    %v5729 = vld [vmem:[%s9 + $0x1c] sm:$0xf]
    %s5730 = scalar_lea.vmem %s9, 32
    %v5731 = vld [vmem:[%s5730] sm:$0xf]
    %v5732 = vld [vmem:[%s5730 + $0x4] sm:$0xf]
    %v5733 = vld [vmem:[%s5730 + $0x8] sm:$0xf]
    %v5734 = vld [vmem:[%s5730 + $0xc] sm:$0xf]
    %v5735 = vld [vmem:[%s5730 + $0x10] sm:$0xf]
    %v5736 = vld [vmem:[%s5730 + $0x14] sm:$0xf]
    %v5737 = vld [vmem:[%s5730 + $0x18] sm:$0xf]
    %v5738 = vld [vmem:[%s5730 + $0x1c] sm:$0xf]
    %v5803 = vunpack.c.l.b16 %v5658
    %v5804 = vunpack.c.l.b16 %v5659
    %v5805 = vunpack.c.l.b16 %v5660
    %v5806 = vunpack.c.l.b16 %v5661
    %v5807 = vunpack.c.l.b16 %v5662
    %v5808 = vunpack.c.l.b16 %v5663
    %v5809 = vunpack.c.l.b16 %v5664
    %v5810 = vunpack.c.l.b16 %v5665
    %v5811 = vunpack.c.l.b16 %v5666
    %v5812 = vunpack.c.l.b16 %v5667
    %v5813 = vunpack.c.l.b16 %v5668
    %v5814 = vunpack.c.l.b16 %v5669
    %v5815 = vunpack.c.l.b16 %v5670
    %v5816 = vunpack.c.l.b16 %v5671
    %v5817 = vunpack.c.l.b16 %v5672
    %v5818 = vunpack.c.l.b16 %v5673
    %v5819 = vunpack.c.l.b16 %v5674
    %v5820 = vunpack.c.l.b16 %v5675
    %v5821 = vunpack.c.l.b16 %v5676
    %v5822 = vunpack.c.l.b16 %v5677
    %v5823 = vunpack.c.l.b16 %v5678
    %v5824 = vunpack.c.l.b16 %v5679
    %v5825 = vunpack.c.l.b16 %v5680
    %v5826 = vunpack.c.l.b16 %v5681
    %v5827 = vunpack.c.l.b16 %v5682
    %v5828 = vunpack.c.l.b16 %v5683
    %v5829 = vunpack.c.l.b16 %v5684
    %v5830 = vunpack.c.l.b16 %v5685
    %v5831 = vunpack.c.l.b16 %v5686
    %v5832 = vunpack.c.l.b16 %v5687
    %v5833 = vunpack.c.l.b16 %v5688
    %v5834 = vunpack.c.l.b16 %v5689
    %v5835 = vunpack.c.l.b16 %v5690
    %v5836 = vunpack.c.l.b16 %v5691
    %v5837 = vunpack.c.l.b16 %v5692
    %v5838 = vunpack.c.l.b16 %v5693
    %v5839 = vunpack.c.l.b16 %v5694
    %v5840 = vunpack.c.l.b16 %v5695
    %v5841 = vunpack.c.l.b16 %v5696
    %v5842 = vunpack.c.l.b16 %v5697
    %v5843 = vunpack.c.l.b16 %v5698
    %v5844 = vunpack.c.l.b16 %v5699
    %v5845 = vunpack.c.l.b16 %v5700
    %v5846 = vunpack.c.l.b16 %v5701
    %v5847 = vunpack.c.l.b16 %v5702
    %v5848 = vunpack.c.l.b16 %v5703
    %v5849 = vunpack.c.l.b16 %v5704
    %v5850 = vunpack.c.l.b16 %v5705
    %v5851 = vunpack.c.l.b16 %v5706
    %v5852 = vunpack.c.l.b16 %v5707
    %v5853 = vunpack.c.l.b16 %v5708
    %v5854 = vunpack.c.l.b16 %v5709
    %v5855 = vunpack.c.l.b16 %v5710
    %v5856 = vunpack.c.l.b16 %v5711
    %v5857 = vunpack.c.l.b16 %v5712
    %v5858 = vunpack.c.l.b16 %v5713
    %v5859 = vunpack.c.l.b16 %v5714
    %v5860 = vunpack.c.l.b16 %v5715
    %v5861 = vunpack.c.l.b16 %v5716
    %v5862 = vunpack.c.l.b16 %v5717
    %v5863 = vunpack.c.l.b16 %v5718
    %v5864 = vunpack.c.l.b16 %v5719
    %v5865 = vunpack.c.l.b16 %v5720
    %v5866 = vunpack.c.l.b16 %v5721
    %v5867 = vpack.c.b16 %v5804, %v5803
    %v5868 = vpack.c.b16 %v5806, %v5805
    %v5869 = vpack.c.b16 %v5808, %v5807
    %v5870 = vpack.c.b16 %v5810, %v5809
    %v5871 = vpack.c.b16 %v5812, %v5811
    %v5872 = vpack.c.b16 %v5814, %v5813
    %v5873 = vpack.c.b16 %v5816, %v5815
    %v5874 = vpack.c.b16 %v5818, %v5817
    %v5875 = vpack.c.b16 %v5820, %v5819
    %v5876 = vpack.c.b16 %v5822, %v5821
    %v5877 = vpack.c.b16 %v5824, %v5823
    %v5878 = vpack.c.b16 %v5826, %v5825
    %v5879 = vpack.c.b16 %v5828, %v5827
    %v5880 = vpack.c.b16 %v5830, %v5829
    %v5881 = vpack.c.b16 %v5832, %v5831
    %v5882 = vpack.c.b16 %v5834, %v5833
    %v5883 = vpack.c.b16 %v5836, %v5835
    %v5884 = vpack.c.b16 %v5838, %v5837
    %v5885 = vpack.c.b16 %v5840, %v5839
    %v5886 = vpack.c.b16 %v5842, %v5841
    %v5887 = vpack.c.b16 %v5844, %v5843
    %v5888 = vpack.c.b16 %v5846, %v5845
    %v5889 = vpack.c.b16 %v5848, %v5847
    %v5890 = vpack.c.b16 %v5850, %v5849
    %v5891 = vpack.c.b16 %v5852, %v5851
    %v5892 = vpack.c.b16 %v5854, %v5853
    %v5893 = vpack.c.b16 %v5856, %v5855
    %v5894 = vpack.c.b16 %v5858, %v5857
    %v5895 = vpack.c.b16 %v5860, %v5859
    %v5896 = vpack.c.b16 %v5862, %v5861
    %v5897 = vpack.c.b16 %v5864, %v5863
    %v5898 = vpack.c.b16 %v5866, %v5865
    %v5907 = vunpack.c.l.b16 %v5731
    %v5908 = vunpack.c.l.b16 %v5732
    %v5909 = vunpack.c.l.b16 %v5733
    %v5910 = vunpack.c.l.b16 %v5734
    %v5911 = vunpack.c.l.b16 %v5735
    %v5912 = vunpack.c.l.b16 %v5736
    %v5913 = vunpack.c.l.b16 %v5737
    %v5914 = vunpack.c.l.b16 %v5738
    %v5915 = vpack.c.b16 %v5908, %v5907
    %v5916 = vpack.c.b16 %v5910, %v5909
    %v5917 = vpack.c.b16 %v5912, %v5911
    %v5918 = vpack.c.b16 %v5914, %v5913
    %v5924 = vsel %vm4306, %v5867, 0
    %v5927 = vsel %vm4306, %v5868, 0
    %v5930 = vsel %vm4306, %v5869, 0
    %v5933 = vsel %vm4306, %v5870, 0
    %v5936 = vsel %vm4306, %v5871, 0
    %v5939 = vsel %vm4306, %v5872, 0
    %v5942 = vsel %vm4306, %v5873, 0
    %v5945 = vsel %vm4306, %v5874, 0
    %v5948 = vsel %vm4306, %v5875, 0
    %v5951 = vsel %vm4306, %v5876, 0
    %v5954 = vsel %vm4306, %v5877, 0
    %v5957 = vsel %vm4306, %v5878, 0
    %v5960 = vsel %vm4306, %v5879, 0
    %v5963 = vsel %vm4306, %v5880, 0
    %v5966 = vsel %vm4306, %v5881, 0
    %v5969 = vsel %vm4306, %v5882, 0
    %v5972 = vsel %vm4306, %v5883, 0
    %v5975 = vsel %vm4306, %v5884, 0
    %v5978 = vsel %vm4306, %v5885, 0
    %v5981 = vsel %vm4306, %v5886, 0
    %v5984 = vsel %vm4306, %v5887, 0
    %v5987 = vsel %vm4306, %v5888, 0
    %v5990 = vsel %vm4306, %v5889, 0
    %v5993 = vsel %vm4306, %v5890, 0
    %v5996 = vsel %vm4306, %v5891, 0
    %v5999 = vsel %vm4306, %v5892, 0
    %v6002 = vsel %vm4306, %v5893, 0
    %v6005 = vsel %vm4306, %v5894, 0
    %v6008 = vsel %vm4306, %v5895, 0
    %v6011 = vsel %vm4306, %v5896, 0
    %v6014 = vsel %vm4306, %v5897, 0
    %v6017 = vsel %vm4306, %v5898, 0
    %6019 = vmatprep.subr.bf16.mxu0 0
    %6020 = vmatpush1.bf16.msra.mxu0 %v5915
    %6021 = vmatprep.subr.bf16.mxu0 0
    %6022 = vmatpush1.bf16.msra.mxu0 %v5916
    %6023 = vmatprep.subr.bf16.mxu0 0
    %6024 = vmatpush1.bf16.msra.mxu0 %v5917
    %6025 = vmatprep.subr.bf16.mxu0 0
    %6026 = vmatpush1.bf16.msra.mxu0 %v5918
    %6027 = vmatprep.subr.bf16.mxu0 0
    %6028 = vmatpush1.bf16.msra.mxu0 0
    %6029 = vmatprep.subr.bf16.mxu0 0
    %6030 = vmatpush1.bf16.msra.mxu0 0
    %6031 = vmatprep.subr.bf16.mxu0 0
    %6032 = vmatpush1.bf16.msra.mxu0 0
    %6033 = vmatprep.subr.bf16.mxu0 0
    %6034 = vmatpush1.bf16.msra.mxu0 0
    %6035 = vmatprep.subr.bf16.mxu0 0
    %6036 = vmatpush1.bf16.msra.mxu0 0
    %6037 = vmatprep.subr.bf16.mxu0 0
    %6038 = vmatpush1.bf16.msra.mxu0 0
    %6039 = vmatprep.subr.bf16.mxu0 0
    %6040 = vmatpush1.bf16.msra.mxu0 0
    %6041 = vmatprep.subr.bf16.mxu0 0
    %6042 = vmatpush1.bf16.msra.mxu0 0
    %6043 = vmatprep.subr.bf16.mxu0 0
    %6044 = vmatpush1.bf16.msra.mxu0 0
    %6045 = vmatprep.subr.bf16.mxu0 0
    %6046 = vmatpush1.bf16.msra.mxu0 0
    %6047 = vmatprep.subr.bf16.mxu0 0
    %6048 = vmatpush1.bf16.msra.mxu0 0
    %6049 = vmatprep.subr.bf16.mxu0 0
    %6050 = vmatpush1.bf16.msra.mxu0 0
    %6051 = vmatprep.mubr.bf16.mxu0 0
    %6052 = vmatmul.mubr.bf16.gmra.mrb[0].mxu0 %v5924
    %v6053 = vpop.f32.mrb[0].mxu0
    %v6054 = vadd.f32 0.0, %v6053
    %v6055 = vpop.f32.mrb[0].mxu0
    %v6056 = vpop.f32.mrb[0].mxu0
    %v6057 = vadd.f32 0.0, %v6056
    %v6058 = vpop.f32.mrb[0].mxu0
    %6059 = vmatprep.mubr.bf16.mxu0 0
    %6060 = vmatmul.mubr.bf16.gmra.mrb[0].mxu0 %v5927
    %v6061 = vpop.f32.mrb[0].mxu0
    %v6062 = vadd.f32 0.0, %v6061
    %v6063 = vpop.f32.mrb[0].mxu0
    %v6064 = vpop.f32.mrb[0].mxu0
    %v6065 = vadd.f32 0.0, %v6064
    %v6066 = vpop.f32.mrb[0].mxu0
    %6067 = vmatprep.mubr.bf16.mxu0 0
    %6068 = vmatmul.mubr.bf16.gmra.mrb[0].mxu0 %v5930
    %v6069 = vpop.f32.mrb[0].mxu0
    %v6070 = vadd.f32 0.0, %v6069
    %v6071 = vpop.f32.mrb[0].mxu0
    %v6072 = vpop.f32.mrb[0].mxu0
    %v6073 = vadd.f32 0.0, %v6072
    %v6074 = vpop.f32.mrb[0].mxu0
    %6075 = vmatprep.mubr.bf16.mxu0 0
    %6076 = vmatmul.mubr.bf16.gmra.mrb[0].mxu0 %v5933
    %v6077 = vpop.f32.mrb[0].mxu0
    %v6078 = vadd.f32 0.0, %v6077
    %v6079 = vpop.f32.mrb[0].mxu0
    %v6080 = vpop.f32.mrb[0].mxu0
    %v6081 = vadd.f32 0.0, %v6080
    %v6082 = vpop.f32.mrb[0].mxu0
    %6083 = vmatprep.mubr.bf16.mxu0 0
    %6084 = vmatmul.mubr.bf16.gmra.mrb[0].mxu0 %v5936
    %v6085 = vpop.f32.mrb[0].mxu0
    %v6086 = vadd.f32 0.0, %v6085
    %v6087 = vpop.f32.mrb[0].mxu0
    %v6088 = vpop.f32.mrb[0].mxu0
    %v6089 = vadd.f32 0.0, %v6088
    %v6090 = vpop.f32.mrb[0].mxu0
    %6091 = vmatprep.mubr.bf16.mxu0 0
    %6092 = vmatmul.mubr.bf16.gmra.mrb[0].mxu0 %v5939
    %v6093 = vpop.f32.mrb[0].mxu0
    %v6094 = vadd.f32 0.0, %v6093
    %v6095 = vpop.f32.mrb[0].mxu0
    %v6096 = vpop.f32.mrb[0].mxu0
    %v6097 = vadd.f32 0.0, %v6096
    %v6098 = vpop.f32.mrb[0].mxu0
    %6099 = vmatprep.mubr.bf16.mxu0 0
    %6100 = vmatmul.mubr.bf16.gmra.mrb[0].mxu0 %v5942
    %v6101 = vpop.f32.mrb[0].mxu0
    %v6102 = vadd.f32 0.0, %v6101
    %v6103 = vpop.f32.mrb[0].mxu0
    %v6104 = vpop.f32.mrb[0].mxu0
    %v6105 = vadd.f32 0.0, %v6104
    %v6106 = vpop.f32.mrb[0].mxu0
    %6107 = vmatprep.mubr.bf16.mxu0 0
    %6108 = vmatmul.mubr.bf16.gmra.mrb[0].mxu0 %v5945
    %v6109 = vpop.f32.mrb[0].mxu0
    %v6110 = vadd.f32 0.0, %v6109
    %v6111 = vpop.f32.mrb[0].mxu0
    %v6112 = vpop.f32.mrb[0].mxu0
    %v6113 = vadd.f32 0.0, %v6112
    %v6114 = vpop.f32.mrb[0].mxu0
    %6115 = vmatprep.mubr.bf16.mxu0 0
    %6116 = vmatmul.mubr.bf16.gmra.mrb[0].mxu0 %v5948
    %v6117 = vpop.f32.mrb[0].mxu0
    %v6118 = vadd.f32 0.0, %v6117
    %v6119 = vpop.f32.mrb[0].mxu0
    %v6120 = vpop.f32.mrb[0].mxu0
    %v6121 = vadd.f32 0.0, %v6120
    %v6122 = vpop.f32.mrb[0].mxu0
    %6123 = vmatprep.mubr.bf16.mxu0 0
    %6124 = vmatmul.mubr.bf16.gmra.mrb[0].mxu0 %v5951
    %v6125 = vpop.f32.mrb[0].mxu0
    %v6126 = vadd.f32 0.0, %v6125
    %v6127 = vpop.f32.mrb[0].mxu0
    %v6128 = vpop.f32.mrb[0].mxu0
    %v6129 = vadd.f32 0.0, %v6128
    %v6130 = vpop.f32.mrb[0].mxu0
    %6131 = vmatprep.mubr.bf16.mxu0 0
    %6132 = vmatmul.mubr.bf16.gmra.mrb[0].mxu0 %v5954
    %v6133 = vpop.f32.mrb[0].mxu0
    %v6134 = vadd.f32 0.0, %v6133
    %v6135 = vpop.f32.mrb[0].mxu0
    %v6136 = vpop.f32.mrb[0].mxu0
    %v6137 = vadd.f32 0.0, %v6136
    %v6138 = vpop.f32.mrb[0].mxu0
    %6139 = vmatprep.mubr.bf16.mxu0 0
    %6140 = vmatmul.mubr.bf16.gmra.mrb[0].mxu0 %v5957
    %v6141 = vpop.f32.mrb[0].mxu0
    %v6142 = vadd.f32 0.0, %v6141
    %v6143 = vpop.f32.mrb[0].mxu0
    %v6144 = vpop.f32.mrb[0].mxu0
    %v6145 = vadd.f32 0.0, %v6144
    %v6146 = vpop.f32.mrb[0].mxu0
    %6147 = vmatprep.mubr.bf16.mxu0 0
    %6148 = vmatmul.mubr.bf16.gmra.mrb[0].mxu0 %v5960
    %v6149 = vpop.f32.mrb[0].mxu0
    %v6150 = vadd.f32 0.0, %v6149
    %v6151 = vpop.f32.mrb[0].mxu0
    %v6152 = vpop.f32.mrb[0].mxu0
    %v6153 = vadd.f32 0.0, %v6152
    %v6154 = vpop.f32.mrb[0].mxu0
    %6155 = vmatprep.mubr.bf16.mxu0 0
    %6156 = vmatmul.mubr.bf16.gmra.mrb[0].mxu0 %v5963
    %v6157 = vpop.f32.mrb[0].mxu0
    %v6158 = vadd.f32 0.0, %v6157
    %v6159 = vpop.f32.mrb[0].mxu0
    %v6160 = vpop.f32.mrb[0].mxu0
    %v6161 = vadd.f32 0.0, %v6160
    %v6162 = vpop.f32.mrb[0].mxu0
    %6163 = vmatprep.mubr.bf16.mxu0 0
    %6164 = vmatmul.mubr.bf16.gmra.mrb[0].mxu0 %v5966
    %v6165 = vpop.f32.mrb[0].mxu0
    %v6166 = vadd.f32 0.0, %v6165
    %v6167 = vpop.f32.mrb[0].mxu0
    %v6168 = vpop.f32.mrb[0].mxu0
    %v6169 = vadd.f32 0.0, %v6168
    %v6170 = vpop.f32.mrb[0].mxu0
    %6171 = vmatprep.mubr.bf16.mxu0 0
    %6172 = vmatmul.mubr.bf16.gmra.mrb[0].mxu0 %v5969
    %v6173 = vpop.f32.mrb[0].mxu0
    %v6174 = vadd.f32 0.0, %v6173
    %v6175 = vpop.f32.mrb[0].mxu0
    %v6176 = vpop.f32.mrb[0].mxu0
    %v6177 = vadd.f32 0.0, %v6176
    %v6178 = vpop.f32.mrb[0].mxu0
    %6179 = vmatprep.mubr.bf16.mxu0 0
    %6180 = vmatmul.mubr.bf16.gmra.mrb[0].mxu0 %v5972
    %v6181 = vpop.f32.mrb[0].mxu0
    %v6182 = vadd.f32 0.0, %v6181
    %v6183 = vpop.f32.mrb[0].mxu0
    %v6184 = vpop.f32.mrb[0].mxu0
    %v6185 = vadd.f32 0.0, %v6184
    %v6186 = vpop.f32.mrb[0].mxu0
    %6187 = vmatprep.mubr.bf16.mxu0 0
    %6188 = vmatmul.mubr.bf16.gmra.mrb[0].mxu0 %v5975
    %v6189 = vpop.f32.mrb[0].mxu0
    %v6190 = vadd.f32 0.0, %v6189
    %v6191 = vpop.f32.mrb[0].mxu0
    %v6192 = vpop.f32.mrb[0].mxu0
    %v6193 = vadd.f32 0.0, %v6192
    %v6194 = vpop.f32.mrb[0].mxu0
    %6195 = vmatprep.mubr.bf16.mxu0 0
    %6196 = vmatmul.mubr.bf16.gmra.mrb[0].mxu0 %v5978
    %v6197 = vpop.f32.mrb[0].mxu0
    %v6198 = vadd.f32 0.0, %v6197
    %v6199 = vpop.f32.mrb[0].mxu0
    %v6200 = vpop.f32.mrb[0].mxu0
    %v6201 = vadd.f32 0.0, %v6200
    %v6202 = vpop.f32.mrb[0].mxu0
    %6203 = vmatprep.mubr.bf16.mxu0 0
    %6204 = vmatmul.mubr.bf16.gmra.mrb[0].mxu0 %v5981
    %v6205 = vpop.f32.mrb[0].mxu0
    %v6206 = vadd.f32 0.0, %v6205
    %v6207 = vpop.f32.mrb[0].mxu0
    %v6208 = vpop.f32.mrb[0].mxu0
    %v6209 = vadd.f32 0.0, %v6208
    %v6210 = vpop.f32.mrb[0].mxu0
    %6211 = vmatprep.mubr.bf16.mxu0 0
    %6212 = vmatmul.mubr.bf16.gmra.mrb[0].mxu0 %v5984
    %v6213 = vpop.f32.mrb[0].mxu0
    %v6214 = vadd.f32 0.0, %v6213
    %v6215 = vpop.f32.mrb[0].mxu0
    %v6216 = vpop.f32.mrb[0].mxu0
    %v6217 = vadd.f32 0.0, %v6216
    %v6218 = vpop.f32.mrb[0].mxu0
    %6219 = vmatprep.mubr.bf16.mxu0 0
    %6220 = vmatmul.mubr.bf16.gmra.mrb[0].mxu0 %v5987
    %v6221 = vpop.f32.mrb[0].mxu0
    %v6222 = vadd.f32 0.0, %v6221
    %v6223 = vpop.f32.mrb[0].mxu0
    %v6224 = vpop.f32.mrb[0].mxu0
    %v6225 = vadd.f32 0.0, %v6224
    %v6226 = vpop.f32.mrb[0].mxu0
    %6227 = vmatprep.mubr.bf16.mxu0 0
    %6228 = vmatmul.mubr.bf16.gmra.mrb[0].mxu0 %v5990
    %v6229 = vpop.f32.mrb[0].mxu0
    %v6230 = vadd.f32 0.0, %v6229
    %v6231 = vpop.f32.mrb[0].mxu0
    %v6232 = vpop.f32.mrb[0].mxu0
    %v6233 = vadd.f32 0.0, %v6232
    %v6234 = vpop.f32.mrb[0].mxu0
    %6235 = vmatprep.mubr.bf16.mxu0 0
    %6236 = vmatmul.mubr.bf16.gmra.mrb[0].mxu0 %v5993
    %v6237 = vpop.f32.mrb[0].mxu0
    %v6238 = vadd.f32 0.0, %v6237
    %v6239 = vpop.f32.mrb[0].mxu0
    %v6240 = vpop.f32.mrb[0].mxu0
    %v6241 = vadd.f32 0.0, %v6240
    %v6242 = vpop.f32.mrb[0].mxu0
    %6243 = vmatprep.mubr.bf16.mxu0 0
    %6244 = vmatmul.mubr.bf16.gmra.mrb[0].mxu0 %v5996
    %v6245 = vpop.f32.mrb[0].mxu0
    %v6246 = vadd.f32 0.0, %v6245
    %v6247 = vpop.f32.mrb[0].mxu0
    %v6248 = vpop.f32.mrb[0].mxu0
    %v6249 = vadd.f32 0.0, %v6248
    %v6250 = vpop.f32.mrb[0].mxu0
    %6251 = vmatprep.mubr.bf16.mxu0 0
    %6252 = vmatmul.mubr.bf16.gmra.mrb[0].mxu0 %v5999
    %v6253 = vpop.f32.mrb[0].mxu0
    %v6254 = vadd.f32 0.0, %v6253
    %v6255 = vpop.f32.mrb[0].mxu0
    %v6256 = vpop.f32.mrb[0].mxu0
    %v6257 = vadd.f32 0.0, %v6256
    %v6258 = vpop.f32.mrb[0].mxu0
    %6259 = vmatprep.mubr.bf16.mxu0 0
    %6260 = vmatmul.mubr.bf16.gmra.mrb[0].mxu0 %v6002
    %v6261 = vpop.f32.mrb[0].mxu0
    %v6262 = vadd.f32 0.0, %v6261
    %v6263 = vpop.f32.mrb[0].mxu0
    %v6264 = vpop.f32.mrb[0].mxu0
    %v6265 = vadd.f32 0.0, %v6264
    %v6266 = vpop.f32.mrb[0].mxu0
    %6267 = vmatprep.mubr.bf16.mxu0 0
    %6268 = vmatmul.mubr.bf16.gmra.mrb[0].mxu0 %v6005
    %v6269 = vpop.f32.mrb[0].mxu0
    %v6270 = vadd.f32 0.0, %v6269
    %v6271 = vpop.f32.mrb[0].mxu0
    %v6272 = vpop.f32.mrb[0].mxu0
    %v6273 = vadd.f32 0.0, %v6272
    %v6274 = vpop.f32.mrb[0].mxu0
    %6275 = vmatprep.mubr.bf16.mxu0 0
    %6276 = vmatmul.mubr.bf16.gmra.mrb[0].mxu0 %v6008
    %v6277 = vpop.f32.mrb[0].mxu0
    %v6278 = vadd.f32 0.0, %v6277
    %v6279 = vpop.f32.mrb[0].mxu0
    %v6280 = vpop.f32.mrb[0].mxu0
    %v6281 = vadd.f32 0.0, %v6280
    %v6282 = vpop.f32.mrb[0].mxu0
    %6283 = vmatprep.mubr.bf16.mxu0 0
    %6284 = vmatmul.mubr.bf16.gmra.mrb[0].mxu0 %v6011
    %v6285 = vpop.f32.mrb[0].mxu0
    %v6286 = vadd.f32 0.0, %v6285
    %v6287 = vpop.f32.mrb[0].mxu0
    %v6288 = vpop.f32.mrb[0].mxu0
    %v6289 = vadd.f32 0.0, %v6288
    %v6290 = vpop.f32.mrb[0].mxu0
    %6291 = vmatprep.mubr.bf16.mxu0 0
    %6292 = vmatmul.mubr.bf16.gmra.mrb[0].mxu0 %v6014
    %v6293 = vpop.f32.mrb[0].mxu0
    %v6294 = vadd.f32 0.0, %v6293
    %v6295 = vpop.f32.mrb[0].mxu0
    %v6296 = vpop.f32.mrb[0].mxu0
    %v6297 = vadd.f32 0.0, %v6296
    %v6298 = vpop.f32.mrb[0].mxu0
    %6299 = vmatprep.mubr.bf16.mxu0 0
    %6300 = vmatmul.mubr.bf16.gmra.mrb[0].mxu0 %v6017
    %v6301 = vpop.f32.mrb[0].mxu0
    %v6302 = vadd.f32 0.0, %v6301
    %v6303 = vpop.f32.mrb[0].mxu0
    %v6304 = vpop.f32.mrb[0].mxu0
    %v6305 = vadd.f32 0.0, %v6304
    %v6306 = vpop.f32.mrb[0].mxu0
    %6307 = vdwg.mxu0
    %v6308 = vpack.c.b16 %v5803, %v1547
    %v6309 = vpack.c.b16 %v5805, %v5804
    %v6310 = vpack.c.b16 %v5807, %v5806
    %v6311 = vpack.c.b16 %v5809, %v5808
    %v6312 = vpack.c.b16 %v5811, %v5810
    %v6313 = vpack.c.b16 %v5813, %v5812
    %v6314 = vpack.c.b16 %v5815, %v5814
    %v6315 = vpack.c.b16 %v5817, %v5816
    %v6316 = vpack.c.b16 %v5819, %v5818
    %v6317 = vpack.c.b16 %v5821, %v5820
    %v6318 = vpack.c.b16 %v5823, %v5822
    %v6319 = vpack.c.b16 %v5825, %v5824
    %v6320 = vpack.c.b16 %v5827, %v5826
    %v6321 = vpack.c.b16 %v5829, %v5828
    %v6322 = vpack.c.b16 %v5831, %v5830
    %v6323 = vpack.c.b16 %v5833, %v5832
    %v6324 = vpack.c.b16 %v5835, %v5834
    %v6325 = vpack.c.b16 %v5837, %v5836
    %v6326 = vpack.c.b16 %v5839, %v5838
    %v6327 = vpack.c.b16 %v5841, %v5840
    %v6328 = vpack.c.b16 %v5843, %v5842
    %v6329 = vpack.c.b16 %v5845, %v5844
    %v6330 = vpack.c.b16 %v5847, %v5846
    %v6331 = vpack.c.b16 %v5849, %v5848
    %v6332 = vpack.c.b16 %v5851, %v5850
    %v6333 = vpack.c.b16 %v5853, %v5852
    %v6334 = vpack.c.b16 %v5855, %v5854
    %v6335 = vpack.c.b16 %v5857, %v5856
    %v6336 = vpack.c.b16 %v5859, %v5858
    %v6337 = vpack.c.b16 %v5861, %v5860
    %v6338 = vpack.c.b16 %v5863, %v5862
    %v6339 = vpack.c.b16 %v5865, %v5864
    %v6348 = vunpack.c.l.b16 %v5722
    %v6349 = vunpack.c.l.b16 %v5723
    %v6350 = vunpack.c.l.b16 %v5724
    %v6351 = vunpack.c.l.b16 %v5725
    %v6352 = vunpack.c.l.b16 %v5726
    %v6353 = vunpack.c.l.b16 %v5727
    %v6354 = vunpack.c.l.b16 %v5728
    %v6355 = vunpack.c.l.b16 %v5729
    %v6356 = vpack.c.b16 %v6349, %v6348
    %v6357 = vpack.c.b16 %v6351, %v6350
    %v6358 = vpack.c.b16 %v6353, %v6352
    %v6359 = vpack.c.b16 %v6355, %v6354
    %v6365 = vsel %vm4306, %v6308, 0
    %v6368 = vsel %vm4306, %v6309, 0
    %v6371 = vsel %vm4306, %v6310, 0
    %v6374 = vsel %vm4306, %v6311, 0
    %v6377 = vsel %vm4306, %v6312, 0
    %v6380 = vsel %vm4306, %v6313, 0
    %v6383 = vsel %vm4306, %v6314, 0
    %v6386 = vsel %vm4306, %v6315, 0
    %v6389 = vsel %vm4306, %v6316, 0
    %v6392 = vsel %vm4306, %v6317, 0
    %v6395 = vsel %vm4306, %v6318, 0
    %v6398 = vsel %vm4306, %v6319, 0
    %v6401 = vsel %vm4306, %v6320, 0
    %v6404 = vsel %vm4306, %v6321, 0
    %v6407 = vsel %vm4306, %v6322, 0
    %v6410 = vsel %vm4306, %v6323, 0
    %v6413 = vsel %vm4306, %v6324, 0
    %v6416 = vsel %vm4306, %v6325, 0
    %v6419 = vsel %vm4306, %v6326, 0
    %v6422 = vsel %vm4306, %v6327, 0
    %v6425 = vsel %vm4306, %v6328, 0
    %v6428 = vsel %vm4306, %v6329, 0
    %v6431 = vsel %vm4306, %v6330, 0
    %v6434 = vsel %vm4306, %v6331, 0
    %v6437 = vsel %vm4306, %v6332, 0
    %v6440 = vsel %vm4306, %v6333, 0
    %v6443 = vsel %vm4306, %v6334, 0
    %v6446 = vsel %vm4306, %v6335, 0
    %v6449 = vsel %vm4306, %v6336, 0
    %v6452 = vsel %vm4306, %v6337, 0
    %v6455 = vsel %vm4306, %v6338, 0
    %v6458 = vsel %vm4306, %v6339, 0
    %6460 = vmatprep.subr.bf16.mxu0 0
    %6461 = vmatpush1.bf16.msra.mxu0 %v6356
    %6462 = vmatprep.subr.bf16.mxu0 0
    %6463 = vmatpush1.bf16.msra.mxu0 %v6357
    %6464 = vmatprep.subr.bf16.mxu0 0
    %6465 = vmatpush1.bf16.msra.mxu0 %v6358
    %6466 = vmatprep.subr.bf16.mxu0 0
    %6467 = vmatpush1.bf16.msra.mxu0 %v6359
    %6468 = vmatprep.subr.bf16.mxu0 0
    %6469 = vmatpush1.bf16.msra.mxu0 0
    %6470 = vmatprep.subr.bf16.mxu0 0
    %6471 = vmatpush1.bf16.msra.mxu0 0
    %6472 = vmatprep.subr.bf16.mxu0 0
    %6473 = vmatpush1.bf16.msra.mxu0 0
    %6474 = vmatprep.subr.bf16.mxu0 0
    %6475 = vmatpush1.bf16.msra.mxu0 0
    %6476 = vmatprep.subr.bf16.mxu0 0
    %6477 = vmatpush1.bf16.msra.mxu0 0
    %6478 = vmatprep.subr.bf16.mxu0 0
    %6479 = vmatpush1.bf16.msra.mxu0 0
    %6480 = vmatprep.subr.bf16.mxu0 0
    %6481 = vmatpush1.bf16.msra.mxu0 0
    %6482 = vmatprep.subr.bf16.mxu0 0
    %6483 = vmatpush1.bf16.msra.mxu0 0
    %6484 = vmatprep.subr.bf16.mxu0 0
    %6485 = vmatpush1.bf16.msra.mxu0 0
    %6486 = vmatprep.subr.bf16.mxu0 0
    %6487 = vmatpush1.bf16.msra.mxu0 0
    %6488 = vmatprep.subr.bf16.mxu0 0
    %6489 = vmatpush1.bf16.msra.mxu0 0
    %6490 = vmatprep.subr.bf16.mxu0 0
    %6491 = vmatpush1.bf16.msra.mxu0 0
    %6492 = vmatprep.mubr.bf16.mxu0 0
    %6493 = vmatmul.mubr.bf16.gmra.mrb[0].mxu0 %v6365
    %v6494 = vpop.f32.mrb[0].mxu0
    %v6495 = vadd.f32 %v6054, %v6494
    %v6496 = vpop.f32.mrb[0].mxu0
    %v6497 = vpop.f32.mrb[0].mxu0
    %v6498 = vadd.f32 %v6057, %v6497
    %v6499 = vpop.f32.mrb[0].mxu0
    %6500 = vmatprep.mubr.bf16.mxu0 0
    %6501 = vmatmul.mubr.bf16.gmra.mrb[0].mxu0 %v6368
    %v6502 = vpop.f32.mrb[0].mxu0
    %v6503 = vadd.f32 %v6062, %v6502
    %v6504 = vpop.f32.mrb[0].mxu0
    %v6505 = vpop.f32.mrb[0].mxu0
    %v6506 = vadd.f32 %v6065, %v6505
    %v6507 = vpop.f32.mrb[0].mxu0
    %6508 = vmatprep.mubr.bf16.mxu0 0
    %6509 = vmatmul.mubr.bf16.gmra.mrb[0].mxu0 %v6371
    %v6510 = vpop.f32.mrb[0].mxu0
    %v6511 = vadd.f32 %v6070, %v6510
    %v6512 = vpop.f32.mrb[0].mxu0
    %v6513 = vpop.f32.mrb[0].mxu0
    %v6514 = vadd.f32 %v6073, %v6513
    %v6515 = vpop.f32.mrb[0].mxu0
    %6516 = vmatprep.mubr.bf16.mxu0 0
    %6517 = vmatmul.mubr.bf16.gmra.mrb[0].mxu0 %v6374
    %v6518 = vpop.f32.mrb[0].mxu0
    %v6519 = vadd.f32 %v6078, %v6518
    %v6520 = vpop.f32.mrb[0].mxu0
    %v6521 = vpop.f32.mrb[0].mxu0
    %v6522 = vadd.f32 %v6081, %v6521
    %v6523 = vpop.f32.mrb[0].mxu0
    %6524 = vmatprep.mubr.bf16.mxu0 0
    %6525 = vmatmul.mubr.bf16.gmra.mrb[0].mxu0 %v6377
    %v6526 = vpop.f32.mrb[0].mxu0
    %v6527 = vadd.f32 %v6086, %v6526
    %v6528 = vpop.f32.mrb[0].mxu0
    %v6529 = vpop.f32.mrb[0].mxu0
    %v6530 = vadd.f32 %v6089, %v6529
    %v6531 = vpop.f32.mrb[0].mxu0
    %6532 = vmatprep.mubr.bf16.mxu0 0
    %6533 = vmatmul.mubr.bf16.gmra.mrb[0].mxu0 %v6380
    %v6534 = vpop.f32.mrb[0].mxu0
    %v6535 = vadd.f32 %v6094, %v6534
    %v6536 = vpop.f32.mrb[0].mxu0
    %v6537 = vpop.f32.mrb[0].mxu0
    %v6538 = vadd.f32 %v6097, %v6537
    %v6539 = vpop.f32.mrb[0].mxu0
    %6540 = vmatprep.mubr.bf16.mxu0 0
    %6541 = vmatmul.mubr.bf16.gmra.mrb[0].mxu0 %v6383
    %v6542 = vpop.f32.mrb[0].mxu0
    %v6543 = vadd.f32 %v6102, %v6542
    %v6544 = vpop.f32.mrb[0].mxu0
    %v6545 = vpop.f32.mrb[0].mxu0
    %v6546 = vadd.f32 %v6105, %v6545
    %v6547 = vpop.f32.mrb[0].mxu0
    %6548 = vmatprep.mubr.bf16.mxu0 0
    %6549 = vmatmul.mubr.bf16.gmra.mrb[0].mxu0 %v6386
    %v6550 = vpop.f32.mrb[0].mxu0
    %v6551 = vadd.f32 %v6110, %v6550
    %v6552 = vpop.f32.mrb[0].mxu0
    %v6553 = vpop.f32.mrb[0].mxu0
    %v6554 = vadd.f32 %v6113, %v6553
    %v6555 = vpop.f32.mrb[0].mxu0
    %6556 = vmatprep.mubr.bf16.mxu0 0
    %6557 = vmatmul.mubr.bf16.gmra.mrb[0].mxu0 %v6389
    %v6558 = vpop.f32.mrb[0].mxu0
    %v6559 = vadd.f32 %v6118, %v6558
    %v6560 = vpop.f32.mrb[0].mxu0
    %v6561 = vpop.f32.mrb[0].mxu0
    %v6562 = vadd.f32 %v6121, %v6561
    %v6563 = vpop.f32.mrb[0].mxu0
    %6564 = vmatprep.mubr.bf16.mxu0 0
    %6565 = vmatmul.mubr.bf16.gmra.mrb[0].mxu0 %v6392
    %v6566 = vpop.f32.mrb[0].mxu0
    %v6567 = vadd.f32 %v6126, %v6566
    %v6568 = vpop.f32.mrb[0].mxu0
    %v6569 = vpop.f32.mrb[0].mxu0
    %v6570 = vadd.f32 %v6129, %v6569
    %v6571 = vpop.f32.mrb[0].mxu0
    %6572 = vmatprep.mubr.bf16.mxu0 0
    %6573 = vmatmul.mubr.bf16.gmra.mrb[0].mxu0 %v6395
    %v6574 = vpop.f32.mrb[0].mxu0
    %v6575 = vadd.f32 %v6134, %v6574
    %v6576 = vpop.f32.mrb[0].mxu0
    %v6577 = vpop.f32.mrb[0].mxu0
    %v6578 = vadd.f32 %v6137, %v6577
    %v6579 = vpop.f32.mrb[0].mxu0
    %6580 = vmatprep.mubr.bf16.mxu0 0
    %6581 = vmatmul.mubr.bf16.gmra.mrb[0].mxu0 %v6398
    %v6582 = vpop.f32.mrb[0].mxu0
    %v6583 = vadd.f32 %v6142, %v6582
    %v6584 = vpop.f32.mrb[0].mxu0
    %v6585 = vpop.f32.mrb[0].mxu0
    %v6586 = vadd.f32 %v6145, %v6585
    %v6587 = vpop.f32.mrb[0].mxu0
    %6588 = vmatprep.mubr.bf16.mxu0 0
    %6589 = vmatmul.mubr.bf16.gmra.mrb[0].mxu0 %v6401
    %v6590 = vpop.f32.mrb[0].mxu0
    %v6591 = vadd.f32 %v6150, %v6590
    %v6592 = vpop.f32.mrb[0].mxu0
    %v6593 = vpop.f32.mrb[0].mxu0
    %v6594 = vadd.f32 %v6153, %v6593
    %v6595 = vpop.f32.mrb[0].mxu0
    %6596 = vmatprep.mubr.bf16.mxu0 0
    %6597 = vmatmul.mubr.bf16.gmra.mrb[0].mxu0 %v6404
    %v6598 = vpop.f32.mrb[0].mxu0
    %v6599 = vadd.f32 %v6158, %v6598
    %v6600 = vpop.f32.mrb[0].mxu0
    %v6601 = vpop.f32.mrb[0].mxu0
    %v6602 = vadd.f32 %v6161, %v6601
    %v6603 = vpop.f32.mrb[0].mxu0
    %6604 = vmatprep.mubr.bf16.mxu0 0
    %6605 = vmatmul.mubr.bf16.gmra.mrb[0].mxu0 %v6407
    %v6606 = vpop.f32.mrb[0].mxu0
    %v6607 = vadd.f32 %v6166, %v6606
    %v6608 = vpop.f32.mrb[0].mxu0
    %v6609 = vpop.f32.mrb[0].mxu0
    %v6610 = vadd.f32 %v6169, %v6609
    %v6611 = vpop.f32.mrb[0].mxu0
    %6612 = vmatprep.mubr.bf16.mxu0 0
    %6613 = vmatmul.mubr.bf16.gmra.mrb[0].mxu0 %v6410
    %v6614 = vpop.f32.mrb[0].mxu0
    %v6615 = vadd.f32 %v6174, %v6614
    %v6616 = vpop.f32.mrb[0].mxu0
    %v6617 = vpop.f32.mrb[0].mxu0
    %v6618 = vadd.f32 %v6177, %v6617
    %v6619 = vpop.f32.mrb[0].mxu0
    %6620 = vmatprep.mubr.bf16.mxu0 0
    %6621 = vmatmul.mubr.bf16.gmra.mrb[0].mxu0 %v6413
    %v6622 = vpop.f32.mrb[0].mxu0
    %v6623 = vadd.f32 %v6182, %v6622
    %v6624 = vpop.f32.mrb[0].mxu0
    %v6625 = vpop.f32.mrb[0].mxu0
    %v6626 = vadd.f32 %v6185, %v6625
    %v6627 = vpop.f32.mrb[0].mxu0
    %6628 = vmatprep.mubr.bf16.mxu0 0
    %6629 = vmatmul.mubr.bf16.gmra.mrb[0].mxu0 %v6416
    %v6630 = vpop.f32.mrb[0].mxu0
    %v6631 = vadd.f32 %v6190, %v6630
    %v6632 = vpop.f32.mrb[0].mxu0
    %v6633 = vpop.f32.mrb[0].mxu0
    %v6634 = vadd.f32 %v6193, %v6633
    %v6635 = vpop.f32.mrb[0].mxu0
    %6636 = vmatprep.mubr.bf16.mxu0 0
    %6637 = vmatmul.mubr.bf16.gmra.mrb[0].mxu0 %v6419
    %v6638 = vpop.f32.mrb[0].mxu0
    %v6639 = vadd.f32 %v6198, %v6638
    %v6640 = vpop.f32.mrb[0].mxu0
    %v6641 = vpop.f32.mrb[0].mxu0
    %v6642 = vadd.f32 %v6201, %v6641
    %v6643 = vpop.f32.mrb[0].mxu0
    %6644 = vmatprep.mubr.bf16.mxu0 0
    %6645 = vmatmul.mubr.bf16.gmra.mrb[0].mxu0 %v6422
    %v6646 = vpop.f32.mrb[0].mxu0
    %v6647 = vadd.f32 %v6206, %v6646
    %v6648 = vpop.f32.mrb[0].mxu0
    %v6649 = vpop.f32.mrb[0].mxu0
    %v6650 = vadd.f32 %v6209, %v6649
    %v6651 = vpop.f32.mrb[0].mxu0
    %6652 = vmatprep.mubr.bf16.mxu0 0
    %6653 = vmatmul.mubr.bf16.gmra.mrb[0].mxu0 %v6425
    %v6654 = vpop.f32.mrb[0].mxu0
    %v6655 = vadd.f32 %v6214, %v6654
    %v6656 = vpop.f32.mrb[0].mxu0
    %v6657 = vpop.f32.mrb[0].mxu0
    %v6658 = vadd.f32 %v6217, %v6657
    %v6659 = vpop.f32.mrb[0].mxu0
    %6660 = vmatprep.mubr.bf16.mxu0 0
    %6661 = vmatmul.mubr.bf16.gmra.mrb[0].mxu0 %v6428
    %v6662 = vpop.f32.mrb[0].mxu0
    %v6663 = vadd.f32 %v6222, %v6662
    %v6664 = vpop.f32.mrb[0].mxu0
    %v6665 = vpop.f32.mrb[0].mxu0
    %v6666 = vadd.f32 %v6225, %v6665
    %v6667 = vpop.f32.mrb[0].mxu0
    %6668 = vmatprep.mubr.bf16.mxu0 0
    %6669 = vmatmul.mubr.bf16.gmra.mrb[0].mxu0 %v6431
    %v6670 = vpop.f32.mrb[0].mxu0
    %v6671 = vadd.f32 %v6230, %v6670
    %v6672 = vpop.f32.mrb[0].mxu0
    %v6673 = vpop.f32.mrb[0].mxu0
    %v6674 = vadd.f32 %v6233, %v6673
    %v6675 = vpop.f32.mrb[0].mxu0
    %6676 = vmatprep.mubr.bf16.mxu0 0
    %6677 = vmatmul.mubr.bf16.gmra.mrb[0].mxu0 %v6434
    %v6678 = vpop.f32.mrb[0].mxu0
    %v6679 = vadd.f32 %v6238, %v6678
    %v6680 = vpop.f32.mrb[0].mxu0
    %v6681 = vpop.f32.mrb[0].mxu0
    %v6682 = vadd.f32 %v6241, %v6681
    %v6683 = vpop.f32.mrb[0].mxu0
    %6684 = vmatprep.mubr.bf16.mxu0 0
    %6685 = vmatmul.mubr.bf16.gmra.mrb[0].mxu0 %v6437
    %v6686 = vpop.f32.mrb[0].mxu0
    %v6687 = vadd.f32 %v6246, %v6686
    %v6688 = vpop.f32.mrb[0].mxu0
    %v6689 = vpop.f32.mrb[0].mxu0
    %v6690 = vadd.f32 %v6249, %v6689
    %v6691 = vpop.f32.mrb[0].mxu0
    %6692 = vmatprep.mubr.bf16.mxu0 0
    %6693 = vmatmul.mubr.bf16.gmra.mrb[0].mxu0 %v6440
    %v6694 = vpop.f32.mrb[0].mxu0
    %v6695 = vadd.f32 %v6254, %v6694
    %v6696 = vpop.f32.mrb[0].mxu0
    %v6697 = vpop.f32.mrb[0].mxu0
    %v6698 = vadd.f32 %v6257, %v6697
    %v6699 = vpop.f32.mrb[0].mxu0
    %6700 = vmatprep.mubr.bf16.mxu0 0
    %6701 = vmatmul.mubr.bf16.gmra.mrb[0].mxu0 %v6443
    %v6702 = vpop.f32.mrb[0].mxu0
    %v6703 = vadd.f32 %v6262, %v6702
    %v6704 = vpop.f32.mrb[0].mxu0
    %v6705 = vpop.f32.mrb[0].mxu0
    %v6706 = vadd.f32 %v6265, %v6705
    %v6707 = vpop.f32.mrb[0].mxu0
    %6708 = vmatprep.mubr.bf16.mxu0 0
    %6709 = vmatmul.mubr.bf16.gmra.mrb[0].mxu0 %v6446
    %v6710 = vpop.f32.mrb[0].mxu0
    %v6711 = vadd.f32 %v6270, %v6710
    %v6712 = vpop.f32.mrb[0].mxu0
    %v6713 = vpop.f32.mrb[0].mxu0
    %v6714 = vadd.f32 %v6273, %v6713
    %v6715 = vpop.f32.mrb[0].mxu0
    %6716 = vmatprep.mubr.bf16.mxu0 0
    %6717 = vmatmul.mubr.bf16.gmra.mrb[0].mxu0 %v6449
    %v6718 = vpop.f32.mrb[0].mxu0
    %v6719 = vadd.f32 %v6278, %v6718
    %v6720 = vpop.f32.mrb[0].mxu0
    %v6721 = vpop.f32.mrb[0].mxu0
    %v6722 = vadd.f32 %v6281, %v6721
    %v6723 = vpop.f32.mrb[0].mxu0
    %6724 = vmatprep.mubr.bf16.mxu0 0
    %6725 = vmatmul.mubr.bf16.gmra.mrb[0].mxu0 %v6452
    %v6726 = vpop.f32.mrb[0].mxu0
    %v6727 = vadd.f32 %v6286, %v6726
    %v6728 = vpop.f32.mrb[0].mxu0
    %v6729 = vpop.f32.mrb[0].mxu0
    %v6730 = vadd.f32 %v6289, %v6729
    %v6731 = vpop.f32.mrb[0].mxu0
    %6732 = vmatprep.mubr.bf16.mxu0 0
    %6733 = vmatmul.mubr.bf16.gmra.mrb[0].mxu0 %v6455
    %v6734 = vpop.f32.mrb[0].mxu0
    %v6735 = vadd.f32 %v6294, %v6734
    %v6736 = vpop.f32.mrb[0].mxu0
    %v6737 = vpop.f32.mrb[0].mxu0
    %v6738 = vadd.f32 %v6297, %v6737
    %v6739 = vpop.f32.mrb[0].mxu0
    %6740 = vmatprep.mubr.bf16.mxu0 0
    %6741 = vmatmul.mubr.bf16.gmra.mrb[0].mxu0 %v6458
    %v6742 = vpop.f32.mrb[0].mxu0
    %v6743 = vadd.f32 %v6302, %v6742
    %v6744 = vpop.f32.mrb[0].mxu0
    %v6745 = vpop.f32.mrb[0].mxu0
    %v6746 = vadd.f32 %v6305, %v6745
    %v6747 = vpop.f32.mrb[0].mxu0
    %6748 = vdwg.mxu0
    %s6749 = scalar_lea.vmem %s9, 64
    %v6750 = vld [vmem:[%s6749] sm:$0xf]
    %v6751 = vld [vmem:[%s6749 + $0x4] sm:$0xf]
    %v6752 = vld [vmem:[%s6749 + $0x8] sm:$0xf]
    %v6753 = vld [vmem:[%s6749 + $0xc] sm:$0xf]
    %v6754 = vld [vmem:[%s6749 + $0x10] sm:$0xf]
    %v6755 = vld [vmem:[%s6749 + $0x14] sm:$0xf]
    %v6756 = vld [vmem:[%s6749 + $0x18] sm:$0xf]
    %v6757 = vld [vmem:[%s6749 + $0x1c] sm:$0xf]
    %v6758 = vpack.c.b16 %v1547, %v5866
    %v6767 = vunpack.c.l.b16 %v6750
    %v6768 = vunpack.c.l.b16 %v6751
    %v6769 = vunpack.c.l.b16 %v6752
    %v6770 = vunpack.c.l.b16 %v6753
    %v6771 = vunpack.c.l.b16 %v6754
    %v6772 = vunpack.c.l.b16 %v6755
    %v6773 = vunpack.c.l.b16 %v6756
    %v6774 = vunpack.c.l.b16 %v6757
    %v6775 = vpack.c.b16 %v6768, %v6767
    %v6776 = vpack.c.b16 %v6770, %v6769
    %v6777 = vpack.c.b16 %v6772, %v6771
    %v6778 = vpack.c.b16 %v6774, %v6773
    %v6784 = vsel %vm4306, %v6758, 0
    %6786 = vmatprep.subr.bf16.mxu0 0
    %6787 = vmatpush1.bf16.msra.mxu0 %v6775
    %6788 = vmatprep.subr.bf16.mxu0 0
    %6789 = vmatpush1.bf16.msra.mxu0 %v6776
    %6790 = vmatprep.subr.bf16.mxu0 0
    %6791 = vmatpush1.bf16.msra.mxu0 %v6777
    %6792 = vmatprep.subr.bf16.mxu0 0
    %6793 = vmatpush1.bf16.msra.mxu0 %v6778
    %6794 = vmatprep.subr.bf16.mxu0 0
    %6795 = vmatpush1.bf16.msra.mxu0 0
    %6796 = vmatprep.subr.bf16.mxu0 0
    %6797 = vmatpush1.bf16.msra.mxu0 0
    %6798 = vmatprep.subr.bf16.mxu0 0
    %6799 = vmatpush1.bf16.msra.mxu0 0
    %6800 = vmatprep.subr.bf16.mxu0 0
    %6801 = vmatpush1.bf16.msra.mxu0 0
    %6802 = vmatprep.subr.bf16.mxu0 0
    %6803 = vmatpush1.bf16.msra.mxu0 0
    %6804 = vmatprep.subr.bf16.mxu0 0
    %6805 = vmatpush1.bf16.msra.mxu0 0
    %6806 = vmatprep.subr.bf16.mxu0 0
    %6807 = vmatpush1.bf16.msra.mxu0 0
    %6808 = vmatprep.subr.bf16.mxu0 0
    %6809 = vmatpush1.bf16.msra.mxu0 0
    %6810 = vmatprep.subr.bf16.mxu0 0
    %6811 = vmatpush1.bf16.msra.mxu0 0
    %6812 = vmatprep.subr.bf16.mxu0 0
    %6813 = vmatpush1.bf16.msra.mxu0 0
    %6814 = vmatprep.subr.bf16.mxu0 0
    %6815 = vmatpush1.bf16.msra.mxu0 0
    %6816 = vmatprep.subr.bf16.mxu0 0
    %6817 = vmatpush1.bf16.msra.mxu0 0
    %6818 = vmatprep.mubr.bf16.mxu0 0
    %6819 = vmatmul.mubr.bf16.gmra.mrb[0].mxu0 %v6368
    %v6820 = vpop.f32.mrb[0].mxu0
    %v6821 = vadd.f32 0.0, %v6820
    %v6822 = vpop.f32.mrb[0].mxu0
    %v6823 = vpop.f32.mrb[0].mxu0
    %v6824 = vadd.f32 0.0, %v6823
    %v6825 = vpop.f32.mrb[0].mxu0
    %6826 = vmatprep.mubr.bf16.mxu0 0
    %6827 = vmatmul.mubr.bf16.gmra.mrb[0].mxu0 %v6371
    %v6828 = vpop.f32.mrb[0].mxu0
    %v6829 = vadd.f32 0.0, %v6828
    %v6830 = vpop.f32.mrb[0].mxu0
    %v6831 = vpop.f32.mrb[0].mxu0
    %v6832 = vadd.f32 0.0, %v6831
    %v6833 = vpop.f32.mrb[0].mxu0
    %6834 = vmatprep.mubr.bf16.mxu0 0
    %6835 = vmatmul.mubr.bf16.gmra.mrb[0].mxu0 %v6374
    %v6836 = vpop.f32.mrb[0].mxu0
    %v6837 = vadd.f32 0.0, %v6836
    %v6838 = vpop.f32.mrb[0].mxu0
    %v6839 = vpop.f32.mrb[0].mxu0
    %v6840 = vadd.f32 0.0, %v6839
    %v6841 = vpop.f32.mrb[0].mxu0
    %6842 = vmatprep.mubr.bf16.mxu0 0
    %6843 = vmatmul.mubr.bf16.gmra.mrb[0].mxu0 %v6377
    %v6844 = vpop.f32.mrb[0].mxu0
    %v6845 = vadd.f32 0.0, %v6844
    %v6846 = vpop.f32.mrb[0].mxu0
    %v6847 = vpop.f32.mrb[0].mxu0
    %v6848 = vadd.f32 0.0, %v6847
    %v6849 = vpop.f32.mrb[0].mxu0
    %6850 = vmatprep.mubr.bf16.mxu0 0
    %6851 = vmatmul.mubr.bf16.gmra.mrb[0].mxu0 %v6380
    %v6852 = vpop.f32.mrb[0].mxu0
    %v6853 = vadd.f32 0.0, %v6852
    %v6854 = vpop.f32.mrb[0].mxu0
    %v6855 = vpop.f32.mrb[0].mxu0
    %v6856 = vadd.f32 0.0, %v6855
    %v6857 = vpop.f32.mrb[0].mxu0
    %6858 = vmatprep.mubr.bf16.mxu0 0
    %6859 = vmatmul.mubr.bf16.gmra.mrb[0].mxu0 %v6383
    %v6860 = vpop.f32.mrb[0].mxu0
    %v6861 = vadd.f32 0.0, %v6860
    %v6862 = vpop.f32.mrb[0].mxu0
    %v6863 = vpop.f32.mrb[0].mxu0
    %v6864 = vadd.f32 0.0, %v6863
    %v6865 = vpop.f32.mrb[0].mxu0
    %6866 = vmatprep.mubr.bf16.mxu0 0
    %6867 = vmatmul.mubr.bf16.gmra.mrb[0].mxu0 %v6386
    %v6868 = vpop.f32.mrb[0].mxu0
    %v6869 = vadd.f32 0.0, %v6868
    %v6870 = vpop.f32.mrb[0].mxu0
    %v6871 = vpop.f32.mrb[0].mxu0
    %v6872 = vadd.f32 0.0, %v6871
    %v6873 = vpop.f32.mrb[0].mxu0
    %6874 = vmatprep.mubr.bf16.mxu0 0
    %6875 = vmatmul.mubr.bf16.gmra.mrb[0].mxu0 %v6389
    %v6876 = vpop.f32.mrb[0].mxu0
    %v6877 = vadd.f32 0.0, %v6876
    %v6878 = vpop.f32.mrb[0].mxu0
    %v6879 = vpop.f32.mrb[0].mxu0
    %v6880 = vadd.f32 0.0, %v6879
    %v6881 = vpop.f32.mrb[0].mxu0
    %6882 = vmatprep.mubr.bf16.mxu0 0
    %6883 = vmatmul.mubr.bf16.gmra.mrb[0].mxu0 %v6392
    %v6884 = vpop.f32.mrb[0].mxu0
    %v6885 = vadd.f32 0.0, %v6884
    %v6886 = vpop.f32.mrb[0].mxu0
    %v6887 = vpop.f32.mrb[0].mxu0
    %v6888 = vadd.f32 0.0, %v6887
    %v6889 = vpop.f32.mrb[0].mxu0
    %6890 = vmatprep.mubr.bf16.mxu0 0
    %6891 = vmatmul.mubr.bf16.gmra.mrb[0].mxu0 %v6395
    %v6892 = vpop.f32.mrb[0].mxu0
    %v6893 = vadd.f32 0.0, %v6892
    %v6894 = vpop.f32.mrb[0].mxu0
    %v6895 = vpop.f32.mrb[0].mxu0
    %v6896 = vadd.f32 0.0, %v6895
    %v6897 = vpop.f32.mrb[0].mxu0
    %6898 = vmatprep.mubr.bf16.mxu0 0
    %6899 = vmatmul.mubr.bf16.gmra.mrb[0].mxu0 %v6398
    %v6900 = vpop.f32.mrb[0].mxu0
    %v6901 = vadd.f32 0.0, %v6900
    %v6902 = vpop.f32.mrb[0].mxu0
    %v6903 = vpop.f32.mrb[0].mxu0
    %v6904 = vadd.f32 0.0, %v6903
    %v6905 = vpop.f32.mrb[0].mxu0
    %6906 = vmatprep.mubr.bf16.mxu0 0
    %6907 = vmatmul.mubr.bf16.gmra.mrb[0].mxu0 %v6401
    %v6908 = vpop.f32.mrb[0].mxu0
    %v6909 = vadd.f32 0.0, %v6908
    %v6910 = vpop.f32.mrb[0].mxu0
    %v6911 = vpop.f32.mrb[0].mxu0
    %v6912 = vadd.f32 0.0, %v6911
    %v6913 = vpop.f32.mrb[0].mxu0
    %6914 = vmatprep.mubr.bf16.mxu0 0
    %6915 = vmatmul.mubr.bf16.gmra.mrb[0].mxu0 %v6404
    %v6916 = vpop.f32.mrb[0].mxu0
    %v6917 = vadd.f32 0.0, %v6916
    %v6918 = vpop.f32.mrb[0].mxu0
    %v6919 = vpop.f32.mrb[0].mxu0
    %v6920 = vadd.f32 0.0, %v6919
    %v6921 = vpop.f32.mrb[0].mxu0
    %6922 = vmatprep.mubr.bf16.mxu0 0
    %6923 = vmatmul.mubr.bf16.gmra.mrb[0].mxu0 %v6407
    %v6924 = vpop.f32.mrb[0].mxu0
    %v6925 = vadd.f32 0.0, %v6924
    %v6926 = vpop.f32.mrb[0].mxu0
    %v6927 = vpop.f32.mrb[0].mxu0
    %v6928 = vadd.f32 0.0, %v6927
    %v6929 = vpop.f32.mrb[0].mxu0
    %6930 = vmatprep.mubr.bf16.mxu0 0
    %6931 = vmatmul.mubr.bf16.gmra.mrb[0].mxu0 %v6410
    %v6932 = vpop.f32.mrb[0].mxu0
    %v6933 = vadd.f32 0.0, %v6932
    %v6934 = vpop.f32.mrb[0].mxu0
    %v6935 = vpop.f32.mrb[0].mxu0
    %v6936 = vadd.f32 0.0, %v6935
    %v6937 = vpop.f32.mrb[0].mxu0
    %6938 = vmatprep.mubr.bf16.mxu0 0
    %6939 = vmatmul.mubr.bf16.gmra.mrb[0].mxu0 %v6413
    %v6940 = vpop.f32.mrb[0].mxu0
    %v6941 = vadd.f32 0.0, %v6940
    %v6942 = vpop.f32.mrb[0].mxu0
    %v6943 = vpop.f32.mrb[0].mxu0
    %v6944 = vadd.f32 0.0, %v6943
    %v6945 = vpop.f32.mrb[0].mxu0
    %6946 = vmatprep.mubr.bf16.mxu0 0
    %6947 = vmatmul.mubr.bf16.gmra.mrb[0].mxu0 %v6416
    %v6948 = vpop.f32.mrb[0].mxu0
    %v6949 = vadd.f32 0.0, %v6948
    %v6950 = vpop.f32.mrb[0].mxu0
    %v6951 = vpop.f32.mrb[0].mxu0
    %v6952 = vadd.f32 0.0, %v6951
    %v6953 = vpop.f32.mrb[0].mxu0
    %6954 = vmatprep.mubr.bf16.mxu0 0
    %6955 = vmatmul.mubr.bf16.gmra.mrb[0].mxu0 %v6419
    %v6956 = vpop.f32.mrb[0].mxu0
    %v6957 = vadd.f32 0.0, %v6956
    %v6958 = vpop.f32.mrb[0].mxu0
    %v6959 = vpop.f32.mrb[0].mxu0
    %v6960 = vadd.f32 0.0, %v6959
    %v6961 = vpop.f32.mrb[0].mxu0
    %6962 = vmatprep.mubr.bf16.mxu0 0
    %6963 = vmatmul.mubr.bf16.gmra.mrb[0].mxu0 %v6422
    %v6964 = vpop.f32.mrb[0].mxu0
    %v6965 = vadd.f32 0.0, %v6964
    %v6966 = vpop.f32.mrb[0].mxu0
    %v6967 = vpop.f32.mrb[0].mxu0
    %v6968 = vadd.f32 0.0, %v6967
    %v6969 = vpop.f32.mrb[0].mxu0
    %6970 = vmatprep.mubr.bf16.mxu0 0
    %6971 = vmatmul.mubr.bf16.gmra.mrb[0].mxu0 %v6425
    %v6972 = vpop.f32.mrb[0].mxu0
    %v6973 = vadd.f32 0.0, %v6972
    %v6974 = vpop.f32.mrb[0].mxu0
    %v6975 = vpop.f32.mrb[0].mxu0
    %v6976 = vadd.f32 0.0, %v6975
    %v6977 = vpop.f32.mrb[0].mxu0
    %6978 = vmatprep.mubr.bf16.mxu0 0
    %6979 = vmatmul.mubr.bf16.gmra.mrb[0].mxu0 %v6428
    %v6980 = vpop.f32.mrb[0].mxu0
    %v6981 = vadd.f32 0.0, %v6980
    %v6982 = vpop.f32.mrb[0].mxu0
    %v6983 = vpop.f32.mrb[0].mxu0
    %v6984 = vadd.f32 0.0, %v6983
    %v6985 = vpop.f32.mrb[0].mxu0
    %6986 = vmatprep.mubr.bf16.mxu0 0
    %6987 = vmatmul.mubr.bf16.gmra.mrb[0].mxu0 %v6431
    %v6988 = vpop.f32.mrb[0].mxu0
    %v6989 = vadd.f32 0.0, %v6988
    %v6990 = vpop.f32.mrb[0].mxu0
    %v6991 = vpop.f32.mrb[0].mxu0
    %v6992 = vadd.f32 0.0, %v6991
    %v6993 = vpop.f32.mrb[0].mxu0
    %6994 = vmatprep.mubr.bf16.mxu0 0
    %6995 = vmatmul.mubr.bf16.gmra.mrb[0].mxu0 %v6434
    %v6996 = vpop.f32.mrb[0].mxu0
    %v6997 = vadd.f32 0.0, %v6996
    %v6998 = vpop.f32.mrb[0].mxu0
    %v6999 = vpop.f32.mrb[0].mxu0
    %v7000 = vadd.f32 0.0, %v6999
    %v7001 = vpop.f32.mrb[0].mxu0
    %7002 = vmatprep.mubr.bf16.mxu0 0
    %7003 = vmatmul.mubr.bf16.gmra.mrb[0].mxu0 %v6437
    %v7004 = vpop.f32.mrb[0].mxu0
    %v7005 = vadd.f32 0.0, %v7004
    %v7006 = vpop.f32.mrb[0].mxu0
    %v7007 = vpop.f32.mrb[0].mxu0
    %v7008 = vadd.f32 0.0, %v7007
    %v7009 = vpop.f32.mrb[0].mxu0
    %7010 = vmatprep.mubr.bf16.mxu0 0
    %7011 = vmatmul.mubr.bf16.gmra.mrb[0].mxu0 %v6440
    %v7012 = vpop.f32.mrb[0].mxu0
    %v7013 = vadd.f32 0.0, %v7012
    %v7014 = vpop.f32.mrb[0].mxu0
    %v7015 = vpop.f32.mrb[0].mxu0
    %v7016 = vadd.f32 0.0, %v7015
    %v7017 = vpop.f32.mrb[0].mxu0
    %7018 = vmatprep.mubr.bf16.mxu0 0
    %7019 = vmatmul.mubr.bf16.gmra.mrb[0].mxu0 %v6443
    %v7020 = vpop.f32.mrb[0].mxu0
    %v7021 = vadd.f32 0.0, %v7020
    %v7022 = vpop.f32.mrb[0].mxu0
    %v7023 = vpop.f32.mrb[0].mxu0
    %v7024 = vadd.f32 0.0, %v7023
    %v7025 = vpop.f32.mrb[0].mxu0
    %7026 = vmatprep.mubr.bf16.mxu0 0
    %7027 = vmatmul.mubr.bf16.gmra.mrb[0].mxu0 %v6446
    %v7028 = vpop.f32.mrb[0].mxu0
    %v7029 = vadd.f32 0.0, %v7028
    %v7030 = vpop.f32.mrb[0].mxu0
    %v7031 = vpop.f32.mrb[0].mxu0
    %v7032 = vadd.f32 0.0, %v7031
    %v7033 = vpop.f32.mrb[0].mxu0
    %7034 = vmatprep.mubr.bf16.mxu0 0
    %7035 = vmatmul.mubr.bf16.gmra.mrb[0].mxu0 %v6449
    %v7036 = vpop.f32.mrb[0].mxu0
    %v7037 = vadd.f32 0.0, %v7036
    %v7038 = vpop.f32.mrb[0].mxu0
    %v7039 = vpop.f32.mrb[0].mxu0
    %v7040 = vadd.f32 0.0, %v7039
    %v7041 = vpop.f32.mrb[0].mxu0
    %7042 = vmatprep.mubr.bf16.mxu0 0
    %7043 = vmatmul.mubr.bf16.gmra.mrb[0].mxu0 %v6452
    %v7044 = vpop.f32.mrb[0].mxu0
    %v7045 = vadd.f32 0.0, %v7044
    %v7046 = vpop.f32.mrb[0].mxu0
    %v7047 = vpop.f32.mrb[0].mxu0
    %v7048 = vadd.f32 0.0, %v7047
    %v7049 = vpop.f32.mrb[0].mxu0
    %7050 = vmatprep.mubr.bf16.mxu0 0
    %7051 = vmatmul.mubr.bf16.gmra.mrb[0].mxu0 %v6455
    %v7052 = vpop.f32.mrb[0].mxu0
    %v7053 = vadd.f32 0.0, %v7052
    %v7054 = vpop.f32.mrb[0].mxu0
    %v7055 = vpop.f32.mrb[0].mxu0
    %v7056 = vadd.f32 0.0, %v7055
    %v7057 = vpop.f32.mrb[0].mxu0
    %7058 = vmatprep.mubr.bf16.mxu0 0
    %7059 = vmatmul.mubr.bf16.gmra.mrb[0].mxu0 %v6458
    %v7060 = vpop.f32.mrb[0].mxu0
    %v7061 = vadd.f32 0.0, %v7060
    %v7062 = vpop.f32.mrb[0].mxu0
    %v7063 = vpop.f32.mrb[0].mxu0
    %v7064 = vadd.f32 0.0, %v7063
    %v7065 = vpop.f32.mrb[0].mxu0
    %7066 = vmatprep.mubr.bf16.mxu0 0
    %7067 = vmatmul.mubr.bf16.gmra.mrb[0].mxu0 %v6784
    %v7068 = vpop.f32.mrb[0].mxu0
    %v7069 = vadd.f32 0.0, %v7068
    %v7070 = vpop.f32.mrb[0].mxu0
    %v7071 = vpop.f32.mrb[0].mxu0
    %v7072 = vadd.f32 0.0, %v7071
    %v7073 = vpop.f32.mrb[0].mxu0
    %7074 = vdwg.mxu0
    %v7075 = vadd.f32 %v6495, %v6821
    %v7076 = vadd.f32 %v6498, %v6824
    %v7077 = vadd.f32 %v6503, %v6829
    %v7078 = vadd.f32 %v6506, %v6832
    %v7079 = vadd.f32 %v6511, %v6837
    %v7080 = vadd.f32 %v6514, %v6840
    %v7081 = vadd.f32 %v6519, %v6845
    %v7082 = vadd.f32 %v6522, %v6848
    %v7083 = vadd.f32 %v6527, %v6853
    %v7084 = vadd.f32 %v6530, %v6856
    %v7085 = vadd.f32 %v6535, %v6861
    %v7086 = vadd.f32 %v6538, %v6864
    %v7087 = vadd.f32 %v6543, %v6869
    %v7088 = vadd.f32 %v6546, %v6872
    %v7089 = vadd.f32 %v6551, %v6877
    %v7090 = vadd.f32 %v6554, %v6880
    %v7091 = vadd.f32 %v6559, %v6885
    %v7092 = vadd.f32 %v6562, %v6888
    %v7093 = vadd.f32 %v6567, %v6893
    %v7094 = vadd.f32 %v6570, %v6896
    %v7095 = vadd.f32 %v6575, %v6901
    %v7096 = vadd.f32 %v6578, %v6904
    %v7097 = vadd.f32 %v6583, %v6909
    %v7098 = vadd.f32 %v6586, %v6912
    %v7099 = vadd.f32 %v6591, %v6917
    %v7100 = vadd.f32 %v6594, %v6920
    %v7101 = vadd.f32 %v6599, %v6925
    %v7102 = vadd.f32 %v6602, %v6928
    %v7103 = vadd.f32 %v6607, %v6933
    %v7104 = vadd.f32 %v6610, %v6936
    %v7105 = vadd.f32 %v6615, %v6941
    %v7106 = vadd.f32 %v6618, %v6944
    %v7107 = vadd.f32 %v6623, %v6949
    %v7108 = vadd.f32 %v6626, %v6952
    %v7109 = vadd.f32 %v6631, %v6957
    %v7110 = vadd.f32 %v6634, %v6960
    %v7111 = vadd.f32 %v6639, %v6965
    %v7112 = vadd.f32 %v6642, %v6968
    %v7113 = vadd.f32 %v6647, %v6973
    %v7114 = vadd.f32 %v6650, %v6976
    %v7115 = vadd.f32 %v6655, %v6981
    %v7116 = vadd.f32 %v6658, %v6984
    %v7117 = vadd.f32 %v6663, %v6989
    %v7118 = vadd.f32 %v6666, %v6992
    %v7119 = vadd.f32 %v6671, %v6997
    %v7120 = vadd.f32 %v6674, %v7000
    %v7121 = vadd.f32 %v6679, %v7005
    %v7122 = vadd.f32 %v6682, %v7008
    %v7123 = vadd.f32 %v6687, %v7013
    %v7124 = vadd.f32 %v6690, %v7016
    %v7125 = vadd.f32 %v6695, %v7021
    %v7126 = vadd.f32 %v6698, %v7024
    %v7127 = vadd.f32 %v6703, %v7029
    %v7128 = vadd.f32 %v6706, %v7032
    %v7129 = vadd.f32 %v6711, %v7037
    %v7130 = vadd.f32 %v6714, %v7040
    %v7131 = vadd.f32 %v6719, %v7045
    %v7132 = vadd.f32 %v6722, %v7048
    %v7133 = vadd.f32 %v6727, %v7053
    %v7134 = vadd.f32 %v6730, %v7056
    %v7135 = vadd.f32 %v6735, %v7061
    %v7136 = vadd.f32 %v6738, %v7064
    %v7137 = vadd.f32 %v6743, %v7069
    %v7138 = vadd.f32 %v6746, %v7072
    %v7139 = vld [vmem:[%s10] sm:$0x1]
    %v7141 = vlaneseq
    %v7142 = vshrl.u32 %v7141, 7
    %v7143 = vsub.s32 0, %v7142
    %v7144 = vrot.slane %v7139, %v7143
    %v7146 = vadd.f32 %v7075, %v7144
    %v7147 = vadd.f32 %v7076, %v7144
    %v7148 = vadd.f32 %v7077, %v7144
    %v7149 = vadd.f32 %v7078, %v7144
    %v7150 = vadd.f32 %v7079, %v7144
    %v7151 = vadd.f32 %v7080, %v7144
    %v7152 = vadd.f32 %v7081, %v7144
    %v7153 = vadd.f32 %v7082, %v7144
    %v7154 = vadd.f32 %v7083, %v7144
    %v7155 = vadd.f32 %v7084, %v7144
    %v7156 = vadd.f32 %v7085, %v7144
    %v7157 = vadd.f32 %v7086, %v7144
    %v7158 = vadd.f32 %v7087, %v7144
    %v7159 = vadd.f32 %v7088, %v7144
    %v7160 = vadd.f32 %v7089, %v7144
    %v7161 = vadd.f32 %v7090, %v7144
    %v7162 = vadd.f32 %v7091, %v7144
    %v7163 = vadd.f32 %v7092, %v7144
    %v7164 = vadd.f32 %v7093, %v7144
    %v7165 = vadd.f32 %v7094, %v7144
    %v7166 = vadd.f32 %v7095, %v7144
    %v7167 = vadd.f32 %v7096, %v7144
    %v7168 = vadd.f32 %v7097, %v7144
    %v7169 = vadd.f32 %v7098, %v7144
    %v7170 = vadd.f32 %v7099, %v7144
    %v7171 = vadd.f32 %v7100, %v7144
    %v7172 = vadd.f32 %v7101, %v7144
    %v7173 = vadd.f32 %v7102, %v7144
    %v7174 = vadd.f32 %v7103, %v7144
    %v7175 = vadd.f32 %v7104, %v7144
    %v7176 = vadd.f32 %v7105, %v7144
    %v7177 = vadd.f32 %v7106, %v7144
    %v7178 = vadd.f32 %v7107, %v7144
    %v7179 = vadd.f32 %v7108, %v7144
    %v7180 = vadd.f32 %v7109, %v7144
    %v7181 = vadd.f32 %v7110, %v7144
    %v7182 = vadd.f32 %v7111, %v7144
    %v7183 = vadd.f32 %v7112, %v7144
    %v7184 = vadd.f32 %v7113, %v7144
    %v7185 = vadd.f32 %v7114, %v7144
    %v7186 = vadd.f32 %v7115, %v7144
    %v7187 = vadd.f32 %v7116, %v7144
    %v7188 = vadd.f32 %v7117, %v7144
    %v7189 = vadd.f32 %v7118, %v7144
    %v7190 = vadd.f32 %v7119, %v7144
    %v7191 = vadd.f32 %v7120, %v7144
    %v7192 = vadd.f32 %v7121, %v7144
    %v7193 = vadd.f32 %v7122, %v7144
    %v7194 = vadd.f32 %v7123, %v7144
    %v7195 = vadd.f32 %v7124, %v7144
    %v7196 = vadd.f32 %v7125, %v7144
    %v7197 = vadd.f32 %v7126, %v7144
    %v7198 = vadd.f32 %v7127, %v7144
    %v7199 = vadd.f32 %v7128, %v7144
    %v7200 = vadd.f32 %v7129, %v7144
    %v7201 = vadd.f32 %v7130, %v7144
    %v7202 = vadd.f32 %v7131, %v7144
    %v7203 = vadd.f32 %v7132, %v7144
    %v7204 = vadd.f32 %v7133, %v7144
    %v7205 = vadd.f32 %v7134, %v7144
    %v7206 = vadd.f32 %v7135, %v7144
    %v7207 = vadd.f32 %v7136, %v7144
    %v7208 = vadd.f32 %v7137, %v7144
    %v7209 = vadd.f32 %v7138, %v7144
    %v7210 = vmax.f32 %v7146, 0.0
    %v7211 = vmax.f32 %v7147, 0.0
    %v7212 = vmax.f32 %v7148, 0.0
    %v7213 = vmax.f32 %v7149, 0.0
    %v7214 = vmax.f32 %v7150, 0.0
    %v7215 = vmax.f32 %v7151, 0.0
    %v7216 = vmax.f32 %v7152, 0.0
    %v7217 = vmax.f32 %v7153, 0.0
    %v7218 = vmax.f32 %v7154, 0.0
    %v7219 = vmax.f32 %v7155, 0.0
    %v7220 = vmax.f32 %v7156, 0.0
    %v7221 = vmax.f32 %v7157, 0.0
    %v7222 = vmax.f32 %v7158, 0.0
    %v7223 = vmax.f32 %v7159, 0.0
    %v7224 = vmax.f32 %v7160, 0.0
    %v7225 = vmax.f32 %v7161, 0.0
    %v7226 = vmax.f32 %v7162, 0.0
    %v7227 = vmax.f32 %v7163, 0.0
    %v7228 = vmax.f32 %v7164, 0.0
    %v7229 = vmax.f32 %v7165, 0.0
    %v7230 = vmax.f32 %v7166, 0.0
    %v7231 = vmax.f32 %v7167, 0.0
    %v7232 = vmax.f32 %v7168, 0.0
    %v7233 = vmax.f32 %v7169, 0.0
    %v7234 = vmax.f32 %v7170, 0.0
    %v7235 = vmax.f32 %v7171, 0.0
    %v7236 = vmax.f32 %v7172, 0.0
    %v7237 = vmax.f32 %v7173, 0.0
    %v7238 = vmax.f32 %v7174, 0.0
    %v7239 = vmax.f32 %v7175, 0.0
    %v7240 = vmax.f32 %v7176, 0.0
    %v7241 = vmax.f32 %v7177, 0.0
    %v7242 = vmax.f32 %v7178, 0.0
    %v7243 = vmax.f32 %v7179, 0.0
    %v7244 = vmax.f32 %v7180, 0.0
    %v7245 = vmax.f32 %v7181, 0.0
    %v7246 = vmax.f32 %v7182, 0.0
    %v7247 = vmax.f32 %v7183, 0.0
    %v7248 = vmax.f32 %v7184, 0.0
    %v7249 = vmax.f32 %v7185, 0.0
    %v7250 = vmax.f32 %v7186, 0.0
    %v7251 = vmax.f32 %v7187, 0.0
    %v7252 = vmax.f32 %v7188, 0.0
    %v7253 = vmax.f32 %v7189, 0.0
    %v7254 = vmax.f32 %v7190, 0.0
    %v7255 = vmax.f32 %v7191, 0.0
    %v7256 = vmax.f32 %v7192, 0.0
    %v7257 = vmax.f32 %v7193, 0.0
    %v7258 = vmax.f32 %v7194, 0.0
    %v7259 = vmax.f32 %v7195, 0.0
    %v7260 = vmax.f32 %v7196, 0.0
    %v7261 = vmax.f32 %v7197, 0.0
    %v7262 = vmax.f32 %v7198, 0.0
    %v7263 = vmax.f32 %v7199, 0.0
    %v7264 = vmax.f32 %v7200, 0.0
    %v7265 = vmax.f32 %v7201, 0.0
    %v7266 = vmax.f32 %v7202, 0.0
    %v7267 = vmax.f32 %v7203, 0.0
    %v7268 = vmax.f32 %v7204, 0.0
    %v7269 = vmax.f32 %v7205, 0.0
    %v7270 = vmax.f32 %v7206, 0.0
    %v7271 = vmax.f32 %v7207, 0.0
    %v7272 = vmax.f32 %v7208, 0.0
    %v7273 = vmax.f32 %v7209, 0.0
    %v7274 = vpack.c.bf16 %v7210, %v7210
    %v7275 = vpack.c.bf16 %v7211, %v7211
    %v7276 = vpack.c.bf16 %v7212, %v7212
    %v7277 = vpack.c.bf16 %v7213, %v7213
    %v7278 = vpack.c.bf16 %v7214, %v7214
    %v7279 = vpack.c.bf16 %v7215, %v7215
    %v7280 = vpack.c.bf16 %v7216, %v7216
    %v7281 = vpack.c.bf16 %v7217, %v7217
    %v7282 = vpack.c.bf16 %v7218, %v7218
    %v7283 = vpack.c.bf16 %v7219, %v7219
    %v7284 = vpack.c.bf16 %v7220, %v7220
    %v7285 = vpack.c.bf16 %v7221, %v7221
    %v7286 = vpack.c.bf16 %v7222, %v7222
    %v7287 = vpack.c.bf16 %v7223, %v7223
    %v7288 = vpack.c.bf16 %v7224, %v7224
    %v7289 = vpack.c.bf16 %v7225, %v7225
    %v7290 = vpack.c.bf16 %v7226, %v7226
    %v7291 = vpack.c.bf16 %v7227, %v7227
    %v7292 = vpack.c.bf16 %v7228, %v7228
    %v7293 = vpack.c.bf16 %v7229, %v7229
    %v7294 = vpack.c.bf16 %v7230, %v7230
    %v7295 = vpack.c.bf16 %v7231, %v7231
    %v7296 = vpack.c.bf16 %v7232, %v7232
    %v7297 = vpack.c.bf16 %v7233, %v7233
    %v7298 = vpack.c.bf16 %v7234, %v7234
    %v7299 = vpack.c.bf16 %v7235, %v7235
    %v7300 = vpack.c.bf16 %v7236, %v7236
    %v7301 = vpack.c.bf16 %v7237, %v7237
    %v7302 = vpack.c.bf16 %v7238, %v7238
    %v7303 = vpack.c.bf16 %v7239, %v7239
    %v7304 = vpack.c.bf16 %v7240, %v7240
    %v7305 = vpack.c.bf16 %v7241, %v7241
    %v7306 = vpack.c.bf16 %v7242, %v7242
    %v7307 = vpack.c.bf16 %v7243, %v7243
    %v7308 = vpack.c.bf16 %v7244, %v7244
    %v7309 = vpack.c.bf16 %v7245, %v7245
    %v7310 = vpack.c.bf16 %v7246, %v7246
    %v7311 = vpack.c.bf16 %v7247, %v7247
    %v7312 = vpack.c.bf16 %v7248, %v7248
    %v7313 = vpack.c.bf16 %v7249, %v7249
    %v7314 = vpack.c.bf16 %v7250, %v7250
    %v7315 = vpack.c.bf16 %v7251, %v7251
    %v7316 = vpack.c.bf16 %v7252, %v7252
    %v7317 = vpack.c.bf16 %v7253, %v7253
    %v7318 = vpack.c.bf16 %v7254, %v7254
    %v7319 = vpack.c.bf16 %v7255, %v7255
    %v7320 = vpack.c.bf16 %v7256, %v7256
    %v7321 = vpack.c.bf16 %v7257, %v7257
    %v7322 = vpack.c.bf16 %v7258, %v7258
    %v7323 = vpack.c.bf16 %v7259, %v7259
    %v7324 = vpack.c.bf16 %v7260, %v7260
    %v7325 = vpack.c.bf16 %v7261, %v7261
    %v7326 = vpack.c.bf16 %v7262, %v7262
    %v7327 = vpack.c.bf16 %v7263, %v7263
    %v7328 = vpack.c.bf16 %v7264, %v7264
    %v7329 = vpack.c.bf16 %v7265, %v7265
    %v7330 = vpack.c.bf16 %v7266, %v7266
    %v7331 = vpack.c.bf16 %v7267, %v7267
    %v7332 = vpack.c.bf16 %v7268, %v7268
    %v7333 = vpack.c.bf16 %v7269, %v7269
    %v7334 = vpack.c.bf16 %v7270, %v7270
    %v7335 = vpack.c.bf16 %v7271, %v7271
    %v7336 = vpack.c.bf16 %v7272, %v7272
    %v7337 = vpack.c.bf16 %v7273, %v7273
    %v7338 = vld [vmem:[#allocation2] sm:$0xf]
    %v7339 = vld [vmem:[#allocation2 + $0x4] sm:$0xf]
    %v7340 = vld [vmem:[#allocation2 + $0x8] sm:$0xf]
    %v7341 = vld [vmem:[#allocation2 + $0xc] sm:$0xf]
    %v7342 = vld [vmem:[#allocation2 + $0x10] sm:$0xf]
    %v7343 = vld [vmem:[#allocation2 + $0x14] sm:$0xf]
    %v7344 = vld [vmem:[#allocation2 + $0x18] sm:$0xf]
    %v7345 = vld [vmem:[#allocation2 + $0x1c] sm:$0xf]
    %v7346 = vld [vmem:[#allocation2 + $0x20] sm:$0xf]
    %v7347 = vld [vmem:[#allocation2 + $0x24] sm:$0xf]
    %v7348 = vld [vmem:[#allocation2 + $0x28] sm:$0xf]
    %v7349 = vld [vmem:[#allocation2 + $0x2c] sm:$0xf]
    %v7350 = vld [vmem:[#allocation2 + $0x30] sm:$0xf]
    %v7351 = vld [vmem:[#allocation2 + $0x34] sm:$0xf]
    %v7352 = vld [vmem:[#allocation2 + $0x38] sm:$0xf]
    %v7353 = vld [vmem:[#allocation2 + $0x3c] sm:$0xf]
    %v7354 = vld [vmem:[#allocation2 + $0x40] sm:$0xf]
    %v7355 = vld [vmem:[#allocation2 + $0x44] sm:$0xf]
    %v7356 = vld [vmem:[#allocation2 + $0x48] sm:$0xf]
    %v7357 = vld [vmem:[#allocation2 + $0x4c] sm:$0xf]
    %v7358 = vld [vmem:[#allocation2 + $0x50] sm:$0xf]
    %v7359 = vld [vmem:[#allocation2 + $0x54] sm:$0xf]
    %v7360 = vld [vmem:[#allocation2 + $0x58] sm:$0xf]
    %v7361 = vld [vmem:[#allocation2 + $0x5c] sm:$0xf]
    %v7362 = vld [vmem:[#allocation2 + $0x60] sm:$0xf]
    %v7363 = vld [vmem:[#allocation2 + $0x64] sm:$0xf]
    %v7364 = vld [vmem:[#allocation2 + $0x68] sm:$0xf]
    %v7365 = vld [vmem:[#allocation2 + $0x6c] sm:$0xf]
    %v7366 = vld [vmem:[#allocation2 + $0x70] sm:$0xf]
    %v7367 = vld [vmem:[#allocation2 + $0x74] sm:$0xf]
    %v7368 = vld [vmem:[#allocation2 + $0x78] sm:$0xf]
    %v7369 = vld [vmem:[#allocation2 + $0x7c] sm:$0xf]
    %v7370 = vld [vmem:[#allocation2 + $0x80] sm:$0xf]
    %v7371 = vld [vmem:[#allocation2 + $0x84] sm:$0xf]
    %v7372 = vld [vmem:[#allocation2 + $0x88] sm:$0xf]
    %v7373 = vld [vmem:[#allocation2 + $0x8c] sm:$0xf]
    %v7374 = vld [vmem:[#allocation2 + $0x90] sm:$0xf]
    %v7375 = vld [vmem:[#allocation2 + $0x94] sm:$0xf]
    %v7376 = vld [vmem:[#allocation2 + $0x98] sm:$0xf]
    %v7377 = vld [vmem:[#allocation2 + $0x9c] sm:$0xf]
    %v7378 = vld [vmem:[#allocation2 + $0xa0] sm:$0xf]
    %v7379 = vld [vmem:[#allocation2 + $0xa4] sm:$0xf]
    %v7380 = vld [vmem:[#allocation2 + $0xa8] sm:$0xf]
    %v7381 = vld [vmem:[#allocation2 + $0xac] sm:$0xf]
    %v7382 = vld [vmem:[#allocation2 + $0xb0] sm:$0xf]
    %v7383 = vld [vmem:[#allocation2 + $0xb4] sm:$0xf]
    %v7384 = vld [vmem:[#allocation2 + $0xb8] sm:$0xf]
    %v7385 = vld [vmem:[#allocation2 + $0xbc] sm:$0xf]
    %v7386 = vld [vmem:[#allocation2 + $0xc0] sm:$0xf]
    %v7387 = vld [vmem:[#allocation2 + $0xc4] sm:$0xf]
    %v7388 = vld [vmem:[#allocation2 + $0xc8] sm:$0xf]
    %v7389 = vld [vmem:[#allocation2 + $0xcc] sm:$0xf]
    %v7390 = vld [vmem:[#allocation2 + $0xd0] sm:$0xf]
    %v7391 = vld [vmem:[#allocation2 + $0xd4] sm:$0xf]
    %v7392 = vld [vmem:[#allocation2 + $0xd8] sm:$0xf]
    %v7393 = vld [vmem:[#allocation2 + $0xdc] sm:$0xf]
    %v7394 = vld [vmem:[#allocation2 + $0xe0] sm:$0xf]
    %v7395 = vld [vmem:[#allocation2 + $0xe4] sm:$0xf]
    %v7396 = vld [vmem:[#allocation2 + $0xe8] sm:$0xf]
    %v7397 = vld [vmem:[#allocation2 + $0xec] sm:$0xf]
    %v7398 = vld [vmem:[#allocation2 + $0xf0] sm:$0xf]
    %v7399 = vld [vmem:[#allocation2 + $0xf4] sm:$0xf]
    %v7400 = vld [vmem:[#allocation2 + $0xf8] sm:$0xf]
    %v7401 = vld [vmem:[#allocation2 + $0xfc] sm:$0xf]
    %v7402 = vld [vmem:[#allocation2 + $0x100] sm:$0xf]
    %v7403 = vld [vmem:[#allocation2 + $0x104] sm:$0xf]
    %v7404 = vld [vmem:[#allocation2 + $0x108] sm:$0xf]
    %v7405 = vld [vmem:[#allocation2 + $0x10c] sm:$0xf]
    %v7406 = vld [vmem:[#allocation2 + $0x110] sm:$0xf]
    %v7407 = vld [vmem:[#allocation2 + $0x114] sm:$0xf]
    %v7408 = vld [vmem:[#allocation2 + $0x118] sm:$0xf]
    %v7409 = vld [vmem:[#allocation2 + $0x11c] sm:$0xf]
    %v7410 = vld [vmem:[#allocation2 + $0x120] sm:$0xf]
    %v7411 = vld [vmem:[#allocation2 + $0x124] sm:$0xf]
    %v7412 = vld [vmem:[#allocation2 + $0x128] sm:$0xf]
    %v7413 = vld [vmem:[#allocation2 + $0x12c] sm:$0xf]
    %v7414 = vld [vmem:[#allocation2 + $0x130] sm:$0xf]
    %v7415 = vld [vmem:[#allocation2 + $0x134] sm:$0xf]
    %v7416 = vld [vmem:[#allocation2 + $0x138] sm:$0xf]
    %v7417 = vld [vmem:[#allocation2 + $0x13c] sm:$0xf]
    %v7418 = vld [vmem:[#allocation2 + $0x140] sm:$0xf]
    %v7419 = vld [vmem:[#allocation2 + $0x144] sm:$0xf]
    %v7420 = vld [vmem:[#allocation2 + $0x148] sm:$0xf]
    %v7421 = vld [vmem:[#allocation2 + $0x14c] sm:$0xf]
    %v7422 = vld [vmem:[#allocation2 + $0x150] sm:$0xf]
    %v7423 = vld [vmem:[#allocation2 + $0x154] sm:$0xf]
    %v7424 = vld [vmem:[#allocation2 + $0x158] sm:$0xf]
    %v7425 = vld [vmem:[#allocation2 + $0x15c] sm:$0xf]
    %v7426 = vld [vmem:[#allocation2 + $0x160] sm:$0xf]
    %v7427 = vld [vmem:[#allocation2 + $0x164] sm:$0xf]
    %v7428 = vld [vmem:[#allocation2 + $0x168] sm:$0xf]
    %v7429 = vld [vmem:[#allocation2 + $0x16c] sm:$0xf]
    %v7430 = vld [vmem:[#allocation2 + $0x170] sm:$0xf]
    %v7431 = vld [vmem:[#allocation2 + $0x174] sm:$0xf]
    %v7432 = vld [vmem:[#allocation2 + $0x178] sm:$0xf]
    %v7433 = vld [vmem:[#allocation2 + $0x17c] sm:$0xf]
    %v7434 = vld [vmem:[#allocation2 + $0x180] sm:$0xf]
    %v7435 = vld [vmem:[#allocation2 + $0x184] sm:$0xf]
    %v7436 = vld [vmem:[#allocation2 + $0x188] sm:$0xf]
    %v7437 = vld [vmem:[#allocation2 + $0x18c] sm:$0xf]
    %v7438 = vld [vmem:[#allocation2 + $0x190] sm:$0xf]
    %v7439 = vld [vmem:[#allocation2 + $0x194] sm:$0xf]
    %v7440 = vld [vmem:[#allocation2 + $0x198] sm:$0xf]
    %v7441 = vld [vmem:[#allocation2 + $0x19c] sm:$0xf]
    %v7442 = vld [vmem:[#allocation2 + $0x1a0] sm:$0xf]
    %v7443 = vld [vmem:[#allocation2 + $0x1a4] sm:$0xf]
    %v7444 = vld [vmem:[#allocation2 + $0x1a8] sm:$0xf]
    %v7445 = vld [vmem:[#allocation2 + $0x1ac] sm:$0xf]
    %v7446 = vld [vmem:[#allocation2 + $0x1b0] sm:$0xf]
    %v7447 = vld [vmem:[#allocation2 + $0x1b4] sm:$0xf]
    %v7448 = vld [vmem:[#allocation2 + $0x1b8] sm:$0xf]
    %v7449 = vld [vmem:[#allocation2 + $0x1bc] sm:$0xf]
    %v7450 = vld [vmem:[#allocation2 + $0x1c0] sm:$0xf]
    %v7451 = vld [vmem:[#allocation2 + $0x1c4] sm:$0xf]
    %v7452 = vld [vmem:[#allocation2 + $0x1c8] sm:$0xf]
    %v7453 = vld [vmem:[#allocation2 + $0x1cc] sm:$0xf]
    %v7454 = vld [vmem:[#allocation2 + $0x1d0] sm:$0xf]
    %v7455 = vld [vmem:[#allocation2 + $0x1d4] sm:$0xf]
    %v7456 = vld [vmem:[#allocation2 + $0x1d8] sm:$0xf]
    %v7457 = vld [vmem:[#allocation2 + $0x1dc] sm:$0xf]
    %v7458 = vld [vmem:[#allocation2 + $0x1e0] sm:$0xf]
    %v7459 = vld [vmem:[#allocation2 + $0x1e4] sm:$0xf]
    %v7460 = vld [vmem:[#allocation2 + $0x1e8] sm:$0xf]
    %v7461 = vld [vmem:[#allocation2 + $0x1ec] sm:$0xf]
    %v7462 = vld [vmem:[#allocation2 + $0x1f0] sm:$0xf]
    %v7463 = vld [vmem:[#allocation2 + $0x1f4] sm:$0xf]
    %v7464 = vld [vmem:[#allocation2 + $0x1f8] sm:$0xf]
    %v7465 = vld [vmem:[#allocation2 + $0x1fc] sm:$0xf]
    %v7466 = vld [vmem:[#allocation2 + $0x200] sm:$0xf]
    %v7467 = vld [vmem:[#allocation2 + $0x204] sm:$0xf]
    %v7468 = vld [vmem:[#allocation2 + $0x208] sm:$0xf]
    %v7469 = vld [vmem:[#allocation2 + $0x20c] sm:$0xf]
    %v7470 = vld [vmem:[#allocation2 + $0x210] sm:$0xf]
    %v7471 = vld [vmem:[#allocation2 + $0x214] sm:$0xf]
    %v7472 = vld [vmem:[#allocation2 + $0x218] sm:$0xf]
    %v7473 = vld [vmem:[#allocation2 + $0x21c] sm:$0xf]
    %v7474 = vld [vmem:[#allocation2 + $0x220] sm:$0xf]
    %v7475 = vld [vmem:[#allocation2 + $0x224] sm:$0xf]
    %v7476 = vld [vmem:[#allocation2 + $0x228] sm:$0xf]
    %v7477 = vld [vmem:[#allocation2 + $0x22c] sm:$0xf]
    %v7478 = vld [vmem:[#allocation2 + $0x230] sm:$0xf]
    %v7479 = vld [vmem:[#allocation2 + $0x234] sm:$0xf]
    %v7480 = vld [vmem:[#allocation2 + $0x238] sm:$0xf]
    %v7481 = vld [vmem:[#allocation2 + $0x23c] sm:$0xf]
    %v7482 = vld [vmem:[#allocation2 + $0x240] sm:$0xf]
    %v7483 = vld [vmem:[#allocation2 + $0x244] sm:$0xf]
    %v7484 = vld [vmem:[#allocation2 + $0x248] sm:$0xf]
    %v7485 = vld [vmem:[#allocation2 + $0x24c] sm:$0xf]
    %v7486 = vld [vmem:[#allocation2 + $0x250] sm:$0xf]
    %v7487 = vld [vmem:[#allocation2 + $0x254] sm:$0xf]
    %v7488 = vld [vmem:[#allocation2 + $0x258] sm:$0xf]
    %v7489 = vld [vmem:[#allocation2 + $0x25c] sm:$0xf]
    %v7490 = vld [vmem:[#allocation2 + $0x260] sm:$0xf]
    %v7491 = vld [vmem:[#allocation2 + $0x264] sm:$0xf]
    %v7492 = vld [vmem:[#allocation2 + $0x268] sm:$0xf]
    %v7493 = vld [vmem:[#allocation2 + $0x26c] sm:$0xf]
    %v7494 = vld [vmem:[#allocation2 + $0x270] sm:$0xf]
    %v7495 = vld [vmem:[#allocation2 + $0x274] sm:$0xf]
    %v7496 = vld [vmem:[#allocation2 + $0x278] sm:$0xf]
    %v7497 = vld [vmem:[#allocation2 + $0x27c] sm:$0xf]
    %v7498 = vld [vmem:[#allocation2 + $0x280] sm:$0xf]
    %v7499 = vld [vmem:[#allocation2 + $0x284] sm:$0xf]
    %v7500 = vld [vmem:[#allocation2 + $0x288] sm:$0xf]
    %v7501 = vld [vmem:[#allocation2 + $0x28c] sm:$0xf]
    %v7502 = vld [vmem:[#allocation2 + $0x290] sm:$0xf]
    %v7503 = vld [vmem:[#allocation2 + $0x294] sm:$0xf]
    %v7504 = vld [vmem:[#allocation2 + $0x298] sm:$0xf]
    %v7505 = vld [vmem:[#allocation2 + $0x29c] sm:$0xf]
    %v7506 = vld [vmem:[#allocation2 + $0x2a0] sm:$0xf]
    %v7507 = vld [vmem:[#allocation2 + $0x2a4] sm:$0xf]
    %v7508 = vld [vmem:[#allocation2 + $0x2a8] sm:$0xf]
    %v7509 = vld [vmem:[#allocation2 + $0x2ac] sm:$0xf]
    %v7510 = vld [vmem:[#allocation2 + $0x2b0] sm:$0xf]
    %v7511 = vld [vmem:[#allocation2 + $0x2b4] sm:$0xf]
    %v7512 = vld [vmem:[#allocation2 + $0x2b8] sm:$0xf]
    %v7513 = vld [vmem:[#allocation2 + $0x2bc] sm:$0xf]
    %v7514 = vld [vmem:[#allocation2 + $0x2c0] sm:$0xf]
    %v7515 = vld [vmem:[#allocation2 + $0x2c4] sm:$0xf]
    %v7516 = vld [vmem:[#allocation2 + $0x2c8] sm:$0xf]
    %v7517 = vld [vmem:[#allocation2 + $0x2cc] sm:$0xf]
    %v7518 = vld [vmem:[#allocation2 + $0x2d0] sm:$0xf]
    %v7519 = vld [vmem:[#allocation2 + $0x2d4] sm:$0xf]
    %v7520 = vld [vmem:[#allocation2 + $0x2d8] sm:$0xf]
    %v7521 = vld [vmem:[#allocation2 + $0x2dc] sm:$0xf]
    %v7522 = vld [vmem:[#allocation2 + $0x2e0] sm:$0xf]
    %v7523 = vld [vmem:[#allocation2 + $0x2e4] sm:$0xf]
    %v7524 = vld [vmem:[#allocation2 + $0x2e8] sm:$0xf]
    %v7525 = vld [vmem:[#allocation2 + $0x2ec] sm:$0xf]
    %v7526 = vld [vmem:[#allocation2 + $0x2f0] sm:$0xf]
    %v7527 = vld [vmem:[#allocation2 + $0x2f4] sm:$0xf]
    %v7528 = vld [vmem:[#allocation2 + $0x2f8] sm:$0xf]
    %v7529 = vld [vmem:[#allocation2 + $0x2fc] sm:$0xf]
    %v7530 = vld [vmem:[#allocation2 + $0x300] sm:$0xf]
    %v7531 = vld [vmem:[#allocation2 + $0x304] sm:$0xf]
    %v7532 = vld [vmem:[#allocation2 + $0x308] sm:$0xf]
    %v7533 = vld [vmem:[#allocation2 + $0x30c] sm:$0xf]
    %v7534 = vld [vmem:[#allocation2 + $0x310] sm:$0xf]
    %v7535 = vld [vmem:[#allocation2 + $0x314] sm:$0xf]
    %v7536 = vld [vmem:[#allocation2 + $0x318] sm:$0xf]
    %v7537 = vld [vmem:[#allocation2 + $0x31c] sm:$0xf]
    %v7538 = vld [vmem:[#allocation2 + $0x320] sm:$0xf]
    %v7539 = vld [vmem:[#allocation2 + $0x324] sm:$0xf]
    %v7540 = vld [vmem:[#allocation2 + $0x328] sm:$0xf]
    %v7541 = vld [vmem:[#allocation2 + $0x32c] sm:$0xf]
    %v7542 = vld [vmem:[#allocation2 + $0x330] sm:$0xf]
    %v7543 = vld [vmem:[#allocation2 + $0x334] sm:$0xf]
    %v7544 = vld [vmem:[#allocation2 + $0x338] sm:$0xf]
    %v7545 = vld [vmem:[#allocation2 + $0x33c] sm:$0xf]
    %v7546 = vld [vmem:[#allocation2 + $0x340] sm:$0xf]
    %v7547 = vld [vmem:[#allocation2 + $0x344] sm:$0xf]
    %v7548 = vld [vmem:[#allocation2 + $0x348] sm:$0xf]
    %v7549 = vld [vmem:[#allocation2 + $0x34c] sm:$0xf]
    %v7550 = vld [vmem:[#allocation2 + $0x350] sm:$0xf]
    %v7551 = vld [vmem:[#allocation2 + $0x354] sm:$0xf]
    %v7552 = vld [vmem:[#allocation2 + $0x358] sm:$0xf]
    %v7553 = vld [vmem:[#allocation2 + $0x35c] sm:$0xf]
    %v7554 = vld [vmem:[#allocation2 + $0x360] sm:$0xf]
    %v7555 = vld [vmem:[#allocation2 + $0x364] sm:$0xf]
    %v7556 = vld [vmem:[#allocation2 + $0x368] sm:$0xf]
    %v7557 = vld [vmem:[#allocation2 + $0x36c] sm:$0xf]
    %v7558 = vld [vmem:[#allocation2 + $0x370] sm:$0xf]
    %v7559 = vld [vmem:[#allocation2 + $0x374] sm:$0xf]
    %v7560 = vld [vmem:[#allocation2 + $0x378] sm:$0xf]
    %v7561 = vld [vmem:[#allocation2 + $0x37c] sm:$0xf]
    %v7562 = vld [vmem:[#allocation2 + $0x380] sm:$0xf]
    %v7563 = vld [vmem:[#allocation2 + $0x384] sm:$0xf]
    %v7564 = vld [vmem:[#allocation2 + $0x388] sm:$0xf]
    %v7565 = vld [vmem:[#allocation2 + $0x38c] sm:$0xf]
    %v7566 = vld [vmem:[#allocation2 + $0x390] sm:$0xf]
    %v7567 = vld [vmem:[#allocation2 + $0x394] sm:$0xf]
    %v7568 = vld [vmem:[#allocation2 + $0x398] sm:$0xf]
    %v7569 = vld [vmem:[#allocation2 + $0x39c] sm:$0xf]
    %v7570 = vld [vmem:[#allocation2 + $0x3a0] sm:$0xf]
    %v7571 = vld [vmem:[#allocation2 + $0x3a4] sm:$0xf]
    %v7572 = vld [vmem:[#allocation2 + $0x3a8] sm:$0xf]
    %v7573 = vld [vmem:[#allocation2 + $0x3ac] sm:$0xf]
    %v7574 = vld [vmem:[#allocation2 + $0x3b0] sm:$0xf]
    %v7575 = vld [vmem:[#allocation2 + $0x3b4] sm:$0xf]
    %v7576 = vld [vmem:[#allocation2 + $0x3b8] sm:$0xf]
    %v7577 = vld [vmem:[#allocation2 + $0x3bc] sm:$0xf]
    %v7578 = vld [vmem:[#allocation2 + $0x3c0] sm:$0xf]
    %v7579 = vld [vmem:[#allocation2 + $0x3c4] sm:$0xf]
    %v7580 = vld [vmem:[#allocation2 + $0x3c8] sm:$0xf]
    %v7581 = vld [vmem:[#allocation2 + $0x3cc] sm:$0xf]
    %v7582 = vld [vmem:[#allocation2 + $0x3d0] sm:$0xf]
    %v7583 = vld [vmem:[#allocation2 + $0x3d4] sm:$0xf]
    %v7584 = vld [vmem:[#allocation2 + $0x3d8] sm:$0xf]
    %v7585 = vld [vmem:[#allocation2 + $0x3dc] sm:$0xf]
    %v7586 = vld [vmem:[#allocation2 + $0x3e0] sm:$0xf]
    %v7587 = vld [vmem:[#allocation2 + $0x3e4] sm:$0xf]
    %v7588 = vld [vmem:[#allocation2 + $0x3e8] sm:$0xf]
    %v7589 = vld [vmem:[#allocation2 + $0x3ec] sm:$0xf]
    %v7590 = vld [vmem:[#allocation2 + $0x3f0] sm:$0xf]
    %v7591 = vld [vmem:[#allocation2 + $0x3f4] sm:$0xf]
    %v7592 = vld [vmem:[#allocation2 + $0x3f8] sm:$0xf]
    %v7593 = vld [vmem:[#allocation2 + $0x3fc] sm:$0xf]
    %v7594 = vld [vmem:[#allocation2 + $0x400] sm:$0xf]
    %v7595 = vld [vmem:[#allocation2 + $0x404] sm:$0xf]
    %v7596 = vld [vmem:[#allocation2 + $0x408] sm:$0xf]
    %v7597 = vld [vmem:[#allocation2 + $0x40c] sm:$0xf]
    %v7598 = vld [vmem:[#allocation2 + $0x410] sm:$0xf]
    %v7599 = vld [vmem:[#allocation2 + $0x414] sm:$0xf]
    %v7600 = vld [vmem:[#allocation2 + $0x418] sm:$0xf]
    %v7601 = vld [vmem:[#allocation2 + $0x41c] sm:$0xf]
    %v7602 = vld [vmem:[#allocation2 + $0x420] sm:$0xf]
    %v7603 = vld [vmem:[#allocation2 + $0x424] sm:$0xf]
    %v7604 = vld [vmem:[#allocation2 + $0x428] sm:$0xf]
    %v7605 = vld [vmem:[#allocation2 + $0x42c] sm:$0xf]
    %v7606 = vld [vmem:[#allocation2 + $0x430] sm:$0xf]
    %v7607 = vld [vmem:[#allocation2 + $0x434] sm:$0xf]
    %v7608 = vld [vmem:[#allocation2 + $0x438] sm:$0xf]
    %v7609 = vld [vmem:[#allocation2 + $0x43c] sm:$0xf]
    %v7610 = vld [vmem:[#allocation2 + $0x440] sm:$0xf]
    %v7611 = vld [vmem:[#allocation2 + $0x444] sm:$0xf]
    %v7612 = vld [vmem:[#allocation2 + $0x448] sm:$0xf]
    %v7613 = vld [vmem:[#allocation2 + $0x44c] sm:$0xf]
    %v7614 = vld [vmem:[#allocation2 + $0x450] sm:$0xf]
    %v7615 = vld [vmem:[#allocation2 + $0x454] sm:$0xf]
    %v7616 = vld [vmem:[#allocation2 + $0x458] sm:$0xf]
    %v7617 = vld [vmem:[#allocation2 + $0x45c] sm:$0xf]
    %v7618 = vld [vmem:[#allocation2 + $0x460] sm:$0xf]
    %v7619 = vld [vmem:[#allocation2 + $0x464] sm:$0xf]
    %v7620 = vld [vmem:[#allocation2 + $0x468] sm:$0xf]
    %v7621 = vld [vmem:[#allocation2 + $0x46c] sm:$0xf]
    %v7622 = vld [vmem:[#allocation2 + $0x470] sm:$0xf]
    %v7623 = vld [vmem:[#allocation2 + $0x474] sm:$0xf]
    %v7624 = vld [vmem:[#allocation2 + $0x478] sm:$0xf]
    %v7625 = vld [vmem:[#allocation2 + $0x47c] sm:$0xf]
    %v7626 = vld [vmem:[#allocation2 + $0x480] sm:$0xf]
    %v7627 = vld [vmem:[#allocation2 + $0x484] sm:$0xf]
    %v7628 = vld [vmem:[#allocation2 + $0x488] sm:$0xf]
    %v7629 = vld [vmem:[#allocation2 + $0x48c] sm:$0xf]
    %v7630 = vld [vmem:[#allocation2 + $0x490] sm:$0xf]
    %v7631 = vld [vmem:[#allocation2 + $0x494] sm:$0xf]
    %v7632 = vld [vmem:[#allocation2 + $0x498] sm:$0xf]
    %v7633 = vld [vmem:[#allocation2 + $0x49c] sm:$0xf]
    %v7634 = vld [vmem:[#allocation2 + $0x4a0] sm:$0xf]
    %v7635 = vld [vmem:[#allocation2 + $0x4a4] sm:$0xf]
    %v7636 = vld [vmem:[#allocation2 + $0x4a8] sm:$0xf]
    %v7637 = vld [vmem:[#allocation2 + $0x4ac] sm:$0xf]
    %v7638 = vld [vmem:[#allocation2 + $0x4b0] sm:$0xf]
    %v7639 = vld [vmem:[#allocation2 + $0x4b4] sm:$0xf]
    %v7640 = vld [vmem:[#allocation2 + $0x4b8] sm:$0xf]
    %v7641 = vld [vmem:[#allocation2 + $0x4bc] sm:$0xf]
    %v7642 = vld [vmem:[#allocation2 + $0x4c0] sm:$0xf]
    %v7643 = vld [vmem:[#allocation2 + $0x4c4] sm:$0xf]
    %v7644 = vld [vmem:[#allocation2 + $0x4c8] sm:$0xf]
    %v7645 = vld [vmem:[#allocation2 + $0x4cc] sm:$0xf]
    %v7646 = vld [vmem:[#allocation2 + $0x4d0] sm:$0xf]
    %v7647 = vld [vmem:[#allocation2 + $0x4d4] sm:$0xf]
    %v7648 = vld [vmem:[#allocation2 + $0x4d8] sm:$0xf]
    %v7649 = vld [vmem:[#allocation2 + $0x4dc] sm:$0xf]
    %v7650 = vld [vmem:[#allocation2 + $0x4e0] sm:$0xf]
    %v7651 = vld [vmem:[#allocation2 + $0x4e4] sm:$0xf]
    %v7652 = vld [vmem:[#allocation2 + $0x4e8] sm:$0xf]
    %v7653 = vld [vmem:[#allocation2 + $0x4ec] sm:$0xf]
    %v7654 = vld [vmem:[#allocation2 + $0x4f0] sm:$0xf]
    %v7655 = vld [vmem:[#allocation2 + $0x4f4] sm:$0xf]
    %v7656 = vld [vmem:[#allocation2 + $0x4f8] sm:$0xf]
    %v7657 = vld [vmem:[#allocation2 + $0x4fc] sm:$0xf]
    %v7658 = vld [vmem:[#allocation2 + $0x500] sm:$0xf]
    %v7659 = vld [vmem:[#allocation2 + $0x504] sm:$0xf]
    %v7660 = vld [vmem:[#allocation2 + $0x508] sm:$0xf]
    %v7661 = vld [vmem:[#allocation2 + $0x50c] sm:$0xf]
    %v7662 = vld [vmem:[#allocation2 + $0x510] sm:$0xf]
    %v7663 = vld [vmem:[#allocation2 + $0x514] sm:$0xf]
    %v7664 = vld [vmem:[#allocation2 + $0x518] sm:$0xf]
    %v7665 = vld [vmem:[#allocation2 + $0x51c] sm:$0xf]
    %v7666 = vld [vmem:[#allocation2 + $0x520] sm:$0xf]
    %v7667 = vld [vmem:[#allocation2 + $0x524] sm:$0xf]
    %v7668 = vld [vmem:[#allocation2 + $0x528] sm:$0xf]
    %v7669 = vld [vmem:[#allocation2 + $0x52c] sm:$0xf]
    %v7670 = vld [vmem:[#allocation2 + $0x530] sm:$0xf]
    %v7671 = vld [vmem:[#allocation2 + $0x534] sm:$0xf]
    %v7672 = vld [vmem:[#allocation2 + $0x538] sm:$0xf]
    %v7673 = vld [vmem:[#allocation2 + $0x53c] sm:$0xf]
    %v7674 = vld [vmem:[#allocation2 + $0x540] sm:$0xf]
    %v7675 = vld [vmem:[#allocation2 + $0x544] sm:$0xf]
    %v7676 = vld [vmem:[#allocation2 + $0x548] sm:$0xf]
    %v7677 = vld [vmem:[#allocation2 + $0x54c] sm:$0xf]
    %v7678 = vld [vmem:[#allocation2 + $0x550] sm:$0xf]
    %v7679 = vld [vmem:[#allocation2 + $0x554] sm:$0xf]
    %v7680 = vld [vmem:[#allocation2 + $0x558] sm:$0xf]
    %v7681 = vld [vmem:[#allocation2 + $0x55c] sm:$0xf]
    %v7682 = vld [vmem:[#allocation2 + $0x560] sm:$0xf]
    %v7683 = vld [vmem:[#allocation2 + $0x564] sm:$0xf]
    %v7684 = vld [vmem:[#allocation2 + $0x568] sm:$0xf]
    %v7685 = vld [vmem:[#allocation2 + $0x56c] sm:$0xf]
    %v7686 = vld [vmem:[#allocation2 + $0x570] sm:$0xf]
    %v7687 = vld [vmem:[#allocation2 + $0x574] sm:$0xf]
    %v7688 = vld [vmem:[#allocation2 + $0x578] sm:$0xf]
    %v7689 = vld [vmem:[#allocation2 + $0x57c] sm:$0xf]
    %v7690 = vld [vmem:[#allocation2 + $0x580] sm:$0xf]
    %v7691 = vld [vmem:[#allocation2 + $0x584] sm:$0xf]
    %v7692 = vld [vmem:[#allocation2 + $0x588] sm:$0xf]
    %v7693 = vld [vmem:[#allocation2 + $0x58c] sm:$0xf]
    %v7694 = vld [vmem:[#allocation2 + $0x590] sm:$0xf]
    %v7695 = vld [vmem:[#allocation2 + $0x594] sm:$0xf]
    %v7696 = vld [vmem:[#allocation2 + $0x598] sm:$0xf]
    %v7697 = vld [vmem:[#allocation2 + $0x59c] sm:$0xf]
    %v7698 = vld [vmem:[#allocation2 + $0x5a0] sm:$0xf]
    %v7699 = vld [vmem:[#allocation2 + $0x5a4] sm:$0xf]
    %v7700 = vld [vmem:[#allocation2 + $0x5a8] sm:$0xf]
    %v7701 = vld [vmem:[#allocation2 + $0x5ac] sm:$0xf]
    %v7702 = vld [vmem:[#allocation2 + $0x5b0] sm:$0xf]
    %v7703 = vld [vmem:[#allocation2 + $0x5b4] sm:$0xf]
    %v7704 = vld [vmem:[#allocation2 + $0x5b8] sm:$0xf]
    %v7705 = vld [vmem:[#allocation2 + $0x5bc] sm:$0xf]
    %v7706 = vld [vmem:[#allocation2 + $0x5c0] sm:$0xf]
    %v7707 = vld [vmem:[#allocation2 + $0x5c4] sm:$0xf]
    %v7708 = vld [vmem:[#allocation2 + $0x5c8] sm:$0xf]
    %v7709 = vld [vmem:[#allocation2 + $0x5cc] sm:$0xf]
    %v7710 = vld [vmem:[#allocation2 + $0x5d0] sm:$0xf]
    %v7711 = vld [vmem:[#allocation2 + $0x5d4] sm:$0xf]
    %v7712 = vld [vmem:[#allocation2 + $0x5d8] sm:$0xf]
    %v7713 = vld [vmem:[#allocation2 + $0x5dc] sm:$0xf]
    %v7714 = vld [vmem:[#allocation2 + $0x5e0] sm:$0xf]
    %v7715 = vld [vmem:[#allocation2 + $0x5e4] sm:$0xf]
    %v7716 = vld [vmem:[#allocation2 + $0x5e8] sm:$0xf]
    %v7717 = vld [vmem:[#allocation2 + $0x5ec] sm:$0xf]
    %v7718 = vld [vmem:[#allocation2 + $0x5f0] sm:$0xf]
    %v7719 = vld [vmem:[#allocation2 + $0x5f4] sm:$0xf]
    %v7720 = vld [vmem:[#allocation2 + $0x5f8] sm:$0xf]
    %v7721 = vld [vmem:[#allocation2 + $0x5fc] sm:$0xf]
    %v7722 = vld [vmem:[#allocation2 + $0x600] sm:$0xf]
    %v7723 = vld [vmem:[#allocation2 + $0x604] sm:$0xf]
    %v7724 = vld [vmem:[#allocation2 + $0x608] sm:$0xf]
    %v7725 = vld [vmem:[#allocation2 + $0x60c] sm:$0xf]
    %v7726 = vld [vmem:[#allocation2 + $0x610] sm:$0xf]
    %v7727 = vld [vmem:[#allocation2 + $0x614] sm:$0xf]
    %v7728 = vld [vmem:[#allocation2 + $0x618] sm:$0xf]
    %v7729 = vld [vmem:[#allocation2 + $0x61c] sm:$0xf]
    %v7730 = vld [vmem:[#allocation2 + $0x620] sm:$0xf]
    %v7731 = vld [vmem:[#allocation2 + $0x624] sm:$0xf]
    %v7732 = vld [vmem:[#allocation2 + $0x628] sm:$0xf]
    %v7733 = vld [vmem:[#allocation2 + $0x62c] sm:$0xf]
    %v7734 = vld [vmem:[#allocation2 + $0x630] sm:$0xf]
    %v7735 = vld [vmem:[#allocation2 + $0x634] sm:$0xf]
    %v7736 = vld [vmem:[#allocation2 + $0x638] sm:$0xf]
    %v7737 = vld [vmem:[#allocation2 + $0x63c] sm:$0xf]
    %v7738 = vld [vmem:[#allocation2 + $0x640] sm:$0xf]
    %v7739 = vld [vmem:[#allocation2 + $0x644] sm:$0xf]
    %v7740 = vld [vmem:[#allocation2 + $0x648] sm:$0xf]
    %v7741 = vld [vmem:[#allocation2 + $0x64c] sm:$0xf]
    %v7742 = vld [vmem:[#allocation2 + $0x650] sm:$0xf]
    %v7743 = vld [vmem:[#allocation2 + $0x654] sm:$0xf]
    %v7744 = vld [vmem:[#allocation2 + $0x658] sm:$0xf]
    %v7745 = vld [vmem:[#allocation2 + $0x65c] sm:$0xf]
    %v7746 = vld [vmem:[#allocation2 + $0x660] sm:$0xf]
    %v7747 = vld [vmem:[#allocation2 + $0x664] sm:$0xf]
    %v7748 = vld [vmem:[#allocation2 + $0x668] sm:$0xf]
    %v7749 = vld [vmem:[#allocation2 + $0x66c] sm:$0xf]
    %v7750 = vld [vmem:[#allocation2 + $0x670] sm:$0xf]
    %v7751 = vld [vmem:[#allocation2 + $0x674] sm:$0xf]
    %v7752 = vld [vmem:[#allocation2 + $0x678] sm:$0xf]
    %v7753 = vld [vmem:[#allocation2 + $0x67c] sm:$0xf]
    %v7754 = vld [vmem:[#allocation2 + $0x680] sm:$0xf]
    %v7755 = vld [vmem:[#allocation2 + $0x684] sm:$0xf]
    %v7756 = vld [vmem:[#allocation2 + $0x688] sm:$0xf]
    %v7757 = vld [vmem:[#allocation2 + $0x68c] sm:$0xf]
    %v7758 = vld [vmem:[#allocation2 + $0x690] sm:$0xf]
    %v7759 = vld [vmem:[#allocation2 + $0x694] sm:$0xf]
    %v7760 = vld [vmem:[#allocation2 + $0x698] sm:$0xf]
    %v7761 = vld [vmem:[#allocation2 + $0x69c] sm:$0xf]
    %v7762 = vld [vmem:[#allocation2 + $0x6a0] sm:$0xf]
    %v7763 = vld [vmem:[#allocation2 + $0x6a4] sm:$0xf]
    %v7764 = vld [vmem:[#allocation2 + $0x6a8] sm:$0xf]
    %v7765 = vld [vmem:[#allocation2 + $0x6ac] sm:$0xf]
    %v7766 = vld [vmem:[#allocation2 + $0x6b0] sm:$0xf]
    %v7767 = vld [vmem:[#allocation2 + $0x6b4] sm:$0xf]
    %v7768 = vld [vmem:[#allocation2 + $0x6b8] sm:$0xf]
    %v7769 = vld [vmem:[#allocation2 + $0x6bc] sm:$0xf]
    %v7770 = vld [vmem:[#allocation2 + $0x6c0] sm:$0xf]
    %v7771 = vld [vmem:[#allocation2 + $0x6c4] sm:$0xf]
    %v7772 = vld [vmem:[#allocation2 + $0x6c8] sm:$0xf]
    %v7773 = vld [vmem:[#allocation2 + $0x6cc] sm:$0xf]
    %v7774 = vld [vmem:[#allocation2 + $0x6d0] sm:$0xf]
    %v7775 = vld [vmem:[#allocation2 + $0x6d4] sm:$0xf]
    %v7776 = vld [vmem:[#allocation2 + $0x6d8] sm:$0xf]
    %v7777 = vld [vmem:[#allocation2 + $0x6dc] sm:$0xf]
    %v7778 = vld [vmem:[#allocation2 + $0x6e0] sm:$0xf]
    %v7779 = vld [vmem:[#allocation2 + $0x6e4] sm:$0xf]
    %v7780 = vld [vmem:[#allocation2 + $0x6e8] sm:$0xf]
    %v7781 = vld [vmem:[#allocation2 + $0x6ec] sm:$0xf]
    %v7782 = vld [vmem:[#allocation2 + $0x6f0] sm:$0xf]
    %v7783 = vld [vmem:[#allocation2 + $0x6f4] sm:$0xf]
    %v7784 = vld [vmem:[#allocation2 + $0x6f8] sm:$0xf]
    %v7785 = vld [vmem:[#allocation2 + $0x6fc] sm:$0xf]
    %v7786 = vld [vmem:[#allocation2 + $0x700] sm:$0xf]
    %v7787 = vld [vmem:[#allocation2 + $0x704] sm:$0xf]
    %v7788 = vld [vmem:[#allocation2 + $0x708] sm:$0xf]
    %v7789 = vld [vmem:[#allocation2 + $0x70c] sm:$0xf]
    %v7790 = vld [vmem:[#allocation2 + $0x710] sm:$0xf]
    %v7791 = vld [vmem:[#allocation2 + $0x714] sm:$0xf]
    %v7792 = vld [vmem:[#allocation2 + $0x718] sm:$0xf]
    %v7793 = vld [vmem:[#allocation2 + $0x71c] sm:$0xf]
    %v7794 = vld [vmem:[#allocation2 + $0x720] sm:$0xf]
    %v7795 = vld [vmem:[#allocation2 + $0x724] sm:$0xf]
    %v7796 = vld [vmem:[#allocation2 + $0x728] sm:$0xf]
    %v7797 = vld [vmem:[#allocation2 + $0x72c] sm:$0xf]
    %v7798 = vld [vmem:[#allocation2 + $0x730] sm:$0xf]
    %v7799 = vld [vmem:[#allocation2 + $0x734] sm:$0xf]
    %v7800 = vld [vmem:[#allocation2 + $0x738] sm:$0xf]
    %v7801 = vld [vmem:[#allocation2 + $0x73c] sm:$0xf]
    %v7802 = vld [vmem:[#allocation2 + $0x740] sm:$0xf]
    %v7803 = vld [vmem:[#allocation2 + $0x744] sm:$0xf]
    %v7804 = vld [vmem:[#allocation2 + $0x748] sm:$0xf]
    %v7805 = vld [vmem:[#allocation2 + $0x74c] sm:$0xf]
    %v7806 = vld [vmem:[#allocation2 + $0x750] sm:$0xf]
    %v7807 = vld [vmem:[#allocation2 + $0x754] sm:$0xf]
    %v7808 = vld [vmem:[#allocation2 + $0x758] sm:$0xf]
    %v7809 = vld [vmem:[#allocation2 + $0x75c] sm:$0xf]
    %v7810 = vld [vmem:[#allocation2 + $0x760] sm:$0xf]
    %v7811 = vld [vmem:[#allocation2 + $0x764] sm:$0xf]
    %v7812 = vld [vmem:[#allocation2 + $0x768] sm:$0xf]
    %v7813 = vld [vmem:[#allocation2 + $0x76c] sm:$0xf]
    %v7814 = vld [vmem:[#allocation2 + $0x770] sm:$0xf]
    %v7815 = vld [vmem:[#allocation2 + $0x774] sm:$0xf]
    %v7816 = vld [vmem:[#allocation2 + $0x778] sm:$0xf]
    %v7817 = vld [vmem:[#allocation2 + $0x77c] sm:$0xf]
    %v7818 = vld [vmem:[#allocation2 + $0x780] sm:$0xf]
    %v7819 = vld [vmem:[#allocation2 + $0x784] sm:$0xf]
    %v7820 = vld [vmem:[#allocation2 + $0x788] sm:$0xf]
    %v7821 = vld [vmem:[#allocation2 + $0x78c] sm:$0xf]
    %v7822 = vld [vmem:[#allocation2 + $0x790] sm:$0xf]
    %v7823 = vld [vmem:[#allocation2 + $0x794] sm:$0xf]
    %v7824 = vld [vmem:[#allocation2 + $0x798] sm:$0xf]
    %v7825 = vld [vmem:[#allocation2 + $0x79c] sm:$0xf]
    %v7826 = vld [vmem:[#allocation2 + $0x7a0] sm:$0xf]
    %v7827 = vld [vmem:[#allocation2 + $0x7a4] sm:$0xf]
    %v7828 = vld [vmem:[#allocation2 + $0x7a8] sm:$0xf]
    %v7829 = vld [vmem:[#allocation2 + $0x7ac] sm:$0xf]
    %v7830 = vld [vmem:[#allocation2 + $0x7b0] sm:$0xf]
    %v7831 = vld [vmem:[#allocation2 + $0x7b4] sm:$0xf]
    %v7832 = vld [vmem:[#allocation2 + $0x7b8] sm:$0xf]
    %v7833 = vld [vmem:[#allocation2 + $0x7bc] sm:$0xf]
    %v7834 = vld [vmem:[#allocation2 + $0x7c0] sm:$0xf]
    %v7835 = vld [vmem:[#allocation2 + $0x7c4] sm:$0xf]
    %v7836 = vld [vmem:[#allocation2 + $0x7c8] sm:$0xf]
    %v7837 = vld [vmem:[#allocation2 + $0x7cc] sm:$0xf]
    %v7838 = vld [vmem:[#allocation2 + $0x7d0] sm:$0xf]
    %v7839 = vld [vmem:[#allocation2 + $0x7d4] sm:$0xf]
    %v7840 = vld [vmem:[#allocation2 + $0x7d8] sm:$0xf]
    %v7841 = vld [vmem:[#allocation2 + $0x7dc] sm:$0xf]
    %v7842 = vld [vmem:[#allocation2 + $0x7e0] sm:$0xf]
    %v7843 = vld [vmem:[#allocation2 + $0x7e4] sm:$0xf]
    %v7844 = vld [vmem:[#allocation2 + $0x7e8] sm:$0xf]
    %v7845 = vld [vmem:[#allocation2 + $0x7ec] sm:$0xf]
    %v7846 = vld [vmem:[#allocation2 + $0x7f0] sm:$0xf]
    %v7847 = vld [vmem:[#allocation2 + $0x7f4] sm:$0xf]
    %v7848 = vld [vmem:[#allocation2 + $0x7f8] sm:$0xf]
    %v7849 = vld [vmem:[#allocation2 + $0x7fc] sm:$0xf]
    %v7858 = vunpack.c.l.b16 %v7346
    %v7859 = vunpack.c.l.b16 %v7347
    %v7860 = vunpack.c.l.b16 %v7348
    %v7861 = vunpack.c.l.b16 %v7349
    %v7862 = vunpack.c.l.b16 %v7350
    %v7863 = vunpack.c.l.b16 %v7351
    %v7864 = vunpack.c.l.b16 %v7352
    %v7865 = vunpack.c.l.b16 %v7353
    %v7866 = vpack.c.b16 %v7859, %v7858
    %v7867 = vpack.c.b16 %v7861, %v7860
    %v7868 = vpack.c.b16 %v7863, %v7862
    %v7869 = vpack.c.b16 %v7865, %v7864
    %v7875 = vsel %vm4306, %v7275, 0
    %7877 = vmatprep.subr.bf16.mxu0 0
    %7878 = vmatpush1.bf16.msra.mxu0 %v7866
    %7879 = vmatprep.subr.bf16.mxu0 0
    %7880 = vmatpush1.bf16.msra.mxu0 %v7867
    %7881 = vmatprep.subr.bf16.mxu0 0
    %7882 = vmatpush1.bf16.msra.mxu0 %v7868
    %7883 = vmatprep.subr.bf16.mxu0 0
    %7884 = vmatpush1.bf16.msra.mxu0 %v7869
    %7885 = vmatprep.subr.bf16.mxu0 0
    %7886 = vmatpush1.bf16.msra.mxu0 0
    %7887 = vmatprep.subr.bf16.mxu0 0
    %7888 = vmatpush1.bf16.msra.mxu0 0
    %7889 = vmatprep.subr.bf16.mxu0 0
    %7890 = vmatpush1.bf16.msra.mxu0 0
    %7891 = vmatprep.subr.bf16.mxu0 0
    %7892 = vmatpush1.bf16.msra.mxu0 0
    %7893 = vmatprep.subr.bf16.mxu0 0
    %7894 = vmatpush1.bf16.msra.mxu0 0
    %7895 = vmatprep.subr.bf16.mxu0 0
    %7896 = vmatpush1.bf16.msra.mxu0 0
    %7897 = vmatprep.subr.bf16.mxu0 0
    %7898 = vmatpush1.bf16.msra.mxu0 0
    %7899 = vmatprep.subr.bf16.mxu0 0
    %7900 = vmatpush1.bf16.msra.mxu0 0
    %7901 = vmatprep.subr.bf16.mxu0 0
    %7902 = vmatpush1.bf16.msra.mxu0 0
    %7903 = vmatprep.subr.bf16.mxu0 0
    %7904 = vmatpush1.bf16.msra.mxu0 0
    %7905 = vmatprep.subr.bf16.mxu0 0
    %7906 = vmatpush1.bf16.msra.mxu0 0
    %7907 = vmatprep.subr.bf16.mxu0 0
    %7908 = vmatpush1.bf16.msra.mxu0 0
    %7909 = vmatprep.mubr.bf16.mxu0 0
    %7910 = vmatmul.mubr.bf16.gmra.mrb[0].mxu0 %v7875
    %v7911 = vpop.f32.mrb[0].mxu0
    %v7912 = vadd.f32 0.0, %v7911
    %v7913 = vpop.f32.mrb[0].mxu0
    %v7914 = vpop.f32.mrb[0].mxu0
    %v7915 = vpop.f32.mrb[0].mxu0
    %7916 = vdwg.mxu0
    %v7925 = vunpack.c.l.b16 %v7338
    %v7926 = vunpack.c.l.b16 %v7339
    %v7927 = vunpack.c.l.b16 %v7340
    %v7928 = vunpack.c.l.b16 %v7341
    %v7929 = vunpack.c.l.b16 %v7342
    %v7930 = vunpack.c.l.b16 %v7343
    %v7931 = vunpack.c.l.b16 %v7344
    %v7932 = vunpack.c.l.b16 %v7345
    %v7933 = vpack.c.b16 %v7926, %v7925
    %v7934 = vpack.c.b16 %v7928, %v7927
    %v7935 = vpack.c.b16 %v7930, %v7929
    %v7936 = vpack.c.b16 %v7932, %v7931
    %v7942 = vsel %vm4306, %v7274, 0
    %7944 = vmatprep.subr.bf16.mxu0 0
    %7945 = vmatpush1.bf16.msra.mxu0 %v7933
    %7946 = vmatprep.subr.bf16.mxu0 0
    %7947 = vmatpush1.bf16.msra.mxu0 %v7934
    %7948 = vmatprep.subr.bf16.mxu0 0
    %7949 = vmatpush1.bf16.msra.mxu0 %v7935
    %7950 = vmatprep.subr.bf16.mxu0 0
    %7951 = vmatpush1.bf16.msra.mxu0 %v7936
    %7952 = vmatprep.subr.bf16.mxu0 0
    %7953 = vmatpush1.bf16.msra.mxu0 0
    %7954 = vmatprep.subr.bf16.mxu0 0
    %7955 = vmatpush1.bf16.msra.mxu0 0
    %7956 = vmatprep.subr.bf16.mxu0 0
    %7957 = vmatpush1.bf16.msra.mxu0 0
    %7958 = vmatprep.subr.bf16.mxu0 0
    %7959 = vmatpush1.bf16.msra.mxu0 0
    %7960 = vmatprep.subr.bf16.mxu0 0
    %7961 = vmatpush1.bf16.msra.mxu0 0
    %7962 = vmatprep.subr.bf16.mxu0 0
    %7963 = vmatpush1.bf16.msra.mxu0 0
    %7964 = vmatprep.subr.bf16.mxu0 0
    %7965 = vmatpush1.bf16.msra.mxu0 0
    %7966 = vmatprep.subr.bf16.mxu0 0
    %7967 = vmatpush1.bf16.msra.mxu0 0
    %7968 = vmatprep.subr.bf16.mxu0 0
    %7969 = vmatpush1.bf16.msra.mxu0 0
    %7970 = vmatprep.subr.bf16.mxu0 0
    %7971 = vmatpush1.bf16.msra.mxu0 0
    %7972 = vmatprep.subr.bf16.mxu0 0
    %7973 = vmatpush1.bf16.msra.mxu0 0
    %7974 = vmatprep.subr.bf16.mxu0 0
    %7975 = vmatpush1.bf16.msra.mxu0 0
    %7976 = vmatprep.mubr.bf16.mxu0 0
    %7977 = vmatmul.mubr.bf16.gmra.mrb[0].mxu0 %v7942
    %v7978 = vpop.f32.mrb[0].mxu0
    %v7979 = vadd.f32 %v7912, %v7978
    %v7980 = vpop.f32.mrb[0].mxu0
    %v7981 = vpop.f32.mrb[0].mxu0
    %v7982 = vpop.f32.mrb[0].mxu0
    %7983 = vdwg.mxu0
    %v7992 = vunpack.c.l.b16 %v7354
    %v7993 = vunpack.c.l.b16 %v7355
    %v7994 = vunpack.c.l.b16 %v7356
    %v7995 = vunpack.c.l.b16 %v7357
    %v7996 = vunpack.c.l.b16 %v7358
    %v7997 = vunpack.c.l.b16 %v7359
    %v7998 = vunpack.c.l.b16 %v7360
    %v7999 = vunpack.c.l.b16 %v7361
    %v8000 = vpack.c.b16 %v7993, %v7992
    %v8001 = vpack.c.b16 %v7995, %v7994
    %v8002 = vpack.c.b16 %v7997, %v7996
    %v8003 = vpack.c.b16 %v7999, %v7998
    %v8009 = vsel %vm4306, %v7276, 0
    %8011 = vmatprep.subr.bf16.mxu0 0
    %8012 = vmatpush1.bf16.msra.mxu0 %v8000
    %8013 = vmatprep.subr.bf16.mxu0 0
    %8014 = vmatpush1.bf16.msra.mxu0 %v8001
    %8015 = vmatprep.subr.bf16.mxu0 0
    %8016 = vmatpush1.bf16.msra.mxu0 %v8002
    %8017 = vmatprep.subr.bf16.mxu0 0
    %8018 = vmatpush1.bf16.msra.mxu0 %v8003
    %8019 = vmatprep.subr.bf16.mxu0 0
    %8020 = vmatpush1.bf16.msra.mxu0 0
    %8021 = vmatprep.subr.bf16.mxu0 0
    %8022 = vmatpush1.bf16.msra.mxu0 0
    %8023 = vmatprep.subr.bf16.mxu0 0
    %8024 = vmatpush1.bf16.msra.mxu0 0
    %8025 = vmatprep.subr.bf16.mxu0 0
    %8026 = vmatpush1.bf16.msra.mxu0 0
    %8027 = vmatprep.subr.bf16.mxu0 0
    %8028 = vmatpush1.bf16.msra.mxu0 0
    %8029 = vmatprep.subr.bf16.mxu0 0
    %8030 = vmatpush1.bf16.msra.mxu0 0
    %8031 = vmatprep.subr.bf16.mxu0 0
    %8032 = vmatpush1.bf16.msra.mxu0 0
    %8033 = vmatprep.subr.bf16.mxu0 0
    %8034 = vmatpush1.bf16.msra.mxu0 0
    %8035 = vmatprep.subr.bf16.mxu0 0
    %8036 = vmatpush1.bf16.msra.mxu0 0
    %8037 = vmatprep.subr.bf16.mxu0 0
    %8038 = vmatpush1.bf16.msra.mxu0 0
    %8039 = vmatprep.subr.bf16.mxu0 0
    %8040 = vmatpush1.bf16.msra.mxu0 0
    %8041 = vmatprep.subr.bf16.mxu0 0
    %8042 = vmatpush1.bf16.msra.mxu0 0
    %8043 = vmatprep.mubr.bf16.mxu0 0
    %8044 = vmatmul.mubr.bf16.gmra.mrb[0].mxu0 %v8009
    %v8045 = vpop.f32.mrb[0].mxu0
    %v8046 = vadd.f32 0.0, %v8045
    %v8047 = vpop.f32.mrb[0].mxu0
    %v8048 = vpop.f32.mrb[0].mxu0
    %v8049 = vpop.f32.mrb[0].mxu0
    %8050 = vdwg.mxu0
    %v8051 = vadd.f32 %v7979, %v8046
    %v8060 = vunpack.c.l.b16 %v7362
    %v8061 = vunpack.c.l.b16 %v7363
    %v8062 = vunpack.c.l.b16 %v7364
    %v8063 = vunpack.c.l.b16 %v7365
    %v8064 = vunpack.c.l.b16 %v7366
    %v8065 = vunpack.c.l.b16 %v7367
    %v8066 = vunpack.c.l.b16 %v7368
    %v8067 = vunpack.c.l.b16 %v7369
    %v8068 = vpack.c.b16 %v8061, %v8060
    %v8069 = vpack.c.b16 %v8063, %v8062
    %v8070 = vpack.c.b16 %v8065, %v8064
    %v8071 = vpack.c.b16 %v8067, %v8066
    %v8077 = vsel %vm4306, %v7277, 0
    %8079 = vmatprep.subr.bf16.mxu0 0
    %8080 = vmatpush1.bf16.msra.mxu0 %v8068
    %8081 = vmatprep.subr.bf16.mxu0 0
    %8082 = vmatpush1.bf16.msra.mxu0 %v8069
    %8083 = vmatprep.subr.bf16.mxu0 0
    %8084 = vmatpush1.bf16.msra.mxu0 %v8070
    %8085 = vmatprep.subr.bf16.mxu0 0
    %8086 = vmatpush1.bf16.msra.mxu0 %v8071
    %8087 = vmatprep.subr.bf16.mxu0 0
    %8088 = vmatpush1.bf16.msra.mxu0 0
    %8089 = vmatprep.subr.bf16.mxu0 0
    %8090 = vmatpush1.bf16.msra.mxu0 0
    %8091 = vmatprep.subr.bf16.mxu0 0
    %8092 = vmatpush1.bf16.msra.mxu0 0
    %8093 = vmatprep.subr.bf16.mxu0 0
    %8094 = vmatpush1.bf16.msra.mxu0 0
    %8095 = vmatprep.subr.bf16.mxu0 0
    %8096 = vmatpush1.bf16.msra.mxu0 0
    %8097 = vmatprep.subr.bf16.mxu0 0
    %8098 = vmatpush1.bf16.msra.mxu0 0
    %8099 = vmatprep.subr.bf16.mxu0 0
    %8100 = vmatpush1.bf16.msra.mxu0 0
    %8101 = vmatprep.subr.bf16.mxu0 0
    %8102 = vmatpush1.bf16.msra.mxu0 0
    %8103 = vmatprep.subr.bf16.mxu0 0
    %8104 = vmatpush1.bf16.msra.mxu0 0
    %8105 = vmatprep.subr.bf16.mxu0 0
    %8106 = vmatpush1.bf16.msra.mxu0 0
    %8107 = vmatprep.subr.bf16.mxu0 0
    %8108 = vmatpush1.bf16.msra.mxu0 0
    %8109 = vmatprep.subr.bf16.mxu0 0
    %8110 = vmatpush1.bf16.msra.mxu0 0
    %8111 = vmatprep.mubr.bf16.mxu0 0
    %8112 = vmatmul.mubr.bf16.gmra.mrb[0].mxu0 %v8077
    %v8113 = vpop.f32.mrb[0].mxu0
    %v8114 = vadd.f32 0.0, %v8113
    %v8115 = vpop.f32.mrb[0].mxu0
    %v8116 = vpop.f32.mrb[0].mxu0
    %v8117 = vpop.f32.mrb[0].mxu0
    %8118 = vdwg.mxu0
    %v8119 = vadd.f32 %v8051, %v8114
    %v8128 = vunpack.c.l.b16 %v7370
    %v8129 = vunpack.c.l.b16 %v7371
    %v8130 = vunpack.c.l.b16 %v7372
    %v8131 = vunpack.c.l.b16 %v7373
    %v8132 = vunpack.c.l.b16 %v7374
    %v8133 = vunpack.c.l.b16 %v7375
    %v8134 = vunpack.c.l.b16 %v7376
    %v8135 = vunpack.c.l.b16 %v7377
    %v8136 = vpack.c.b16 %v8129, %v8128
    %v8137 = vpack.c.b16 %v8131, %v8130
    %v8138 = vpack.c.b16 %v8133, %v8132
    %v8139 = vpack.c.b16 %v8135, %v8134
    %v8145 = vsel %vm4306, %v7278, 0
    %8147 = vmatprep.subr.bf16.mxu0 0
    %8148 = vmatpush1.bf16.msra.mxu0 %v8136
    %8149 = vmatprep.subr.bf16.mxu0 0
    %8150 = vmatpush1.bf16.msra.mxu0 %v8137
    %8151 = vmatprep.subr.bf16.mxu0 0
    %8152 = vmatpush1.bf16.msra.mxu0 %v8138
    %8153 = vmatprep.subr.bf16.mxu0 0
    %8154 = vmatpush1.bf16.msra.mxu0 %v8139
    %8155 = vmatprep.subr.bf16.mxu0 0
    %8156 = vmatpush1.bf16.msra.mxu0 0
    %8157 = vmatprep.subr.bf16.mxu0 0
    %8158 = vmatpush1.bf16.msra.mxu0 0
    %8159 = vmatprep.subr.bf16.mxu0 0
    %8160 = vmatpush1.bf16.msra.mxu0 0
    %8161 = vmatprep.subr.bf16.mxu0 0
    %8162 = vmatpush1.bf16.msra.mxu0 0
    %8163 = vmatprep.subr.bf16.mxu0 0
    %8164 = vmatpush1.bf16.msra.mxu0 0
    %8165 = vmatprep.subr.bf16.mxu0 0
    %8166 = vmatpush1.bf16.msra.mxu0 0
    %8167 = vmatprep.subr.bf16.mxu0 0
    %8168 = vmatpush1.bf16.msra.mxu0 0
    %8169 = vmatprep.subr.bf16.mxu0 0
    %8170 = vmatpush1.bf16.msra.mxu0 0
    %8171 = vmatprep.subr.bf16.mxu0 0
    %8172 = vmatpush1.bf16.msra.mxu0 0
    %8173 = vmatprep.subr.bf16.mxu0 0
    %8174 = vmatpush1.bf16.msra.mxu0 0
    %8175 = vmatprep.subr.bf16.mxu0 0
    %8176 = vmatpush1.bf16.msra.mxu0 0
    %8177 = vmatprep.subr.bf16.mxu0 0
    %8178 = vmatpush1.bf16.msra.mxu0 0
    %8179 = vmatprep.mubr.bf16.mxu0 0
    %8180 = vmatmul.mubr.bf16.gmra.mrb[0].mxu0 %v8145
    %v8181 = vpop.f32.mrb[0].mxu0
    %v8182 = vadd.f32 0.0, %v8181
    %v8183 = vpop.f32.mrb[0].mxu0
    %v8184 = vpop.f32.mrb[0].mxu0
    %v8185 = vpop.f32.mrb[0].mxu0
    %8186 = vdwg.mxu0
    %v8187 = vadd.f32 %v8119, %v8182
    %v8196 = vunpack.c.l.b16 %v7378
    %v8197 = vunpack.c.l.b16 %v7379
    %v8198 = vunpack.c.l.b16 %v7380
    %v8199 = vunpack.c.l.b16 %v7381
    %v8200 = vunpack.c.l.b16 %v7382
    %v8201 = vunpack.c.l.b16 %v7383
    %v8202 = vunpack.c.l.b16 %v7384
    %v8203 = vunpack.c.l.b16 %v7385
    %v8204 = vpack.c.b16 %v8197, %v8196
    %v8205 = vpack.c.b16 %v8199, %v8198
    %v8206 = vpack.c.b16 %v8201, %v8200
    %v8207 = vpack.c.b16 %v8203, %v8202
    %v8213 = vsel %vm4306, %v7279, 0
    %8215 = vmatprep.subr.bf16.mxu0 0
    %8216 = vmatpush1.bf16.msra.mxu0 %v8204
    %8217 = vmatprep.subr.bf16.mxu0 0
    %8218 = vmatpush1.bf16.msra.mxu0 %v8205
    %8219 = vmatprep.subr.bf16.mxu0 0
    %8220 = vmatpush1.bf16.msra.mxu0 %v8206
    %8221 = vmatprep.subr.bf16.mxu0 0
    %8222 = vmatpush1.bf16.msra.mxu0 %v8207
    %8223 = vmatprep.subr.bf16.mxu0 0
    %8224 = vmatpush1.bf16.msra.mxu0 0
    %8225 = vmatprep.subr.bf16.mxu0 0
    %8226 = vmatpush1.bf16.msra.mxu0 0
    %8227 = vmatprep.subr.bf16.mxu0 0
    %8228 = vmatpush1.bf16.msra.mxu0 0
    %8229 = vmatprep.subr.bf16.mxu0 0
    %8230 = vmatpush1.bf16.msra.mxu0 0
    %8231 = vmatprep.subr.bf16.mxu0 0
    %8232 = vmatpush1.bf16.msra.mxu0 0
    %8233 = vmatprep.subr.bf16.mxu0 0
    %8234 = vmatpush1.bf16.msra.mxu0 0
    %8235 = vmatprep.subr.bf16.mxu0 0
    %8236 = vmatpush1.bf16.msra.mxu0 0
    %8237 = vmatprep.subr.bf16.mxu0 0
    %8238 = vmatpush1.bf16.msra.mxu0 0
    %8239 = vmatprep.subr.bf16.mxu0 0
    %8240 = vmatpush1.bf16.msra.mxu0 0
    %8241 = vmatprep.subr.bf16.mxu0 0
    %8242 = vmatpush1.bf16.msra.mxu0 0
    %8243 = vmatprep.subr.bf16.mxu0 0
    %8244 = vmatpush1.bf16.msra.mxu0 0
    %8245 = vmatprep.subr.bf16.mxu0 0
    %8246 = vmatpush1.bf16.msra.mxu0 0
    %8247 = vmatprep.mubr.bf16.mxu0 0
    %8248 = vmatmul.mubr.bf16.gmra.mrb[0].mxu0 %v8213
    %v8249 = vpop.f32.mrb[0].mxu0
    %v8250 = vadd.f32 0.0, %v8249
    %v8251 = vpop.f32.mrb[0].mxu0
    %v8252 = vpop.f32.mrb[0].mxu0
    %v8253 = vpop.f32.mrb[0].mxu0
    %8254 = vdwg.mxu0
    %v8255 = vadd.f32 %v8187, %v8250
    %v8264 = vunpack.c.l.b16 %v7386
    %v8265 = vunpack.c.l.b16 %v7387
    %v8266 = vunpack.c.l.b16 %v7388
    %v8267 = vunpack.c.l.b16 %v7389
    %v8268 = vunpack.c.l.b16 %v7390
    %v8269 = vunpack.c.l.b16 %v7391
    %v8270 = vunpack.c.l.b16 %v7392
    %v8271 = vunpack.c.l.b16 %v7393
    %v8272 = vpack.c.b16 %v8265, %v8264
    %v8273 = vpack.c.b16 %v8267, %v8266
    %v8274 = vpack.c.b16 %v8269, %v8268
    %v8275 = vpack.c.b16 %v8271, %v8270
    %v8281 = vsel %vm4306, %v7280, 0
    %8283 = vmatprep.subr.bf16.mxu0 0
    %8284 = vmatpush1.bf16.msra.mxu0 %v8272
    %8285 = vmatprep.subr.bf16.mxu0 0
    %8286 = vmatpush1.bf16.msra.mxu0 %v8273
    %8287 = vmatprep.subr.bf16.mxu0 0
    %8288 = vmatpush1.bf16.msra.mxu0 %v8274
    %8289 = vmatprep.subr.bf16.mxu0 0
    %8290 = vmatpush1.bf16.msra.mxu0 %v8275
    %8291 = vmatprep.subr.bf16.mxu0 0
    %8292 = vmatpush1.bf16.msra.mxu0 0
    %8293 = vmatprep.subr.bf16.mxu0 0
    %8294 = vmatpush1.bf16.msra.mxu0 0
    %8295 = vmatprep.subr.bf16.mxu0 0
    %8296 = vmatpush1.bf16.msra.mxu0 0
    %8297 = vmatprep.subr.bf16.mxu0 0
    %8298 = vmatpush1.bf16.msra.mxu0 0
    %8299 = vmatprep.subr.bf16.mxu0 0
    %8300 = vmatpush1.bf16.msra.mxu0 0
    %8301 = vmatprep.subr.bf16.mxu0 0
    %8302 = vmatpush1.bf16.msra.mxu0 0
    %8303 = vmatprep.subr.bf16.mxu0 0
    %8304 = vmatpush1.bf16.msra.mxu0 0
    %8305 = vmatprep.subr.bf16.mxu0 0
    %8306 = vmatpush1.bf16.msra.mxu0 0
    %8307 = vmatprep.subr.bf16.mxu0 0
    %8308 = vmatpush1.bf16.msra.mxu0 0
    %8309 = vmatprep.subr.bf16.mxu0 0
    %8310 = vmatpush1.bf16.msra.mxu0 0
    %8311 = vmatprep.subr.bf16.mxu0 0
    %8312 = vmatpush1.bf16.msra.mxu0 0
    %8313 = vmatprep.subr.bf16.mxu0 0
    %8314 = vmatpush1.bf16.msra.mxu0 0
    %8315 = vmatprep.mubr.bf16.mxu0 0
    %8316 = vmatmul.mubr.bf16.gmra.mrb[0].mxu0 %v8281
    %v8317 = vpop.f32.mrb[0].mxu0
    %v8318 = vadd.f32 0.0, %v8317
    %v8319 = vpop.f32.mrb[0].mxu0
    %v8320 = vpop.f32.mrb[0].mxu0
    %v8321 = vpop.f32.mrb[0].mxu0
    %8322 = vdwg.mxu0
    %v8323 = vadd.f32 %v8255, %v8318
    %v8332 = vunpack.c.l.b16 %v7394
    %v8333 = vunpack.c.l.b16 %v7395
    %v8334 = vunpack.c.l.b16 %v7396
    %v8335 = vunpack.c.l.b16 %v7397
    %v8336 = vunpack.c.l.b16 %v7398
    %v8337 = vunpack.c.l.b16 %v7399
    %v8338 = vunpack.c.l.b16 %v7400
    %v8339 = vunpack.c.l.b16 %v7401
    %v8340 = vpack.c.b16 %v8333, %v8332
    %v8341 = vpack.c.b16 %v8335, %v8334
    %v8342 = vpack.c.b16 %v8337, %v8336
    %v8343 = vpack.c.b16 %v8339, %v8338
    %v8349 = vsel %vm4306, %v7281, 0
    %8351 = vmatprep.subr.bf16.mxu0 0
    %8352 = vmatpush1.bf16.msra.mxu0 %v8340
    %8353 = vmatprep.subr.bf16.mxu0 0
    %8354 = vmatpush1.bf16.msra.mxu0 %v8341
    %8355 = vmatprep.subr.bf16.mxu0 0
    %8356 = vmatpush1.bf16.msra.mxu0 %v8342
    %8357 = vmatprep.subr.bf16.mxu0 0
    %8358 = vmatpush1.bf16.msra.mxu0 %v8343
    %8359 = vmatprep.subr.bf16.mxu0 0
    %8360 = vmatpush1.bf16.msra.mxu0 0
    %8361 = vmatprep.subr.bf16.mxu0 0
    %8362 = vmatpush1.bf16.msra.mxu0 0
    %8363 = vmatprep.subr.bf16.mxu0 0
    %8364 = vmatpush1.bf16.msra.mxu0 0
    %8365 = vmatprep.subr.bf16.mxu0 0
    %8366 = vmatpush1.bf16.msra.mxu0 0
    %8367 = vmatprep.subr.bf16.mxu0 0
    %8368 = vmatpush1.bf16.msra.mxu0 0
    %8369 = vmatprep.subr.bf16.mxu0 0
    %8370 = vmatpush1.bf16.msra.mxu0 0
    %8371 = vmatprep.subr.bf16.mxu0 0
    %8372 = vmatpush1.bf16.msra.mxu0 0
    %8373 = vmatprep.subr.bf16.mxu0 0
    %8374 = vmatpush1.bf16.msra.mxu0 0
    %8375 = vmatprep.subr.bf16.mxu0 0
    %8376 = vmatpush1.bf16.msra.mxu0 0
    %8377 = vmatprep.subr.bf16.mxu0 0
    %8378 = vmatpush1.bf16.msra.mxu0 0
    %8379 = vmatprep.subr.bf16.mxu0 0
    %8380 = vmatpush1.bf16.msra.mxu0 0
    %8381 = vmatprep.subr.bf16.mxu0 0
    %8382 = vmatpush1.bf16.msra.mxu0 0
    %8383 = vmatprep.mubr.bf16.mxu0 0
    %8384 = vmatmul.mubr.bf16.gmra.mrb[0].mxu0 %v8349
    %v8385 = vpop.f32.mrb[0].mxu0
    %v8386 = vadd.f32 0.0, %v8385
    %v8387 = vpop.f32.mrb[0].mxu0
    %v8388 = vpop.f32.mrb[0].mxu0
    %v8389 = vpop.f32.mrb[0].mxu0
    %8390 = vdwg.mxu0
    %v8391 = vadd.f32 %v8323, %v8386
    %v8400 = vunpack.c.l.b16 %v7402
    %v8401 = vunpack.c.l.b16 %v7403
    %v8402 = vunpack.c.l.b16 %v7404
    %v8403 = vunpack.c.l.b16 %v7405
    %v8404 = vunpack.c.l.b16 %v7406
    %v8405 = vunpack.c.l.b16 %v7407
    %v8406 = vunpack.c.l.b16 %v7408
    %v8407 = vunpack.c.l.b16 %v7409
    %v8408 = vpack.c.b16 %v8401, %v8400
    %v8409 = vpack.c.b16 %v8403, %v8402
    %v8410 = vpack.c.b16 %v8405, %v8404
    %v8411 = vpack.c.b16 %v8407, %v8406
    %v8417 = vsel %vm4306, %v7282, 0
    %8419 = vmatprep.subr.bf16.mxu0 0
    %8420 = vmatpush1.bf16.msra.mxu0 %v8408
    %8421 = vmatprep.subr.bf16.mxu0 0
    %8422 = vmatpush1.bf16.msra.mxu0 %v8409
    %8423 = vmatprep.subr.bf16.mxu0 0
    %8424 = vmatpush1.bf16.msra.mxu0 %v8410
    %8425 = vmatprep.subr.bf16.mxu0 0
    %8426 = vmatpush1.bf16.msra.mxu0 %v8411
    %8427 = vmatprep.subr.bf16.mxu0 0
    %8428 = vmatpush1.bf16.msra.mxu0 0
    %8429 = vmatprep.subr.bf16.mxu0 0
    %8430 = vmatpush1.bf16.msra.mxu0 0
    %8431 = vmatprep.subr.bf16.mxu0 0
    %8432 = vmatpush1.bf16.msra.mxu0 0
    %8433 = vmatprep.subr.bf16.mxu0 0
    %8434 = vmatpush1.bf16.msra.mxu0 0
    %8435 = vmatprep.subr.bf16.mxu0 0
    %8436 = vmatpush1.bf16.msra.mxu0 0
    %8437 = vmatprep.subr.bf16.mxu0 0
    %8438 = vmatpush1.bf16.msra.mxu0 0
    %8439 = vmatprep.subr.bf16.mxu0 0
    %8440 = vmatpush1.bf16.msra.mxu0 0
    %8441 = vmatprep.subr.bf16.mxu0 0
    %8442 = vmatpush1.bf16.msra.mxu0 0
    %8443 = vmatprep.subr.bf16.mxu0 0
    %8444 = vmatpush1.bf16.msra.mxu0 0
    %8445 = vmatprep.subr.bf16.mxu0 0
    %8446 = vmatpush1.bf16.msra.mxu0 0
    %8447 = vmatprep.subr.bf16.mxu0 0
    %8448 = vmatpush1.bf16.msra.mxu0 0
    %8449 = vmatprep.subr.bf16.mxu0 0
    %8450 = vmatpush1.bf16.msra.mxu0 0
    %8451 = vmatprep.mubr.bf16.mxu0 0
    %8452 = vmatmul.mubr.bf16.gmra.mrb[0].mxu0 %v8417
    %v8453 = vpop.f32.mrb[0].mxu0
    %v8454 = vadd.f32 0.0, %v8453
    %v8455 = vpop.f32.mrb[0].mxu0
    %v8456 = vpop.f32.mrb[0].mxu0
    %v8457 = vpop.f32.mrb[0].mxu0
    %8458 = vdwg.mxu0
    %v8459 = vadd.f32 %v8391, %v8454
    %v8468 = vunpack.c.l.b16 %v7410
    %v8469 = vunpack.c.l.b16 %v7411
    %v8470 = vunpack.c.l.b16 %v7412
    %v8471 = vunpack.c.l.b16 %v7413
    %v8472 = vunpack.c.l.b16 %v7414
    %v8473 = vunpack.c.l.b16 %v7415
    %v8474 = vunpack.c.l.b16 %v7416
    %v8475 = vunpack.c.l.b16 %v7417
    %v8476 = vpack.c.b16 %v8469, %v8468
    %v8477 = vpack.c.b16 %v8471, %v8470
    %v8478 = vpack.c.b16 %v8473, %v8472
    %v8479 = vpack.c.b16 %v8475, %v8474
    %v8485 = vsel %vm4306, %v7283, 0
    %8487 = vmatprep.subr.bf16.mxu0 0
    %8488 = vmatpush1.bf16.msra.mxu0 %v8476
    %8489 = vmatprep.subr.bf16.mxu0 0
    %8490 = vmatpush1.bf16.msra.mxu0 %v8477
    %8491 = vmatprep.subr.bf16.mxu0 0
    %8492 = vmatpush1.bf16.msra.mxu0 %v8478
    %8493 = vmatprep.subr.bf16.mxu0 0
    %8494 = vmatpush1.bf16.msra.mxu0 %v8479
    %8495 = vmatprep.subr.bf16.mxu0 0
    %8496 = vmatpush1.bf16.msra.mxu0 0
    %8497 = vmatprep.subr.bf16.mxu0 0
    %8498 = vmatpush1.bf16.msra.mxu0 0
    %8499 = vmatprep.subr.bf16.mxu0 0
    %8500 = vmatpush1.bf16.msra.mxu0 0
    %8501 = vmatprep.subr.bf16.mxu0 0
    %8502 = vmatpush1.bf16.msra.mxu0 0
    %8503 = vmatprep.subr.bf16.mxu0 0
    %8504 = vmatpush1.bf16.msra.mxu0 0
    %8505 = vmatprep.subr.bf16.mxu0 0
    %8506 = vmatpush1.bf16.msra.mxu0 0
    %8507 = vmatprep.subr.bf16.mxu0 0
    %8508 = vmatpush1.bf16.msra.mxu0 0
    %8509 = vmatprep.subr.bf16.mxu0 0
    %8510 = vmatpush1.bf16.msra.mxu0 0
    %8511 = vmatprep.subr.bf16.mxu0 0
    %8512 = vmatpush1.bf16.msra.mxu0 0
    %8513 = vmatprep.subr.bf16.mxu0 0
    %8514 = vmatpush1.bf16.msra.mxu0 0
    %8515 = vmatprep.subr.bf16.mxu0 0
    %8516 = vmatpush1.bf16.msra.mxu0 0
    %8517 = vmatprep.subr.bf16.mxu0 0
    %8518 = vmatpush1.bf16.msra.mxu0 0
    %8519 = vmatprep.mubr.bf16.mxu0 0
    %8520 = vmatmul.mubr.bf16.gmra.mrb[0].mxu0 %v8485
    %v8521 = vpop.f32.mrb[0].mxu0
    %v8522 = vadd.f32 0.0, %v8521
    %v8523 = vpop.f32.mrb[0].mxu0
    %v8524 = vpop.f32.mrb[0].mxu0
    %v8525 = vpop.f32.mrb[0].mxu0
    %8526 = vdwg.mxu0
    %v8527 = vadd.f32 %v8459, %v8522
    %v8536 = vunpack.c.l.b16 %v7418
    %v8537 = vunpack.c.l.b16 %v7419
    %v8538 = vunpack.c.l.b16 %v7420
    %v8539 = vunpack.c.l.b16 %v7421
    %v8540 = vunpack.c.l.b16 %v7422
    %v8541 = vunpack.c.l.b16 %v7423
    %v8542 = vunpack.c.l.b16 %v7424
    %v8543 = vunpack.c.l.b16 %v7425
    %v8544 = vpack.c.b16 %v8537, %v8536
    %v8545 = vpack.c.b16 %v8539, %v8538
    %v8546 = vpack.c.b16 %v8541, %v8540
    %v8547 = vpack.c.b16 %v8543, %v8542
    %v8553 = vsel %vm4306, %v7284, 0
    %8555 = vmatprep.subr.bf16.mxu0 0
    %8556 = vmatpush1.bf16.msra.mxu0 %v8544
    %8557 = vmatprep.subr.bf16.mxu0 0
    %8558 = vmatpush1.bf16.msra.mxu0 %v8545
    %8559 = vmatprep.subr.bf16.mxu0 0
    %8560 = vmatpush1.bf16.msra.mxu0 %v8546
    %8561 = vmatprep.subr.bf16.mxu0 0
    %8562 = vmatpush1.bf16.msra.mxu0 %v8547
    %8563 = vmatprep.subr.bf16.mxu0 0
    %8564 = vmatpush1.bf16.msra.mxu0 0
    %8565 = vmatprep.subr.bf16.mxu0 0
    %8566 = vmatpush1.bf16.msra.mxu0 0
    %8567 = vmatprep.subr.bf16.mxu0 0
    %8568 = vmatpush1.bf16.msra.mxu0 0
    %8569 = vmatprep.subr.bf16.mxu0 0
    %8570 = vmatpush1.bf16.msra.mxu0 0
    %8571 = vmatprep.subr.bf16.mxu0 0
    %8572 = vmatpush1.bf16.msra.mxu0 0
    %8573 = vmatprep.subr.bf16.mxu0 0
    %8574 = vmatpush1.bf16.msra.mxu0 0
    %8575 = vmatprep.subr.bf16.mxu0 0
    %8576 = vmatpush1.bf16.msra.mxu0 0
    %8577 = vmatprep.subr.bf16.mxu0 0
    %8578 = vmatpush1.bf16.msra.mxu0 0
    %8579 = vmatprep.subr.bf16.mxu0 0
    %8580 = vmatpush1.bf16.msra.mxu0 0
    %8581 = vmatprep.subr.bf16.mxu0 0
    %8582 = vmatpush1.bf16.msra.mxu0 0
    %8583 = vmatprep.subr.bf16.mxu0 0
    %8584 = vmatpush1.bf16.msra.mxu0 0
    %8585 = vmatprep.subr.bf16.mxu0 0
    %8586 = vmatpush1.bf16.msra.mxu0 0
    %8587 = vmatprep.mubr.bf16.mxu0 0
    %8588 = vmatmul.mubr.bf16.gmra.mrb[0].mxu0 %v8553
    %v8589 = vpop.f32.mrb[0].mxu0
    %v8590 = vadd.f32 0.0, %v8589
    %v8591 = vpop.f32.mrb[0].mxu0
    %v8592 = vpop.f32.mrb[0].mxu0
    %v8593 = vpop.f32.mrb[0].mxu0
    %8594 = vdwg.mxu0
    %v8595 = vadd.f32 %v8527, %v8590
    %v8604 = vunpack.c.l.b16 %v7426
    %v8605 = vunpack.c.l.b16 %v7427
    %v8606 = vunpack.c.l.b16 %v7428
    %v8607 = vunpack.c.l.b16 %v7429
    %v8608 = vunpack.c.l.b16 %v7430
    %v8609 = vunpack.c.l.b16 %v7431
    %v8610 = vunpack.c.l.b16 %v7432
    %v8611 = vunpack.c.l.b16 %v7433
    %v8612 = vpack.c.b16 %v8605, %v8604
    %v8613 = vpack.c.b16 %v8607, %v8606
    %v8614 = vpack.c.b16 %v8609, %v8608
    %v8615 = vpack.c.b16 %v8611, %v8610
    %v8621 = vsel %vm4306, %v7285, 0
    %8623 = vmatprep.subr.bf16.mxu0 0
    %8624 = vmatpush1.bf16.msra.mxu0 %v8612
    %8625 = vmatprep.subr.bf16.mxu0 0
    %8626 = vmatpush1.bf16.msra.mxu0 %v8613
    %8627 = vmatprep.subr.bf16.mxu0 0
    %8628 = vmatpush1.bf16.msra.mxu0 %v8614
    %8629 = vmatprep.subr.bf16.mxu0 0
    %8630 = vmatpush1.bf16.msra.mxu0 %v8615
    %8631 = vmatprep.subr.bf16.mxu0 0
    %8632 = vmatpush1.bf16.msra.mxu0 0
    %8633 = vmatprep.subr.bf16.mxu0 0
    %8634 = vmatpush1.bf16.msra.mxu0 0
    %8635 = vmatprep.subr.bf16.mxu0 0
    %8636 = vmatpush1.bf16.msra.mxu0 0
    %8637 = vmatprep.subr.bf16.mxu0 0
    %8638 = vmatpush1.bf16.msra.mxu0 0
    %8639 = vmatprep.subr.bf16.mxu0 0
    %8640 = vmatpush1.bf16.msra.mxu0 0
    %8641 = vmatprep.subr.bf16.mxu0 0
    %8642 = vmatpush1.bf16.msra.mxu0 0
    %8643 = vmatprep.subr.bf16.mxu0 0
    %8644 = vmatpush1.bf16.msra.mxu0 0
    %8645 = vmatprep.subr.bf16.mxu0 0
    %8646 = vmatpush1.bf16.msra.mxu0 0
    %8647 = vmatprep.subr.bf16.mxu0 0
    %8648 = vmatpush1.bf16.msra.mxu0 0
    %8649 = vmatprep.subr.bf16.mxu0 0
    %8650 = vmatpush1.bf16.msra.mxu0 0
    %8651 = vmatprep.subr.bf16.mxu0 0
    %8652 = vmatpush1.bf16.msra.mxu0 0
    %8653 = vmatprep.subr.bf16.mxu0 0
    %8654 = vmatpush1.bf16.msra.mxu0 0
    %8655 = vmatprep.mubr.bf16.mxu0 0
    %8656 = vmatmul.mubr.bf16.gmra.mrb[0].mxu0 %v8621
    %v8657 = vpop.f32.mrb[0].mxu0
    %v8658 = vadd.f32 0.0, %v8657
    %v8659 = vpop.f32.mrb[0].mxu0
    %v8660 = vpop.f32.mrb[0].mxu0
    %v8661 = vpop.f32.mrb[0].mxu0
    %8662 = vdwg.mxu0
    %v8663 = vadd.f32 %v8595, %v8658
    %v8672 = vunpack.c.l.b16 %v7434
    %v8673 = vunpack.c.l.b16 %v7435
    %v8674 = vunpack.c.l.b16 %v7436
    %v8675 = vunpack.c.l.b16 %v7437
    %v8676 = vunpack.c.l.b16 %v7438
    %v8677 = vunpack.c.l.b16 %v7439
    %v8678 = vunpack.c.l.b16 %v7440
    %v8679 = vunpack.c.l.b16 %v7441
    %v8680 = vpack.c.b16 %v8673, %v8672
    %v8681 = vpack.c.b16 %v8675, %v8674
    %v8682 = vpack.c.b16 %v8677, %v8676
    %v8683 = vpack.c.b16 %v8679, %v8678
    %v8689 = vsel %vm4306, %v7286, 0
    %8691 = vmatprep.subr.bf16.mxu0 0
    %8692 = vmatpush1.bf16.msra.mxu0 %v8680
    %8693 = vmatprep.subr.bf16.mxu0 0
    %8694 = vmatpush1.bf16.msra.mxu0 %v8681
    %8695 = vmatprep.subr.bf16.mxu0 0
    %8696 = vmatpush1.bf16.msra.mxu0 %v8682
    %8697 = vmatprep.subr.bf16.mxu0 0
    %8698 = vmatpush1.bf16.msra.mxu0 %v8683
    %8699 = vmatprep.subr.bf16.mxu0 0
    %8700 = vmatpush1.bf16.msra.mxu0 0
    %8701 = vmatprep.subr.bf16.mxu0 0
    %8702 = vmatpush1.bf16.msra.mxu0 0
    %8703 = vmatprep.subr.bf16.mxu0 0
    %8704 = vmatpush1.bf16.msra.mxu0 0
    %8705 = vmatprep.subr.bf16.mxu0 0
    %8706 = vmatpush1.bf16.msra.mxu0 0
    %8707 = vmatprep.subr.bf16.mxu0 0
    %8708 = vmatpush1.bf16.msra.mxu0 0
    %8709 = vmatprep.subr.bf16.mxu0 0
    %8710 = vmatpush1.bf16.msra.mxu0 0
    %8711 = vmatprep.subr.bf16.mxu0 0
    %8712 = vmatpush1.bf16.msra.mxu0 0
    %8713 = vmatprep.subr.bf16.mxu0 0
    %8714 = vmatpush1.bf16.msra.mxu0 0
    %8715 = vmatprep.subr.bf16.mxu0 0
    %8716 = vmatpush1.bf16.msra.mxu0 0
    %8717 = vmatprep.subr.bf16.mxu0 0
    %8718 = vmatpush1.bf16.msra.mxu0 0
    %8719 = vmatprep.subr.bf16.mxu0 0
    %8720 = vmatpush1.bf16.msra.mxu0 0
    %8721 = vmatprep.subr.bf16.mxu0 0
    %8722 = vmatpush1.bf16.msra.mxu0 0
    %8723 = vmatprep.mubr.bf16.mxu0 0
    %8724 = vmatmul.mubr.bf16.gmra.mrb[0].mxu0 %v8689
    %v8725 = vpop.f32.mrb[0].mxu0
    %v8726 = vadd.f32 0.0, %v8725
    %v8727 = vpop.f32.mrb[0].mxu0
    %v8728 = vpop.f32.mrb[0].mxu0
    %v8729 = vpop.f32.mrb[0].mxu0
    %8730 = vdwg.mxu0
    %v8731 = vadd.f32 %v8663, %v8726
    %v8740 = vunpack.c.l.b16 %v7442
    %v8741 = vunpack.c.l.b16 %v7443
    %v8742 = vunpack.c.l.b16 %v7444
    %v8743 = vunpack.c.l.b16 %v7445
    %v8744 = vunpack.c.l.b16 %v7446
    %v8745 = vunpack.c.l.b16 %v7447
    %v8746 = vunpack.c.l.b16 %v7448
    %v8747 = vunpack.c.l.b16 %v7449
    %v8748 = vpack.c.b16 %v8741, %v8740
    %v8749 = vpack.c.b16 %v8743, %v8742
    %v8750 = vpack.c.b16 %v8745, %v8744
    %v8751 = vpack.c.b16 %v8747, %v8746
    %v8757 = vsel %vm4306, %v7287, 0
    %8759 = vmatprep.subr.bf16.mxu0 0
    %8760 = vmatpush1.bf16.msra.mxu0 %v8748
    %8761 = vmatprep.subr.bf16.mxu0 0
    %8762 = vmatpush1.bf16.msra.mxu0 %v8749
    %8763 = vmatprep.subr.bf16.mxu0 0
    %8764 = vmatpush1.bf16.msra.mxu0 %v8750
    %8765 = vmatprep.subr.bf16.mxu0 0
    %8766 = vmatpush1.bf16.msra.mxu0 %v8751
    %8767 = vmatprep.subr.bf16.mxu0 0
    %8768 = vmatpush1.bf16.msra.mxu0 0
    %8769 = vmatprep.subr.bf16.mxu0 0
    %8770 = vmatpush1.bf16.msra.mxu0 0
    %8771 = vmatprep.subr.bf16.mxu0 0
    %8772 = vmatpush1.bf16.msra.mxu0 0
    %8773 = vmatprep.subr.bf16.mxu0 0
    %8774 = vmatpush1.bf16.msra.mxu0 0
    %8775 = vmatprep.subr.bf16.mxu0 0
    %8776 = vmatpush1.bf16.msra.mxu0 0
    %8777 = vmatprep.subr.bf16.mxu0 0
    %8778 = vmatpush1.bf16.msra.mxu0 0
    %8779 = vmatprep.subr.bf16.mxu0 0
    %8780 = vmatpush1.bf16.msra.mxu0 0
    %8781 = vmatprep.subr.bf16.mxu0 0
    %8782 = vmatpush1.bf16.msra.mxu0 0
    %8783 = vmatprep.subr.bf16.mxu0 0
    %8784 = vmatpush1.bf16.msra.mxu0 0
    %8785 = vmatprep.subr.bf16.mxu0 0
    %8786 = vmatpush1.bf16.msra.mxu0 0
    %8787 = vmatprep.subr.bf16.mxu0 0
    %8788 = vmatpush1.bf16.msra.mxu0 0
    %8789 = vmatprep.subr.bf16.mxu0 0
    %8790 = vmatpush1.bf16.msra.mxu0 0
    %8791 = vmatprep.mubr.bf16.mxu0 0
    %8792 = vmatmul.mubr.bf16.gmra.mrb[0].mxu0 %v8757
    %v8793 = vpop.f32.mrb[0].mxu0
    %v8794 = vadd.f32 0.0, %v8793
    %v8795 = vpop.f32.mrb[0].mxu0
    %v8796 = vpop.f32.mrb[0].mxu0
    %v8797 = vpop.f32.mrb[0].mxu0
    %8798 = vdwg.mxu0
    %v8799 = vadd.f32 %v8731, %v8794
    %v8808 = vunpack.c.l.b16 %v7450
    %v8809 = vunpack.c.l.b16 %v7451
    %v8810 = vunpack.c.l.b16 %v7452
    %v8811 = vunpack.c.l.b16 %v7453
    %v8812 = vunpack.c.l.b16 %v7454
    %v8813 = vunpack.c.l.b16 %v7455
    %v8814 = vunpack.c.l.b16 %v7456
    %v8815 = vunpack.c.l.b16 %v7457
    %v8816 = vpack.c.b16 %v8809, %v8808
    %v8817 = vpack.c.b16 %v8811, %v8810
    %v8818 = vpack.c.b16 %v8813, %v8812
    %v8819 = vpack.c.b16 %v8815, %v8814
    %v8825 = vsel %vm4306, %v7288, 0
    %8827 = vmatprep.subr.bf16.mxu0 0
    %8828 = vmatpush1.bf16.msra.mxu0 %v8816
    %8829 = vmatprep.subr.bf16.mxu0 0
    %8830 = vmatpush1.bf16.msra.mxu0 %v8817
    %8831 = vmatprep.subr.bf16.mxu0 0
    %8832 = vmatpush1.bf16.msra.mxu0 %v8818
    %8833 = vmatprep.subr.bf16.mxu0 0
    %8834 = vmatpush1.bf16.msra.mxu0 %v8819
    %8835 = vmatprep.subr.bf16.mxu0 0
    %8836 = vmatpush1.bf16.msra.mxu0 0
    %8837 = vmatprep.subr.bf16.mxu0 0
    %8838 = vmatpush1.bf16.msra.mxu0 0
    %8839 = vmatprep.subr.bf16.mxu0 0
    %8840 = vmatpush1.bf16.msra.mxu0 0
    %8841 = vmatprep.subr.bf16.mxu0 0
    %8842 = vmatpush1.bf16.msra.mxu0 0
    %8843 = vmatprep.subr.bf16.mxu0 0
    %8844 = vmatpush1.bf16.msra.mxu0 0
    %8845 = vmatprep.subr.bf16.mxu0 0
    %8846 = vmatpush1.bf16.msra.mxu0 0
    %8847 = vmatprep.subr.bf16.mxu0 0
    %8848 = vmatpush1.bf16.msra.mxu0 0
    %8849 = vmatprep.subr.bf16.mxu0 0
    %8850 = vmatpush1.bf16.msra.mxu0 0
    %8851 = vmatprep.subr.bf16.mxu0 0
    %8852 = vmatpush1.bf16.msra.mxu0 0
    %8853 = vmatprep.subr.bf16.mxu0 0
    %8854 = vmatpush1.bf16.msra.mxu0 0
    %8855 = vmatprep.subr.bf16.mxu0 0
    %8856 = vmatpush1.bf16.msra.mxu0 0
    %8857 = vmatprep.subr.bf16.mxu0 0
    %8858 = vmatpush1.bf16.msra.mxu0 0
    %8859 = vmatprep.mubr.bf16.mxu0 0
    %8860 = vmatmul.mubr.bf16.gmra.mrb[0].mxu0 %v8825
    %v8861 = vpop.f32.mrb[0].mxu0
    %v8862 = vadd.f32 0.0, %v8861
    %v8863 = vpop.f32.mrb[0].mxu0
    %v8864 = vpop.f32.mrb[0].mxu0
    %v8865 = vpop.f32.mrb[0].mxu0
    %8866 = vdwg.mxu0
    %v8867 = vadd.f32 %v8799, %v8862
    %v8876 = vunpack.c.l.b16 %v7458
    %v8877 = vunpack.c.l.b16 %v7459
    %v8878 = vunpack.c.l.b16 %v7460
    %v8879 = vunpack.c.l.b16 %v7461
    %v8880 = vunpack.c.l.b16 %v7462
    %v8881 = vunpack.c.l.b16 %v7463
    %v8882 = vunpack.c.l.b16 %v7464
    %v8883 = vunpack.c.l.b16 %v7465
    %v8884 = vpack.c.b16 %v8877, %v8876
    %v8885 = vpack.c.b16 %v8879, %v8878
    %v8886 = vpack.c.b16 %v8881, %v8880
    %v8887 = vpack.c.b16 %v8883, %v8882
    %v8893 = vsel %vm4306, %v7289, 0
    %8895 = vmatprep.subr.bf16.mxu0 0
    %8896 = vmatpush1.bf16.msra.mxu0 %v8884
    %8897 = vmatprep.subr.bf16.mxu0 0
    %8898 = vmatpush1.bf16.msra.mxu0 %v8885
    %8899 = vmatprep.subr.bf16.mxu0 0
    %8900 = vmatpush1.bf16.msra.mxu0 %v8886
    %8901 = vmatprep.subr.bf16.mxu0 0
    %8902 = vmatpush1.bf16.msra.mxu0 %v8887
    %8903 = vmatprep.subr.bf16.mxu0 0
    %8904 = vmatpush1.bf16.msra.mxu0 0
    %8905 = vmatprep.subr.bf16.mxu0 0
    %8906 = vmatpush1.bf16.msra.mxu0 0
    %8907 = vmatprep.subr.bf16.mxu0 0
    %8908 = vmatpush1.bf16.msra.mxu0 0
    %8909 = vmatprep.subr.bf16.mxu0 0
    %8910 = vmatpush1.bf16.msra.mxu0 0
    %8911 = vmatprep.subr.bf16.mxu0 0
    %8912 = vmatpush1.bf16.msra.mxu0 0
    %8913 = vmatprep.subr.bf16.mxu0 0
    %8914 = vmatpush1.bf16.msra.mxu0 0
    %8915 = vmatprep.subr.bf16.mxu0 0
    %8916 = vmatpush1.bf16.msra.mxu0 0
    %8917 = vmatprep.subr.bf16.mxu0 0
    %8918 = vmatpush1.bf16.msra.mxu0 0
    %8919 = vmatprep.subr.bf16.mxu0 0
    %8920 = vmatpush1.bf16.msra.mxu0 0
    %8921 = vmatprep.subr.bf16.mxu0 0
    %8922 = vmatpush1.bf16.msra.mxu0 0
    %8923 = vmatprep.subr.bf16.mxu0 0
    %8924 = vmatpush1.bf16.msra.mxu0 0
    %8925 = vmatprep.subr.bf16.mxu0 0
    %8926 = vmatpush1.bf16.msra.mxu0 0
    %8927 = vmatprep.mubr.bf16.mxu0 0
    %8928 = vmatmul.mubr.bf16.gmra.mrb[0].mxu0 %v8893
    %v8929 = vpop.f32.mrb[0].mxu0
    %v8930 = vadd.f32 0.0, %v8929
    %v8931 = vpop.f32.mrb[0].mxu0
    %v8932 = vpop.f32.mrb[0].mxu0
    %v8933 = vpop.f32.mrb[0].mxu0
    %8934 = vdwg.mxu0
    %v8935 = vadd.f32 %v8867, %v8930
    %v8944 = vunpack.c.l.b16 %v7466
    %v8945 = vunpack.c.l.b16 %v7467
    %v8946 = vunpack.c.l.b16 %v7468
    %v8947 = vunpack.c.l.b16 %v7469
    %v8948 = vunpack.c.l.b16 %v7470
    %v8949 = vunpack.c.l.b16 %v7471
    %v8950 = vunpack.c.l.b16 %v7472
    %v8951 = vunpack.c.l.b16 %v7473
    %v8952 = vpack.c.b16 %v8945, %v8944
    %v8953 = vpack.c.b16 %v8947, %v8946
    %v8954 = vpack.c.b16 %v8949, %v8948
    %v8955 = vpack.c.b16 %v8951, %v8950
    %v8961 = vsel %vm4306, %v7290, 0
    %8963 = vmatprep.subr.bf16.mxu0 0
    %8964 = vmatpush1.bf16.msra.mxu0 %v8952
    %8965 = vmatprep.subr.bf16.mxu0 0
    %8966 = vmatpush1.bf16.msra.mxu0 %v8953
    %8967 = vmatprep.subr.bf16.mxu0 0
    %8968 = vmatpush1.bf16.msra.mxu0 %v8954
    %8969 = vmatprep.subr.bf16.mxu0 0
    %8970 = vmatpush1.bf16.msra.mxu0 %v8955
    %8971 = vmatprep.subr.bf16.mxu0 0
    %8972 = vmatpush1.bf16.msra.mxu0 0
    %8973 = vmatprep.subr.bf16.mxu0 0
    %8974 = vmatpush1.bf16.msra.mxu0 0
    %8975 = vmatprep.subr.bf16.mxu0 0
    %8976 = vmatpush1.bf16.msra.mxu0 0
    %8977 = vmatprep.subr.bf16.mxu0 0
    %8978 = vmatpush1.bf16.msra.mxu0 0
    %8979 = vmatprep.subr.bf16.mxu0 0
    %8980 = vmatpush1.bf16.msra.mxu0 0
    %8981 = vmatprep.subr.bf16.mxu0 0
    %8982 = vmatpush1.bf16.msra.mxu0 0
    %8983 = vmatprep.subr.bf16.mxu0 0
    %8984 = vmatpush1.bf16.msra.mxu0 0
    %8985 = vmatprep.subr.bf16.mxu0 0
    %8986 = vmatpush1.bf16.msra.mxu0 0
    %8987 = vmatprep.subr.bf16.mxu0 0
    %8988 = vmatpush1.bf16.msra.mxu0 0
    %8989 = vmatprep.subr.bf16.mxu0 0
    %8990 = vmatpush1.bf16.msra.mxu0 0
    %8991 = vmatprep.subr.bf16.mxu0 0
    %8992 = vmatpush1.bf16.msra.mxu0 0
    %8993 = vmatprep.subr.bf16.mxu0 0
    %8994 = vmatpush1.bf16.msra.mxu0 0
    %8995 = vmatprep.mubr.bf16.mxu0 0
    %8996 = vmatmul.mubr.bf16.gmra.mrb[0].mxu0 %v8961
    %v8997 = vpop.f32.mrb[0].mxu0
    %v8998 = vadd.f32 0.0, %v8997
    %v8999 = vpop.f32.mrb[0].mxu0
    %v9000 = vpop.f32.mrb[0].mxu0
    %v9001 = vpop.f32.mrb[0].mxu0
    %9002 = vdwg.mxu0
    %v9003 = vadd.f32 %v8935, %v8998
    %v9012 = vunpack.c.l.b16 %v7474
    %v9013 = vunpack.c.l.b16 %v7475
    %v9014 = vunpack.c.l.b16 %v7476
    %v9015 = vunpack.c.l.b16 %v7477
    %v9016 = vunpack.c.l.b16 %v7478
    %v9017 = vunpack.c.l.b16 %v7479
    %v9018 = vunpack.c.l.b16 %v7480
    %v9019 = vunpack.c.l.b16 %v7481
    %v9020 = vpack.c.b16 %v9013, %v9012
    %v9021 = vpack.c.b16 %v9015, %v9014
    %v9022 = vpack.c.b16 %v9017, %v9016
    %v9023 = vpack.c.b16 %v9019, %v9018
    %v9029 = vsel %vm4306, %v7291, 0
    %9031 = vmatprep.subr.bf16.mxu0 0
    %9032 = vmatpush1.bf16.msra.mxu0 %v9020
    %9033 = vmatprep.subr.bf16.mxu0 0
    %9034 = vmatpush1.bf16.msra.mxu0 %v9021
    %9035 = vmatprep.subr.bf16.mxu0 0
    %9036 = vmatpush1.bf16.msra.mxu0 %v9022
    %9037 = vmatprep.subr.bf16.mxu0 0
    %9038 = vmatpush1.bf16.msra.mxu0 %v9023
    %9039 = vmatprep.subr.bf16.mxu0 0
    %9040 = vmatpush1.bf16.msra.mxu0 0
    %9041 = vmatprep.subr.bf16.mxu0 0
    %9042 = vmatpush1.bf16.msra.mxu0 0
    %9043 = vmatprep.subr.bf16.mxu0 0
    %9044 = vmatpush1.bf16.msra.mxu0 0
    %9045 = vmatprep.subr.bf16.mxu0 0
    %9046 = vmatpush1.bf16.msra.mxu0 0
    %9047 = vmatprep.subr.bf16.mxu0 0
    %9048 = vmatpush1.bf16.msra.mxu0 0
    %9049 = vmatprep.subr.bf16.mxu0 0
    %9050 = vmatpush1.bf16.msra.mxu0 0
    %9051 = vmatprep.subr.bf16.mxu0 0
    %9052 = vmatpush1.bf16.msra.mxu0 0
    %9053 = vmatprep.subr.bf16.mxu0 0
    %9054 = vmatpush1.bf16.msra.mxu0 0
    %9055 = vmatprep.subr.bf16.mxu0 0
    %9056 = vmatpush1.bf16.msra.mxu0 0
    %9057 = vmatprep.subr.bf16.mxu0 0
    %9058 = vmatpush1.bf16.msra.mxu0 0
    %9059 = vmatprep.subr.bf16.mxu0 0
    %9060 = vmatpush1.bf16.msra.mxu0 0
    %9061 = vmatprep.subr.bf16.mxu0 0
    %9062 = vmatpush1.bf16.msra.mxu0 0
    %9063 = vmatprep.mubr.bf16.mxu0 0
    %9064 = vmatmul.mubr.bf16.gmra.mrb[0].mxu0 %v9029
    %v9065 = vpop.f32.mrb[0].mxu0
    %v9066 = vadd.f32 0.0, %v9065
    %v9067 = vpop.f32.mrb[0].mxu0
    %v9068 = vpop.f32.mrb[0].mxu0
    %v9069 = vpop.f32.mrb[0].mxu0
    %9070 = vdwg.mxu0
    %v9071 = vadd.f32 %v9003, %v9066
    %v9080 = vunpack.c.l.b16 %v7482
    %v9081 = vunpack.c.l.b16 %v7483
    %v9082 = vunpack.c.l.b16 %v7484
    %v9083 = vunpack.c.l.b16 %v7485
    %v9084 = vunpack.c.l.b16 %v7486
    %v9085 = vunpack.c.l.b16 %v7487
    %v9086 = vunpack.c.l.b16 %v7488
    %v9087 = vunpack.c.l.b16 %v7489
    %v9088 = vpack.c.b16 %v9081, %v9080
    %v9089 = vpack.c.b16 %v9083, %v9082
    %v9090 = vpack.c.b16 %v9085, %v9084
    %v9091 = vpack.c.b16 %v9087, %v9086
    %v9097 = vsel %vm4306, %v7292, 0
    %9099 = vmatprep.subr.bf16.mxu0 0
    %9100 = vmatpush1.bf16.msra.mxu0 %v9088
    %9101 = vmatprep.subr.bf16.mxu0 0
    %9102 = vmatpush1.bf16.msra.mxu0 %v9089
    %9103 = vmatprep.subr.bf16.mxu0 0
    %9104 = vmatpush1.bf16.msra.mxu0 %v9090
    %9105 = vmatprep.subr.bf16.mxu0 0
    %9106 = vmatpush1.bf16.msra.mxu0 %v9091
    %9107 = vmatprep.subr.bf16.mxu0 0
    %9108 = vmatpush1.bf16.msra.mxu0 0
    %9109 = vmatprep.subr.bf16.mxu0 0
    %9110 = vmatpush1.bf16.msra.mxu0 0
    %9111 = vmatprep.subr.bf16.mxu0 0
    %9112 = vmatpush1.bf16.msra.mxu0 0
    %9113 = vmatprep.subr.bf16.mxu0 0
    %9114 = vmatpush1.bf16.msra.mxu0 0
    %9115 = vmatprep.subr.bf16.mxu0 0
    %9116 = vmatpush1.bf16.msra.mxu0 0
    %9117 = vmatprep.subr.bf16.mxu0 0
    %9118 = vmatpush1.bf16.msra.mxu0 0
    %9119 = vmatprep.subr.bf16.mxu0 0
    %9120 = vmatpush1.bf16.msra.mxu0 0
    %9121 = vmatprep.subr.bf16.mxu0 0
    %9122 = vmatpush1.bf16.msra.mxu0 0
    %9123 = vmatprep.subr.bf16.mxu0 0
    %9124 = vmatpush1.bf16.msra.mxu0 0
    %9125 = vmatprep.subr.bf16.mxu0 0
    %9126 = vmatpush1.bf16.msra.mxu0 0
    %9127 = vmatprep.subr.bf16.mxu0 0
    %9128 = vmatpush1.bf16.msra.mxu0 0
    %9129 = vmatprep.subr.bf16.mxu0 0
    %9130 = vmatpush1.bf16.msra.mxu0 0
    %9131 = vmatprep.mubr.bf16.mxu0 0
    %9132 = vmatmul.mubr.bf16.gmra.mrb[0].mxu0 %v9097
    %v9133 = vpop.f32.mrb[0].mxu0
    %v9134 = vadd.f32 0.0, %v9133
    %v9135 = vpop.f32.mrb[0].mxu0
    %v9136 = vpop.f32.mrb[0].mxu0
    %v9137 = vpop.f32.mrb[0].mxu0
    %9138 = vdwg.mxu0
    %v9139 = vadd.f32 %v9071, %v9134
    %v9148 = vunpack.c.l.b16 %v7490
    %v9149 = vunpack.c.l.b16 %v7491
    %v9150 = vunpack.c.l.b16 %v7492
    %v9151 = vunpack.c.l.b16 %v7493
    %v9152 = vunpack.c.l.b16 %v7494
    %v9153 = vunpack.c.l.b16 %v7495
    %v9154 = vunpack.c.l.b16 %v7496
    %v9155 = vunpack.c.l.b16 %v7497
    %v9156 = vpack.c.b16 %v9149, %v9148
    %v9157 = vpack.c.b16 %v9151, %v9150
    %v9158 = vpack.c.b16 %v9153, %v9152
    %v9159 = vpack.c.b16 %v9155, %v9154
    %v9165 = vsel %vm4306, %v7293, 0
    %9167 = vmatprep.subr.bf16.mxu0 0
    %9168 = vmatpush1.bf16.msra.mxu0 %v9156
    %9169 = vmatprep.subr.bf16.mxu0 0
    %9170 = vmatpush1.bf16.msra.mxu0 %v9157
    %9171 = vmatprep.subr.bf16.mxu0 0
    %9172 = vmatpush1.bf16.msra.mxu0 %v9158
    %9173 = vmatprep.subr.bf16.mxu0 0
    %9174 = vmatpush1.bf16.msra.mxu0 %v9159
    %9175 = vmatprep.subr.bf16.mxu0 0
    %9176 = vmatpush1.bf16.msra.mxu0 0
    %9177 = vmatprep.subr.bf16.mxu0 0
    %9178 = vmatpush1.bf16.msra.mxu0 0
    %9179 = vmatprep.subr.bf16.mxu0 0
    %9180 = vmatpush1.bf16.msra.mxu0 0
    %9181 = vmatprep.subr.bf16.mxu0 0
    %9182 = vmatpush1.bf16.msra.mxu0 0
    %9183 = vmatprep.subr.bf16.mxu0 0
    %9184 = vmatpush1.bf16.msra.mxu0 0
    %9185 = vmatprep.subr.bf16.mxu0 0
    %9186 = vmatpush1.bf16.msra.mxu0 0
    %9187 = vmatprep.subr.bf16.mxu0 0
    %9188 = vmatpush1.bf16.msra.mxu0 0
    %9189 = vmatprep.subr.bf16.mxu0 0
    %9190 = vmatpush1.bf16.msra.mxu0 0
    %9191 = vmatprep.subr.bf16.mxu0 0
    %9192 = vmatpush1.bf16.msra.mxu0 0
    %9193 = vmatprep.subr.bf16.mxu0 0
    %9194 = vmatpush1.bf16.msra.mxu0 0
    %9195 = vmatprep.subr.bf16.mxu0 0
    %9196 = vmatpush1.bf16.msra.mxu0 0
    %9197 = vmatprep.subr.bf16.mxu0 0
    %9198 = vmatpush1.bf16.msra.mxu0 0
    %9199 = vmatprep.mubr.bf16.mxu0 0
    %9200 = vmatmul.mubr.bf16.gmra.mrb[0].mxu0 %v9165
    %v9201 = vpop.f32.mrb[0].mxu0
    %v9202 = vadd.f32 0.0, %v9201
    %v9203 = vpop.f32.mrb[0].mxu0
    %v9204 = vpop.f32.mrb[0].mxu0
    %v9205 = vpop.f32.mrb[0].mxu0
    %9206 = vdwg.mxu0
    %v9207 = vadd.f32 %v9139, %v9202
    %v9216 = vunpack.c.l.b16 %v7498
    %v9217 = vunpack.c.l.b16 %v7499
    %v9218 = vunpack.c.l.b16 %v7500
    %v9219 = vunpack.c.l.b16 %v7501
    %v9220 = vunpack.c.l.b16 %v7502
    %v9221 = vunpack.c.l.b16 %v7503
    %v9222 = vunpack.c.l.b16 %v7504
    %v9223 = vunpack.c.l.b16 %v7505
    %v9224 = vpack.c.b16 %v9217, %v9216
    %v9225 = vpack.c.b16 %v9219, %v9218
    %v9226 = vpack.c.b16 %v9221, %v9220
    %v9227 = vpack.c.b16 %v9223, %v9222
    %v9233 = vsel %vm4306, %v7294, 0
    %9235 = vmatprep.subr.bf16.mxu0 0
    %9236 = vmatpush1.bf16.msra.mxu0 %v9224
    %9237 = vmatprep.subr.bf16.mxu0 0
    %9238 = vmatpush1.bf16.msra.mxu0 %v9225
    %9239 = vmatprep.subr.bf16.mxu0 0
    %9240 = vmatpush1.bf16.msra.mxu0 %v9226
    %9241 = vmatprep.subr.bf16.mxu0 0
    %9242 = vmatpush1.bf16.msra.mxu0 %v9227
    %9243 = vmatprep.subr.bf16.mxu0 0
    %9244 = vmatpush1.bf16.msra.mxu0 0
    %9245 = vmatprep.subr.bf16.mxu0 0
    %9246 = vmatpush1.bf16.msra.mxu0 0
    %9247 = vmatprep.subr.bf16.mxu0 0
    %9248 = vmatpush1.bf16.msra.mxu0 0
    %9249 = vmatprep.subr.bf16.mxu0 0
    %9250 = vmatpush1.bf16.msra.mxu0 0
    %9251 = vmatprep.subr.bf16.mxu0 0
    %9252 = vmatpush1.bf16.msra.mxu0 0
    %9253 = vmatprep.subr.bf16.mxu0 0
    %9254 = vmatpush1.bf16.msra.mxu0 0
    %9255 = vmatprep.subr.bf16.mxu0 0
    %9256 = vmatpush1.bf16.msra.mxu0 0
    %9257 = vmatprep.subr.bf16.mxu0 0
    %9258 = vmatpush1.bf16.msra.mxu0 0
    %9259 = vmatprep.subr.bf16.mxu0 0
    %9260 = vmatpush1.bf16.msra.mxu0 0
    %9261 = vmatprep.subr.bf16.mxu0 0
    %9262 = vmatpush1.bf16.msra.mxu0 0
    %9263 = vmatprep.subr.bf16.mxu0 0
    %9264 = vmatpush1.bf16.msra.mxu0 0
    %9265 = vmatprep.subr.bf16.mxu0 0
    %9266 = vmatpush1.bf16.msra.mxu0 0
    %9267 = vmatprep.mubr.bf16.mxu0 0
    %9268 = vmatmul.mubr.bf16.gmra.mrb[0].mxu0 %v9233
    %v9269 = vpop.f32.mrb[0].mxu0
    %v9270 = vadd.f32 0.0, %v9269
    %v9271 = vpop.f32.mrb[0].mxu0
    %v9272 = vpop.f32.mrb[0].mxu0
    %v9273 = vpop.f32.mrb[0].mxu0
    %9274 = vdwg.mxu0
    %v9275 = vadd.f32 %v9207, %v9270
    %v9284 = vunpack.c.l.b16 %v7506
    %v9285 = vunpack.c.l.b16 %v7507
    %v9286 = vunpack.c.l.b16 %v7508
    %v9287 = vunpack.c.l.b16 %v7509
    %v9288 = vunpack.c.l.b16 %v7510
    %v9289 = vunpack.c.l.b16 %v7511
    %v9290 = vunpack.c.l.b16 %v7512
    %v9291 = vunpack.c.l.b16 %v7513
    %v9292 = vpack.c.b16 %v9285, %v9284
    %v9293 = vpack.c.b16 %v9287, %v9286
    %v9294 = vpack.c.b16 %v9289, %v9288
    %v9295 = vpack.c.b16 %v9291, %v9290
    %v9301 = vsel %vm4306, %v7295, 0
    %9303 = vmatprep.subr.bf16.mxu0 0
    %9304 = vmatpush1.bf16.msra.mxu0 %v9292
    %9305 = vmatprep.subr.bf16.mxu0 0
    %9306 = vmatpush1.bf16.msra.mxu0 %v9293
    %9307 = vmatprep.subr.bf16.mxu0 0
    %9308 = vmatpush1.bf16.msra.mxu0 %v9294
    %9309 = vmatprep.subr.bf16.mxu0 0
    %9310 = vmatpush1.bf16.msra.mxu0 %v9295
    %9311 = vmatprep.subr.bf16.mxu0 0
    %9312 = vmatpush1.bf16.msra.mxu0 0
    %9313 = vmatprep.subr.bf16.mxu0 0
    %9314 = vmatpush1.bf16.msra.mxu0 0
    %9315 = vmatprep.subr.bf16.mxu0 0
    %9316 = vmatpush1.bf16.msra.mxu0 0
    %9317 = vmatprep.subr.bf16.mxu0 0
    %9318 = vmatpush1.bf16.msra.mxu0 0
    %9319 = vmatprep.subr.bf16.mxu0 0
    %9320 = vmatpush1.bf16.msra.mxu0 0
    %9321 = vmatprep.subr.bf16.mxu0 0
    %9322 = vmatpush1.bf16.msra.mxu0 0
    %9323 = vmatprep.subr.bf16.mxu0 0
    %9324 = vmatpush1.bf16.msra.mxu0 0
    %9325 = vmatprep.subr.bf16.mxu0 0
    %9326 = vmatpush1.bf16.msra.mxu0 0
    %9327 = vmatprep.subr.bf16.mxu0 0
    %9328 = vmatpush1.bf16.msra.mxu0 0
    %9329 = vmatprep.subr.bf16.mxu0 0
    %9330 = vmatpush1.bf16.msra.mxu0 0
    %9331 = vmatprep.subr.bf16.mxu0 0
    %9332 = vmatpush1.bf16.msra.mxu0 0
    %9333 = vmatprep.subr.bf16.mxu0 0
    %9334 = vmatpush1.bf16.msra.mxu0 0
    %9335 = vmatprep.mubr.bf16.mxu0 0
    %9336 = vmatmul.mubr.bf16.gmra.mrb[0].mxu0 %v9301
    %v9337 = vpop.f32.mrb[0].mxu0
    %v9338 = vadd.f32 0.0, %v9337
    %v9339 = vpop.f32.mrb[0].mxu0
    %v9340 = vpop.f32.mrb[0].mxu0
    %v9341 = vpop.f32.mrb[0].mxu0
    %9342 = vdwg.mxu0
    %v9343 = vadd.f32 %v9275, %v9338
    %v9352 = vunpack.c.l.b16 %v7514
    %v9353 = vunpack.c.l.b16 %v7515
    %v9354 = vunpack.c.l.b16 %v7516
    %v9355 = vunpack.c.l.b16 %v7517
    %v9356 = vunpack.c.l.b16 %v7518
    %v9357 = vunpack.c.l.b16 %v7519
    %v9358 = vunpack.c.l.b16 %v7520
    %v9359 = vunpack.c.l.b16 %v7521
    %v9360 = vpack.c.b16 %v9353, %v9352
    %v9361 = vpack.c.b16 %v9355, %v9354
    %v9362 = vpack.c.b16 %v9357, %v9356
    %v9363 = vpack.c.b16 %v9359, %v9358
    %v9369 = vsel %vm4306, %v7296, 0
    %9371 = vmatprep.subr.bf16.mxu0 0
    %9372 = vmatpush1.bf16.msra.mxu0 %v9360
    %9373 = vmatprep.subr.bf16.mxu0 0
    %9374 = vmatpush1.bf16.msra.mxu0 %v9361
    %9375 = vmatprep.subr.bf16.mxu0 0
    %9376 = vmatpush1.bf16.msra.mxu0 %v9362
    %9377 = vmatprep.subr.bf16.mxu0 0
    %9378 = vmatpush1.bf16.msra.mxu0 %v9363
    %9379 = vmatprep.subr.bf16.mxu0 0
    %9380 = vmatpush1.bf16.msra.mxu0 0
    %9381 = vmatprep.subr.bf16.mxu0 0
    %9382 = vmatpush1.bf16.msra.mxu0 0
    %9383 = vmatprep.subr.bf16.mxu0 0
    %9384 = vmatpush1.bf16.msra.mxu0 0
    %9385 = vmatprep.subr.bf16.mxu0 0
    %9386 = vmatpush1.bf16.msra.mxu0 0
    %9387 = vmatprep.subr.bf16.mxu0 0
    %9388 = vmatpush1.bf16.msra.mxu0 0
    %9389 = vmatprep.subr.bf16.mxu0 0
    %9390 = vmatpush1.bf16.msra.mxu0 0
    %9391 = vmatprep.subr.bf16.mxu0 0
    %9392 = vmatpush1.bf16.msra.mxu0 0
    %9393 = vmatprep.subr.bf16.mxu0 0
    %9394 = vmatpush1.bf16.msra.mxu0 0
    %9395 = vmatprep.subr.bf16.mxu0 0
    %9396 = vmatpush1.bf16.msra.mxu0 0
    %9397 = vmatprep.subr.bf16.mxu0 0
    %9398 = vmatpush1.bf16.msra.mxu0 0
    %9399 = vmatprep.subr.bf16.mxu0 0
    %9400 = vmatpush1.bf16.msra.mxu0 0
    %9401 = vmatprep.subr.bf16.mxu0 0
    %9402 = vmatpush1.bf16.msra.mxu0 0
    %9403 = vmatprep.mubr.bf16.mxu0 0
    %9404 = vmatmul.mubr.bf16.gmra.mrb[0].mxu0 %v9369
    %v9405 = vpop.f32.mrb[0].mxu0
    %v9406 = vadd.f32 0.0, %v9405
    %v9407 = vpop.f32.mrb[0].mxu0
    %v9408 = vpop.f32.mrb[0].mxu0
    %v9409 = vpop.f32.mrb[0].mxu0
    %9410 = vdwg.mxu0
    %v9411 = vadd.f32 %v9343, %v9406
    %v9420 = vunpack.c.l.b16 %v7522
    %v9421 = vunpack.c.l.b16 %v7523
    %v9422 = vunpack.c.l.b16 %v7524
    %v9423 = vunpack.c.l.b16 %v7525
    %v9424 = vunpack.c.l.b16 %v7526
    %v9425 = vunpack.c.l.b16 %v7527
    %v9426 = vunpack.c.l.b16 %v7528
    %v9427 = vunpack.c.l.b16 %v7529
    %v9428 = vpack.c.b16 %v9421, %v9420
    %v9429 = vpack.c.b16 %v9423, %v9422
    %v9430 = vpack.c.b16 %v9425, %v9424
    %v9431 = vpack.c.b16 %v9427, %v9426
    %v9437 = vsel %vm4306, %v7297, 0
    %9439 = vmatprep.subr.bf16.mxu0 0
    %9440 = vmatpush1.bf16.msra.mxu0 %v9428
    %9441 = vmatprep.subr.bf16.mxu0 0
    %9442 = vmatpush1.bf16.msra.mxu0 %v9429
    %9443 = vmatprep.subr.bf16.mxu0 0
    %9444 = vmatpush1.bf16.msra.mxu0 %v9430
    %9445 = vmatprep.subr.bf16.mxu0 0
    %9446 = vmatpush1.bf16.msra.mxu0 %v9431
    %9447 = vmatprep.subr.bf16.mxu0 0
    %9448 = vmatpush1.bf16.msra.mxu0 0
    %9449 = vmatprep.subr.bf16.mxu0 0
    %9450 = vmatpush1.bf16.msra.mxu0 0
    %9451 = vmatprep.subr.bf16.mxu0 0
    %9452 = vmatpush1.bf16.msra.mxu0 0
    %9453 = vmatprep.subr.bf16.mxu0 0
    %9454 = vmatpush1.bf16.msra.mxu0 0
    %9455 = vmatprep.subr.bf16.mxu0 0
    %9456 = vmatpush1.bf16.msra.mxu0 0
    %9457 = vmatprep.subr.bf16.mxu0 0
    %9458 = vmatpush1.bf16.msra.mxu0 0
    %9459 = vmatprep.subr.bf16.mxu0 0
    %9460 = vmatpush1.bf16.msra.mxu0 0
    %9461 = vmatprep.subr.bf16.mxu0 0
    %9462 = vmatpush1.bf16.msra.mxu0 0
    %9463 = vmatprep.subr.bf16.mxu0 0
    %9464 = vmatpush1.bf16.msra.mxu0 0
    %9465 = vmatprep.subr.bf16.mxu0 0
    %9466 = vmatpush1.bf16.msra.mxu0 0
    %9467 = vmatprep.subr.bf16.mxu0 0
    %9468 = vmatpush1.bf16.msra.mxu0 0
    %9469 = vmatprep.subr.bf16.mxu0 0
    %9470 = vmatpush1.bf16.msra.mxu0 0
    %9471 = vmatprep.mubr.bf16.mxu0 0
    %9472 = vmatmul.mubr.bf16.gmra.mrb[0].mxu0 %v9437
    %v9473 = vpop.f32.mrb[0].mxu0
    %v9474 = vadd.f32 0.0, %v9473
    %v9475 = vpop.f32.mrb[0].mxu0
    %v9476 = vpop.f32.mrb[0].mxu0
    %v9477 = vpop.f32.mrb[0].mxu0
    %9478 = vdwg.mxu0
    %v9479 = vadd.f32 %v9411, %v9474
    %v9488 = vunpack.c.l.b16 %v7530
    %v9489 = vunpack.c.l.b16 %v7531
    %v9490 = vunpack.c.l.b16 %v7532
    %v9491 = vunpack.c.l.b16 %v7533
    %v9492 = vunpack.c.l.b16 %v7534
    %v9493 = vunpack.c.l.b16 %v7535
    %v9494 = vunpack.c.l.b16 %v7536
    %v9495 = vunpack.c.l.b16 %v7537
    %v9496 = vpack.c.b16 %v9489, %v9488
    %v9497 = vpack.c.b16 %v9491, %v9490
    %v9498 = vpack.c.b16 %v9493, %v9492
    %v9499 = vpack.c.b16 %v9495, %v9494
    %v9505 = vsel %vm4306, %v7298, 0
    %9507 = vmatprep.subr.bf16.mxu0 0
    %9508 = vmatpush1.bf16.msra.mxu0 %v9496
    %9509 = vmatprep.subr.bf16.mxu0 0
    %9510 = vmatpush1.bf16.msra.mxu0 %v9497
    %9511 = vmatprep.subr.bf16.mxu0 0
    %9512 = vmatpush1.bf16.msra.mxu0 %v9498
    %9513 = vmatprep.subr.bf16.mxu0 0
    %9514 = vmatpush1.bf16.msra.mxu0 %v9499
    %9515 = vmatprep.subr.bf16.mxu0 0
    %9516 = vmatpush1.bf16.msra.mxu0 0
    %9517 = vmatprep.subr.bf16.mxu0 0
    %9518 = vmatpush1.bf16.msra.mxu0 0
    %9519 = vmatprep.subr.bf16.mxu0 0
    %9520 = vmatpush1.bf16.msra.mxu0 0
    %9521 = vmatprep.subr.bf16.mxu0 0
    %9522 = vmatpush1.bf16.msra.mxu0 0
    %9523 = vmatprep.subr.bf16.mxu0 0
    %9524 = vmatpush1.bf16.msra.mxu0 0
    %9525 = vmatprep.subr.bf16.mxu0 0
    %9526 = vmatpush1.bf16.msra.mxu0 0
    %9527 = vmatprep.subr.bf16.mxu0 0
    %9528 = vmatpush1.bf16.msra.mxu0 0
    %9529 = vmatprep.subr.bf16.mxu0 0
    %9530 = vmatpush1.bf16.msra.mxu0 0
    %9531 = vmatprep.subr.bf16.mxu0 0
    %9532 = vmatpush1.bf16.msra.mxu0 0
    %9533 = vmatprep.subr.bf16.mxu0 0
    %9534 = vmatpush1.bf16.msra.mxu0 0
    %9535 = vmatprep.subr.bf16.mxu0 0
    %9536 = vmatpush1.bf16.msra.mxu0 0
    %9537 = vmatprep.subr.bf16.mxu0 0
    %9538 = vmatpush1.bf16.msra.mxu0 0
    %9539 = vmatprep.mubr.bf16.mxu0 0
    %9540 = vmatmul.mubr.bf16.gmra.mrb[0].mxu0 %v9505
    %v9541 = vpop.f32.mrb[0].mxu0
    %v9542 = vadd.f32 0.0, %v9541
    %v9543 = vpop.f32.mrb[0].mxu0
    %v9544 = vpop.f32.mrb[0].mxu0
    %v9545 = vpop.f32.mrb[0].mxu0
    %9546 = vdwg.mxu0
    %v9547 = vadd.f32 %v9479, %v9542
    %v9556 = vunpack.c.l.b16 %v7538
    %v9557 = vunpack.c.l.b16 %v7539
    %v9558 = vunpack.c.l.b16 %v7540
    %v9559 = vunpack.c.l.b16 %v7541
    %v9560 = vunpack.c.l.b16 %v7542
    %v9561 = vunpack.c.l.b16 %v7543
    %v9562 = vunpack.c.l.b16 %v7544
    %v9563 = vunpack.c.l.b16 %v7545
    %v9564 = vpack.c.b16 %v9557, %v9556
    %v9565 = vpack.c.b16 %v9559, %v9558
    %v9566 = vpack.c.b16 %v9561, %v9560
    %v9567 = vpack.c.b16 %v9563, %v9562
    %v9573 = vsel %vm4306, %v7299, 0
    %9575 = vmatprep.subr.bf16.mxu0 0
    %9576 = vmatpush1.bf16.msra.mxu0 %v9564
    %9577 = vmatprep.subr.bf16.mxu0 0
    %9578 = vmatpush1.bf16.msra.mxu0 %v9565
    %9579 = vmatprep.subr.bf16.mxu0 0
    %9580 = vmatpush1.bf16.msra.mxu0 %v9566
    %9581 = vmatprep.subr.bf16.mxu0 0
    %9582 = vmatpush1.bf16.msra.mxu0 %v9567
    %9583 = vmatprep.subr.bf16.mxu0 0
    %9584 = vmatpush1.bf16.msra.mxu0 0
    %9585 = vmatprep.subr.bf16.mxu0 0
    %9586 = vmatpush1.bf16.msra.mxu0 0
    %9587 = vmatprep.subr.bf16.mxu0 0
    %9588 = vmatpush1.bf16.msra.mxu0 0
    %9589 = vmatprep.subr.bf16.mxu0 0
    %9590 = vmatpush1.bf16.msra.mxu0 0
    %9591 = vmatprep.subr.bf16.mxu0 0
    %9592 = vmatpush1.bf16.msra.mxu0 0
    %9593 = vmatprep.subr.bf16.mxu0 0
    %9594 = vmatpush1.bf16.msra.mxu0 0
    %9595 = vmatprep.subr.bf16.mxu0 0
    %9596 = vmatpush1.bf16.msra.mxu0 0
    %9597 = vmatprep.subr.bf16.mxu0 0
    %9598 = vmatpush1.bf16.msra.mxu0 0
    %9599 = vmatprep.subr.bf16.mxu0 0
    %9600 = vmatpush1.bf16.msra.mxu0 0
    %9601 = vmatprep.subr.bf16.mxu0 0
    %9602 = vmatpush1.bf16.msra.mxu0 0
    %9603 = vmatprep.subr.bf16.mxu0 0
    %9604 = vmatpush1.bf16.msra.mxu0 0
    %9605 = vmatprep.subr.bf16.mxu0 0
    %9606 = vmatpush1.bf16.msra.mxu0 0
    %9607 = vmatprep.mubr.bf16.mxu0 0
    %9608 = vmatmul.mubr.bf16.gmra.mrb[0].mxu0 %v9573
    %v9609 = vpop.f32.mrb[0].mxu0
    %v9610 = vadd.f32 0.0, %v9609
    %v9611 = vpop.f32.mrb[0].mxu0
    %v9612 = vpop.f32.mrb[0].mxu0
    %v9613 = vpop.f32.mrb[0].mxu0
    %9614 = vdwg.mxu0
    %v9615 = vadd.f32 %v9547, %v9610
    %v9624 = vunpack.c.l.b16 %v7546
    %v9625 = vunpack.c.l.b16 %v7547
    %v9626 = vunpack.c.l.b16 %v7548
    %v9627 = vunpack.c.l.b16 %v7549
    %v9628 = vunpack.c.l.b16 %v7550
    %v9629 = vunpack.c.l.b16 %v7551
    %v9630 = vunpack.c.l.b16 %v7552
    %v9631 = vunpack.c.l.b16 %v7553
    %v9632 = vpack.c.b16 %v9625, %v9624
    %v9633 = vpack.c.b16 %v9627, %v9626
    %v9634 = vpack.c.b16 %v9629, %v9628
    %v9635 = vpack.c.b16 %v9631, %v9630
    %v9641 = vsel %vm4306, %v7300, 0
    %9643 = vmatprep.subr.bf16.mxu0 0
    %9644 = vmatpush1.bf16.msra.mxu0 %v9632
    %9645 = vmatprep.subr.bf16.mxu0 0
    %9646 = vmatpush1.bf16.msra.mxu0 %v9633
    %9647 = vmatprep.subr.bf16.mxu0 0
    %9648 = vmatpush1.bf16.msra.mxu0 %v9634
    %9649 = vmatprep.subr.bf16.mxu0 0
    %9650 = vmatpush1.bf16.msra.mxu0 %v9635
    %9651 = vmatprep.subr.bf16.mxu0 0
    %9652 = vmatpush1.bf16.msra.mxu0 0
    %9653 = vmatprep.subr.bf16.mxu0 0
    %9654 = vmatpush1.bf16.msra.mxu0 0
    %9655 = vmatprep.subr.bf16.mxu0 0
    %9656 = vmatpush1.bf16.msra.mxu0 0
    %9657 = vmatprep.subr.bf16.mxu0 0
    %9658 = vmatpush1.bf16.msra.mxu0 0
    %9659 = vmatprep.subr.bf16.mxu0 0
    %9660 = vmatpush1.bf16.msra.mxu0 0
    %9661 = vmatprep.subr.bf16.mxu0 0
    %9662 = vmatpush1.bf16.msra.mxu0 0
    %9663 = vmatprep.subr.bf16.mxu0 0
    %9664 = vmatpush1.bf16.msra.mxu0 0
    %9665 = vmatprep.subr.bf16.mxu0 0
    %9666 = vmatpush1.bf16.msra.mxu0 0
    %9667 = vmatprep.subr.bf16.mxu0 0
    %9668 = vmatpush1.bf16.msra.mxu0 0
    %9669 = vmatprep.subr.bf16.mxu0 0
    %9670 = vmatpush1.bf16.msra.mxu0 0
    %9671 = vmatprep.subr.bf16.mxu0 0
    %9672 = vmatpush1.bf16.msra.mxu0 0
    %9673 = vmatprep.subr.bf16.mxu0 0
    %9674 = vmatpush1.bf16.msra.mxu0 0
    %9675 = vmatprep.mubr.bf16.mxu0 0
    %9676 = vmatmul.mubr.bf16.gmra.mrb[0].mxu0 %v9641
    %v9677 = vpop.f32.mrb[0].mxu0
    %v9678 = vadd.f32 0.0, %v9677
    %v9679 = vpop.f32.mrb[0].mxu0
    %v9680 = vpop.f32.mrb[0].mxu0
    %v9681 = vpop.f32.mrb[0].mxu0
    %9682 = vdwg.mxu0
    %v9683 = vadd.f32 %v9615, %v9678
    %v9692 = vunpack.c.l.b16 %v7554
    %v9693 = vunpack.c.l.b16 %v7555
    %v9694 = vunpack.c.l.b16 %v7556
    %v9695 = vunpack.c.l.b16 %v7557
    %v9696 = vunpack.c.l.b16 %v7558
    %v9697 = vunpack.c.l.b16 %v7559
    %v9698 = vunpack.c.l.b16 %v7560
    %v9699 = vunpack.c.l.b16 %v7561
    %v9700 = vpack.c.b16 %v9693, %v9692
    %v9701 = vpack.c.b16 %v9695, %v9694
    %v9702 = vpack.c.b16 %v9697, %v9696
    %v9703 = vpack.c.b16 %v9699, %v9698
    %v9709 = vsel %vm4306, %v7301, 0
    %9711 = vmatprep.subr.bf16.mxu0 0
    %9712 = vmatpush1.bf16.msra.mxu0 %v9700
    %9713 = vmatprep.subr.bf16.mxu0 0
    %9714 = vmatpush1.bf16.msra.mxu0 %v9701
    %9715 = vmatprep.subr.bf16.mxu0 0
    %9716 = vmatpush1.bf16.msra.mxu0 %v9702
    %9717 = vmatprep.subr.bf16.mxu0 0
    %9718 = vmatpush1.bf16.msra.mxu0 %v9703
    %9719 = vmatprep.subr.bf16.mxu0 0
    %9720 = vmatpush1.bf16.msra.mxu0 0
    %9721 = vmatprep.subr.bf16.mxu0 0
    %9722 = vmatpush1.bf16.msra.mxu0 0
    %9723 = vmatprep.subr.bf16.mxu0 0
    %9724 = vmatpush1.bf16.msra.mxu0 0
    %9725 = vmatprep.subr.bf16.mxu0 0
    %9726 = vmatpush1.bf16.msra.mxu0 0
    %9727 = vmatprep.subr.bf16.mxu0 0
    %9728 = vmatpush1.bf16.msra.mxu0 0
    %9729 = vmatprep.subr.bf16.mxu0 0
    %9730 = vmatpush1.bf16.msra.mxu0 0
    %9731 = vmatprep.subr.bf16.mxu0 0
    %9732 = vmatpush1.bf16.msra.mxu0 0
    %9733 = vmatprep.subr.bf16.mxu0 0
    %9734 = vmatpush1.bf16.msra.mxu0 0
    %9735 = vmatprep.subr.bf16.mxu0 0
    %9736 = vmatpush1.bf16.msra.mxu0 0
    %9737 = vmatprep.subr.bf16.mxu0 0
    %9738 = vmatpush1.bf16.msra.mxu0 0
    %9739 = vmatprep.subr.bf16.mxu0 0
    %9740 = vmatpush1.bf16.msra.mxu0 0
    %9741 = vmatprep.subr.bf16.mxu0 0
    %9742 = vmatpush1.bf16.msra.mxu0 0
    %9743 = vmatprep.mubr.bf16.mxu0 0
    %9744 = vmatmul.mubr.bf16.gmra.mrb[0].mxu0 %v9709
    %v9745 = vpop.f32.mrb[0].mxu0
    %v9746 = vadd.f32 0.0, %v9745
    %v9747 = vpop.f32.mrb[0].mxu0
    %v9748 = vpop.f32.mrb[0].mxu0
    %v9749 = vpop.f32.mrb[0].mxu0
    %9750 = vdwg.mxu0
    %v9751 = vadd.f32 %v9683, %v9746
    %v9760 = vunpack.c.l.b16 %v7562
    %v9761 = vunpack.c.l.b16 %v7563
    %v9762 = vunpack.c.l.b16 %v7564
    %v9763 = vunpack.c.l.b16 %v7565
    %v9764 = vunpack.c.l.b16 %v7566
    %v9765 = vunpack.c.l.b16 %v7567
    %v9766 = vunpack.c.l.b16 %v7568
    %v9767 = vunpack.c.l.b16 %v7569
    %v9768 = vpack.c.b16 %v9761, %v9760
    %v9769 = vpack.c.b16 %v9763, %v9762
    %v9770 = vpack.c.b16 %v9765, %v9764
    %v9771 = vpack.c.b16 %v9767, %v9766
    %v9777 = vsel %vm4306, %v7302, 0
    %9779 = vmatprep.subr.bf16.mxu0 0
    %9780 = vmatpush1.bf16.msra.mxu0 %v9768
    %9781 = vmatprep.subr.bf16.mxu0 0
    %9782 = vmatpush1.bf16.msra.mxu0 %v9769
    %9783 = vmatprep.subr.bf16.mxu0 0
    %9784 = vmatpush1.bf16.msra.mxu0 %v9770
    %9785 = vmatprep.subr.bf16.mxu0 0
    %9786 = vmatpush1.bf16.msra.mxu0 %v9771
    %9787 = vmatprep.subr.bf16.mxu0 0
    %9788 = vmatpush1.bf16.msra.mxu0 0
    %9789 = vmatprep.subr.bf16.mxu0 0
    %9790 = vmatpush1.bf16.msra.mxu0 0
    %9791 = vmatprep.subr.bf16.mxu0 0
    %9792 = vmatpush1.bf16.msra.mxu0 0
    %9793 = vmatprep.subr.bf16.mxu0 0
    %9794 = vmatpush1.bf16.msra.mxu0 0
    %9795 = vmatprep.subr.bf16.mxu0 0
    %9796 = vmatpush1.bf16.msra.mxu0 0
    %9797 = vmatprep.subr.bf16.mxu0 0
    %9798 = vmatpush1.bf16.msra.mxu0 0
    %9799 = vmatprep.subr.bf16.mxu0 0
    %9800 = vmatpush1.bf16.msra.mxu0 0
    %9801 = vmatprep.subr.bf16.mxu0 0
    %9802 = vmatpush1.bf16.msra.mxu0 0
    %9803 = vmatprep.subr.bf16.mxu0 0
    %9804 = vmatpush1.bf16.msra.mxu0 0
    %9805 = vmatprep.subr.bf16.mxu0 0
    %9806 = vmatpush1.bf16.msra.mxu0 0
    %9807 = vmatprep.subr.bf16.mxu0 0
    %9808 = vmatpush1.bf16.msra.mxu0 0
    %9809 = vmatprep.subr.bf16.mxu0 0
    %9810 = vmatpush1.bf16.msra.mxu0 0
    %9811 = vmatprep.mubr.bf16.mxu0 0
    %9812 = vmatmul.mubr.bf16.gmra.mrb[0].mxu0 %v9777
    %v9813 = vpop.f32.mrb[0].mxu0
    %v9814 = vadd.f32 0.0, %v9813
    %v9815 = vpop.f32.mrb[0].mxu0
    %v9816 = vpop.f32.mrb[0].mxu0
    %v9817 = vpop.f32.mrb[0].mxu0
    %9818 = vdwg.mxu0
    %v9819 = vadd.f32 %v9751, %v9814
    %v9828 = vunpack.c.l.b16 %v7570
    %v9829 = vunpack.c.l.b16 %v7571
    %v9830 = vunpack.c.l.b16 %v7572
    %v9831 = vunpack.c.l.b16 %v7573
    %v9832 = vunpack.c.l.b16 %v7574
    %v9833 = vunpack.c.l.b16 %v7575
    %v9834 = vunpack.c.l.b16 %v7576
    %v9835 = vunpack.c.l.b16 %v7577
    %v9836 = vpack.c.b16 %v9829, %v9828
    %v9837 = vpack.c.b16 %v9831, %v9830
    %v9838 = vpack.c.b16 %v9833, %v9832
    %v9839 = vpack.c.b16 %v9835, %v9834
    %v9845 = vsel %vm4306, %v7303, 0
    %9847 = vmatprep.subr.bf16.mxu0 0
    %9848 = vmatpush1.bf16.msra.mxu0 %v9836
    %9849 = vmatprep.subr.bf16.mxu0 0
    %9850 = vmatpush1.bf16.msra.mxu0 %v9837
    %9851 = vmatprep.subr.bf16.mxu0 0
    %9852 = vmatpush1.bf16.msra.mxu0 %v9838
    %9853 = vmatprep.subr.bf16.mxu0 0
    %9854 = vmatpush1.bf16.msra.mxu0 %v9839
    %9855 = vmatprep.subr.bf16.mxu0 0
    %9856 = vmatpush1.bf16.msra.mxu0 0
    %9857 = vmatprep.subr.bf16.mxu0 0
    %9858 = vmatpush1.bf16.msra.mxu0 0
    %9859 = vmatprep.subr.bf16.mxu0 0
    %9860 = vmatpush1.bf16.msra.mxu0 0
    %9861 = vmatprep.subr.bf16.mxu0 0
    %9862 = vmatpush1.bf16.msra.mxu0 0
    %9863 = vmatprep.subr.bf16.mxu0 0
    %9864 = vmatpush1.bf16.msra.mxu0 0
    %9865 = vmatprep.subr.bf16.mxu0 0
    %9866 = vmatpush1.bf16.msra.mxu0 0
    %9867 = vmatprep.subr.bf16.mxu0 0
    %9868 = vmatpush1.bf16.msra.mxu0 0
    %9869 = vmatprep.subr.bf16.mxu0 0
    %9870 = vmatpush1.bf16.msra.mxu0 0
    %9871 = vmatprep.subr.bf16.mxu0 0
    %9872 = vmatpush1.bf16.msra.mxu0 0
    %9873 = vmatprep.subr.bf16.mxu0 0
    %9874 = vmatpush1.bf16.msra.mxu0 0
    %9875 = vmatprep.subr.bf16.mxu0 0
    %9876 = vmatpush1.bf16.msra.mxu0 0
    %9877 = vmatprep.subr.bf16.mxu0 0
    %9878 = vmatpush1.bf16.msra.mxu0 0
    %9879 = vmatprep.mubr.bf16.mxu0 0
    %9880 = vmatmul.mubr.bf16.gmra.mrb[0].mxu0 %v9845
    %v9881 = vpop.f32.mrb[0].mxu0
    %v9882 = vadd.f32 0.0, %v9881
    %v9883 = vpop.f32.mrb[0].mxu0
    %v9884 = vpop.f32.mrb[0].mxu0
    %v9885 = vpop.f32.mrb[0].mxu0
    %9886 = vdwg.mxu0
    %v9887 = vadd.f32 %v9819, %v9882
    %v9896 = vunpack.c.l.b16 %v7578
    %v9897 = vunpack.c.l.b16 %v7579
    %v9898 = vunpack.c.l.b16 %v7580
    %v9899 = vunpack.c.l.b16 %v7581
    %v9900 = vunpack.c.l.b16 %v7582
    %v9901 = vunpack.c.l.b16 %v7583
    %v9902 = vunpack.c.l.b16 %v7584
    %v9903 = vunpack.c.l.b16 %v7585
    %v9904 = vpack.c.b16 %v9897, %v9896
    %v9905 = vpack.c.b16 %v9899, %v9898
    %v9906 = vpack.c.b16 %v9901, %v9900
    %v9907 = vpack.c.b16 %v9903, %v9902
    %v9913 = vsel %vm4306, %v7304, 0
    %9915 = vmatprep.subr.bf16.mxu0 0
    %9916 = vmatpush1.bf16.msra.mxu0 %v9904
    %9917 = vmatprep.subr.bf16.mxu0 0
    %9918 = vmatpush1.bf16.msra.mxu0 %v9905
    %9919 = vmatprep.subr.bf16.mxu0 0
    %9920 = vmatpush1.bf16.msra.mxu0 %v9906
    %9921 = vmatprep.subr.bf16.mxu0 0
    %9922 = vmatpush1.bf16.msra.mxu0 %v9907
    %9923 = vmatprep.subr.bf16.mxu0 0
    %9924 = vmatpush1.bf16.msra.mxu0 0
    %9925 = vmatprep.subr.bf16.mxu0 0
    %9926 = vmatpush1.bf16.msra.mxu0 0
    %9927 = vmatprep.subr.bf16.mxu0 0
    %9928 = vmatpush1.bf16.msra.mxu0 0
    %9929 = vmatprep.subr.bf16.mxu0 0
    %9930 = vmatpush1.bf16.msra.mxu0 0
    %9931 = vmatprep.subr.bf16.mxu0 0
    %9932 = vmatpush1.bf16.msra.mxu0 0
    %9933 = vmatprep.subr.bf16.mxu0 0
    %9934 = vmatpush1.bf16.msra.mxu0 0
    %9935 = vmatprep.subr.bf16.mxu0 0
    %9936 = vmatpush1.bf16.msra.mxu0 0
    %9937 = vmatprep.subr.bf16.mxu0 0
    %9938 = vmatpush1.bf16.msra.mxu0 0
    %9939 = vmatprep.subr.bf16.mxu0 0
    %9940 = vmatpush1.bf16.msra.mxu0 0
    %9941 = vmatprep.subr.bf16.mxu0 0
    %9942 = vmatpush1.bf16.msra.mxu0 0
    %9943 = vmatprep.subr.bf16.mxu0 0
    %9944 = vmatpush1.bf16.msra.mxu0 0
    %9945 = vmatprep.subr.bf16.mxu0 0
    %9946 = vmatpush1.bf16.msra.mxu0 0
    %9947 = vmatprep.mubr.bf16.mxu0 0
    %9948 = vmatmul.mubr.bf16.gmra.mrb[0].mxu0 %v9913
    %v9949 = vpop.f32.mrb[0].mxu0
    %v9950 = vadd.f32 0.0, %v9949
    %v9951 = vpop.f32.mrb[0].mxu0
    %v9952 = vpop.f32.mrb[0].mxu0
    %v9953 = vpop.f32.mrb[0].mxu0
    %9954 = vdwg.mxu0
    %v9955 = vadd.f32 %v9887, %v9950
    %v9964 = vunpack.c.l.b16 %v7586
    %v9965 = vunpack.c.l.b16 %v7587
    %v9966 = vunpack.c.l.b16 %v7588
    %v9967 = vunpack.c.l.b16 %v7589
    %v9968 = vunpack.c.l.b16 %v7590
    %v9969 = vunpack.c.l.b16 %v7591
    %v9970 = vunpack.c.l.b16 %v7592
    %v9971 = vunpack.c.l.b16 %v7593
    %v9972 = vpack.c.b16 %v9965, %v9964
    %v9973 = vpack.c.b16 %v9967, %v9966
    %v9974 = vpack.c.b16 %v9969, %v9968
    %v9975 = vpack.c.b16 %v9971, %v9970
    %v9981 = vsel %vm4306, %v7305, 0
    %9983 = vmatprep.subr.bf16.mxu0 0
    %9984 = vmatpush1.bf16.msra.mxu0 %v9972
    %9985 = vmatprep.subr.bf16.mxu0 0
    %9986 = vmatpush1.bf16.msra.mxu0 %v9973
    %9987 = vmatprep.subr.bf16.mxu0 0
    %9988 = vmatpush1.bf16.msra.mxu0 %v9974
    %9989 = vmatprep.subr.bf16.mxu0 0
    %9990 = vmatpush1.bf16.msra.mxu0 %v9975
    %9991 = vmatprep.subr.bf16.mxu0 0
    %9992 = vmatpush1.bf16.msra.mxu0 0
    %9993 = vmatprep.subr.bf16.mxu0 0
    %9994 = vmatpush1.bf16.msra.mxu0 0
    %9995 = vmatprep.subr.bf16.mxu0 0
    %9996 = vmatpush1.bf16.msra.mxu0 0
    %9997 = vmatprep.subr.bf16.mxu0 0
    %9998 = vmatpush1.bf16.msra.mxu0 0
    %9999 = vmatprep.subr.bf16.mxu0 0
    %10000 = vmatpush1.bf16.msra.mxu0 0
    %10001 = vmatprep.subr.bf16.mxu0 0
    %10002 = vmatpush1.bf16.msra.mxu0 0
    %10003 = vmatprep.subr.bf16.mxu0 0
    %10004 = vmatpush1.bf16.msra.mxu0 0
    %10005 = vmatprep.subr.bf16.mxu0 0
    %10006 = vmatpush1.bf16.msra.mxu0 0
    %10007 = vmatprep.subr.bf16.mxu0 0
    %10008 = vmatpush1.bf16.msra.mxu0 0
    %10009 = vmatprep.subr.bf16.mxu0 0
    %10010 = vmatpush1.bf16.msra.mxu0 0
    %10011 = vmatprep.subr.bf16.mxu0 0
    %10012 = vmatpush1.bf16.msra.mxu0 0
    %10013 = vmatprep.subr.bf16.mxu0 0
    %10014 = vmatpush1.bf16.msra.mxu0 0
    %10015 = vmatprep.mubr.bf16.mxu0 0
    %10016 = vmatmul.mubr.bf16.gmra.mrb[0].mxu0 %v9981
    %v10017 = vpop.f32.mrb[0].mxu0
    %v10018 = vadd.f32 0.0, %v10017
    %v10019 = vpop.f32.mrb[0].mxu0
    %v10020 = vpop.f32.mrb[0].mxu0
    %v10021 = vpop.f32.mrb[0].mxu0
    %10022 = vdwg.mxu0
    %v10023 = vadd.f32 %v9955, %v10018
    %v10032 = vunpack.c.l.b16 %v7594
    %v10033 = vunpack.c.l.b16 %v7595
    %v10034 = vunpack.c.l.b16 %v7596
    %v10035 = vunpack.c.l.b16 %v7597
    %v10036 = vunpack.c.l.b16 %v7598
    %v10037 = vunpack.c.l.b16 %v7599
    %v10038 = vunpack.c.l.b16 %v7600
    %v10039 = vunpack.c.l.b16 %v7601
    %v10040 = vpack.c.b16 %v10033, %v10032
    %v10041 = vpack.c.b16 %v10035, %v10034
    %v10042 = vpack.c.b16 %v10037, %v10036
    %v10043 = vpack.c.b16 %v10039, %v10038
    %v10049 = vsel %vm4306, %v7306, 0
    %10051 = vmatprep.subr.bf16.mxu0 0
    %10052 = vmatpush1.bf16.msra.mxu0 %v10040
    %10053 = vmatprep.subr.bf16.mxu0 0
    %10054 = vmatpush1.bf16.msra.mxu0 %v10041
    %10055 = vmatprep.subr.bf16.mxu0 0
    %10056 = vmatpush1.bf16.msra.mxu0 %v10042
    %10057 = vmatprep.subr.bf16.mxu0 0
    %10058 = vmatpush1.bf16.msra.mxu0 %v10043
    %10059 = vmatprep.subr.bf16.mxu0 0
    %10060 = vmatpush1.bf16.msra.mxu0 0
    %10061 = vmatprep.subr.bf16.mxu0 0
    %10062 = vmatpush1.bf16.msra.mxu0 0
    %10063 = vmatprep.subr.bf16.mxu0 0
    %10064 = vmatpush1.bf16.msra.mxu0 0
    %10065 = vmatprep.subr.bf16.mxu0 0
    %10066 = vmatpush1.bf16.msra.mxu0 0
    %10067 = vmatprep.subr.bf16.mxu0 0
    %10068 = vmatpush1.bf16.msra.mxu0 0
    %10069 = vmatprep.subr.bf16.mxu0 0
    %10070 = vmatpush1.bf16.msra.mxu0 0
    %10071 = vmatprep.subr.bf16.mxu0 0
    %10072 = vmatpush1.bf16.msra.mxu0 0
    %10073 = vmatprep.subr.bf16.mxu0 0
    %10074 = vmatpush1.bf16.msra.mxu0 0
    %10075 = vmatprep.subr.bf16.mxu0 0
    %10076 = vmatpush1.bf16.msra.mxu0 0
    %10077 = vmatprep.subr.bf16.mxu0 0
    %10078 = vmatpush1.bf16.msra.mxu0 0
    %10079 = vmatprep.subr.bf16.mxu0 0
    %10080 = vmatpush1.bf16.msra.mxu0 0
    %10081 = vmatprep.subr.bf16.mxu0 0
    %10082 = vmatpush1.bf16.msra.mxu0 0
    %10083 = vmatprep.mubr.bf16.mxu0 0
    %10084 = vmatmul.mubr.bf16.gmra.mrb[0].mxu0 %v10049
    %v10085 = vpop.f32.mrb[0].mxu0
    %v10086 = vadd.f32 0.0, %v10085
    %v10087 = vpop.f32.mrb[0].mxu0
    %v10088 = vpop.f32.mrb[0].mxu0
    %v10089 = vpop.f32.mrb[0].mxu0
    %10090 = vdwg.mxu0
    %v10091 = vadd.f32 %v10023, %v10086
    %v10100 = vunpack.c.l.b16 %v7602
    %v10101 = vunpack.c.l.b16 %v7603
    %v10102 = vunpack.c.l.b16 %v7604
    %v10103 = vunpack.c.l.b16 %v7605
    %v10104 = vunpack.c.l.b16 %v7606
    %v10105 = vunpack.c.l.b16 %v7607
    %v10106 = vunpack.c.l.b16 %v7608
    %v10107 = vunpack.c.l.b16 %v7609
    %v10108 = vpack.c.b16 %v10101, %v10100
    %v10109 = vpack.c.b16 %v10103, %v10102
    %v10110 = vpack.c.b16 %v10105, %v10104
    %v10111 = vpack.c.b16 %v10107, %v10106
    %v10117 = vsel %vm4306, %v7307, 0
    %10119 = vmatprep.subr.bf16.mxu0 0
    %10120 = vmatpush1.bf16.msra.mxu0 %v10108
    %10121 = vmatprep.subr.bf16.mxu0 0
    %10122 = vmatpush1.bf16.msra.mxu0 %v10109
    %10123 = vmatprep.subr.bf16.mxu0 0
    %10124 = vmatpush1.bf16.msra.mxu0 %v10110
    %10125 = vmatprep.subr.bf16.mxu0 0
    %10126 = vmatpush1.bf16.msra.mxu0 %v10111
    %10127 = vmatprep.subr.bf16.mxu0 0
    %10128 = vmatpush1.bf16.msra.mxu0 0
    %10129 = vmatprep.subr.bf16.mxu0 0
    %10130 = vmatpush1.bf16.msra.mxu0 0
    %10131 = vmatprep.subr.bf16.mxu0 0
    %10132 = vmatpush1.bf16.msra.mxu0 0
    %10133 = vmatprep.subr.bf16.mxu0 0
    %10134 = vmatpush1.bf16.msra.mxu0 0
    %10135 = vmatprep.subr.bf16.mxu0 0
    %10136 = vmatpush1.bf16.msra.mxu0 0
    %10137 = vmatprep.subr.bf16.mxu0 0
    %10138 = vmatpush1.bf16.msra.mxu0 0
    %10139 = vmatprep.subr.bf16.mxu0 0
    %10140 = vmatpush1.bf16.msra.mxu0 0
    %10141 = vmatprep.subr.bf16.mxu0 0
    %10142 = vmatpush1.bf16.msra.mxu0 0
    %10143 = vmatprep.subr.bf16.mxu0 0
    %10144 = vmatpush1.bf16.msra.mxu0 0
    %10145 = vmatprep.subr.bf16.mxu0 0
    %10146 = vmatpush1.bf16.msra.mxu0 0
    %10147 = vmatprep.subr.bf16.mxu0 0
    %10148 = vmatpush1.bf16.msra.mxu0 0
    %10149 = vmatprep.subr.bf16.mxu0 0
    %10150 = vmatpush1.bf16.msra.mxu0 0
    %10151 = vmatprep.mubr.bf16.mxu0 0
    %10152 = vmatmul.mubr.bf16.gmra.mrb[0].mxu0 %v10117
    %v10153 = vpop.f32.mrb[0].mxu0
    %v10154 = vadd.f32 0.0, %v10153
    %v10155 = vpop.f32.mrb[0].mxu0
    %v10156 = vpop.f32.mrb[0].mxu0
    %v10157 = vpop.f32.mrb[0].mxu0
    %10158 = vdwg.mxu0
    %v10159 = vadd.f32 %v10091, %v10154
    %v10168 = vunpack.c.l.b16 %v7610
    %v10169 = vunpack.c.l.b16 %v7611
    %v10170 = vunpack.c.l.b16 %v7612
    %v10171 = vunpack.c.l.b16 %v7613
    %v10172 = vunpack.c.l.b16 %v7614
    %v10173 = vunpack.c.l.b16 %v7615
    %v10174 = vunpack.c.l.b16 %v7616
    %v10175 = vunpack.c.l.b16 %v7617
    %v10176 = vpack.c.b16 %v10169, %v10168
    %v10177 = vpack.c.b16 %v10171, %v10170
    %v10178 = vpack.c.b16 %v10173, %v10172
    %v10179 = vpack.c.b16 %v10175, %v10174
    %v10185 = vsel %vm4306, %v7308, 0
    %10187 = vmatprep.subr.bf16.mxu0 0
    %10188 = vmatpush1.bf16.msra.mxu0 %v10176
    %10189 = vmatprep.subr.bf16.mxu0 0
    %10190 = vmatpush1.bf16.msra.mxu0 %v10177
    %10191 = vmatprep.subr.bf16.mxu0 0
    %10192 = vmatpush1.bf16.msra.mxu0 %v10178
    %10193 = vmatprep.subr.bf16.mxu0 0
    %10194 = vmatpush1.bf16.msra.mxu0 %v10179
    %10195 = vmatprep.subr.bf16.mxu0 0
    %10196 = vmatpush1.bf16.msra.mxu0 0
    %10197 = vmatprep.subr.bf16.mxu0 0
    %10198 = vmatpush1.bf16.msra.mxu0 0
    %10199 = vmatprep.subr.bf16.mxu0 0
    %10200 = vmatpush1.bf16.msra.mxu0 0
    %10201 = vmatprep.subr.bf16.mxu0 0
    %10202 = vmatpush1.bf16.msra.mxu0 0
    %10203 = vmatprep.subr.bf16.mxu0 0
    %10204 = vmatpush1.bf16.msra.mxu0 0
    %10205 = vmatprep.subr.bf16.mxu0 0
    %10206 = vmatpush1.bf16.msra.mxu0 0
    %10207 = vmatprep.subr.bf16.mxu0 0
    %10208 = vmatpush1.bf16.msra.mxu0 0
    %10209 = vmatprep.subr.bf16.mxu0 0
    %10210 = vmatpush1.bf16.msra.mxu0 0
    %10211 = vmatprep.subr.bf16.mxu0 0
    %10212 = vmatpush1.bf16.msra.mxu0 0
    %10213 = vmatprep.subr.bf16.mxu0 0
    %10214 = vmatpush1.bf16.msra.mxu0 0
    %10215 = vmatprep.subr.bf16.mxu0 0
    %10216 = vmatpush1.bf16.msra.mxu0 0
    %10217 = vmatprep.subr.bf16.mxu0 0
    %10218 = vmatpush1.bf16.msra.mxu0 0
    %10219 = vmatprep.mubr.bf16.mxu0 0
    %10220 = vmatmul.mubr.bf16.gmra.mrb[0].mxu0 %v10185
    %v10221 = vpop.f32.mrb[0].mxu0
    %v10222 = vadd.f32 0.0, %v10221
    %v10223 = vpop.f32.mrb[0].mxu0
    %v10224 = vpop.f32.mrb[0].mxu0
    %v10225 = vpop.f32.mrb[0].mxu0
    %10226 = vdwg.mxu0
    %v10227 = vadd.f32 %v10159, %v10222
    %v10236 = vunpack.c.l.b16 %v7618
    %v10237 = vunpack.c.l.b16 %v7619
    %v10238 = vunpack.c.l.b16 %v7620
    %v10239 = vunpack.c.l.b16 %v7621
    %v10240 = vunpack.c.l.b16 %v7622
    %v10241 = vunpack.c.l.b16 %v7623
    %v10242 = vunpack.c.l.b16 %v7624
    %v10243 = vunpack.c.l.b16 %v7625
    %v10244 = vpack.c.b16 %v10237, %v10236
    %v10245 = vpack.c.b16 %v10239, %v10238
    %v10246 = vpack.c.b16 %v10241, %v10240
    %v10247 = vpack.c.b16 %v10243, %v10242
    %v10253 = vsel %vm4306, %v7309, 0
    %10255 = vmatprep.subr.bf16.mxu0 0
    %10256 = vmatpush1.bf16.msra.mxu0 %v10244
    %10257 = vmatprep.subr.bf16.mxu0 0
    %10258 = vmatpush1.bf16.msra.mxu0 %v10245
    %10259 = vmatprep.subr.bf16.mxu0 0
    %10260 = vmatpush1.bf16.msra.mxu0 %v10246
    %10261 = vmatprep.subr.bf16.mxu0 0
    %10262 = vmatpush1.bf16.msra.mxu0 %v10247
    %10263 = vmatprep.subr.bf16.mxu0 0
    %10264 = vmatpush1.bf16.msra.mxu0 0
    %10265 = vmatprep.subr.bf16.mxu0 0
    %10266 = vmatpush1.bf16.msra.mxu0 0
    %10267 = vmatprep.subr.bf16.mxu0 0
    %10268 = vmatpush1.bf16.msra.mxu0 0
    %10269 = vmatprep.subr.bf16.mxu0 0
    %10270 = vmatpush1.bf16.msra.mxu0 0
    %10271 = vmatprep.subr.bf16.mxu0 0
    %10272 = vmatpush1.bf16.msra.mxu0 0
    %10273 = vmatprep.subr.bf16.mxu0 0
    %10274 = vmatpush1.bf16.msra.mxu0 0
    %10275 = vmatprep.subr.bf16.mxu0 0
    %10276 = vmatpush1.bf16.msra.mxu0 0
    %10277 = vmatprep.subr.bf16.mxu0 0
    %10278 = vmatpush1.bf16.msra.mxu0 0
    %10279 = vmatprep.subr.bf16.mxu0 0
    %10280 = vmatpush1.bf16.msra.mxu0 0
    %10281 = vmatprep.subr.bf16.mxu0 0
    %10282 = vmatpush1.bf16.msra.mxu0 0
    %10283 = vmatprep.subr.bf16.mxu0 0
    %10284 = vmatpush1.bf16.msra.mxu0 0
    %10285 = vmatprep.subr.bf16.mxu0 0
    %10286 = vmatpush1.bf16.msra.mxu0 0
    %10287 = vmatprep.mubr.bf16.mxu0 0
    %10288 = vmatmul.mubr.bf16.gmra.mrb[0].mxu0 %v10253
    %v10289 = vpop.f32.mrb[0].mxu0
    %v10290 = vadd.f32 0.0, %v10289
    %v10291 = vpop.f32.mrb[0].mxu0
    %v10292 = vpop.f32.mrb[0].mxu0
    %v10293 = vpop.f32.mrb[0].mxu0
    %10294 = vdwg.mxu0
    %v10295 = vadd.f32 %v10227, %v10290
    %v10304 = vunpack.c.l.b16 %v7626
    %v10305 = vunpack.c.l.b16 %v7627
    %v10306 = vunpack.c.l.b16 %v7628
    %v10307 = vunpack.c.l.b16 %v7629
    %v10308 = vunpack.c.l.b16 %v7630
    %v10309 = vunpack.c.l.b16 %v7631
    %v10310 = vunpack.c.l.b16 %v7632
    %v10311 = vunpack.c.l.b16 %v7633
    %v10312 = vpack.c.b16 %v10305, %v10304
    %v10313 = vpack.c.b16 %v10307, %v10306
    %v10314 = vpack.c.b16 %v10309, %v10308
    %v10315 = vpack.c.b16 %v10311, %v10310
    %v10321 = vsel %vm4306, %v7310, 0
    %10323 = vmatprep.subr.bf16.mxu0 0
    %10324 = vmatpush1.bf16.msra.mxu0 %v10312
    %10325 = vmatprep.subr.bf16.mxu0 0
    %10326 = vmatpush1.bf16.msra.mxu0 %v10313
    %10327 = vmatprep.subr.bf16.mxu0 0
    %10328 = vmatpush1.bf16.msra.mxu0 %v10314
    %10329 = vmatprep.subr.bf16.mxu0 0
    %10330 = vmatpush1.bf16.msra.mxu0 %v10315
    %10331 = vmatprep.subr.bf16.mxu0 0
    %10332 = vmatpush1.bf16.msra.mxu0 0
    %10333 = vmatprep.subr.bf16.mxu0 0
    %10334 = vmatpush1.bf16.msra.mxu0 0
    %10335 = vmatprep.subr.bf16.mxu0 0
    %10336 = vmatpush1.bf16.msra.mxu0 0
    %10337 = vmatprep.subr.bf16.mxu0 0
    %10338 = vmatpush1.bf16.msra.mxu0 0
    %10339 = vmatprep.subr.bf16.mxu0 0
    %10340 = vmatpush1.bf16.msra.mxu0 0
    %10341 = vmatprep.subr.bf16.mxu0 0
    %10342 = vmatpush1.bf16.msra.mxu0 0
    %10343 = vmatprep.subr.bf16.mxu0 0
    %10344 = vmatpush1.bf16.msra.mxu0 0
    %10345 = vmatprep.subr.bf16.mxu0 0
    %10346 = vmatpush1.bf16.msra.mxu0 0
    %10347 = vmatprep.subr.bf16.mxu0 0
    %10348 = vmatpush1.bf16.msra.mxu0 0
    %10349 = vmatprep.subr.bf16.mxu0 0
    %10350 = vmatpush1.bf16.msra.mxu0 0
    %10351 = vmatprep.subr.bf16.mxu0 0
    %10352 = vmatpush1.bf16.msra.mxu0 0
    %10353 = vmatprep.subr.bf16.mxu0 0
    %10354 = vmatpush1.bf16.msra.mxu0 0
    %10355 = vmatprep.mubr.bf16.mxu0 0
    %10356 = vmatmul.mubr.bf16.gmra.mrb[0].mxu0 %v10321
    %v10357 = vpop.f32.mrb[0].mxu0
    %v10358 = vadd.f32 0.0, %v10357
    %v10359 = vpop.f32.mrb[0].mxu0
    %v10360 = vpop.f32.mrb[0].mxu0
    %v10361 = vpop.f32.mrb[0].mxu0
    %10362 = vdwg.mxu0
    %v10363 = vadd.f32 %v10295, %v10358
    %v10372 = vunpack.c.l.b16 %v7634
    %v10373 = vunpack.c.l.b16 %v7635
    %v10374 = vunpack.c.l.b16 %v7636
    %v10375 = vunpack.c.l.b16 %v7637
    %v10376 = vunpack.c.l.b16 %v7638
    %v10377 = vunpack.c.l.b16 %v7639
    %v10378 = vunpack.c.l.b16 %v7640
    %v10379 = vunpack.c.l.b16 %v7641
    %v10380 = vpack.c.b16 %v10373, %v10372
    %v10381 = vpack.c.b16 %v10375, %v10374
    %v10382 = vpack.c.b16 %v10377, %v10376
    %v10383 = vpack.c.b16 %v10379, %v10378
    %v10389 = vsel %vm4306, %v7311, 0
    %10391 = vmatprep.subr.bf16.mxu0 0
    %10392 = vmatpush1.bf16.msra.mxu0 %v10380
    %10393 = vmatprep.subr.bf16.mxu0 0
    %10394 = vmatpush1.bf16.msra.mxu0 %v10381
    %10395 = vmatprep.subr.bf16.mxu0 0
    %10396 = vmatpush1.bf16.msra.mxu0 %v10382
    %10397 = vmatprep.subr.bf16.mxu0 0
    %10398 = vmatpush1.bf16.msra.mxu0 %v10383
    %10399 = vmatprep.subr.bf16.mxu0 0
    %10400 = vmatpush1.bf16.msra.mxu0 0
    %10401 = vmatprep.subr.bf16.mxu0 0
    %10402 = vmatpush1.bf16.msra.mxu0 0
    %10403 = vmatprep.subr.bf16.mxu0 0
    %10404 = vmatpush1.bf16.msra.mxu0 0
    %10405 = vmatprep.subr.bf16.mxu0 0
    %10406 = vmatpush1.bf16.msra.mxu0 0
    %10407 = vmatprep.subr.bf16.mxu0 0
    %10408 = vmatpush1.bf16.msra.mxu0 0
    %10409 = vmatprep.subr.bf16.mxu0 0
    %10410 = vmatpush1.bf16.msra.mxu0 0
    %10411 = vmatprep.subr.bf16.mxu0 0
    %10412 = vmatpush1.bf16.msra.mxu0 0
    %10413 = vmatprep.subr.bf16.mxu0 0
    %10414 = vmatpush1.bf16.msra.mxu0 0
    %10415 = vmatprep.subr.bf16.mxu0 0
    %10416 = vmatpush1.bf16.msra.mxu0 0
    %10417 = vmatprep.subr.bf16.mxu0 0
    %10418 = vmatpush1.bf16.msra.mxu0 0
    %10419 = vmatprep.subr.bf16.mxu0 0
    %10420 = vmatpush1.bf16.msra.mxu0 0
    %10421 = vmatprep.subr.bf16.mxu0 0
    %10422 = vmatpush1.bf16.msra.mxu0 0
    %10423 = vmatprep.mubr.bf16.mxu0 0
    %10424 = vmatmul.mubr.bf16.gmra.mrb[0].mxu0 %v10389
    %v10425 = vpop.f32.mrb[0].mxu0
    %v10426 = vadd.f32 0.0, %v10425
    %v10427 = vpop.f32.mrb[0].mxu0
    %v10428 = vpop.f32.mrb[0].mxu0
    %v10429 = vpop.f32.mrb[0].mxu0
    %10430 = vdwg.mxu0
    %v10431 = vadd.f32 %v10363, %v10426
    %v10440 = vunpack.c.l.b16 %v7642
    %v10441 = vunpack.c.l.b16 %v7643
    %v10442 = vunpack.c.l.b16 %v7644
    %v10443 = vunpack.c.l.b16 %v7645
    %v10444 = vunpack.c.l.b16 %v7646
    %v10445 = vunpack.c.l.b16 %v7647
    %v10446 = vunpack.c.l.b16 %v7648
    %v10447 = vunpack.c.l.b16 %v7649
    %v10448 = vpack.c.b16 %v10441, %v10440
    %v10449 = vpack.c.b16 %v10443, %v10442
    %v10450 = vpack.c.b16 %v10445, %v10444
    %v10451 = vpack.c.b16 %v10447, %v10446
    %v10457 = vsel %vm4306, %v7312, 0
    %10459 = vmatprep.subr.bf16.mxu0 0
    %10460 = vmatpush1.bf16.msra.mxu0 %v10448
    %10461 = vmatprep.subr.bf16.mxu0 0
    %10462 = vmatpush1.bf16.msra.mxu0 %v10449
    %10463 = vmatprep.subr.bf16.mxu0 0
    %10464 = vmatpush1.bf16.msra.mxu0 %v10450
    %10465 = vmatprep.subr.bf16.mxu0 0
    %10466 = vmatpush1.bf16.msra.mxu0 %v10451
    %10467 = vmatprep.subr.bf16.mxu0 0
    %10468 = vmatpush1.bf16.msra.mxu0 0
    %10469 = vmatprep.subr.bf16.mxu0 0
    %10470 = vmatpush1.bf16.msra.mxu0 0
    %10471 = vmatprep.subr.bf16.mxu0 0
    %10472 = vmatpush1.bf16.msra.mxu0 0
    %10473 = vmatprep.subr.bf16.mxu0 0
    %10474 = vmatpush1.bf16.msra.mxu0 0
    %10475 = vmatprep.subr.bf16.mxu0 0
    %10476 = vmatpush1.bf16.msra.mxu0 0
    %10477 = vmatprep.subr.bf16.mxu0 0
    %10478 = vmatpush1.bf16.msra.mxu0 0
    %10479 = vmatprep.subr.bf16.mxu0 0
    %10480 = vmatpush1.bf16.msra.mxu0 0
    %10481 = vmatprep.subr.bf16.mxu0 0
    %10482 = vmatpush1.bf16.msra.mxu0 0
    %10483 = vmatprep.subr.bf16.mxu0 0
    %10484 = vmatpush1.bf16.msra.mxu0 0
    %10485 = vmatprep.subr.bf16.mxu0 0
    %10486 = vmatpush1.bf16.msra.mxu0 0
    %10487 = vmatprep.subr.bf16.mxu0 0
    %10488 = vmatpush1.bf16.msra.mxu0 0
    %10489 = vmatprep.subr.bf16.mxu0 0
    %10490 = vmatpush1.bf16.msra.mxu0 0
    %10491 = vmatprep.mubr.bf16.mxu0 0
    %10492 = vmatmul.mubr.bf16.gmra.mrb[0].mxu0 %v10457
    %v10493 = vpop.f32.mrb[0].mxu0
    %v10494 = vadd.f32 0.0, %v10493
    %v10495 = vpop.f32.mrb[0].mxu0
    %v10496 = vpop.f32.mrb[0].mxu0
    %v10497 = vpop.f32.mrb[0].mxu0
    %10498 = vdwg.mxu0
    %v10499 = vadd.f32 %v10431, %v10494
    %v10508 = vunpack.c.l.b16 %v7650
    %v10509 = vunpack.c.l.b16 %v7651
    %v10510 = vunpack.c.l.b16 %v7652
    %v10511 = vunpack.c.l.b16 %v7653
    %v10512 = vunpack.c.l.b16 %v7654
    %v10513 = vunpack.c.l.b16 %v7655
    %v10514 = vunpack.c.l.b16 %v7656
    %v10515 = vunpack.c.l.b16 %v7657
    %v10516 = vpack.c.b16 %v10509, %v10508
    %v10517 = vpack.c.b16 %v10511, %v10510
    %v10518 = vpack.c.b16 %v10513, %v10512
    %v10519 = vpack.c.b16 %v10515, %v10514
    %v10525 = vsel %vm4306, %v7313, 0
    %10527 = vmatprep.subr.bf16.mxu0 0
    %10528 = vmatpush1.bf16.msra.mxu0 %v10516
    %10529 = vmatprep.subr.bf16.mxu0 0
    %10530 = vmatpush1.bf16.msra.mxu0 %v10517
    %10531 = vmatprep.subr.bf16.mxu0 0
    %10532 = vmatpush1.bf16.msra.mxu0 %v10518
    %10533 = vmatprep.subr.bf16.mxu0 0
    %10534 = vmatpush1.bf16.msra.mxu0 %v10519
    %10535 = vmatprep.subr.bf16.mxu0 0
    %10536 = vmatpush1.bf16.msra.mxu0 0
    %10537 = vmatprep.subr.bf16.mxu0 0
    %10538 = vmatpush1.bf16.msra.mxu0 0
    %10539 = vmatprep.subr.bf16.mxu0 0
    %10540 = vmatpush1.bf16.msra.mxu0 0
    %10541 = vmatprep.subr.bf16.mxu0 0
    %10542 = vmatpush1.bf16.msra.mxu0 0
    %10543 = vmatprep.subr.bf16.mxu0 0
    %10544 = vmatpush1.bf16.msra.mxu0 0
    %10545 = vmatprep.subr.bf16.mxu0 0
    %10546 = vmatpush1.bf16.msra.mxu0 0
    %10547 = vmatprep.subr.bf16.mxu0 0
    %10548 = vmatpush1.bf16.msra.mxu0 0
    %10549 = vmatprep.subr.bf16.mxu0 0
    %10550 = vmatpush1.bf16.msra.mxu0 0
    %10551 = vmatprep.subr.bf16.mxu0 0
    %10552 = vmatpush1.bf16.msra.mxu0 0
    %10553 = vmatprep.subr.bf16.mxu0 0
    %10554 = vmatpush1.bf16.msra.mxu0 0
    %10555 = vmatprep.subr.bf16.mxu0 0
    %10556 = vmatpush1.bf16.msra.mxu0 0
    %10557 = vmatprep.subr.bf16.mxu0 0
    %10558 = vmatpush1.bf16.msra.mxu0 0
    %10559 = vmatprep.mubr.bf16.mxu0 0
    %10560 = vmatmul.mubr.bf16.gmra.mrb[0].mxu0 %v10525
    %v10561 = vpop.f32.mrb[0].mxu0
    %v10562 = vadd.f32 0.0, %v10561
    %v10563 = vpop.f32.mrb[0].mxu0
    %v10564 = vpop.f32.mrb[0].mxu0
    %v10565 = vpop.f32.mrb[0].mxu0
    %10566 = vdwg.mxu0
    %v10567 = vadd.f32 %v10499, %v10562
    %v10576 = vunpack.c.l.b16 %v7658
    %v10577 = vunpack.c.l.b16 %v7659
    %v10578 = vunpack.c.l.b16 %v7660
    %v10579 = vunpack.c.l.b16 %v7661
    %v10580 = vunpack.c.l.b16 %v7662
    %v10581 = vunpack.c.l.b16 %v7663
    %v10582 = vunpack.c.l.b16 %v7664
    %v10583 = vunpack.c.l.b16 %v7665
    %v10584 = vpack.c.b16 %v10577, %v10576
    %v10585 = vpack.c.b16 %v10579, %v10578
    %v10586 = vpack.c.b16 %v10581, %v10580
    %v10587 = vpack.c.b16 %v10583, %v10582
    %v10593 = vsel %vm4306, %v7314, 0
    %10595 = vmatprep.subr.bf16.mxu0 0
    %10596 = vmatpush1.bf16.msra.mxu0 %v10584
    %10597 = vmatprep.subr.bf16.mxu0 0
    %10598 = vmatpush1.bf16.msra.mxu0 %v10585
    %10599 = vmatprep.subr.bf16.mxu0 0
    %10600 = vmatpush1.bf16.msra.mxu0 %v10586
    %10601 = vmatprep.subr.bf16.mxu0 0
    %10602 = vmatpush1.bf16.msra.mxu0 %v10587
    %10603 = vmatprep.subr.bf16.mxu0 0
    %10604 = vmatpush1.bf16.msra.mxu0 0
    %10605 = vmatprep.subr.bf16.mxu0 0
    %10606 = vmatpush1.bf16.msra.mxu0 0
    %10607 = vmatprep.subr.bf16.mxu0 0
    %10608 = vmatpush1.bf16.msra.mxu0 0
    %10609 = vmatprep.subr.bf16.mxu0 0
    %10610 = vmatpush1.bf16.msra.mxu0 0
    %10611 = vmatprep.subr.bf16.mxu0 0
    %10612 = vmatpush1.bf16.msra.mxu0 0
    %10613 = vmatprep.subr.bf16.mxu0 0
    %10614 = vmatpush1.bf16.msra.mxu0 0
    %10615 = vmatprep.subr.bf16.mxu0 0
    %10616 = vmatpush1.bf16.msra.mxu0 0
    %10617 = vmatprep.subr.bf16.mxu0 0
    %10618 = vmatpush1.bf16.msra.mxu0 0
    %10619 = vmatprep.subr.bf16.mxu0 0
    %10620 = vmatpush1.bf16.msra.mxu0 0
    %10621 = vmatprep.subr.bf16.mxu0 0
    %10622 = vmatpush1.bf16.msra.mxu0 0
    %10623 = vmatprep.subr.bf16.mxu0 0
    %10624 = vmatpush1.bf16.msra.mxu0 0
    %10625 = vmatprep.subr.bf16.mxu0 0
    %10626 = vmatpush1.bf16.msra.mxu0 0
    %10627 = vmatprep.mubr.bf16.mxu0 0
    %10628 = vmatmul.mubr.bf16.gmra.mrb[0].mxu0 %v10593
    %v10629 = vpop.f32.mrb[0].mxu0
    %v10630 = vadd.f32 0.0, %v10629
    %v10631 = vpop.f32.mrb[0].mxu0
    %v10632 = vpop.f32.mrb[0].mxu0
    %v10633 = vpop.f32.mrb[0].mxu0
    %10634 = vdwg.mxu0
    %v10635 = vadd.f32 %v10567, %v10630
    %v10644 = vunpack.c.l.b16 %v7666
    %v10645 = vunpack.c.l.b16 %v7667
    %v10646 = vunpack.c.l.b16 %v7668
    %v10647 = vunpack.c.l.b16 %v7669
    %v10648 = vunpack.c.l.b16 %v7670
    %v10649 = vunpack.c.l.b16 %v7671
    %v10650 = vunpack.c.l.b16 %v7672
    %v10651 = vunpack.c.l.b16 %v7673
    %v10652 = vpack.c.b16 %v10645, %v10644
    %v10653 = vpack.c.b16 %v10647, %v10646
    %v10654 = vpack.c.b16 %v10649, %v10648
    %v10655 = vpack.c.b16 %v10651, %v10650
    %v10661 = vsel %vm4306, %v7315, 0
    %10663 = vmatprep.subr.bf16.mxu0 0
    %10664 = vmatpush1.bf16.msra.mxu0 %v10652
    %10665 = vmatprep.subr.bf16.mxu0 0
    %10666 = vmatpush1.bf16.msra.mxu0 %v10653
    %10667 = vmatprep.subr.bf16.mxu0 0
    %10668 = vmatpush1.bf16.msra.mxu0 %v10654
    %10669 = vmatprep.subr.bf16.mxu0 0
    %10670 = vmatpush1.bf16.msra.mxu0 %v10655
    %10671 = vmatprep.subr.bf16.mxu0 0
    %10672 = vmatpush1.bf16.msra.mxu0 0
    %10673 = vmatprep.subr.bf16.mxu0 0
    %10674 = vmatpush1.bf16.msra.mxu0 0
    %10675 = vmatprep.subr.bf16.mxu0 0
    %10676 = vmatpush1.bf16.msra.mxu0 0
    %10677 = vmatprep.subr.bf16.mxu0 0
    %10678 = vmatpush1.bf16.msra.mxu0 0
    %10679 = vmatprep.subr.bf16.mxu0 0
    %10680 = vmatpush1.bf16.msra.mxu0 0
    %10681 = vmatprep.subr.bf16.mxu0 0
    %10682 = vmatpush1.bf16.msra.mxu0 0
    %10683 = vmatprep.subr.bf16.mxu0 0
    %10684 = vmatpush1.bf16.msra.mxu0 0
    %10685 = vmatprep.subr.bf16.mxu0 0
    %10686 = vmatpush1.bf16.msra.mxu0 0
    %10687 = vmatprep.subr.bf16.mxu0 0
    %10688 = vmatpush1.bf16.msra.mxu0 0
    %10689 = vmatprep.subr.bf16.mxu0 0
    %10690 = vmatpush1.bf16.msra.mxu0 0
    %10691 = vmatprep.subr.bf16.mxu0 0
    %10692 = vmatpush1.bf16.msra.mxu0 0
    %10693 = vmatprep.subr.bf16.mxu0 0
    %10694 = vmatpush1.bf16.msra.mxu0 0
    %10695 = vmatprep.mubr.bf16.mxu0 0
    %10696 = vmatmul.mubr.bf16.gmra.mrb[0].mxu0 %v10661
    %v10697 = vpop.f32.mrb[0].mxu0
    %v10698 = vadd.f32 0.0, %v10697
    %v10699 = vpop.f32.mrb[0].mxu0
    %v10700 = vpop.f32.mrb[0].mxu0
    %v10701 = vpop.f32.mrb[0].mxu0
    %10702 = vdwg.mxu0
    %v10703 = vadd.f32 %v10635, %v10698
    %v10712 = vunpack.c.l.b16 %v7674
    %v10713 = vunpack.c.l.b16 %v7675
    %v10714 = vunpack.c.l.b16 %v7676
    %v10715 = vunpack.c.l.b16 %v7677
    %v10716 = vunpack.c.l.b16 %v7678
    %v10717 = vunpack.c.l.b16 %v7679
    %v10718 = vunpack.c.l.b16 %v7680
    %v10719 = vunpack.c.l.b16 %v7681
    %v10720 = vpack.c.b16 %v10713, %v10712
    %v10721 = vpack.c.b16 %v10715, %v10714
    %v10722 = vpack.c.b16 %v10717, %v10716
    %v10723 = vpack.c.b16 %v10719, %v10718
    %v10729 = vsel %vm4306, %v7316, 0
    %10731 = vmatprep.subr.bf16.mxu0 0
    %10732 = vmatpush1.bf16.msra.mxu0 %v10720
    %10733 = vmatprep.subr.bf16.mxu0 0
    %10734 = vmatpush1.bf16.msra.mxu0 %v10721
    %10735 = vmatprep.subr.bf16.mxu0 0
    %10736 = vmatpush1.bf16.msra.mxu0 %v10722
    %10737 = vmatprep.subr.bf16.mxu0 0
    %10738 = vmatpush1.bf16.msra.mxu0 %v10723
    %10739 = vmatprep.subr.bf16.mxu0 0
    %10740 = vmatpush1.bf16.msra.mxu0 0
    %10741 = vmatprep.subr.bf16.mxu0 0
    %10742 = vmatpush1.bf16.msra.mxu0 0
    %10743 = vmatprep.subr.bf16.mxu0 0
    %10744 = vmatpush1.bf16.msra.mxu0 0
    %10745 = vmatprep.subr.bf16.mxu0 0
    %10746 = vmatpush1.bf16.msra.mxu0 0
    %10747 = vmatprep.subr.bf16.mxu0 0
    %10748 = vmatpush1.bf16.msra.mxu0 0
    %10749 = vmatprep.subr.bf16.mxu0 0
    %10750 = vmatpush1.bf16.msra.mxu0 0
    %10751 = vmatprep.subr.bf16.mxu0 0
    %10752 = vmatpush1.bf16.msra.mxu0 0
    %10753 = vmatprep.subr.bf16.mxu0 0
    %10754 = vmatpush1.bf16.msra.mxu0 0
    %10755 = vmatprep.subr.bf16.mxu0 0
    %10756 = vmatpush1.bf16.msra.mxu0 0
    %10757 = vmatprep.subr.bf16.mxu0 0
    %10758 = vmatpush1.bf16.msra.mxu0 0
    %10759 = vmatprep.subr.bf16.mxu0 0
    %10760 = vmatpush1.bf16.msra.mxu0 0
    %10761 = vmatprep.subr.bf16.mxu0 0
    %10762 = vmatpush1.bf16.msra.mxu0 0
    %10763 = vmatprep.mubr.bf16.mxu0 0
    %10764 = vmatmul.mubr.bf16.gmra.mrb[0].mxu0 %v10729
    %v10765 = vpop.f32.mrb[0].mxu0
    %v10766 = vadd.f32 0.0, %v10765
    %v10767 = vpop.f32.mrb[0].mxu0
    %v10768 = vpop.f32.mrb[0].mxu0
    %v10769 = vpop.f32.mrb[0].mxu0
    %10770 = vdwg.mxu0
    %v10771 = vadd.f32 %v10703, %v10766
    %v10780 = vunpack.c.l.b16 %v7682
    %v10781 = vunpack.c.l.b16 %v7683
    %v10782 = vunpack.c.l.b16 %v7684
    %v10783 = vunpack.c.l.b16 %v7685
    %v10784 = vunpack.c.l.b16 %v7686
    %v10785 = vunpack.c.l.b16 %v7687
    %v10786 = vunpack.c.l.b16 %v7688
    %v10787 = vunpack.c.l.b16 %v7689
    %v10788 = vpack.c.b16 %v10781, %v10780
    %v10789 = vpack.c.b16 %v10783, %v10782
    %v10790 = vpack.c.b16 %v10785, %v10784
    %v10791 = vpack.c.b16 %v10787, %v10786
    %v10797 = vsel %vm4306, %v7317, 0
    %10799 = vmatprep.subr.bf16.mxu0 0
    %10800 = vmatpush1.bf16.msra.mxu0 %v10788
    %10801 = vmatprep.subr.bf16.mxu0 0
    %10802 = vmatpush1.bf16.msra.mxu0 %v10789
    %10803 = vmatprep.subr.bf16.mxu0 0
    %10804 = vmatpush1.bf16.msra.mxu0 %v10790
    %10805 = vmatprep.subr.bf16.mxu0 0
    %10806 = vmatpush1.bf16.msra.mxu0 %v10791
    %10807 = vmatprep.subr.bf16.mxu0 0
    %10808 = vmatpush1.bf16.msra.mxu0 0
    %10809 = vmatprep.subr.bf16.mxu0 0
    %10810 = vmatpush1.bf16.msra.mxu0 0
    %10811 = vmatprep.subr.bf16.mxu0 0
    %10812 = vmatpush1.bf16.msra.mxu0 0
    %10813 = vmatprep.subr.bf16.mxu0 0
    %10814 = vmatpush1.bf16.msra.mxu0 0
    %10815 = vmatprep.subr.bf16.mxu0 0
    %10816 = vmatpush1.bf16.msra.mxu0 0
    %10817 = vmatprep.subr.bf16.mxu0 0
    %10818 = vmatpush1.bf16.msra.mxu0 0
    %10819 = vmatprep.subr.bf16.mxu0 0
    %10820 = vmatpush1.bf16.msra.mxu0 0
    %10821 = vmatprep.subr.bf16.mxu0 0
    %10822 = vmatpush1.bf16.msra.mxu0 0
    %10823 = vmatprep.subr.bf16.mxu0 0
    %10824 = vmatpush1.bf16.msra.mxu0 0
    %10825 = vmatprep.subr.bf16.mxu0 0
    %10826 = vmatpush1.bf16.msra.mxu0 0
    %10827 = vmatprep.subr.bf16.mxu0 0
    %10828 = vmatpush1.bf16.msra.mxu0 0
    %10829 = vmatprep.subr.bf16.mxu0 0
    %10830 = vmatpush1.bf16.msra.mxu0 0
    %10831 = vmatprep.mubr.bf16.mxu0 0
    %10832 = vmatmul.mubr.bf16.gmra.mrb[0].mxu0 %v10797
    %v10833 = vpop.f32.mrb[0].mxu0
    %v10834 = vadd.f32 0.0, %v10833
    %v10835 = vpop.f32.mrb[0].mxu0
    %v10836 = vpop.f32.mrb[0].mxu0
    %v10837 = vpop.f32.mrb[0].mxu0
    %10838 = vdwg.mxu0
    %v10839 = vadd.f32 %v10771, %v10834
    %v10848 = vunpack.c.l.b16 %v7690
    %v10849 = vunpack.c.l.b16 %v7691
    %v10850 = vunpack.c.l.b16 %v7692
    %v10851 = vunpack.c.l.b16 %v7693
    %v10852 = vunpack.c.l.b16 %v7694
    %v10853 = vunpack.c.l.b16 %v7695
    %v10854 = vunpack.c.l.b16 %v7696
    %v10855 = vunpack.c.l.b16 %v7697
    %v10856 = vpack.c.b16 %v10849, %v10848
    %v10857 = vpack.c.b16 %v10851, %v10850
    %v10858 = vpack.c.b16 %v10853, %v10852
    %v10859 = vpack.c.b16 %v10855, %v10854
    %v10865 = vsel %vm4306, %v7318, 0
    %10867 = vmatprep.subr.bf16.mxu0 0
    %10868 = vmatpush1.bf16.msra.mxu0 %v10856
    %10869 = vmatprep.subr.bf16.mxu0 0
    %10870 = vmatpush1.bf16.msra.mxu0 %v10857
    %10871 = vmatprep.subr.bf16.mxu0 0
    %10872 = vmatpush1.bf16.msra.mxu0 %v10858
    %10873 = vmatprep.subr.bf16.mxu0 0
    %10874 = vmatpush1.bf16.msra.mxu0 %v10859
    %10875 = vmatprep.subr.bf16.mxu0 0
    %10876 = vmatpush1.bf16.msra.mxu0 0
    %10877 = vmatprep.subr.bf16.mxu0 0
    %10878 = vmatpush1.bf16.msra.mxu0 0
    %10879 = vmatprep.subr.bf16.mxu0 0
    %10880 = vmatpush1.bf16.msra.mxu0 0
    %10881 = vmatprep.subr.bf16.mxu0 0
    %10882 = vmatpush1.bf16.msra.mxu0 0
    %10883 = vmatprep.subr.bf16.mxu0 0
    %10884 = vmatpush1.bf16.msra.mxu0 0
    %10885 = vmatprep.subr.bf16.mxu0 0
    %10886 = vmatpush1.bf16.msra.mxu0 0
    %10887 = vmatprep.subr.bf16.mxu0 0
    %10888 = vmatpush1.bf16.msra.mxu0 0
    %10889 = vmatprep.subr.bf16.mxu0 0
    %10890 = vmatpush1.bf16.msra.mxu0 0
    %10891 = vmatprep.subr.bf16.mxu0 0
    %10892 = vmatpush1.bf16.msra.mxu0 0
    %10893 = vmatprep.subr.bf16.mxu0 0
    %10894 = vmatpush1.bf16.msra.mxu0 0
    %10895 = vmatprep.subr.bf16.mxu0 0
    %10896 = vmatpush1.bf16.msra.mxu0 0
    %10897 = vmatprep.subr.bf16.mxu0 0
    %10898 = vmatpush1.bf16.msra.mxu0 0
    %10899 = vmatprep.mubr.bf16.mxu0 0
    %10900 = vmatmul.mubr.bf16.gmra.mrb[0].mxu0 %v10865
    %v10901 = vpop.f32.mrb[0].mxu0
    %v10902 = vadd.f32 0.0, %v10901
    %v10903 = vpop.f32.mrb[0].mxu0
    %v10904 = vpop.f32.mrb[0].mxu0
    %v10905 = vpop.f32.mrb[0].mxu0
    %10906 = vdwg.mxu0
    %v10907 = vadd.f32 %v10839, %v10902
    %v10916 = vunpack.c.l.b16 %v7698
    %v10917 = vunpack.c.l.b16 %v7699
    %v10918 = vunpack.c.l.b16 %v7700
    %v10919 = vunpack.c.l.b16 %v7701
    %v10920 = vunpack.c.l.b16 %v7702
    %v10921 = vunpack.c.l.b16 %v7703
    %v10922 = vunpack.c.l.b16 %v7704
    %v10923 = vunpack.c.l.b16 %v7705
    %v10924 = vpack.c.b16 %v10917, %v10916
    %v10925 = vpack.c.b16 %v10919, %v10918
    %v10926 = vpack.c.b16 %v10921, %v10920
    %v10927 = vpack.c.b16 %v10923, %v10922
    %v10933 = vsel %vm4306, %v7319, 0
    %10935 = vmatprep.subr.bf16.mxu0 0
    %10936 = vmatpush1.bf16.msra.mxu0 %v10924
    %10937 = vmatprep.subr.bf16.mxu0 0
    %10938 = vmatpush1.bf16.msra.mxu0 %v10925
    %10939 = vmatprep.subr.bf16.mxu0 0
    %10940 = vmatpush1.bf16.msra.mxu0 %v10926
    %10941 = vmatprep.subr.bf16.mxu0 0
    %10942 = vmatpush1.bf16.msra.mxu0 %v10927
    %10943 = vmatprep.subr.bf16.mxu0 0
    %10944 = vmatpush1.bf16.msra.mxu0 0
    %10945 = vmatprep.subr.bf16.mxu0 0
    %10946 = vmatpush1.bf16.msra.mxu0 0
    %10947 = vmatprep.subr.bf16.mxu0 0
    %10948 = vmatpush1.bf16.msra.mxu0 0
    %10949 = vmatprep.subr.bf16.mxu0 0
    %10950 = vmatpush1.bf16.msra.mxu0 0
    %10951 = vmatprep.subr.bf16.mxu0 0
    %10952 = vmatpush1.bf16.msra.mxu0 0
    %10953 = vmatprep.subr.bf16.mxu0 0
    %10954 = vmatpush1.bf16.msra.mxu0 0
    %10955 = vmatprep.subr.bf16.mxu0 0
    %10956 = vmatpush1.bf16.msra.mxu0 0
    %10957 = vmatprep.subr.bf16.mxu0 0
    %10958 = vmatpush1.bf16.msra.mxu0 0
    %10959 = vmatprep.subr.bf16.mxu0 0
    %10960 = vmatpush1.bf16.msra.mxu0 0
    %10961 = vmatprep.subr.bf16.mxu0 0
    %10962 = vmatpush1.bf16.msra.mxu0 0
    %10963 = vmatprep.subr.bf16.mxu0 0
    %10964 = vmatpush1.bf16.msra.mxu0 0
    %10965 = vmatprep.subr.bf16.mxu0 0
    %10966 = vmatpush1.bf16.msra.mxu0 0
    %10967 = vmatprep.mubr.bf16.mxu0 0
    %10968 = vmatmul.mubr.bf16.gmra.mrb[0].mxu0 %v10933
    %v10969 = vpop.f32.mrb[0].mxu0
    %v10970 = vadd.f32 0.0, %v10969
    %v10971 = vpop.f32.mrb[0].mxu0
    %v10972 = vpop.f32.mrb[0].mxu0
    %v10973 = vpop.f32.mrb[0].mxu0
    %10974 = vdwg.mxu0
    %v10975 = vadd.f32 %v10907, %v10970
    %v10984 = vunpack.c.l.b16 %v7706
    %v10985 = vunpack.c.l.b16 %v7707
    %v10986 = vunpack.c.l.b16 %v7708
    %v10987 = vunpack.c.l.b16 %v7709
    %v10988 = vunpack.c.l.b16 %v7710
    %v10989 = vunpack.c.l.b16 %v7711
    %v10990 = vunpack.c.l.b16 %v7712
    %v10991 = vunpack.c.l.b16 %v7713
    %v10992 = vpack.c.b16 %v10985, %v10984
    %v10993 = vpack.c.b16 %v10987, %v10986
    %v10994 = vpack.c.b16 %v10989, %v10988
    %v10995 = vpack.c.b16 %v10991, %v10990
    %v11001 = vsel %vm4306, %v7320, 0
    %11003 = vmatprep.subr.bf16.mxu0 0
    %11004 = vmatpush1.bf16.msra.mxu0 %v10992
    %11005 = vmatprep.subr.bf16.mxu0 0
    %11006 = vmatpush1.bf16.msra.mxu0 %v10993
    %11007 = vmatprep.subr.bf16.mxu0 0
    %11008 = vmatpush1.bf16.msra.mxu0 %v10994
    %11009 = vmatprep.subr.bf16.mxu0 0
    %11010 = vmatpush1.bf16.msra.mxu0 %v10995
    %11011 = vmatprep.subr.bf16.mxu0 0
    %11012 = vmatpush1.bf16.msra.mxu0 0
    %11013 = vmatprep.subr.bf16.mxu0 0
    %11014 = vmatpush1.bf16.msra.mxu0 0
    %11015 = vmatprep.subr.bf16.mxu0 0
    %11016 = vmatpush1.bf16.msra.mxu0 0
    %11017 = vmatprep.subr.bf16.mxu0 0
    %11018 = vmatpush1.bf16.msra.mxu0 0
    %11019 = vmatprep.subr.bf16.mxu0 0
    %11020 = vmatpush1.bf16.msra.mxu0 0
    %11021 = vmatprep.subr.bf16.mxu0 0
    %11022 = vmatpush1.bf16.msra.mxu0 0
    %11023 = vmatprep.subr.bf16.mxu0 0
    %11024 = vmatpush1.bf16.msra.mxu0 0
    %11025 = vmatprep.subr.bf16.mxu0 0
    %11026 = vmatpush1.bf16.msra.mxu0 0
    %11027 = vmatprep.subr.bf16.mxu0 0
    %11028 = vmatpush1.bf16.msra.mxu0 0
    %11029 = vmatprep.subr.bf16.mxu0 0
    %11030 = vmatpush1.bf16.msra.mxu0 0
    %11031 = vmatprep.subr.bf16.mxu0 0
    %11032 = vmatpush1.bf16.msra.mxu0 0
    %11033 = vmatprep.subr.bf16.mxu0 0
    %11034 = vmatpush1.bf16.msra.mxu0 0
    %11035 = vmatprep.mubr.bf16.mxu0 0
    %11036 = vmatmul.mubr.bf16.gmra.mrb[0].mxu0 %v11001
    %v11037 = vpop.f32.mrb[0].mxu0
    %v11038 = vadd.f32 0.0, %v11037
    %v11039 = vpop.f32.mrb[0].mxu0
    %v11040 = vpop.f32.mrb[0].mxu0
    %v11041 = vpop.f32.mrb[0].mxu0
    %11042 = vdwg.mxu0
    %v11043 = vadd.f32 %v10975, %v11038
    %v11052 = vunpack.c.l.b16 %v7714
    %v11053 = vunpack.c.l.b16 %v7715
    %v11054 = vunpack.c.l.b16 %v7716
    %v11055 = vunpack.c.l.b16 %v7717
    %v11056 = vunpack.c.l.b16 %v7718
    %v11057 = vunpack.c.l.b16 %v7719
    %v11058 = vunpack.c.l.b16 %v7720
    %v11059 = vunpack.c.l.b16 %v7721
    %v11060 = vpack.c.b16 %v11053, %v11052
    %v11061 = vpack.c.b16 %v11055, %v11054
    %v11062 = vpack.c.b16 %v11057, %v11056
    %v11063 = vpack.c.b16 %v11059, %v11058
    %v11069 = vsel %vm4306, %v7321, 0
    %11071 = vmatprep.subr.bf16.mxu0 0
    %11072 = vmatpush1.bf16.msra.mxu0 %v11060
    %11073 = vmatprep.subr.bf16.mxu0 0
    %11074 = vmatpush1.bf16.msra.mxu0 %v11061
    %11075 = vmatprep.subr.bf16.mxu0 0
    %11076 = vmatpush1.bf16.msra.mxu0 %v11062
    %11077 = vmatprep.subr.bf16.mxu0 0
    %11078 = vmatpush1.bf16.msra.mxu0 %v11063
    %11079 = vmatprep.subr.bf16.mxu0 0
    %11080 = vmatpush1.bf16.msra.mxu0 0
    %11081 = vmatprep.subr.bf16.mxu0 0
    %11082 = vmatpush1.bf16.msra.mxu0 0
    %11083 = vmatprep.subr.bf16.mxu0 0
    %11084 = vmatpush1.bf16.msra.mxu0 0
    %11085 = vmatprep.subr.bf16.mxu0 0
    %11086 = vmatpush1.bf16.msra.mxu0 0
    %11087 = vmatprep.subr.bf16.mxu0 0
    %11088 = vmatpush1.bf16.msra.mxu0 0
    %11089 = vmatprep.subr.bf16.mxu0 0
    %11090 = vmatpush1.bf16.msra.mxu0 0
    %11091 = vmatprep.subr.bf16.mxu0 0
    %11092 = vmatpush1.bf16.msra.mxu0 0
    %11093 = vmatprep.subr.bf16.mxu0 0
    %11094 = vmatpush1.bf16.msra.mxu0 0
    %11095 = vmatprep.subr.bf16.mxu0 0
    %11096 = vmatpush1.bf16.msra.mxu0 0
    %11097 = vmatprep.subr.bf16.mxu0 0
    %11098 = vmatpush1.bf16.msra.mxu0 0
    %11099 = vmatprep.subr.bf16.mxu0 0
    %11100 = vmatpush1.bf16.msra.mxu0 0
    %11101 = vmatprep.subr.bf16.mxu0 0
    %11102 = vmatpush1.bf16.msra.mxu0 0
    %11103 = vmatprep.mubr.bf16.mxu0 0
    %11104 = vmatmul.mubr.bf16.gmra.mrb[0].mxu0 %v11069
    %v11105 = vpop.f32.mrb[0].mxu0
    %v11106 = vadd.f32 0.0, %v11105
    %v11107 = vpop.f32.mrb[0].mxu0
    %v11108 = vpop.f32.mrb[0].mxu0
    %v11109 = vpop.f32.mrb[0].mxu0
    %11110 = vdwg.mxu0
    %v11111 = vadd.f32 %v11043, %v11106
    %v11120 = vunpack.c.l.b16 %v7722
    %v11121 = vunpack.c.l.b16 %v7723
    %v11122 = vunpack.c.l.b16 %v7724
    %v11123 = vunpack.c.l.b16 %v7725
    %v11124 = vunpack.c.l.b16 %v7726
    %v11125 = vunpack.c.l.b16 %v7727
    %v11126 = vunpack.c.l.b16 %v7728
    %v11127 = vunpack.c.l.b16 %v7729
    %v11128 = vpack.c.b16 %v11121, %v11120
    %v11129 = vpack.c.b16 %v11123, %v11122
    %v11130 = vpack.c.b16 %v11125, %v11124
    %v11131 = vpack.c.b16 %v11127, %v11126
    %v11137 = vsel %vm4306, %v7322, 0
    %11139 = vmatprep.subr.bf16.mxu0 0
    %11140 = vmatpush1.bf16.msra.mxu0 %v11128
    %11141 = vmatprep.subr.bf16.mxu0 0
    %11142 = vmatpush1.bf16.msra.mxu0 %v11129
    %11143 = vmatprep.subr.bf16.mxu0 0
    %11144 = vmatpush1.bf16.msra.mxu0 %v11130
    %11145 = vmatprep.subr.bf16.mxu0 0
    %11146 = vmatpush1.bf16.msra.mxu0 %v11131
    %11147 = vmatprep.subr.bf16.mxu0 0
    %11148 = vmatpush1.bf16.msra.mxu0 0
    %11149 = vmatprep.subr.bf16.mxu0 0
    %11150 = vmatpush1.bf16.msra.mxu0 0
    %11151 = vmatprep.subr.bf16.mxu0 0
    %11152 = vmatpush1.bf16.msra.mxu0 0
    %11153 = vmatprep.subr.bf16.mxu0 0
    %11154 = vmatpush1.bf16.msra.mxu0 0
    %11155 = vmatprep.subr.bf16.mxu0 0
    %11156 = vmatpush1.bf16.msra.mxu0 0
    %11157 = vmatprep.subr.bf16.mxu0 0
    %11158 = vmatpush1.bf16.msra.mxu0 0
    %11159 = vmatprep.subr.bf16.mxu0 0
    %11160 = vmatpush1.bf16.msra.mxu0 0
    %11161 = vmatprep.subr.bf16.mxu0 0
    %11162 = vmatpush1.bf16.msra.mxu0 0
    %11163 = vmatprep.subr.bf16.mxu0 0
    %11164 = vmatpush1.bf16.msra.mxu0 0
    %11165 = vmatprep.subr.bf16.mxu0 0
    %11166 = vmatpush1.bf16.msra.mxu0 0
    %11167 = vmatprep.subr.bf16.mxu0 0
    %11168 = vmatpush1.bf16.msra.mxu0 0
    %11169 = vmatprep.subr.bf16.mxu0 0
    %11170 = vmatpush1.bf16.msra.mxu0 0
    %11171 = vmatprep.mubr.bf16.mxu0 0
    %11172 = vmatmul.mubr.bf16.gmra.mrb[0].mxu0 %v11137
    %v11173 = vpop.f32.mrb[0].mxu0
    %v11174 = vadd.f32 0.0, %v11173
    %v11175 = vpop.f32.mrb[0].mxu0
    %v11176 = vpop.f32.mrb[0].mxu0
    %v11177 = vpop.f32.mrb[0].mxu0
    %11178 = vdwg.mxu0
    %v11179 = vadd.f32 %v11111, %v11174
    %v11188 = vunpack.c.l.b16 %v7730
    %v11189 = vunpack.c.l.b16 %v7731
    %v11190 = vunpack.c.l.b16 %v7732
    %v11191 = vunpack.c.l.b16 %v7733
    %v11192 = vunpack.c.l.b16 %v7734
    %v11193 = vunpack.c.l.b16 %v7735
    %v11194 = vunpack.c.l.b16 %v7736
    %v11195 = vunpack.c.l.b16 %v7737
    %v11196 = vpack.c.b16 %v11189, %v11188
    %v11197 = vpack.c.b16 %v11191, %v11190
    %v11198 = vpack.c.b16 %v11193, %v11192
    %v11199 = vpack.c.b16 %v11195, %v11194
    %v11205 = vsel %vm4306, %v7323, 0
    %11207 = vmatprep.subr.bf16.mxu0 0
    %11208 = vmatpush1.bf16.msra.mxu0 %v11196
    %11209 = vmatprep.subr.bf16.mxu0 0
    %11210 = vmatpush1.bf16.msra.mxu0 %v11197
    %11211 = vmatprep.subr.bf16.mxu0 0
    %11212 = vmatpush1.bf16.msra.mxu0 %v11198
    %11213 = vmatprep.subr.bf16.mxu0 0
    %11214 = vmatpush1.bf16.msra.mxu0 %v11199
    %11215 = vmatprep.subr.bf16.mxu0 0
    %11216 = vmatpush1.bf16.msra.mxu0 0
    %11217 = vmatprep.subr.bf16.mxu0 0
    %11218 = vmatpush1.bf16.msra.mxu0 0
    %11219 = vmatprep.subr.bf16.mxu0 0
    %11220 = vmatpush1.bf16.msra.mxu0 0
    %11221 = vmatprep.subr.bf16.mxu0 0
    %11222 = vmatpush1.bf16.msra.mxu0 0
    %11223 = vmatprep.subr.bf16.mxu0 0
    %11224 = vmatpush1.bf16.msra.mxu0 0
    %11225 = vmatprep.subr.bf16.mxu0 0
    %11226 = vmatpush1.bf16.msra.mxu0 0
    %11227 = vmatprep.subr.bf16.mxu0 0
    %11228 = vmatpush1.bf16.msra.mxu0 0
    %11229 = vmatprep.subr.bf16.mxu0 0
    %11230 = vmatpush1.bf16.msra.mxu0 0
    %11231 = vmatprep.subr.bf16.mxu0 0
    %11232 = vmatpush1.bf16.msra.mxu0 0
    %11233 = vmatprep.subr.bf16.mxu0 0
    %11234 = vmatpush1.bf16.msra.mxu0 0
    %11235 = vmatprep.subr.bf16.mxu0 0
    %11236 = vmatpush1.bf16.msra.mxu0 0
    %11237 = vmatprep.subr.bf16.mxu0 0
    %11238 = vmatpush1.bf16.msra.mxu0 0
    %11239 = vmatprep.mubr.bf16.mxu0 0
    %11240 = vmatmul.mubr.bf16.gmra.mrb[0].mxu0 %v11205
    %v11241 = vpop.f32.mrb[0].mxu0
    %v11242 = vadd.f32 0.0, %v11241
    %v11243 = vpop.f32.mrb[0].mxu0
    %v11244 = vpop.f32.mrb[0].mxu0
    %v11245 = vpop.f32.mrb[0].mxu0
    %11246 = vdwg.mxu0
    %v11247 = vadd.f32 %v11179, %v11242
    %v11256 = vunpack.c.l.b16 %v7738
    %v11257 = vunpack.c.l.b16 %v7739
    %v11258 = vunpack.c.l.b16 %v7740
    %v11259 = vunpack.c.l.b16 %v7741
    %v11260 = vunpack.c.l.b16 %v7742
    %v11261 = vunpack.c.l.b16 %v7743
    %v11262 = vunpack.c.l.b16 %v7744
    %v11263 = vunpack.c.l.b16 %v7745
    %v11264 = vpack.c.b16 %v11257, %v11256
    %v11265 = vpack.c.b16 %v11259, %v11258
    %v11266 = vpack.c.b16 %v11261, %v11260
    %v11267 = vpack.c.b16 %v11263, %v11262
    %v11273 = vsel %vm4306, %v7324, 0
    %11275 = vmatprep.subr.bf16.mxu0 0
    %11276 = vmatpush1.bf16.msra.mxu0 %v11264
    %11277 = vmatprep.subr.bf16.mxu0 0
    %11278 = vmatpush1.bf16.msra.mxu0 %v11265
    %11279 = vmatprep.subr.bf16.mxu0 0
    %11280 = vmatpush1.bf16.msra.mxu0 %v11266
    %11281 = vmatprep.subr.bf16.mxu0 0
    %11282 = vmatpush1.bf16.msra.mxu0 %v11267
    %11283 = vmatprep.subr.bf16.mxu0 0
    %11284 = vmatpush1.bf16.msra.mxu0 0
    %11285 = vmatprep.subr.bf16.mxu0 0
    %11286 = vmatpush1.bf16.msra.mxu0 0
    %11287 = vmatprep.subr.bf16.mxu0 0
    %11288 = vmatpush1.bf16.msra.mxu0 0
    %11289 = vmatprep.subr.bf16.mxu0 0
    %11290 = vmatpush1.bf16.msra.mxu0 0
    %11291 = vmatprep.subr.bf16.mxu0 0
    %11292 = vmatpush1.bf16.msra.mxu0 0
    %11293 = vmatprep.subr.bf16.mxu0 0
    %11294 = vmatpush1.bf16.msra.mxu0 0
    %11295 = vmatprep.subr.bf16.mxu0 0
    %11296 = vmatpush1.bf16.msra.mxu0 0
    %11297 = vmatprep.subr.bf16.mxu0 0
    %11298 = vmatpush1.bf16.msra.mxu0 0
    %11299 = vmatprep.subr.bf16.mxu0 0
    %11300 = vmatpush1.bf16.msra.mxu0 0
    %11301 = vmatprep.subr.bf16.mxu0 0
    %11302 = vmatpush1.bf16.msra.mxu0 0
    %11303 = vmatprep.subr.bf16.mxu0 0
    %11304 = vmatpush1.bf16.msra.mxu0 0
    %11305 = vmatprep.subr.bf16.mxu0 0
    %11306 = vmatpush1.bf16.msra.mxu0 0
    %11307 = vmatprep.mubr.bf16.mxu0 0
    %11308 = vmatmul.mubr.bf16.gmra.mrb[0].mxu0 %v11273
    %v11309 = vpop.f32.mrb[0].mxu0
    %v11310 = vadd.f32 0.0, %v11309
    %v11311 = vpop.f32.mrb[0].mxu0
    %v11312 = vpop.f32.mrb[0].mxu0
    %v11313 = vpop.f32.mrb[0].mxu0
    %11314 = vdwg.mxu0
    %v11315 = vadd.f32 %v11247, %v11310
    %v11324 = vunpack.c.l.b16 %v7746
    %v11325 = vunpack.c.l.b16 %v7747
    %v11326 = vunpack.c.l.b16 %v7748
    %v11327 = vunpack.c.l.b16 %v7749
    %v11328 = vunpack.c.l.b16 %v7750
    %v11329 = vunpack.c.l.b16 %v7751
    %v11330 = vunpack.c.l.b16 %v7752
    %v11331 = vunpack.c.l.b16 %v7753
    %v11332 = vpack.c.b16 %v11325, %v11324
    %v11333 = vpack.c.b16 %v11327, %v11326
    %v11334 = vpack.c.b16 %v11329, %v11328
    %v11335 = vpack.c.b16 %v11331, %v11330
    %v11341 = vsel %vm4306, %v7325, 0
    %11343 = vmatprep.subr.bf16.mxu0 0
    %11344 = vmatpush1.bf16.msra.mxu0 %v11332
    %11345 = vmatprep.subr.bf16.mxu0 0
    %11346 = vmatpush1.bf16.msra.mxu0 %v11333
    %11347 = vmatprep.subr.bf16.mxu0 0
    %11348 = vmatpush1.bf16.msra.mxu0 %v11334
    %11349 = vmatprep.subr.bf16.mxu0 0
    %11350 = vmatpush1.bf16.msra.mxu0 %v11335
    %11351 = vmatprep.subr.bf16.mxu0 0
    %11352 = vmatpush1.bf16.msra.mxu0 0
    %11353 = vmatprep.subr.bf16.mxu0 0
    %11354 = vmatpush1.bf16.msra.mxu0 0
    %11355 = vmatprep.subr.bf16.mxu0 0
    %11356 = vmatpush1.bf16.msra.mxu0 0
    %11357 = vmatprep.subr.bf16.mxu0 0
    %11358 = vmatpush1.bf16.msra.mxu0 0
    %11359 = vmatprep.subr.bf16.mxu0 0
    %11360 = vmatpush1.bf16.msra.mxu0 0
    %11361 = vmatprep.subr.bf16.mxu0 0
    %11362 = vmatpush1.bf16.msra.mxu0 0
    %11363 = vmatprep.subr.bf16.mxu0 0
    %11364 = vmatpush1.bf16.msra.mxu0 0
    %11365 = vmatprep.subr.bf16.mxu0 0
    %11366 = vmatpush1.bf16.msra.mxu0 0
    %11367 = vmatprep.subr.bf16.mxu0 0
    %11368 = vmatpush1.bf16.msra.mxu0 0
    %11369 = vmatprep.subr.bf16.mxu0 0
    %11370 = vmatpush1.bf16.msra.mxu0 0
    %11371 = vmatprep.subr.bf16.mxu0 0
    %11372 = vmatpush1.bf16.msra.mxu0 0
    %11373 = vmatprep.subr.bf16.mxu0 0
    %11374 = vmatpush1.bf16.msra.mxu0 0
    %11375 = vmatprep.mubr.bf16.mxu0 0
    %11376 = vmatmul.mubr.bf16.gmra.mrb[0].mxu0 %v11341
    %v11377 = vpop.f32.mrb[0].mxu0
    %v11378 = vadd.f32 0.0, %v11377
    %v11379 = vpop.f32.mrb[0].mxu0
    %v11380 = vpop.f32.mrb[0].mxu0
    %v11381 = vpop.f32.mrb[0].mxu0
    %11382 = vdwg.mxu0
    %v11383 = vadd.f32 %v11315, %v11378
    %v11392 = vunpack.c.l.b16 %v7754
    %v11393 = vunpack.c.l.b16 %v7755
    %v11394 = vunpack.c.l.b16 %v7756
    %v11395 = vunpack.c.l.b16 %v7757
    %v11396 = vunpack.c.l.b16 %v7758
    %v11397 = vunpack.c.l.b16 %v7759
    %v11398 = vunpack.c.l.b16 %v7760
    %v11399 = vunpack.c.l.b16 %v7761
    %v11400 = vpack.c.b16 %v11393, %v11392
    %v11401 = vpack.c.b16 %v11395, %v11394
    %v11402 = vpack.c.b16 %v11397, %v11396
    %v11403 = vpack.c.b16 %v11399, %v11398
    %v11409 = vsel %vm4306, %v7326, 0
    %11411 = vmatprep.subr.bf16.mxu0 0
    %11412 = vmatpush1.bf16.msra.mxu0 %v11400
    %11413 = vmatprep.subr.bf16.mxu0 0
    %11414 = vmatpush1.bf16.msra.mxu0 %v11401
    %11415 = vmatprep.subr.bf16.mxu0 0
    %11416 = vmatpush1.bf16.msra.mxu0 %v11402
    %11417 = vmatprep.subr.bf16.mxu0 0
    %11418 = vmatpush1.bf16.msra.mxu0 %v11403
    %11419 = vmatprep.subr.bf16.mxu0 0
    %11420 = vmatpush1.bf16.msra.mxu0 0
    %11421 = vmatprep.subr.bf16.mxu0 0
    %11422 = vmatpush1.bf16.msra.mxu0 0
    %11423 = vmatprep.subr.bf16.mxu0 0
    %11424 = vmatpush1.bf16.msra.mxu0 0
    %11425 = vmatprep.subr.bf16.mxu0 0
    %11426 = vmatpush1.bf16.msra.mxu0 0
    %11427 = vmatprep.subr.bf16.mxu0 0
    %11428 = vmatpush1.bf16.msra.mxu0 0
    %11429 = vmatprep.subr.bf16.mxu0 0
    %11430 = vmatpush1.bf16.msra.mxu0 0
    %11431 = vmatprep.subr.bf16.mxu0 0
    %11432 = vmatpush1.bf16.msra.mxu0 0
    %11433 = vmatprep.subr.bf16.mxu0 0
    %11434 = vmatpush1.bf16.msra.mxu0 0
    %11435 = vmatprep.subr.bf16.mxu0 0
    %11436 = vmatpush1.bf16.msra.mxu0 0
    %11437 = vmatprep.subr.bf16.mxu0 0
    %11438 = vmatpush1.bf16.msra.mxu0 0
    %11439 = vmatprep.subr.bf16.mxu0 0
    %11440 = vmatpush1.bf16.msra.mxu0 0
    %11441 = vmatprep.subr.bf16.mxu0 0
    %11442 = vmatpush1.bf16.msra.mxu0 0
    %11443 = vmatprep.mubr.bf16.mxu0 0
    %11444 = vmatmul.mubr.bf16.gmra.mrb[0].mxu0 %v11409
    %v11445 = vpop.f32.mrb[0].mxu0
    %v11446 = vadd.f32 0.0, %v11445
    %v11447 = vpop.f32.mrb[0].mxu0
    %v11448 = vpop.f32.mrb[0].mxu0
    %v11449 = vpop.f32.mrb[0].mxu0
    %11450 = vdwg.mxu0
    %v11451 = vadd.f32 %v11383, %v11446
    %v11460 = vunpack.c.l.b16 %v7762
    %v11461 = vunpack.c.l.b16 %v7763
    %v11462 = vunpack.c.l.b16 %v7764
    %v11463 = vunpack.c.l.b16 %v7765
    %v11464 = vunpack.c.l.b16 %v7766
    %v11465 = vunpack.c.l.b16 %v7767
    %v11466 = vunpack.c.l.b16 %v7768
    %v11467 = vunpack.c.l.b16 %v7769
    %v11468 = vpack.c.b16 %v11461, %v11460
    %v11469 = vpack.c.b16 %v11463, %v11462
    %v11470 = vpack.c.b16 %v11465, %v11464
    %v11471 = vpack.c.b16 %v11467, %v11466
    %v11477 = vsel %vm4306, %v7327, 0
    %11479 = vmatprep.subr.bf16.mxu0 0
    %11480 = vmatpush1.bf16.msra.mxu0 %v11468
    %11481 = vmatprep.subr.bf16.mxu0 0
    %11482 = vmatpush1.bf16.msra.mxu0 %v11469
    %11483 = vmatprep.subr.bf16.mxu0 0
    %11484 = vmatpush1.bf16.msra.mxu0 %v11470
    %11485 = vmatprep.subr.bf16.mxu0 0
    %11486 = vmatpush1.bf16.msra.mxu0 %v11471
    %11487 = vmatprep.subr.bf16.mxu0 0
    %11488 = vmatpush1.bf16.msra.mxu0 0
    %11489 = vmatprep.subr.bf16.mxu0 0
    %11490 = vmatpush1.bf16.msra.mxu0 0
    %11491 = vmatprep.subr.bf16.mxu0 0
    %11492 = vmatpush1.bf16.msra.mxu0 0
    %11493 = vmatprep.subr.bf16.mxu0 0
    %11494 = vmatpush1.bf16.msra.mxu0 0
    %11495 = vmatprep.subr.bf16.mxu0 0
    %11496 = vmatpush1.bf16.msra.mxu0 0
    %11497 = vmatprep.subr.bf16.mxu0 0
    %11498 = vmatpush1.bf16.msra.mxu0 0
    %11499 = vmatprep.subr.bf16.mxu0 0
    %11500 = vmatpush1.bf16.msra.mxu0 0
    %11501 = vmatprep.subr.bf16.mxu0 0
    %11502 = vmatpush1.bf16.msra.mxu0 0
    %11503 = vmatprep.subr.bf16.mxu0 0
    %11504 = vmatpush1.bf16.msra.mxu0 0
    %11505 = vmatprep.subr.bf16.mxu0 0
    %11506 = vmatpush1.bf16.msra.mxu0 0
    %11507 = vmatprep.subr.bf16.mxu0 0
    %11508 = vmatpush1.bf16.msra.mxu0 0
    %11509 = vmatprep.subr.bf16.mxu0 0
    %11510 = vmatpush1.bf16.msra.mxu0 0
    %11511 = vmatprep.mubr.bf16.mxu0 0
    %11512 = vmatmul.mubr.bf16.gmra.mrb[0].mxu0 %v11477
    %v11513 = vpop.f32.mrb[0].mxu0
    %v11514 = vadd.f32 0.0, %v11513
    %v11515 = vpop.f32.mrb[0].mxu0
    %v11516 = vpop.f32.mrb[0].mxu0
    %v11517 = vpop.f32.mrb[0].mxu0
    %11518 = vdwg.mxu0
    %v11519 = vadd.f32 %v11451, %v11514
    %v11528 = vunpack.c.l.b16 %v7770
    %v11529 = vunpack.c.l.b16 %v7771
    %v11530 = vunpack.c.l.b16 %v7772
    %v11531 = vunpack.c.l.b16 %v7773
    %v11532 = vunpack.c.l.b16 %v7774
    %v11533 = vunpack.c.l.b16 %v7775
    %v11534 = vunpack.c.l.b16 %v7776
    %v11535 = vunpack.c.l.b16 %v7777
    %v11536 = vpack.c.b16 %v11529, %v11528
    %v11537 = vpack.c.b16 %v11531, %v11530
    %v11538 = vpack.c.b16 %v11533, %v11532
    %v11539 = vpack.c.b16 %v11535, %v11534
    %v11545 = vsel %vm4306, %v7328, 0
    %11547 = vmatprep.subr.bf16.mxu0 0
    %11548 = vmatpush1.bf16.msra.mxu0 %v11536
    %11549 = vmatprep.subr.bf16.mxu0 0
    %11550 = vmatpush1.bf16.msra.mxu0 %v11537
    %11551 = vmatprep.subr.bf16.mxu0 0
    %11552 = vmatpush1.bf16.msra.mxu0 %v11538
    %11553 = vmatprep.subr.bf16.mxu0 0
    %11554 = vmatpush1.bf16.msra.mxu0 %v11539
    %11555 = vmatprep.subr.bf16.mxu0 0
    %11556 = vmatpush1.bf16.msra.mxu0 0
    %11557 = vmatprep.subr.bf16.mxu0 0
    %11558 = vmatpush1.bf16.msra.mxu0 0
    %11559 = vmatprep.subr.bf16.mxu0 0
    %11560 = vmatpush1.bf16.msra.mxu0 0
    %11561 = vmatprep.subr.bf16.mxu0 0
    %11562 = vmatpush1.bf16.msra.mxu0 0
    %11563 = vmatprep.subr.bf16.mxu0 0
    %11564 = vmatpush1.bf16.msra.mxu0 0
    %11565 = vmatprep.subr.bf16.mxu0 0
    %11566 = vmatpush1.bf16.msra.mxu0 0
    %11567 = vmatprep.subr.bf16.mxu0 0
    %11568 = vmatpush1.bf16.msra.mxu0 0
    %11569 = vmatprep.subr.bf16.mxu0 0
    %11570 = vmatpush1.bf16.msra.mxu0 0
    %11571 = vmatprep.subr.bf16.mxu0 0
    %11572 = vmatpush1.bf16.msra.mxu0 0
    %11573 = vmatprep.subr.bf16.mxu0 0
    %11574 = vmatpush1.bf16.msra.mxu0 0
    %11575 = vmatprep.subr.bf16.mxu0 0
    %11576 = vmatpush1.bf16.msra.mxu0 0
    %11577 = vmatprep.subr.bf16.mxu0 0
    %11578 = vmatpush1.bf16.msra.mxu0 0
    %11579 = vmatprep.mubr.bf16.mxu0 0
    %11580 = vmatmul.mubr.bf16.gmra.mrb[0].mxu0 %v11545
    %v11581 = vpop.f32.mrb[0].mxu0
    %v11582 = vadd.f32 0.0, %v11581
    %v11583 = vpop.f32.mrb[0].mxu0
    %v11584 = vpop.f32.mrb[0].mxu0
    %v11585 = vpop.f32.mrb[0].mxu0
    %11586 = vdwg.mxu0
    %v11587 = vadd.f32 %v11519, %v11582
    %v11596 = vunpack.c.l.b16 %v7778
    %v11597 = vunpack.c.l.b16 %v7779
    %v11598 = vunpack.c.l.b16 %v7780
    %v11599 = vunpack.c.l.b16 %v7781
    %v11600 = vunpack.c.l.b16 %v7782
    %v11601 = vunpack.c.l.b16 %v7783
    %v11602 = vunpack.c.l.b16 %v7784
    %v11603 = vunpack.c.l.b16 %v7785
    %v11604 = vpack.c.b16 %v11597, %v11596
    %v11605 = vpack.c.b16 %v11599, %v11598
    %v11606 = vpack.c.b16 %v11601, %v11600
    %v11607 = vpack.c.b16 %v11603, %v11602
    %v11613 = vsel %vm4306, %v7329, 0
    %11615 = vmatprep.subr.bf16.mxu0 0
    %11616 = vmatpush1.bf16.msra.mxu0 %v11604
    %11617 = vmatprep.subr.bf16.mxu0 0
    %11618 = vmatpush1.bf16.msra.mxu0 %v11605
    %11619 = vmatprep.subr.bf16.mxu0 0
    %11620 = vmatpush1.bf16.msra.mxu0 %v11606
    %11621 = vmatprep.subr.bf16.mxu0 0
    %11622 = vmatpush1.bf16.msra.mxu0 %v11607
    %11623 = vmatprep.subr.bf16.mxu0 0
    %11624 = vmatpush1.bf16.msra.mxu0 0
    %11625 = vmatprep.subr.bf16.mxu0 0
    %11626 = vmatpush1.bf16.msra.mxu0 0
    %11627 = vmatprep.subr.bf16.mxu0 0
    %11628 = vmatpush1.bf16.msra.mxu0 0
    %11629 = vmatprep.subr.bf16.mxu0 0
    %11630 = vmatpush1.bf16.msra.mxu0 0
    %11631 = vmatprep.subr.bf16.mxu0 0
    %11632 = vmatpush1.bf16.msra.mxu0 0
    %11633 = vmatprep.subr.bf16.mxu0 0
    %11634 = vmatpush1.bf16.msra.mxu0 0
    %11635 = vmatprep.subr.bf16.mxu0 0
    %11636 = vmatpush1.bf16.msra.mxu0 0
    %11637 = vmatprep.subr.bf16.mxu0 0
    %11638 = vmatpush1.bf16.msra.mxu0 0
    %11639 = vmatprep.subr.bf16.mxu0 0
    %11640 = vmatpush1.bf16.msra.mxu0 0
    %11641 = vmatprep.subr.bf16.mxu0 0
    %11642 = vmatpush1.bf16.msra.mxu0 0
    %11643 = vmatprep.subr.bf16.mxu0 0
    %11644 = vmatpush1.bf16.msra.mxu0 0
    %11645 = vmatprep.subr.bf16.mxu0 0
    %11646 = vmatpush1.bf16.msra.mxu0 0
    %11647 = vmatprep.mubr.bf16.mxu0 0
    %11648 = vmatmul.mubr.bf16.gmra.mrb[0].mxu0 %v11613
    %v11649 = vpop.f32.mrb[0].mxu0
    %v11650 = vadd.f32 0.0, %v11649
    %v11651 = vpop.f32.mrb[0].mxu0
    %v11652 = vpop.f32.mrb[0].mxu0
    %v11653 = vpop.f32.mrb[0].mxu0
    %11654 = vdwg.mxu0
    %v11655 = vadd.f32 %v11587, %v11650
    %v11664 = vunpack.c.l.b16 %v7786
    %v11665 = vunpack.c.l.b16 %v7787
    %v11666 = vunpack.c.l.b16 %v7788
    %v11667 = vunpack.c.l.b16 %v7789
    %v11668 = vunpack.c.l.b16 %v7790
    %v11669 = vunpack.c.l.b16 %v7791
    %v11670 = vunpack.c.l.b16 %v7792
    %v11671 = vunpack.c.l.b16 %v7793
    %v11672 = vpack.c.b16 %v11665, %v11664
    %v11673 = vpack.c.b16 %v11667, %v11666
    %v11674 = vpack.c.b16 %v11669, %v11668
    %v11675 = vpack.c.b16 %v11671, %v11670
    %v11681 = vsel %vm4306, %v7330, 0
    %11683 = vmatprep.subr.bf16.mxu0 0
    %11684 = vmatpush1.bf16.msra.mxu0 %v11672
    %11685 = vmatprep.subr.bf16.mxu0 0
    %11686 = vmatpush1.bf16.msra.mxu0 %v11673
    %11687 = vmatprep.subr.bf16.mxu0 0
    %11688 = vmatpush1.bf16.msra.mxu0 %v11674
    %11689 = vmatprep.subr.bf16.mxu0 0
    %11690 = vmatpush1.bf16.msra.mxu0 %v11675
    %11691 = vmatprep.subr.bf16.mxu0 0
    %11692 = vmatpush1.bf16.msra.mxu0 0
    %11693 = vmatprep.subr.bf16.mxu0 0
    %11694 = vmatpush1.bf16.msra.mxu0 0
    %11695 = vmatprep.subr.bf16.mxu0 0
    %11696 = vmatpush1.bf16.msra.mxu0 0
    %11697 = vmatprep.subr.bf16.mxu0 0
    %11698 = vmatpush1.bf16.msra.mxu0 0
    %11699 = vmatprep.subr.bf16.mxu0 0
    %11700 = vmatpush1.bf16.msra.mxu0 0
    %11701 = vmatprep.subr.bf16.mxu0 0
    %11702 = vmatpush1.bf16.msra.mxu0 0
    %11703 = vmatprep.subr.bf16.mxu0 0
    %11704 = vmatpush1.bf16.msra.mxu0 0
    %11705 = vmatprep.subr.bf16.mxu0 0
    %11706 = vmatpush1.bf16.msra.mxu0 0
    %11707 = vmatprep.subr.bf16.mxu0 0
    %11708 = vmatpush1.bf16.msra.mxu0 0
    %11709 = vmatprep.subr.bf16.mxu0 0
    %11710 = vmatpush1.bf16.msra.mxu0 0
    %11711 = vmatprep.subr.bf16.mxu0 0
    %11712 = vmatpush1.bf16.msra.mxu0 0
    %11713 = vmatprep.subr.bf16.mxu0 0
    %11714 = vmatpush1.bf16.msra.mxu0 0
    %11715 = vmatprep.mubr.bf16.mxu0 0
    %11716 = vmatmul.mubr.bf16.gmra.mrb[0].mxu0 %v11681
    %v11717 = vpop.f32.mrb[0].mxu0
    %v11718 = vadd.f32 0.0, %v11717
    %v11719 = vpop.f32.mrb[0].mxu0
    %v11720 = vpop.f32.mrb[0].mxu0
    %v11721 = vpop.f32.mrb[0].mxu0
    %11722 = vdwg.mxu0
    %v11723 = vadd.f32 %v11655, %v11718
    %v11732 = vunpack.c.l.b16 %v7794
    %v11733 = vunpack.c.l.b16 %v7795
    %v11734 = vunpack.c.l.b16 %v7796
    %v11735 = vunpack.c.l.b16 %v7797
    %v11736 = vunpack.c.l.b16 %v7798
    %v11737 = vunpack.c.l.b16 %v7799
    %v11738 = vunpack.c.l.b16 %v7800
    %v11739 = vunpack.c.l.b16 %v7801
    %v11740 = vpack.c.b16 %v11733, %v11732
    %v11741 = vpack.c.b16 %v11735, %v11734
    %v11742 = vpack.c.b16 %v11737, %v11736
    %v11743 = vpack.c.b16 %v11739, %v11738
    %v11749 = vsel %vm4306, %v7331, 0
    %11751 = vmatprep.subr.bf16.mxu0 0
    %11752 = vmatpush1.bf16.msra.mxu0 %v11740
    %11753 = vmatprep.subr.bf16.mxu0 0
    %11754 = vmatpush1.bf16.msra.mxu0 %v11741
    %11755 = vmatprep.subr.bf16.mxu0 0
    %11756 = vmatpush1.bf16.msra.mxu0 %v11742
    %11757 = vmatprep.subr.bf16.mxu0 0
    %11758 = vmatpush1.bf16.msra.mxu0 %v11743
    %11759 = vmatprep.subr.bf16.mxu0 0
    %11760 = vmatpush1.bf16.msra.mxu0 0
    %11761 = vmatprep.subr.bf16.mxu0 0
    %11762 = vmatpush1.bf16.msra.mxu0 0
    %11763 = vmatprep.subr.bf16.mxu0 0
    %11764 = vmatpush1.bf16.msra.mxu0 0
    %11765 = vmatprep.subr.bf16.mxu0 0
    %11766 = vmatpush1.bf16.msra.mxu0 0
    %11767 = vmatprep.subr.bf16.mxu0 0
    %11768 = vmatpush1.bf16.msra.mxu0 0
    %11769 = vmatprep.subr.bf16.mxu0 0
    %11770 = vmatpush1.bf16.msra.mxu0 0
    %11771 = vmatprep.subr.bf16.mxu0 0
    %11772 = vmatpush1.bf16.msra.mxu0 0
    %11773 = vmatprep.subr.bf16.mxu0 0
    %11774 = vmatpush1.bf16.msra.mxu0 0
    %11775 = vmatprep.subr.bf16.mxu0 0
    %11776 = vmatpush1.bf16.msra.mxu0 0
    %11777 = vmatprep.subr.bf16.mxu0 0
    %11778 = vmatpush1.bf16.msra.mxu0 0
    %11779 = vmatprep.subr.bf16.mxu0 0
    %11780 = vmatpush1.bf16.msra.mxu0 0
    %11781 = vmatprep.subr.bf16.mxu0 0
    %11782 = vmatpush1.bf16.msra.mxu0 0
    %11783 = vmatprep.mubr.bf16.mxu0 0
    %11784 = vmatmul.mubr.bf16.gmra.mrb[0].mxu0 %v11749
    %v11785 = vpop.f32.mrb[0].mxu0
    %v11786 = vadd.f32 0.0, %v11785
    %v11787 = vpop.f32.mrb[0].mxu0
    %v11788 = vpop.f32.mrb[0].mxu0
    %v11789 = vpop.f32.mrb[0].mxu0
    %11790 = vdwg.mxu0
    %v11791 = vadd.f32 %v11723, %v11786
    %v11800 = vunpack.c.l.b16 %v7802
    %v11801 = vunpack.c.l.b16 %v7803
    %v11802 = vunpack.c.l.b16 %v7804
    %v11803 = vunpack.c.l.b16 %v7805
    %v11804 = vunpack.c.l.b16 %v7806
    %v11805 = vunpack.c.l.b16 %v7807
    %v11806 = vunpack.c.l.b16 %v7808
    %v11807 = vunpack.c.l.b16 %v7809
    %v11808 = vpack.c.b16 %v11801, %v11800
    %v11809 = vpack.c.b16 %v11803, %v11802
    %v11810 = vpack.c.b16 %v11805, %v11804
    %v11811 = vpack.c.b16 %v11807, %v11806
    %v11817 = vsel %vm4306, %v7332, 0
    %11819 = vmatprep.subr.bf16.mxu0 0
    %11820 = vmatpush1.bf16.msra.mxu0 %v11808
    %11821 = vmatprep.subr.bf16.mxu0 0
    %11822 = vmatpush1.bf16.msra.mxu0 %v11809
    %11823 = vmatprep.subr.bf16.mxu0 0
    %11824 = vmatpush1.bf16.msra.mxu0 %v11810
    %11825 = vmatprep.subr.bf16.mxu0 0
    %11826 = vmatpush1.bf16.msra.mxu0 %v11811
    %11827 = vmatprep.subr.bf16.mxu0 0
    %11828 = vmatpush1.bf16.msra.mxu0 0
    %11829 = vmatprep.subr.bf16.mxu0 0
    %11830 = vmatpush1.bf16.msra.mxu0 0
    %11831 = vmatprep.subr.bf16.mxu0 0
    %11832 = vmatpush1.bf16.msra.mxu0 0
    %11833 = vmatprep.subr.bf16.mxu0 0
    %11834 = vmatpush1.bf16.msra.mxu0 0
    %11835 = vmatprep.subr.bf16.mxu0 0
    %11836 = vmatpush1.bf16.msra.mxu0 0
    %11837 = vmatprep.subr.bf16.mxu0 0
    %11838 = vmatpush1.bf16.msra.mxu0 0
    %11839 = vmatprep.subr.bf16.mxu0 0
    %11840 = vmatpush1.bf16.msra.mxu0 0
    %11841 = vmatprep.subr.bf16.mxu0 0
    %11842 = vmatpush1.bf16.msra.mxu0 0
    %11843 = vmatprep.subr.bf16.mxu0 0
    %11844 = vmatpush1.bf16.msra.mxu0 0
    %11845 = vmatprep.subr.bf16.mxu0 0
    %11846 = vmatpush1.bf16.msra.mxu0 0
    %11847 = vmatprep.subr.bf16.mxu0 0
    %11848 = vmatpush1.bf16.msra.mxu0 0
    %11849 = vmatprep.subr.bf16.mxu0 0
    %11850 = vmatpush1.bf16.msra.mxu0 0
    %11851 = vmatprep.mubr.bf16.mxu0 0
    %11852 = vmatmul.mubr.bf16.gmra.mrb[0].mxu0 %v11817
    %v11853 = vpop.f32.mrb[0].mxu0
    %v11854 = vadd.f32 0.0, %v11853
    %v11855 = vpop.f32.mrb[0].mxu0
    %v11856 = vpop.f32.mrb[0].mxu0
    %v11857 = vpop.f32.mrb[0].mxu0
    %11858 = vdwg.mxu0
    %v11859 = vadd.f32 %v11791, %v11854
    %v11868 = vunpack.c.l.b16 %v7810
    %v11869 = vunpack.c.l.b16 %v7811
    %v11870 = vunpack.c.l.b16 %v7812
    %v11871 = vunpack.c.l.b16 %v7813
    %v11872 = vunpack.c.l.b16 %v7814
    %v11873 = vunpack.c.l.b16 %v7815
    %v11874 = vunpack.c.l.b16 %v7816
    %v11875 = vunpack.c.l.b16 %v7817
    %v11876 = vpack.c.b16 %v11869, %v11868
    %v11877 = vpack.c.b16 %v11871, %v11870
    %v11878 = vpack.c.b16 %v11873, %v11872
    %v11879 = vpack.c.b16 %v11875, %v11874
    %v11885 = vsel %vm4306, %v7333, 0
    %11887 = vmatprep.subr.bf16.mxu0 0
    %11888 = vmatpush1.bf16.msra.mxu0 %v11876
    %11889 = vmatprep.subr.bf16.mxu0 0
    %11890 = vmatpush1.bf16.msra.mxu0 %v11877
    %11891 = vmatprep.subr.bf16.mxu0 0
    %11892 = vmatpush1.bf16.msra.mxu0 %v11878
    %11893 = vmatprep.subr.bf16.mxu0 0
    %11894 = vmatpush1.bf16.msra.mxu0 %v11879
    %11895 = vmatprep.subr.bf16.mxu0 0
    %11896 = vmatpush1.bf16.msra.mxu0 0
    %11897 = vmatprep.subr.bf16.mxu0 0
    %11898 = vmatpush1.bf16.msra.mxu0 0
    %11899 = vmatprep.subr.bf16.mxu0 0
    %11900 = vmatpush1.bf16.msra.mxu0 0
    %11901 = vmatprep.subr.bf16.mxu0 0
    %11902 = vmatpush1.bf16.msra.mxu0 0
    %11903 = vmatprep.subr.bf16.mxu0 0
    %11904 = vmatpush1.bf16.msra.mxu0 0
    %11905 = vmatprep.subr.bf16.mxu0 0
    %11906 = vmatpush1.bf16.msra.mxu0 0
    %11907 = vmatprep.subr.bf16.mxu0 0
    %11908 = vmatpush1.bf16.msra.mxu0 0
    %11909 = vmatprep.subr.bf16.mxu0 0
    %11910 = vmatpush1.bf16.msra.mxu0 0
    %11911 = vmatprep.subr.bf16.mxu0 0
    %11912 = vmatpush1.bf16.msra.mxu0 0
    %11913 = vmatprep.subr.bf16.mxu0 0
    %11914 = vmatpush1.bf16.msra.mxu0 0
    %11915 = vmatprep.subr.bf16.mxu0 0
    %11916 = vmatpush1.bf16.msra.mxu0 0
    %11917 = vmatprep.subr.bf16.mxu0 0
    %11918 = vmatpush1.bf16.msra.mxu0 0
    %11919 = vmatprep.mubr.bf16.mxu0 0
    %11920 = vmatmul.mubr.bf16.gmra.mrb[0].mxu0 %v11885
    %v11921 = vpop.f32.mrb[0].mxu0
    %v11922 = vadd.f32 0.0, %v11921
    %v11923 = vpop.f32.mrb[0].mxu0
    %v11924 = vpop.f32.mrb[0].mxu0
    %v11925 = vpop.f32.mrb[0].mxu0
    %11926 = vdwg.mxu0
    %v11927 = vadd.f32 %v11859, %v11922
    %v11936 = vunpack.c.l.b16 %v7818
    %v11937 = vunpack.c.l.b16 %v7819
    %v11938 = vunpack.c.l.b16 %v7820
    %v11939 = vunpack.c.l.b16 %v7821
    %v11940 = vunpack.c.l.b16 %v7822
    %v11941 = vunpack.c.l.b16 %v7823
    %v11942 = vunpack.c.l.b16 %v7824
    %v11943 = vunpack.c.l.b16 %v7825
    %v11944 = vpack.c.b16 %v11937, %v11936
    %v11945 = vpack.c.b16 %v11939, %v11938
    %v11946 = vpack.c.b16 %v11941, %v11940
    %v11947 = vpack.c.b16 %v11943, %v11942
    %v11953 = vsel %vm4306, %v7334, 0
    %11955 = vmatprep.subr.bf16.mxu0 0
    %11956 = vmatpush1.bf16.msra.mxu0 %v11944
    %11957 = vmatprep.subr.bf16.mxu0 0
    %11958 = vmatpush1.bf16.msra.mxu0 %v11945
    %11959 = vmatprep.subr.bf16.mxu0 0
    %11960 = vmatpush1.bf16.msra.mxu0 %v11946
    %11961 = vmatprep.subr.bf16.mxu0 0
    %11962 = vmatpush1.bf16.msra.mxu0 %v11947
    %11963 = vmatprep.subr.bf16.mxu0 0
    %11964 = vmatpush1.bf16.msra.mxu0 0
    %11965 = vmatprep.subr.bf16.mxu0 0
    %11966 = vmatpush1.bf16.msra.mxu0 0
    %11967 = vmatprep.subr.bf16.mxu0 0
    %11968 = vmatpush1.bf16.msra.mxu0 0
    %11969 = vmatprep.subr.bf16.mxu0 0
    %11970 = vmatpush1.bf16.msra.mxu0 0
    %11971 = vmatprep.subr.bf16.mxu0 0
    %11972 = vmatpush1.bf16.msra.mxu0 0
    %11973 = vmatprep.subr.bf16.mxu0 0
    %11974 = vmatpush1.bf16.msra.mxu0 0
    %11975 = vmatprep.subr.bf16.mxu0 0
    %11976 = vmatpush1.bf16.msra.mxu0 0
    %11977 = vmatprep.subr.bf16.mxu0 0
    %11978 = vmatpush1.bf16.msra.mxu0 0
    %11979 = vmatprep.subr.bf16.mxu0 0
    %11980 = vmatpush1.bf16.msra.mxu0 0
    %11981 = vmatprep.subr.bf16.mxu0 0
    %11982 = vmatpush1.bf16.msra.mxu0 0
    %11983 = vmatprep.subr.bf16.mxu0 0
    %11984 = vmatpush1.bf16.msra.mxu0 0
    %11985 = vmatprep.subr.bf16.mxu0 0
    %11986 = vmatpush1.bf16.msra.mxu0 0
    %11987 = vmatprep.mubr.bf16.mxu0 0
    %11988 = vmatmul.mubr.bf16.gmra.mrb[0].mxu0 %v11953
    %v11989 = vpop.f32.mrb[0].mxu0
    %v11990 = vadd.f32 0.0, %v11989
    %v11991 = vpop.f32.mrb[0].mxu0
    %v11992 = vpop.f32.mrb[0].mxu0
    %v11993 = vpop.f32.mrb[0].mxu0
    %11994 = vdwg.mxu0
    %v11995 = vadd.f32 %v11927, %v11990
    %v12004 = vunpack.c.l.b16 %v7826
    %v12005 = vunpack.c.l.b16 %v7827
    %v12006 = vunpack.c.l.b16 %v7828
    %v12007 = vunpack.c.l.b16 %v7829
    %v12008 = vunpack.c.l.b16 %v7830
    %v12009 = vunpack.c.l.b16 %v7831
    %v12010 = vunpack.c.l.b16 %v7832
    %v12011 = vunpack.c.l.b16 %v7833
    %v12012 = vpack.c.b16 %v12005, %v12004
    %v12013 = vpack.c.b16 %v12007, %v12006
    %v12014 = vpack.c.b16 %v12009, %v12008
    %v12015 = vpack.c.b16 %v12011, %v12010
    %v12021 = vsel %vm4306, %v7335, 0
    %12023 = vmatprep.subr.bf16.mxu0 0
    %12024 = vmatpush1.bf16.msra.mxu0 %v12012
    %12025 = vmatprep.subr.bf16.mxu0 0
    %12026 = vmatpush1.bf16.msra.mxu0 %v12013
    %12027 = vmatprep.subr.bf16.mxu0 0
    %12028 = vmatpush1.bf16.msra.mxu0 %v12014
    %12029 = vmatprep.subr.bf16.mxu0 0
    %12030 = vmatpush1.bf16.msra.mxu0 %v12015
    %12031 = vmatprep.subr.bf16.mxu0 0
    %12032 = vmatpush1.bf16.msra.mxu0 0
    %12033 = vmatprep.subr.bf16.mxu0 0
    %12034 = vmatpush1.bf16.msra.mxu0 0
    %12035 = vmatprep.subr.bf16.mxu0 0
    %12036 = vmatpush1.bf16.msra.mxu0 0
    %12037 = vmatprep.subr.bf16.mxu0 0
    %12038 = vmatpush1.bf16.msra.mxu0 0
    %12039 = vmatprep.subr.bf16.mxu0 0
    %12040 = vmatpush1.bf16.msra.mxu0 0
    %12041 = vmatprep.subr.bf16.mxu0 0
    %12042 = vmatpush1.bf16.msra.mxu0 0
    %12043 = vmatprep.subr.bf16.mxu0 0
    %12044 = vmatpush1.bf16.msra.mxu0 0
    %12045 = vmatprep.subr.bf16.mxu0 0
    %12046 = vmatpush1.bf16.msra.mxu0 0
    %12047 = vmatprep.subr.bf16.mxu0 0
    %12048 = vmatpush1.bf16.msra.mxu0 0
    %12049 = vmatprep.subr.bf16.mxu0 0
    %12050 = vmatpush1.bf16.msra.mxu0 0
    %12051 = vmatprep.subr.bf16.mxu0 0
    %12052 = vmatpush1.bf16.msra.mxu0 0
    %12053 = vmatprep.subr.bf16.mxu0 0
    %12054 = vmatpush1.bf16.msra.mxu0 0
    %12055 = vmatprep.mubr.bf16.mxu0 0
    %12056 = vmatmul.mubr.bf16.gmra.mrb[0].mxu0 %v12021
    %v12057 = vpop.f32.mrb[0].mxu0
    %v12058 = vadd.f32 0.0, %v12057
    %v12059 = vpop.f32.mrb[0].mxu0
    %v12060 = vpop.f32.mrb[0].mxu0
    %v12061 = vpop.f32.mrb[0].mxu0
    %12062 = vdwg.mxu0
    %v12063 = vadd.f32 %v11995, %v12058
    %v12072 = vunpack.c.l.b16 %v7834
    %v12073 = vunpack.c.l.b16 %v7835
    %v12074 = vunpack.c.l.b16 %v7836
    %v12075 = vunpack.c.l.b16 %v7837
    %v12076 = vunpack.c.l.b16 %v7838
    %v12077 = vunpack.c.l.b16 %v7839
    %v12078 = vunpack.c.l.b16 %v7840
    %v12079 = vunpack.c.l.b16 %v7841
    %v12080 = vpack.c.b16 %v12073, %v12072
    %v12081 = vpack.c.b16 %v12075, %v12074
    %v12082 = vpack.c.b16 %v12077, %v12076
    %v12083 = vpack.c.b16 %v12079, %v12078
    %v12089 = vsel %vm4306, %v7336, 0
    %12091 = vmatprep.subr.bf16.mxu0 0
    %12092 = vmatpush1.bf16.msra.mxu0 %v12080
    %12093 = vmatprep.subr.bf16.mxu0 0
    %12094 = vmatpush1.bf16.msra.mxu0 %v12081
    %12095 = vmatprep.subr.bf16.mxu0 0
    %12096 = vmatpush1.bf16.msra.mxu0 %v12082
    %12097 = vmatprep.subr.bf16.mxu0 0
    %12098 = vmatpush1.bf16.msra.mxu0 %v12083
    %12099 = vmatprep.subr.bf16.mxu0 0
    %12100 = vmatpush1.bf16.msra.mxu0 0
    %12101 = vmatprep.subr.bf16.mxu0 0
    %12102 = vmatpush1.bf16.msra.mxu0 0
    %12103 = vmatprep.subr.bf16.mxu0 0
    %12104 = vmatpush1.bf16.msra.mxu0 0
    %12105 = vmatprep.subr.bf16.mxu0 0
    %12106 = vmatpush1.bf16.msra.mxu0 0
    %12107 = vmatprep.subr.bf16.mxu0 0
    %12108 = vmatpush1.bf16.msra.mxu0 0
    %12109 = vmatprep.subr.bf16.mxu0 0
    %12110 = vmatpush1.bf16.msra.mxu0 0
    %12111 = vmatprep.subr.bf16.mxu0 0
    %12112 = vmatpush1.bf16.msra.mxu0 0
    %12113 = vmatprep.subr.bf16.mxu0 0
    %12114 = vmatpush1.bf16.msra.mxu0 0
    %12115 = vmatprep.subr.bf16.mxu0 0
    %12116 = vmatpush1.bf16.msra.mxu0 0
    %12117 = vmatprep.subr.bf16.mxu0 0
    %12118 = vmatpush1.bf16.msra.mxu0 0
    %12119 = vmatprep.subr.bf16.mxu0 0
    %12120 = vmatpush1.bf16.msra.mxu0 0
    %12121 = vmatprep.subr.bf16.mxu0 0
    %12122 = vmatpush1.bf16.msra.mxu0 0
    %12123 = vmatprep.mubr.bf16.mxu0 0
    %12124 = vmatmul.mubr.bf16.gmra.mrb[0].mxu0 %v12089
    %v12125 = vpop.f32.mrb[0].mxu0
    %v12126 = vadd.f32 0.0, %v12125
    %v12127 = vpop.f32.mrb[0].mxu0
    %v12128 = vpop.f32.mrb[0].mxu0
    %v12129 = vpop.f32.mrb[0].mxu0
    %12130 = vdwg.mxu0
    %v12131 = vadd.f32 %v12063, %v12126
    %v12140 = vunpack.c.l.b16 %v7842
    %v12141 = vunpack.c.l.b16 %v7843
    %v12142 = vunpack.c.l.b16 %v7844
    %v12143 = vunpack.c.l.b16 %v7845
    %v12144 = vunpack.c.l.b16 %v7846
    %v12145 = vunpack.c.l.b16 %v7847
    %v12146 = vunpack.c.l.b16 %v7848
    %v12147 = vunpack.c.l.b16 %v7849
    %v12148 = vpack.c.b16 %v12141, %v12140
    %v12149 = vpack.c.b16 %v12143, %v12142
    %v12150 = vpack.c.b16 %v12145, %v12144
    %v12151 = vpack.c.b16 %v12147, %v12146
    %v12157 = vsel %vm4306, %v7337, 0
    %12159 = vmatprep.subr.bf16.mxu0 0
    %12160 = vmatpush1.bf16.msra.mxu0 %v12148
    %12161 = vmatprep.subr.bf16.mxu0 0
    %12162 = vmatpush1.bf16.msra.mxu0 %v12149
    %12163 = vmatprep.subr.bf16.mxu0 0
    %12164 = vmatpush1.bf16.msra.mxu0 %v12150
    %12165 = vmatprep.subr.bf16.mxu0 0
    %12166 = vmatpush1.bf16.msra.mxu0 %v12151
    %12167 = vmatprep.subr.bf16.mxu0 0
    %12168 = vmatpush1.bf16.msra.mxu0 0
    %12169 = vmatprep.subr.bf16.mxu0 0
    %12170 = vmatpush1.bf16.msra.mxu0 0
    %12171 = vmatprep.subr.bf16.mxu0 0
    %12172 = vmatpush1.bf16.msra.mxu0 0
    %12173 = vmatprep.subr.bf16.mxu0 0
    %12174 = vmatpush1.bf16.msra.mxu0 0
    %12175 = vmatprep.subr.bf16.mxu0 0
    %12176 = vmatpush1.bf16.msra.mxu0 0
    %12177 = vmatprep.subr.bf16.mxu0 0
    %12178 = vmatpush1.bf16.msra.mxu0 0
    %12179 = vmatprep.subr.bf16.mxu0 0
    %12180 = vmatpush1.bf16.msra.mxu0 0
    %12181 = vmatprep.subr.bf16.mxu0 0
    %12182 = vmatpush1.bf16.msra.mxu0 0
    %12183 = vmatprep.subr.bf16.mxu0 0
    %12184 = vmatpush1.bf16.msra.mxu0 0
    %12185 = vmatprep.subr.bf16.mxu0 0
    %12186 = vmatpush1.bf16.msra.mxu0 0
    %12187 = vmatprep.subr.bf16.mxu0 0
    %12188 = vmatpush1.bf16.msra.mxu0 0
    %12189 = vmatprep.subr.bf16.mxu0 0
    %12190 = vmatpush1.bf16.msra.mxu0 0
    %12191 = vmatprep.mubr.bf16.mxu0 0
    %12192 = vmatmul.mubr.bf16.gmra.mrb[0].mxu0 %v12157
    %v12193 = vpop.f32.mrb[0].mxu0
    %v12194 = vadd.f32 0.0, %v12193
    %v12195 = vpop.f32.mrb[0].mxu0
    %v12196 = vpop.f32.mrb[0].mxu0
    %v12197 = vpop.f32.mrb[0].mxu0
    %12198 = vdwg.mxu0
    %v12199 = vadd.f32 %v12131, %v12194
    %v12200 = vld [vmem:[%s12] sm:$0x1]
    %v12202 = vlaneseq
    %v12203 = vshrl.u32 %v12202, 7
    %v12204 = vsub.s32 0, %v12203
    %v12205 = vrot.slane %v12200, %v12204
    %v12207 = vadd.f32 %v12199, %v12205
    %v12208 = vsel %vm4306, %v12207, 0.0
    %12209 = vst [vmem:[#allocation5] sm:$0xff] %v12208
    // Predicated region
    $region58: #{tpu_custom_call.1} parent=1 // pred_check
      _
    $region59: #{tpu_custom_call.1} parent=1 // pred_check_branch
      %12211 = sbr.rel (0) target = $region61
    $region60: #{tpu_custom_call.1} parent=1 // pred_region
      %s12213 = ssub.s32 128, 128
      %12214 = vsyncadd [#allocation4], %s12213
      %s12216 = sshll.u32 [#allocation5], 4
      %s12217 = int_to_ptr.vmem [resolvable:$true] %s12216
      %12219 = dma.vmem_to_hbm [thread:$0]  %s12217, 128, %s13, [#allocation4]
    $region61: #{tpu_custom_call.1} parent=1 // pred_fallthru
      _
    // Predicated region
    $region62: #{tpu_custom_call.1} parent=1 // pred_check
      _
    $region63: #{tpu_custom_call.1} parent=1 // pred_check_branch
      %12221 = sbr.rel (0) target = $region65
    $region64: #{tpu_custom_call.1} parent=1 // pred_region
      %12222 = dma.done [#allocation4], 128
    $region65: #{tpu_custom_call.1} parent=1 // pred_fallthru
      _
    %12223 = vsyncpa [#allocation3], 1
    %12224 = vsyncpa [#allocation4], 1

</llo_original>
